<compile_context>
chip_gen: v6e
topology: v6e:2x2x1
jax: 0.10.0
libtpu: 0.0.40
codegen_flags: <defaults>
</compile_context>

<pallas_src>
import functools

import jax
import jax.numpy as jnp
from jax.experimental import pallas as pl
from jax.experimental.pallas import tpu as pltpu


_VMEM_LIMIT = 32 * 1024 * 1024   # above v5e's 16 MiB default, <= defaults elsewhere


def _round_up(x, m):
    return ((x + m - 1) // m) * m


def _pick_batch_block(n, hw, target=1024):
    """Largest divisor of n such that nb * Ho * Wo <= target output rows/step."""
    nb = 1
    for d in range(1, n + 1):
        if n % d == 0 and d * hw <= target:
            nb = d
    return nb


def _pick_tile_m(m, cap=512):
    """Largest M tile <= cap (multiple of 8) dividing m; fall back to full m."""
    if m <= cap:
        return m
    for t in range(cap, 7, -8):
        if m % t == 0:
            return t
    return m


# ----------------------------- Pallas kernels ------------------------------ #

def _implicit_3x3_acc(x_ref, w_ref):
    """Implicit-GEMM 3x3/stride-1 conv over a VMEM-resident padded NHWC block.

    x_ref: (nb, Ho+2, Wo+2, C) bf16, spatially padded activations.
    w_ref: (3, 3*C, Cp) bf16, BN scale pre-folded, rows ordered (kw, c).
    Returns f32 accumulator of shape (nb*Ho*Wo, Cp).
    The 3 kw taps are concatenated along channels so each of the 3 dots has
    contraction depth 3*C (better MXU fill than 9 C-deep dots).
    """
    nb, hp, wp, c = x_ref.shape
    ho, wo = hp - 2, wp - 2
    m2 = nb * ho * wo
    k3, _ = w_ref.shape[1], w_ref.shape[2]
    acc = None
    for kh in range(3):                              # static unroll
        rows = x_ref[:, kh:kh + ho, :, :]            # (nb, Ho, Wp, C)
        taps = jnp.concatenate(
            [rows[:, :, kw:kw + wo, :] for kw in range(3)], axis=-1)
        part = jnp.dot(taps.reshape(m2, k3), w_ref[kh],
                       preferred_element_type=jnp.float32)
        acc = part if acc is None else acc + part
    return acc


def _conv3x3_bias_kernel(x_ref, w_ref, b_ref, out_ref, *, relu):
    y = _implicit_3x3_acc(x_ref, w_ref) + b_ref[...]
    if relu:
        y = jnp.maximum(y, 0.0)
    out_ref[...] = y.astype(out_ref.dtype)


def _conv3x3_add_relu_kernel(x_ref, w_ref, b_ref, res_ref, out_ref):
    """conv2 + identity shortcut (residual kept in f32) + final ReLU."""
    y = _implicit_3x3_acc(x_ref, w_ref) + b_ref[...] + res_ref[...]
    out_ref[...] = jnp.maximum(y, 0.0).astype(out_ref.dtype)


def _conv3x3_proj_add_relu_kernel(x_ref, w_ref, b_ref, xs_ref, ws_ref, bs_ref,
                                  out_ref):
    """conv2 + fused projection shortcut (1x1 conv + BN) + add + final ReLU."""
    y = _implicit_3x3_acc(x_ref, w_ref) + b_ref[...]
    shortcut = jnp.dot(xs_ref[...], ws_ref[...],
                       preferred_element_type=jnp.float32) + bs_ref[...]
    out_ref[...] = jnp.maximum(y + shortcut, 0.0).astype(out_ref.dtype)


def _gemm_bias_relu_kernel(a_ref, w_ref, b_ref, out_ref):
    """Single full-K GEMM + bias + ReLU (stride-2 conv1 im2col fallback)."""
    y = jnp.dot(a_ref[...], w_ref[...],
                preferred_element_type=jnp.float32) + b_ref[...]
    out_ref[...] = jnp.maximum(y, 0.0).astype(out_ref.dtype)


# ------------------------------ wrappers ------------------------------------ #

def _conv3x3_s1(xp, w9, bias, *, relu=True, residual=None, proj=None,
                out_dtype=jnp.bfloat16, core_parallel=False):
    """3x3/stride-1 conv (+BN bias, +ReLU, optional fused shortcut) as implicit GEMM."""
    n, hp, wp, c = xp.shape
    ho, wo = hp - 2, wp - 2
    k3, cp = w9.shape[1], w9.shape[2]
    assert k3 == 3 * c, (k3, c)
    nb = _pick_batch_block(n, ho * wo)
    m_blk = nb * ho * wo
    m = n * ho * wo
    out_isz = 2 if out_dtype == jnp.bfloat16 else 4

    in_specs = [
        pl.BlockSpec((nb, hp, wp, c), lambda b: (b, 0, 0, 0)),   # padded activations
        pl.BlockSpec((3, k3, cp), lambda b: (0, 0, 0)),          # folded weights
        pl.BlockSpec((1, cp), lambda b: (0, 0)),                 # folded BN bias
    ]
    args = [xp, w9, bias]
    flops = 2 * m * (3 * k3) * cp
    bytes_acc = xp.size * 2 + w9.size * 2 + bias.size * 4 + m * cp * out_isz

    if proj is not None:
        xs2, ws, bs = proj
        cin_p = xs2.shape[-1]
        in_specs += [
            pl.BlockSpec((m_blk, cin_p), lambda b: (b, 0)),
            pl.BlockSpec((cin_p, cp), lambda b: (0, 0)),
            pl.BlockSpec((1, cp), lambda b: (0, 0)),
        ]
        args += [xs2, ws, bs]
        kernel = _conv3x3_proj_add_relu_kernel
        flops += 2 * m * cin_p * cp
        bytes_acc += xs2.size * 2 + ws.size * 2 + bs.size * 4
    elif residual is not None:
        in_specs.append(pl.BlockSpec((m_blk, cp), lambda b: (b, 0)))   # f32 residual
        args.append(residual)
        kernel = _conv3x3_add_relu_kernel
        bytes_acc += residual.size * 4
    else:
        kernel = functools.partial(_conv3x3_bias_kernel, relu=relu)

    sem = pltpu.CORE_PARALLEL if core_parallel else "parallel"   # v7x: 2 TCs
    out = pl.pallas_call(
        kernel,
        out_shape=jax.ShapeDtypeStruct((m, cp), out_dtype),
        grid=(n // nb,),
        in_specs=in_specs,
        out_specs=pl.BlockSpec((m_blk, cp), lambda b: (b, 0)),
        compiler_params=pltpu.CompilerParams(
            dimension_semantics=(sem,), vmem_limit_bytes=_VMEM_LIMIT),
        cost_estimate=pl.CostEstimate(flops=int(flops), transcendentals=0,
                                      bytes_accessed=int(bytes_acc)),
    )(*args)
    return out.reshape(n, ho, wo, cp)


def _gemm_bias_relu(a, w, bias, *, out_dtype=jnp.bfloat16, core_parallel=False):
    """act(A @ W + bias) with a single full-K block per M tile (stride-2 conv1)."""
    m, k = a.shape
    cp = w.shape[1]
    tm = _pick_tile_m(m)
    out_isz = 2 if out_dtype == jnp.bfloat16 else 4
    sem = pltpu.CORE_PARALLEL if core_parallel else "parallel"
    return pl.pallas_call(
        _gemm_bias_relu_kernel,
        out_shape=jax.ShapeDtypeStruct((m, cp), out_dtype),
        grid=(m // tm,),
        in_specs=[pl.BlockSpec((tm, k), lambda i: (i, 0)),
                  pl.BlockSpec((k, cp), lambda i: (0, 0)),
                  pl.BlockSpec((1, cp), lambda i: (0, 0))],
        out_specs=pl.BlockSpec((tm, cp), lambda i: (i, 0)),
        compiler_params=pltpu.CompilerParams(
            dimension_semantics=(sem,), vmem_limit_bytes=_VMEM_LIMIT),
        cost_estimate=pl.CostEstimate(
            flops=int(2 * m * k * cp), transcendentals=0,
            bytes_accessed=int(a.size * 2 + w.size * 2 + bias.size * 4
                               + m * cp * out_isz)),
    )(a, w, bias)


# ------------------------------ JAX glue ------------------------------------ #

def _fold_bn(gamma, beta, mean, var, eps=1e-5):
    scale = gamma / jnp.sqrt(var + eps)
    return scale, beta - mean * scale


def _im2col_3x3(xp, ho, wo, stride):
    """3x3 im2col from a spatially padded bf16 NHWC tensor (single materialization)."""
    n, _, _, c = xp.shape
    cols = [xp[:, kh:kh + stride * (ho - 1) + 1:stride,
                  kw:kw + stride * (wo - 1) + 1:stride, :]
            for kh in range(3) for kw in range(3)]
    return jnp.concatenate(cols, axis=-1).reshape(n * ho * wo, 9 * c)


def basic_block_forward(x_nchw, params, stride=1, *, core_parallel=False):
    """Pallas implementation of BasicBlock.forward (NCHW in, NCHW out)."""
    f32, bf16 = jnp.float32, jnp.bfloat16
    x = jnp.transpose(x_nchw, (0, 2, 3, 1)).astype(f32)        # NHWC, f32
    n, h, w, cin = x.shape
    cout = params["w1"].shape[0]
    cp = _round_up(cout, 128)                                   # lane-dense channels
    ho, wo = h // stride, w // stride

    x_bf = x.astype(bf16)
    xp = jnp.pad(x_bf, ((0, 0), (1, 1), (1, 1), (0, 0)))        # spatial pad, bf16

    # ---- conv1 (3x3, stride) + BN1 + ReLU (BN scale folded into weights) ----
    s1, b1 = _fold_bn(params["g1"], params["be1"], params["m1"], params["v1"])
    b1p = jnp.pad(b1.reshape(1, cout), ((0, 0), (0, cp - cout)))
    w1t = params["w1"].transpose(2, 3, 1, 0) * s1               # (3,3,Cin,Cout) f32
    if stride == 1:
        w9_1 = jnp.pad(w1t.astype(bf16),
                       ((0, 0), (0, 0), (0, 0), (0, cp - cout))).reshape(3, 3 * cin, cp)
        y1 = _conv3x3_s1(xp, w9_1, b1p, relu=True, out_dtype=bf16,
                         core_parallel=core_parallel)           # (N,Ho,Wo,Cp) bf16
    else:
        # TODO(synk): strided implicit GEMM; for now: one-shot bf16 im2col + GEMM.
        wm1 = jnp.pad(w1t.reshape(9 * cin, cout).astype(bf16),
                      ((0, 0), (0, cp - cout)))
        a1 = _im2col_3x3(xp, ho, wo, stride)                    # (M, 9*Cin) bf16
        y1 = _gemm_bias_relu(a1, wm1, b1p, out_dtype=bf16,
                             core_parallel=core_parallel).reshape(n, ho, wo, cp)

    # ---- conv2 (3x3, stride 1) + BN2 fused with shortcut add + final ReLU ----
    s2, b2 = _fold_bn(params["g2"], params["be2"], params["m2"], params["v2"])
    b2p = jnp.pad(b2.reshape(1, cout), ((0, 0), (0, cp - cout)))
    w2t = params["w2"].transpose(2, 3, 1, 0) * s2               # (3,3,Cout,Cout) f32
    w2t = jnp.pad(w2t, ((0, 0), (0, 0), (0, cp - cout), (0, cp - cout)))
    w9_2 = w2t.astype(bf16).reshape(3, 3 * cp, cp)
    y1p = jnp.pad(y1, ((0, 0), (1, 1), (1, 1), (0, 0)))         # bf16 padded input

    m = n * ho * wo
    if stride != 1 or cin != cout:
        # projection shortcut (1x1 conv + BN), contraction dim padded to 128
        ss, bs = _fold_bn(params["gs"], params["bes"], params["ms"], params["vs"])
        cin_p = _round_up(cin, 128)
        xs = x_bf[:, ::stride, ::stride, :]
        xs = jnp.pad(xs, ((0, 0), (0, 0), (0, 0), (0, cin_p - cin))).reshape(m, cin_p)
        wms = params["ws"].reshape(cout, cin).T * ss            # (Cin, Cout) f32
        wms = jnp.pad(wms.astype(bf16), ((0, cin_p - cin), (0, cp - cout)))
        bsp = jnp.pad(bs.reshape(1, cout), ((0, 0), (0, cp - cout)))
        y2 = _conv3x3_s1(y1p, w9_2, b2p, proj=(xs, wms, bsp), out_dtype=bf16,
                         core_parallel=core_parallel)
    else:
        # identity shortcut kept in f32 (read once in the epilogue)
        res = jnp.pad(x, ((0, 0), (0, 0), (0, 0), (0, cp - cin))).reshape(m, cp)
        y2 = _conv3x3_s1(y1p, w9_2, b2p, residual=res, out_dtype=bf16,
                         core_parallel=core_parallel)

    # NCHW f32 only at the block edge; a chained block would keep NHWC bf16.
    return jnp.transpose(y2[..., :cout], (0, 3, 1, 2)).astype(f32)


# --------------------------- pure-JAX reference ----------------------------- #

def _ref_basic_block(x, params, stride=1, eps=1e-5):
    def conv(x, w, s, pad):
        return jax.lax.conv_general_dilated(
            x, w, (s, s), [(pad, pad), (pad, pad)],
            dimension_numbers=("NCHW", "OIHW", "NCHW"))

    def bn(x, g, b, m, v):
        sc = g / jnp.sqrt(v + eps)
        return x * sc[None, :, None, None] + (b - m * sc)[None, :, None, None]

    r = conv(x, params["w1"], stride, 1)
    r = jnp.maximum(bn(r, params["g1"], params["be1"], params["m1"], params["v1"]), 0.0)
    r = conv(r, params["w2"], 1, 1)
    r = bn(r, params["g2"], params["be2"], params["m2"], params["v2"])
    if stride != 1 or x.shape[1] != params["w1"].shape[0]:
        sc = conv(x, params["ws"], stride, 0)
        sc = bn(sc, params["gs"], params["bes"], params["ms"], params["vs"])
    else:
        sc = x
    return jnp.maximum(r + sc, 0.0)


# ------------------------------ parameters ---------------------------------- #

def init_params(key, in_channels, out_channels):
    ks = jax.random.split(key, 12)
    f32 = jnp.float32
    return {
        # conv weights, PyTorch layout (Cout, Cin, kh, kw)
        "w1": 0.1 * jax.random.normal(ks[0], (out_channels, in_channels, 3, 3), f32),
        "w2": 0.1 * jax.random.normal(ks[1], (out_channels, out_channels, 3, 3), f32),
        "ws": 0.1 * jax.random.normal(ks[2], (out_channels, in_channels, 1, 1), f32),
        # BatchNorm (eval-mode) params: gamma, beta, running_mean, running_var
        "g1": 1.0 + 0.1 * jax.random.normal(ks[3], (out_channels,), f32),
        "be1": 0.1 * jax.random.normal(ks[4], (out_channels,), f32),
        "m1": 0.1 * jax.random.normal(ks[5], (out_channels,), f32),
        "v1": 1.0 + 0.1 * jnp.abs(jax.random.normal(ks[6], (out_channels,), f32)),
        "g2": 1.0 + 0.1 * jax.random.normal(ks[7], (out_channels,), f32),
        "be2": 0.1 * jax.random.normal(ks[8], (out_channels,), f32),
        "m2": 0.1 * jax.random.normal(ks[9], (out_channels,), f32),
        "v2": 1.0 + 0.1 * jnp.abs(jax.random.normal(ks[10], (out_channels,), f32)),
        "gs": jnp.ones((out_channels,), f32),
        "bes": jnp.zeros((out_channels,), f32),
        "ms": jnp.zeros((out_channels,), f32),
        "vs": jnp.ones((out_channels,), f32),
    }


if __name__ == "__main__":
    key = jax.random.PRNGKey(0)

    configs = [
        # (N, Cin, H, W, Cout, stride)
        (2, 4, 16, 16, 8, 1),   # projection shortcut (Cin != Cout) -- primary case
        (2, 8, 16, 16, 8, 1),   # identity shortcut
        (2, 4, 16, 16, 8, 2),   # strided projection shortcut
    ]
    for idx, (N, Cin, H, W, Cout, stride) in enumerate(configs):
        k_x, k_p = jax.random.split(jax.random.fold_in(key, idx))
        x = jax.random.normal(k_x, (N, Cin, H, W), jnp.float32)
        params = init_params(k_p, Cin, Cout)

        fwd = jax.jit(functools.partial(basic_block_forward, stride=stride))
        out = jax.block_until_ready(fwd(x, params))
        ref = jax.block_until_ready(_ref_basic_block(x, params, stride=stride))

        assert out.shape == (N, Cout, H // stride, W // stride), out.shape
        # bf16 MXU operands + bf16 output -> slightly looser tolerance than pure f32
        assert jnp.allclose(out, ref, atol=2e-2, rtol=2e-2), (
            f"mismatch vs reference (config {idx}): "
            f"max abs err {float(jnp.max(jnp.abs(out - ref)))}")

    print("KERNEL_OK")
</pallas_src>

<mosaic_0001>
module attributes {stable_mosaic.version = 11 : i64} {
  func.func @_conv3x3_bias_kernel(%arg0: i32, %arg1: memref<2x18x18x4xbf16, #tpu.memory_space<vmem>>, %arg2: memref<3x12x128xbf16, #tpu.memory_space<vmem>>, %arg3: memref<1x128xf32, #tpu.memory_space<vmem>>, %arg4: memref<512x128xbf16, #tpu.memory_space<vmem>>) attributes {dimension_semantics = [#tpu.dimension_semantics<parallel>], iteration_bounds = array<i64: 1>, scalar_prefetch = 0 : i64, scratch_operands = 0 : i64, tpu.core_type = #tpu.core_type<tc>, window_params = [{transform_indices = @transform_0, window_bounds = array<i64: 2, 18, 18, 4>}, {pipeline_mode = #tpu.pipeline_mode<synchronous>, transform_indices = @transform_1, window_bounds = array<i64: 3, 12, 128>}, {pipeline_mode = #tpu.pipeline_mode<synchronous>, transform_indices = @transform_2, window_bounds = array<i64: 1, 128>}, {transform_indices = @transform_3, window_bounds = array<i64: 512, 128>}]} {
    %c0 = arith.constant 0 : index
    %c0_0 = arith.constant 0 : index
    %c0_1 = arith.constant 0 : index
    %c0_2 = arith.constant 0 : index
    %0 = vector.load %arg1[%c0, %c0_0, %c0_1, %c0_2] : memref<2x18x18x4xbf16, #tpu.memory_space<vmem>>, vector<2x16x18x4xbf16>
    %1 = vector.extract_strided_slice %0 {offsets = [0, 0, 0, 0], sizes = [2, 16, 16, 4], strides = [1, 1, 1, 1]} : vector<2x16x18x4xbf16> to vector<2x16x16x4xbf16>
    %2 = vector.extract_strided_slice %0 {offsets = [0, 0, 1, 0], sizes = [2, 16, 16, 4], strides = [1, 1, 1, 1]} : vector<2x16x18x4xbf16> to vector<2x16x16x4xbf16>
    %3 = vector.extract_strided_slice %0 {offsets = [0, 0, 2, 0], sizes = [2, 16, 16, 4], strides = [1, 1, 1, 1]} : vector<2x16x18x4xbf16> to vector<2x16x16x4xbf16>
    %4 = tpu.concatenate %1, %2, %3 in 3 : vector<2x16x16x4xbf16>, vector<2x16x16x4xbf16>, vector<2x16x16x4xbf16> -> vector<2x16x16x12xbf16>
    %5 = vector.shape_cast %4 : vector<2x16x16x12xbf16> to vector<512x12xbf16>
    %c0_3 = arith.constant 0 : index
    %c0_4 = arith.constant 0 : index
    %c0_5 = arith.constant 0 : index
    %6 = vector.load %arg2[%c0_3, %c0_4, %c0_5] : memref<3x12x128xbf16, #tpu.memory_space<vmem>>, vector<1x12x128xbf16>
    %7 = vector.shape_cast %6 : vector<1x12x128xbf16> to vector<12x128xbf16>
    %cst = arith.constant dense<0.000000e+00> : vector<512x128xf32>
    %8 = tpu.matmul %5, %7, %cst {dimension_numbers = #tpu.dot_dimension_numbers<[1], [0], [0], [1], [0, 0, 1, 1], [], []>} : vector<512x12xbf16>, vector<12x128xbf16>, vector<512x128xf32> -> vector<512x128xf32>
    %c0_6 = arith.constant 0 : index
    %c1 = arith.constant 1 : index
    %c0_7 = arith.constant 0 : index
    %c0_8 = arith.constant 0 : index
    %9 = vector.load %arg1[%c0_6, %c1, %c0_7, %c0_8] : memref<2x18x18x4xbf16, #tpu.memory_space<vmem>>, vector<2x16x18x4xbf16>
    %10 = vector.extract_strided_slice %9 {offsets = [0, 0, 0, 0], sizes = [2, 16, 16, 4], strides = [1, 1, 1, 1]} : vector<2x16x18x4xbf16> to vector<2x16x16x4xbf16>
    %11 = vector.extract_strided_slice %9 {offsets = [0, 0, 1, 0], sizes = [2, 16, 16, 4], strides = [1, 1, 1, 1]} : vector<2x16x18x4xbf16> to vector<2x16x16x4xbf16>
    %12 = vector.extract_strided_slice %9 {offsets = [0, 0, 2, 0], sizes = [2, 16, 16, 4], strides = [1, 1, 1, 1]} : vector<2x16x18x4xbf16> to vector<2x16x16x4xbf16>
    %13 = tpu.concatenate %10, %11, %12 in 3 : vector<2x16x16x4xbf16>, vector<2x16x16x4xbf16>, vector<2x16x16x4xbf16> -> vector<2x16x16x12xbf16>
    %14 = vector.shape_cast %13 : vector<2x16x16x12xbf16> to vector<512x12xbf16>
    %c1_9 = arith.constant 1 : index
    %c0_10 = arith.constant 0 : index
    %c0_11 = arith.constant 0 : index
    %15 = vector.load %arg2[%c1_9, %c0_10, %c0_11] : memref<3x12x128xbf16, #tpu.memory_space<vmem>>, vector<1x12x128xbf16>
    %16 = vector.shape_cast %15 : vector<1x12x128xbf16> to vector<12x128xbf16>
    %cst_12 = arith.constant dense<0.000000e+00> : vector<512x128xf32>
    %17 = tpu.matmul %14, %16, %cst_12 {dimension_numbers = #tpu.dot_dimension_numbers<[1], [0], [0], [1], [0, 0, 1, 1], [], []>} : vector<512x12xbf16>, vector<12x128xbf16>, vector<512x128xf32> -> vector<512x128xf32>
    %18 = arith.addf %8, %17 : vector<512x128xf32>
    %c0_13 = arith.constant 0 : index
    %c2 = arith.constant 2 : index
    %c0_14 = arith.constant 0 : index
    %c0_15 = arith.constant 0 : index
    %19 = vector.load %arg1[%c0_13, %c2, %c0_14, %c0_15] : memref<2x18x18x4xbf16, #tpu.memory_space<vmem>>, vector<2x16x18x4xbf16>
    %20 = vector.extract_strided_slice %19 {offsets = [0, 0, 0, 0], sizes = [2, 16, 16, 4], strides = [1, 1, 1, 1]} : vector<2x16x18x4xbf16> to vector<2x16x16x4xbf16>
    %21 = vector.extract_strided_slice %19 {offsets = [0, 0, 1, 0], sizes = [2, 16, 16, 4], strides = [1, 1, 1, 1]} : vector<2x16x18x4xbf16> to vector<2x16x16x4xbf16>
    %22 = vector.extract_strided_slice %19 {offsets = [0, 0, 2, 0], sizes = [2, 16, 16, 4], strides = [1, 1, 1, 1]} : vector<2x16x18x4xbf16> to vector<2x16x16x4xbf16>
    %23 = tpu.concatenate %20, %21, %22 in 3 : vector<2x16x16x4xbf16>, vector<2x16x16x4xbf16>, vector<2x16x16x4xbf16> -> vector<2x16x16x12xbf16>
    %24 = vector.shape_cast %23 : vector<2x16x16x12xbf16> to vector<512x12xbf16>
    %c2_16 = arith.constant 2 : index
    %c0_17 = arith.constant 0 : index
    %c0_18 = arith.constant 0 : index
    %25 = vector.load %arg2[%c2_16, %c0_17, %c0_18] : memref<3x12x128xbf16, #tpu.memory_space<vmem>>, vector<1x12x128xbf16>
    %26 = vector.shape_cast %25 : vector<1x12x128xbf16> to vector<12x128xbf16>
    %cst_19 = arith.constant dense<0.000000e+00> : vector<512x128xf32>
    %27 = tpu.matmul %24, %26, %cst_19 {dimension_numbers = #tpu.dot_dimension_numbers<[1], [0], [0], [1], [0, 0, 1, 1], [], []>} : vector<512x12xbf16>, vector<12x128xbf16>, vector<512x128xf32> -> vector<512x128xf32>
    %28 = arith.addf %18, %27 : vector<512x128xf32>
    %c0_20 = arith.constant 0 : index
    %c0_21 = arith.constant 0 : index
    %29 = vector.load %arg3[%c0_20, %c0_21] : memref<1x128xf32, #tpu.memory_space<vmem>>, vector<1x128xf32>
    %30 = vector.broadcast %29 : vector<1x128xf32> to vector<512x128xf32>
    %31 = arith.addf %28, %30 : vector<512x128xf32>
    %cst_22 = arith.constant 0.000000e+00 : f32
    %32 = vector.broadcast %cst_22 : f32 to vector<512x128xf32>
    %33 = arith.maximumf %31, %32 : vector<512x128xf32>
    %34 = arith.truncf %33 : vector<512x128xf32> to vector<512x128xbf16>
    %c0_23 = arith.constant 0 : index
    %c0_24 = arith.constant 0 : index
    %35 = vector.load %arg4[%c0_23, %c0_24] : memref<512x128xbf16, #tpu.memory_space<vmem>>, vector<512x128xbf16>
    tpu.vector_store %arg4[%c0_23, %c0_24], %34 {strides = array<i32>} : memref<512x128xbf16, #tpu.memory_space<vmem>>, vector<512x128xbf16>,
    return
  }
  func.func @transform_0(%arg0: i32) -> (i32, i32, i32, i32) {
    %c0_i32 = arith.constant 0 : i32
    %c0_i32_0 = arith.constant 0 : i32
    %c0_i32_1 = arith.constant 0 : i32
    %c0_i32_2 = arith.constant 0 : i32
    return %arg0, %c0_i32, %c0_i32_0, %c0_i32_1 : i32, i32, i32, i32
  }
  func.func @transform_1(%arg0: i32) -> (i32, i32, i32) {
    %c0_i32 = arith.constant 0 : i32
    %c0_i32_0 = arith.constant 0 : i32
    %c0_i32_1 = arith.constant 0 : i32
    %c0_i32_2 = arith.constant 0 : i32
    return %c0_i32, %c0_i32_0, %c0_i32_1 : i32, i32, i32
  }
  func.func @transform_2(%arg0: i32) -> (i32, i32) {
    %c0_i32 = arith.constant 0 : i32
    %c0_i32_0 = arith.constant 0 : i32
    %c0_i32_1 = arith.constant 0 : i32
    return %c0_i32, %c0_i32_0 : i32, i32
  }
  func.func @transform_3(%arg0: i32) -> (i32, i32) {
    %c0_i32 = arith.constant 0 : i32
    %c0_i32_0 = arith.constant 0 : i32
    return %arg0, %c0_i32 : i32, i32
  }
}

module attributes {stable_mosaic.version = 11 : i64} {
  func.func @_conv3x3_proj_add_relu_kernel(%arg0: i32, %arg1: memref<2x18x18x128xbf16, #tpu.memory_space<vmem>>, %arg2: memref<3x384x128xbf16, #tpu.memory_space<vmem>>, %arg3: memref<1x128xf32, #tpu.memory_space<vmem>>, %arg4: memref<512x128xbf16, #tpu.memory_space<vmem>>, %arg5: memref<128x128xbf16, #tpu.memory_space<vmem>>, %arg6: memref<1x128xf32, #tpu.memory_space<vmem>>, %arg7: memref<512x128xbf16, #tpu.memory_space<vmem>>) attributes {dimension_semantics = [#tpu.dimension_semantics<parallel>], iteration_bounds = array<i64: 1>, scalar_prefetch = 0 : i64, scratch_operands = 0 : i64, tpu.core_type = #tpu.core_type<tc>, window_params = [{transform_indices = @transform_0, window_bounds = array<i64: 2, 18, 18, 128>}, {pipeline_mode = #tpu.pipeline_mode<synchronous>, transform_indices = @transform_1, window_bounds = array<i64: 3, 384, 128>}, {pipeline_mode = #tpu.pipeline_mode<synchronous>, transform_indices = @transform_2, window_bounds = array<i64: 1, 128>}, {transform_indices = @transform_3, window_bounds = array<i64: 512, 128>}, {pipeline_mode = #tpu.pipeline_mode<synchronous>, transform_indices = @transform_4, window_bounds = array<i64: 128, 128>}, {pipeline_mode = #tpu.pipeline_mode<synchronous>, transform_indices = @transform_5, window_bounds = array<i64: 1, 128>}, {transform_indices = @transform_6, window_bounds = array<i64: 512, 128>}]} {
    %c0 = arith.constant 0 : index
    %c0_0 = arith.constant 0 : index
    %c0_1 = arith.constant 0 : index
    %c0_2 = arith.constant 0 : index
    %0 = vector.load %arg1[%c0, %c0_0, %c0_1, %c0_2] : memref<2x18x18x128xbf16, #tpu.memory_space<vmem>>, vector<2x16x18x128xbf16>
    %1 = vector.extract_strided_slice %0 {offsets = [0, 0, 0, 0], sizes = [2, 16, 16, 128], strides = [1, 1, 1, 1]} : vector<2x16x18x128xbf16> to vector<2x16x16x128xbf16>
    %2 = vector.extract_strided_slice %0 {offsets = [0, 0, 1, 0], sizes = [2, 16, 16, 128], strides = [1, 1, 1, 1]} : vector<2x16x18x128xbf16> to vector<2x16x16x128xbf16>
    %3 = vector.extract_strided_slice %0 {offsets = [0, 0, 2, 0], sizes = [2, 16, 16, 128], strides = [1, 1, 1, 1]} : vector<2x16x18x128xbf16> to vector<2x16x16x128xbf16>
    %4 = tpu.concatenate %1, %2, %3 in 3 : vector<2x16x16x128xbf16>, vector<2x16x16x128xbf16>, vector<2x16x16x128xbf16> -> vector<2x16x16x384xbf16>
    %5 = vector.shape_cast %4 : vector<2x16x16x384xbf16> to vector<512x384xbf16>
    %c0_3 = arith.constant 0 : index
    %c0_4 = arith.constant 0 : index
    %c0_5 = arith.constant 0 : index
    %6 = vector.load %arg2[%c0_3, %c0_4, %c0_5] : memref<3x384x128xbf16, #tpu.memory_space<vmem>>, vector<1x384x128xbf16>
    %7 = vector.shape_cast %6 : vector<1x384x128xbf16> to vector<384x128xbf16>
    %cst = arith.constant dense<0.000000e+00> : vector<512x128xf32>
    %8 = tpu.matmul %5, %7, %cst {dimension_numbers = #tpu.dot_dimension_numbers<[1], [0], [0], [1], [0, 0, 1, 1], [], []>} : vector<512x384xbf16>, vector<384x128xbf16>, vector<512x128xf32> -> vector<512x128xf32>
    %c0_6 = arith.constant 0 : index
    %c1 = arith.constant 1 : index
    %c0_7 = arith.constant 0 : index
    %c0_8 = arith.constant 0 : index
    %9 = vector.load %arg1[%c0_6, %c1, %c0_7, %c0_8] : memref<2x18x18x128xbf16, #tpu.memory_space<vmem>>, vector<2x16x18x128xbf16>
    %10 = vector.extract_strided_slice %9 {offsets = [0, 0, 0, 0], sizes = [2, 16, 16, 128], strides = [1, 1, 1, 1]} : vector<2x16x18x128xbf16> to vector<2x16x16x128xbf16>
    %11 = vector.extract_strided_slice %9 {offsets = [0, 0, 1, 0], sizes = [2, 16, 16, 128], strides = [1, 1, 1, 1]} : vector<2x16x18x128xbf16> to vector<2x16x16x128xbf16>
    %12 = vector.extract_strided_slice %9 {offsets = [0, 0, 2, 0], sizes = [2, 16, 16, 128], strides = [1, 1, 1, 1]} : vector<2x16x18x128xbf16> to vector<2x16x16x128xbf16>
    %13 = tpu.concatenate %10, %11, %12 in 3 : vector<2x16x16x128xbf16>, vector<2x16x16x128xbf16>, vector<2x16x16x128xbf16> -> vector<2x16x16x384xbf16>
    %14 = vector.shape_cast %13 : vector<2x16x16x384xbf16> to vector<512x384xbf16>
    %c1_9 = arith.constant 1 : index
    %c0_10 = arith.constant 0 : index
    %c0_11 = arith.constant 0 : index
    %15 = vector.load %arg2[%c1_9, %c0_10, %c0_11] : memref<3x384x128xbf16, #tpu.memory_space<vmem>>, vector<1x384x128xbf16>
    %16 = vector.shape_cast %15 : vector<1x384x128xbf16> to vector<384x128xbf16>
    %cst_12 = arith.constant dense<0.000000e+00> : vector<512x128xf32>
    %17 = tpu.matmul %14, %16, %cst_12 {dimension_numbers = #tpu.dot_dimension_numbers<[1], [0], [0], [1], [0, 0, 1, 1], [], []>} : vector<512x384xbf16>, vector<384x128xbf16>, vector<512x128xf32> -> vector<512x128xf32>
    %18 = arith.addf %8, %17 : vector<512x128xf32>
    %c0_13 = arith.constant 0 : index
    %c2 = arith.constant 2 : index
    %c0_14 = arith.constant 0 : index
    %c0_15 = arith.constant 0 : index
    %19 = vector.load %arg1[%c0_13, %c2, %c0_14, %c0_15] : memref<2x18x18x128xbf16, #tpu.memory_space<vmem>>, vector<2x16x18x128xbf16>
    %20 = vector.extract_strided_slice %19 {offsets = [0, 0, 0, 0], sizes = [2, 16, 16, 128], strides = [1, 1, 1, 1]} : vector<2x16x18x128xbf16> to vector<2x16x16x128xbf16>
    %21 = vector.extract_strided_slice %19 {offsets = [0, 0, 1, 0], sizes = [2, 16, 16, 128], strides = [1, 1, 1, 1]} : vector<2x16x18x128xbf16> to vector<2x16x16x128xbf16>
    %22 = vector.extract_strided_slice %19 {offsets = [0, 0, 2, 0], sizes = [2, 16, 16, 128], strides = [1, 1, 1, 1]} : vector<2x16x18x128xbf16> to vector<2x16x16x128xbf16>
    %23 = tpu.concatenate %20, %21, %22 in 3 : vector<2x16x16x128xbf16>, vector<2x16x16x128xbf16>, vector<2x16x16x128xbf16> -> vector<2x16x16x384xbf16>
    %24 = vector.shape_cast %23 : vector<2x16x16x384xbf16> to vector<512x384xbf16>
    %c2_16 = arith.constant 2 : index
    %c0_17 = arith.constant 0 : index
    %c0_18 = arith.constant 0 : index
    %25 = vector.load %arg2[%c2_16, %c0_17, %c0_18] : memref<3x384x128xbf16, #tpu.memory_space<vmem>>, vector<1x384x128xbf16>
    %26 = vector.shape_cast %25 : vector<1x384x128xbf16> to vector<384x128xbf16>
    %cst_19 = arith.constant dense<0.000000e+00> : vector<512x128xf32>
    %27 = tpu.matmul %24, %26, %cst_19 {dimension_numbers = #tpu.dot_dimension_numbers<[1], [0], [0], [1], [0, 0, 1, 1], [], []>} : vector<512x384xbf16>, vector<384x128xbf16>, vector<512x128xf32> -> vector<512x128xf32>
    %28 = arith.addf %18, %27 : vector<512x128xf32>
    %c0_20 = arith.constant 0 : index
    %c0_21 = arith.constant 0 : index
    %29 = vector.load %arg3[%c0_20, %c0_21] : memref<1x128xf32, #tpu.memory_space<vmem>>, vector<1x128xf32>
    %30 = vector.broadcast %29 : vector<1x128xf32> to vector<512x128xf32>
    %31 = arith.addf %28, %30 : vector<512x128xf32>
    %c0_22 = arith.constant 0 : index
    %c0_23 = arith.constant 0 : index
    %32 = vector.load %arg4[%c0_22, %c0_23] : memref<512x128xbf16, #tpu.memory_space<vmem>>, vector<512x128xbf16>
    %c0_24 = arith.constant 0 : index
    %c0_25 = arith.constant 0 : index
    %33 = vector.load %arg5[%c0_24, %c0_25] : memref<128x128xbf16, #tpu.memory_space<vmem>>, vector<128x128xbf16>
    %cst_26 = arith.constant dense<0.000000e+00> : vector<512x128xf32>
    %34 = tpu.matmul %32, %33, %cst_26 {dimension_numbers = #tpu.dot_dimension_numbers<[1], [0], [0], [1], [0, 0, 1, 1], [], []>} : vector<512x128xbf16>, vector<128x128xbf16>, vector<512x128xf32> -> vector<512x128xf32>
    %c0_27 = arith.constant 0 : index
    %c0_28 = arith.constant 0 : index
    %35 = vector.load %arg6[%c0_27, %c0_28] : memref<1x128xf32, #tpu.memory_space<vmem>>, vector<1x128xf32>
    %36 = vector.broadcast %35 : vector<1x128xf32> to vector<512x128xf32>
    %37 = arith.addf %34, %36 : vector<512x128xf32>
    %38 = arith.addf %31, %37 : vector<512x128xf32>
    %cst_29 = arith.constant 0.000000e+00 : f32
    %39 = vector.broadcast %cst_29 : f32 to vector<512x128xf32>
    %40 = arith.maximumf %38, %39 : vector<512x128xf32>
    %41 = arith.truncf %40 : vector<512x128xf32> to vector<512x128xbf16>
    %c0_30 = arith.constant 0 : index
    %c0_31 = arith.constant 0 : index
    %42 = vector.load %arg7[%c0_30, %c0_31] : memref<512x128xbf16, #tpu.memory_space<vmem>>, vector<512x128xbf16>
    tpu.vector_store %arg7[%c0_30, %c0_31], %41 {strides = array<i32>} : memref<512x128xbf16, #tpu.memory_space<vmem>>, vector<512x128xbf16>,
    return
  }
  func.func @transform_0(%arg0: i32) -> (i32, i32, i32, i32) {
    %c0_i32 = arith.constant 0 : i32
    %c0_i32_0 = arith.constant 0 : i32
    %c0_i32_1 = arith.constant 0 : i32
    %c0_i32_2 = arith.constant 0 : i32
    return %arg0, %c0_i32, %c0_i32_0, %c0_i32_1 : i32, i32, i32, i32
  }
  func.func @transform_1(%arg0: i32) -> (i32, i32, i32) {
    %c0_i32 = arith.constant 0 : i32
    %c0_i32_0 = arith.constant 0 : i32
    %c0_i32_1 = arith.constant 0 : i32
    %c0_i32_2 = arith.constant 0 : i32
    return %c0_i32, %c0_i32_0, %c0_i32_1 : i32, i32, i32
  }
  func.func @transform_2(%arg0: i32) -> (i32, i32) {
    %c0_i32 = arith.constant 0 : i32
    %c0_i32_0 = arith.constant 0 : i32
    %c0_i32_1 = arith.constant 0 : i32
    return %c0_i32, %c0_i32_0 : i32, i32
  }
  func.func @transform_3(%arg0: i32) -> (i32, i32) {
    %c0_i32 = arith.constant 0 : i32
    %c0_i32_0 = arith.constant 0 : i32
    return %arg0, %c0_i32 : i32, i32
  }
  func.func @transform_4(%arg0: i32) -> (i32, i32) {
    %c0_i32 = arith.constant 0 : i32
    %c0_i32_0 = arith.constant 0 : i32
    %c0_i32_1 = arith.constant 0 : i32
    return %c0_i32, %c0_i32_0 : i32, i32
  }
  func.func @transform_5(%arg0: i32) -> (i32, i32) {
    %c0_i32 = arith.constant 0 : i32
    %c0_i32_0 = arith.constant 0 : i32
    %c0_i32_1 = arith.constant 0 : i32
    return %c0_i32, %c0_i32_0 : i32, i32
  }
  func.func @transform_6(%arg0: i32) -> (i32, i32) {
    %c0_i32 = arith.constant 0 : i32
    %c0_i32_0 = arith.constant 0 : i32
    return %arg0, %c0_i32 : i32, i32
  }
}

</mosaic_0001>

<llo_original>
// kernel: basic_block_forward.2
$region0: #{basic_block_forward.2}
  #allocation0 [shape = 'u32[]', space=smem, size = 0x4, offset = 0x4, fixed_abs, tag = 'smem constant byte address 0x4 - core index']
  #allocation1 [shape = 'u32[144,128]{1,0:T(1,128)}', space=vmem, size = 0x12000, scoped, tag = 'internal scratch']
  %s0 = inlined_call_operand.vmem [shape: bf16[2,18,18,4], index: 0, kind: input, shape index: {}]
  %s1 = inlined_call_operand.vmem [shape: bf16[3,12,128], index: 1, kind: input, shape index: {}]
  %s2 = inlined_call_operand.vmem [shape: f32[1,128], index: 2, kind: input, shape index: {}]
  %s3 = inlined_call_operand.vmem [shape: bf16[512,128], index: 3, kind: output, shape index: {}]
  %s4 = sld [smem:[#allocation0]]
  $region22: #{basic_block_forward.2} parent=0
    _
  %s6 = ssub.s32 1, %s4
  %s7 = scalar_select 0, %s6, %s4
  // Predicated region
  $region2: #{basic_block_forward.2} parent=0 // pred_check
    _
  $region3: #{basic_block_forward.2} parent=0 // pred_check_branch
    %9 = sbr.rel (0) target = $region5
  $region4: #{basic_block_forward.2} parent=0 // pred_region
    _
  $region5: #{basic_block_forward.2} parent=0 // pred_fallthru
    _
  // Predicated region
  $region6: #{basic_block_forward.2} parent=0 // pred_check
    _
  $region7: #{basic_block_forward.2} parent=0 // pred_check_branch
    %11 = sbr.rel (0) target = $region9
  $region8: #{basic_block_forward.2} parent=0 // pred_region
    _
  $region9: #{basic_block_forward.2} parent=0 // pred_fallthru
    _
  // Predicated region
  $region10: #{basic_block_forward.2} parent=0 // pred_check
    _
  $region11: #{basic_block_forward.2} parent=0 // pred_check_branch
    %13 = sbr.rel (0) target = $region13
  $region12: #{basic_block_forward.2} parent=0 // pred_region
    _
  $region13: #{basic_block_forward.2} parent=0 // pred_fallthru
    _
  %v15 = vld [vmem:[%s0] sm:$0xf]
  %v16 = vld [vmem:[%s0 + $0x4] sm:$0xf]
  %v17 = vld [vmem:[%s0 + $0x8] sm:$0x1]
  %v18 = vld [vmem:[%s0 + $0xc] sm:$0xf]
  %v19 = vld [vmem:[%s0 + $0x10] sm:$0xf]
  %v20 = vld [vmem:[%s0 + $0x14] sm:$0x1]
  %v21 = vld [vmem:[%s0 + $0x18] sm:$0xf]
  %v22 = vld [vmem:[%s0 + $0x1c] sm:$0xf]
  %v23 = vld [vmem:[%s0 + $0x20] sm:$0x1]
  %v24 = vld [vmem:[%s0 + $0x24] sm:$0xf]
  %v25 = vld [vmem:[%s0 + $0x28] sm:$0xf]
  %v26 = vld [vmem:[%s0 + $0x2c] sm:$0x1]
  %v27 = vld [vmem:[%s0 + $0x30] sm:$0xf]
  %v28 = vld [vmem:[%s0 + $0x34] sm:$0xf]
  %v29 = vld [vmem:[%s0 + $0x38] sm:$0x1]
  %v30 = vld [vmem:[%s0 + $0x3c] sm:$0xf]
  %v31 = vld [vmem:[%s0 + $0x40] sm:$0xf]
  %v32 = vld [vmem:[%s0 + $0x44] sm:$0x1]
  %v33 = vld [vmem:[%s0 + $0x48] sm:$0xf]
  %v34 = vld [vmem:[%s0 + $0x4c] sm:$0xf]
  %v35 = vld [vmem:[%s0 + $0x50] sm:$0x1]
  %v36 = vld [vmem:[%s0 + $0x54] sm:$0xf]
  %v37 = vld [vmem:[%s0 + $0x58] sm:$0xf]
  %v38 = vld [vmem:[%s0 + $0x5c] sm:$0x1]
  %v39 = vld [vmem:[%s0 + $0x60] sm:$0xf]
  %v40 = vld [vmem:[%s0 + $0x64] sm:$0xf]
  %v41 = vld [vmem:[%s0 + $0x68] sm:$0x1]
  %v42 = vld [vmem:[%s0 + $0x6c] sm:$0xf]
  %v43 = vld [vmem:[%s0 + $0x70] sm:$0xf]
  %v44 = vld [vmem:[%s0 + $0x74] sm:$0x1]
  %v45 = vld [vmem:[%s0 + $0x78] sm:$0xf]
  %v46 = vld [vmem:[%s0 + $0x7c] sm:$0xf]
  %v47 = vld [vmem:[%s0 + $0x80] sm:$0x1]
  %v48 = vld [vmem:[%s0 + $0x84] sm:$0xf]
  %v49 = vld [vmem:[%s0 + $0x88] sm:$0xf]
  %v50 = vld [vmem:[%s0 + $0x8c] sm:$0x1]
  %v51 = vld [vmem:[%s0 + $0x90] sm:$0xf]
  %v52 = vld [vmem:[%s0 + $0x94] sm:$0xf]
  %v53 = vld [vmem:[%s0 + $0x98] sm:$0x1]
  %v54 = vld [vmem:[%s0 + $0x9c] sm:$0xf]
  %v55 = vld [vmem:[%s0 + $0xa0] sm:$0xf]
  %v56 = vld [vmem:[%s0 + $0xa4] sm:$0x1]
  %v57 = vld [vmem:[%s0 + $0xa8] sm:$0xf]
  %v58 = vld [vmem:[%s0 + $0xac] sm:$0xf]
  %v59 = vld [vmem:[%s0 + $0xb0] sm:$0x1]
  %v60 = vld [vmem:[%s0 + $0xb4] sm:$0xf]
  %v61 = vld [vmem:[%s0 + $0xb8] sm:$0xf]
  %v62 = vld [vmem:[%s0 + $0xbc] sm:$0x1]
  %v63 = vld [vmem:[%s0 + $0xd8] sm:$0xf]
  %v64 = vld [vmem:[%s0 + $0xdc] sm:$0xf]
  %v65 = vld [vmem:[%s0 + $0xe0] sm:$0x1]
  %v66 = vld [vmem:[%s0 + $0xe4] sm:$0xf]
  %v67 = vld [vmem:[%s0 + $0xe8] sm:$0xf]
  %v68 = vld [vmem:[%s0 + $0xec] sm:$0x1]
  %v69 = vld [vmem:[%s0 + $0xf0] sm:$0xf]
  %v70 = vld [vmem:[%s0 + $0xf4] sm:$0xf]
  %v71 = vld [vmem:[%s0 + $0xf8] sm:$0x1]
  %v72 = vld [vmem:[%s0 + $0xfc] sm:$0xf]
  %v73 = vld [vmem:[%s0 + $0x100] sm:$0xf]
  %v74 = vld [vmem:[%s0 + $0x104] sm:$0x1]
  %v75 = vld [vmem:[%s0 + $0x108] sm:$0xf]
  %v76 = vld [vmem:[%s0 + $0x10c] sm:$0xf]
  %v77 = vld [vmem:[%s0 + $0x110] sm:$0x1]
  %v78 = vld [vmem:[%s0 + $0x114] sm:$0xf]
  %v79 = vld [vmem:[%s0 + $0x118] sm:$0xf]
  %v80 = vld [vmem:[%s0 + $0x11c] sm:$0x1]
  %v81 = vld [vmem:[%s0 + $0x120] sm:$0xf]
  %v82 = vld [vmem:[%s0 + $0x124] sm:$0xf]
  %v83 = vld [vmem:[%s0 + $0x128] sm:$0x1]
  %v84 = vld [vmem:[%s0 + $0x12c] sm:$0xf]
  %v85 = vld [vmem:[%s0 + $0x130] sm:$0xf]
  %v86 = vld [vmem:[%s0 + $0x134] sm:$0x1]
  %v87 = vld [vmem:[%s0 + $0x138] sm:$0xf]
  %v88 = vld [vmem:[%s0 + $0x13c] sm:$0xf]
  %v89 = vld [vmem:[%s0 + $0x140] sm:$0x1]
  %v90 = vld [vmem:[%s0 + $0x144] sm:$0xf]
  %v91 = vld [vmem:[%s0 + $0x148] sm:$0xf]
  %v92 = vld [vmem:[%s0 + $0x14c] sm:$0x1]
  %v93 = vld [vmem:[%s0 + $0x150] sm:$0xf]
  %v94 = vld [vmem:[%s0 + $0x154] sm:$0xf]
  %v95 = vld [vmem:[%s0 + $0x158] sm:$0x1]
  %v96 = vld [vmem:[%s0 + $0x15c] sm:$0xf]
  %v97 = vld [vmem:[%s0 + $0x160] sm:$0xf]
  %v98 = vld [vmem:[%s0 + $0x164] sm:$0x1]
  %v99 = vld [vmem:[%s0 + $0x168] sm:$0xf]
  %v100 = vld [vmem:[%s0 + $0x16c] sm:$0xf]
  %v101 = vld [vmem:[%s0 + $0x170] sm:$0x1]
  %v102 = vld [vmem:[%s0 + $0x174] sm:$0xf]
  %v103 = vld [vmem:[%s0 + $0x178] sm:$0xf]
  %v104 = vld [vmem:[%s0 + $0x17c] sm:$0x1]
  %v105 = vld [vmem:[%s0 + $0x180] sm:$0xf]
  %v106 = vld [vmem:[%s0 + $0x184] sm:$0xf]
  %v107 = vld [vmem:[%s0 + $0x188] sm:$0x1]
  %v108 = vld [vmem:[%s0 + $0x18c] sm:$0xf]
  %v109 = vld [vmem:[%s0 + $0x190] sm:$0xf]
  %v110 = vld [vmem:[%s0 + $0x194] sm:$0x1]
  %v175 = vunpack.c.l.b16 %v15
  %v176 = vunpack.c.l.b16 %v16
  %v177 = vunpack.c.l.b16 %v18
  %v178 = vunpack.c.l.b16 %v19
  %v179 = vunpack.c.l.b16 %v21
  %v180 = vunpack.c.l.b16 %v22
  %v181 = vunpack.c.l.b16 %v24
  %v182 = vunpack.c.l.b16 %v25
  %v183 = vunpack.c.l.b16 %v27
  %v184 = vunpack.c.l.b16 %v28
  %v185 = vunpack.c.l.b16 %v30
  %v186 = vunpack.c.l.b16 %v31
  %v187 = vunpack.c.l.b16 %v33
  %v188 = vunpack.c.l.b16 %v34
  %v189 = vunpack.c.l.b16 %v36
  %v190 = vunpack.c.l.b16 %v37
  %v191 = vunpack.c.l.b16 %v39
  %v192 = vunpack.c.l.b16 %v40
  %v193 = vunpack.c.l.b16 %v42
  %v194 = vunpack.c.l.b16 %v43
  %v195 = vunpack.c.l.b16 %v45
  %v196 = vunpack.c.l.b16 %v46
  %v197 = vunpack.c.l.b16 %v48
  %v198 = vunpack.c.l.b16 %v49
  %v199 = vunpack.c.l.b16 %v51
  %v200 = vunpack.c.l.b16 %v52
  %v201 = vunpack.c.l.b16 %v54
  %v202 = vunpack.c.l.b16 %v55
  %v203 = vunpack.c.l.b16 %v57
  %v204 = vunpack.c.l.b16 %v58
  %v205 = vunpack.c.l.b16 %v60
  %v206 = vunpack.c.l.b16 %v61
  %v207 = vunpack.c.l.b16 %v63
  %v208 = vunpack.c.l.b16 %v64
  %v209 = vunpack.c.l.b16 %v66
  %v210 = vunpack.c.l.b16 %v67
  %v211 = vunpack.c.l.b16 %v69
  %v212 = vunpack.c.l.b16 %v70
  %v213 = vunpack.c.l.b16 %v72
  %v214 = vunpack.c.l.b16 %v73
  %v215 = vunpack.c.l.b16 %v75
  %v216 = vunpack.c.l.b16 %v76
  %v217 = vunpack.c.l.b16 %v78
  %v218 = vunpack.c.l.b16 %v79
  %v219 = vunpack.c.l.b16 %v81
  %v220 = vunpack.c.l.b16 %v82
  %v221 = vunpack.c.l.b16 %v84
  %v222 = vunpack.c.l.b16 %v85
  %v223 = vunpack.c.l.b16 %v87
  %v224 = vunpack.c.l.b16 %v88
  %v225 = vunpack.c.l.b16 %v90
  %v226 = vunpack.c.l.b16 %v91
  %v227 = vunpack.c.l.b16 %v93
  %v228 = vunpack.c.l.b16 %v94
  %v229 = vunpack.c.l.b16 %v96
  %v230 = vunpack.c.l.b16 %v97
  %v231 = vunpack.c.l.b16 %v99
  %v232 = vunpack.c.l.b16 %v100
  %v233 = vunpack.c.l.b16 %v102
  %v234 = vunpack.c.l.b16 %v103
  %v235 = vunpack.c.l.b16 %v105
  %v236 = vunpack.c.l.b16 %v106
  %v237 = vunpack.c.l.b16 %v108
  %v238 = vunpack.c.l.b16 %v109
  %v239 = vpack.c.b16 %v176, %v175
  %v240 = vpack.c.b16 %v178, %v177
  %v241 = vpack.c.b16 %v180, %v179
  %v242 = vpack.c.b16 %v182, %v181
  %v243 = vpack.c.b16 %v184, %v183
  %v244 = vpack.c.b16 %v186, %v185
  %v245 = vpack.c.b16 %v188, %v187
  %v246 = vpack.c.b16 %v190, %v189
  %v247 = vpack.c.b16 %v192, %v191
  %v248 = vpack.c.b16 %v194, %v193
  %v249 = vpack.c.b16 %v196, %v195
  %v250 = vpack.c.b16 %v198, %v197
  %v251 = vpack.c.b16 %v200, %v199
  %v252 = vpack.c.b16 %v202, %v201
  %v253 = vpack.c.b16 %v204, %v203
  %v254 = vpack.c.b16 %v206, %v205
  %v255 = vpack.c.b16 %v208, %v207
  %v256 = vpack.c.b16 %v210, %v209
  %v257 = vpack.c.b16 %v212, %v211
  %v258 = vpack.c.b16 %v214, %v213
  %v259 = vpack.c.b16 %v216, %v215
  %v260 = vpack.c.b16 %v218, %v217
  %v261 = vpack.c.b16 %v220, %v219
  %v262 = vpack.c.b16 %v222, %v221
  %v263 = vpack.c.b16 %v224, %v223
  %v264 = vpack.c.b16 %v226, %v225
  %v265 = vpack.c.b16 %v228, %v227
  %v266 = vpack.c.b16 %v230, %v229
  %v267 = vpack.c.b16 %v232, %v231
  %v268 = vpack.c.b16 %v234, %v233
  %v269 = vpack.c.b16 %v236, %v235
  %v270 = vpack.c.b16 %v238, %v237
  %v303 = vunpack.c.l.b16 %v17
  %v304 = vunpack.c.l.b16 %v20
  %v305 = vunpack.c.l.b16 %v23
  %v306 = vunpack.c.l.b16 %v26
  %v307 = vunpack.c.l.b16 %v29
  %v308 = vunpack.c.l.b16 %v32
  %v309 = vunpack.c.l.b16 %v35
  %v310 = vunpack.c.l.b16 %v38
  %v311 = vunpack.c.l.b16 %v41
  %v312 = vunpack.c.l.b16 %v44
  %v313 = vunpack.c.l.b16 %v47
  %v314 = vunpack.c.l.b16 %v50
  %v315 = vunpack.c.l.b16 %v53
  %v316 = vunpack.c.l.b16 %v56
  %v317 = vunpack.c.l.b16 %v59
  %v318 = vunpack.c.l.b16 %v62
  %v319 = vunpack.c.l.b16 %v65
  %v320 = vunpack.c.l.b16 %v68
  %v321 = vunpack.c.l.b16 %v71
  %v322 = vunpack.c.l.b16 %v74
  %v323 = vunpack.c.l.b16 %v77
  %v324 = vunpack.c.l.b16 %v80
  %v325 = vunpack.c.l.b16 %v83
  %v326 = vunpack.c.l.b16 %v86
  %v327 = vunpack.c.l.b16 %v89
  %v328 = vunpack.c.l.b16 %v92
  %v329 = vunpack.c.l.b16 %v95
  %v330 = vunpack.c.l.b16 %v98
  %v331 = vunpack.c.l.b16 %v101
  %v332 = vunpack.c.l.b16 %v104
  %v333 = vunpack.c.l.b16 %v107
  %v334 = vunpack.c.l.b16 %v110
  %v335 = vpack.c.b16 %v303, %v303
  %v336 = vpack.c.b16 %v304, %v304
  %v337 = vpack.c.b16 %v305, %v305
  %v338 = vpack.c.b16 %v306, %v306
  %v339 = vpack.c.b16 %v307, %v307
  %v340 = vpack.c.b16 %v308, %v308
  %v341 = vpack.c.b16 %v309, %v309
  %v342 = vpack.c.b16 %v310, %v310
  %v343 = vpack.c.b16 %v311, %v311
  %v344 = vpack.c.b16 %v312, %v312
  %v345 = vpack.c.b16 %v313, %v313
  %v346 = vpack.c.b16 %v314, %v314
  %v347 = vpack.c.b16 %v315, %v315
  %v348 = vpack.c.b16 %v316, %v316
  %v349 = vpack.c.b16 %v317, %v317
  %v350 = vpack.c.b16 %v318, %v318
  %v351 = vpack.c.b16 %v319, %v319
  %v352 = vpack.c.b16 %v320, %v320
  %v353 = vpack.c.b16 %v321, %v321
  %v354 = vpack.c.b16 %v322, %v322
  %v355 = vpack.c.b16 %v323, %v323
  %v356 = vpack.c.b16 %v324, %v324
  %v357 = vpack.c.b16 %v325, %v325
  %v358 = vpack.c.b16 %v326, %v326
  %v359 = vpack.c.b16 %v327, %v327
  %v360 = vpack.c.b16 %v328, %v328
  %v361 = vpack.c.b16 %v329, %v329
  %v362 = vpack.c.b16 %v330, %v330
  %v363 = vpack.c.b16 %v331, %v331
  %v364 = vpack.c.b16 %v332, %v332
  %v365 = vpack.c.b16 %v333, %v333
  %v366 = vpack.c.b16 %v334, %v334
  %vm367 = vsmask.f32 7424
  %v369 = vshrl.u32 %v239, 16
  %v371 = vshll.u32 %v239, 16
  %v373 = vrot.slane %v371, 1
  %v374 = vor.u32 %v369, %v373
  %v376 = vshll.u32 %v335, 16
  %v378 = vrot.slane %v376, 1
  %v379 = vsel %vm367, %v374, %v378
  %v381 = vshrl.u32 %v240, 16
  %v383 = vshll.u32 %v240, 16
  %v385 = vrot.slane %v383, 1
  %v386 = vor.u32 %v381, %v385
  %v388 = vshll.u32 %v336, 16
  %v390 = vrot.slane %v388, 1
  %v391 = vsel %vm367, %v386, %v390
  %v393 = vshrl.u32 %v241, 16
  %v395 = vshll.u32 %v241, 16
  %v397 = vrot.slane %v395, 1
  %v398 = vor.u32 %v393, %v397
  %v400 = vshll.u32 %v337, 16
  %v402 = vrot.slane %v400, 1
  %v403 = vsel %vm367, %v398, %v402
  %v405 = vshrl.u32 %v242, 16
  %v407 = vshll.u32 %v242, 16
  %v409 = vrot.slane %v407, 1
  %v410 = vor.u32 %v405, %v409
  %v412 = vshll.u32 %v338, 16
  %v414 = vrot.slane %v412, 1
  %v415 = vsel %vm367, %v410, %v414
  %v417 = vshrl.u32 %v243, 16
  %v419 = vshll.u32 %v243, 16
  %v421 = vrot.slane %v419, 1
  %v422 = vor.u32 %v417, %v421
  %v424 = vshll.u32 %v339, 16
  %v426 = vrot.slane %v424, 1
  %v427 = vsel %vm367, %v422, %v426
  %v429 = vshrl.u32 %v244, 16
  %v431 = vshll.u32 %v244, 16
  %v433 = vrot.slane %v431, 1
  %v434 = vor.u32 %v429, %v433
  %v436 = vshll.u32 %v340, 16
  %v438 = vrot.slane %v436, 1
  %v439 = vsel %vm367, %v434, %v438
  %v441 = vshrl.u32 %v245, 16
  %v443 = vshll.u32 %v245, 16
  %v445 = vrot.slane %v443, 1
  %v446 = vor.u32 %v441, %v445
  %v448 = vshll.u32 %v341, 16
  %v450 = vrot.slane %v448, 1
  %v451 = vsel %vm367, %v446, %v450
  %v453 = vshrl.u32 %v246, 16
  %v455 = vshll.u32 %v246, 16
  %v457 = vrot.slane %v455, 1
  %v458 = vor.u32 %v453, %v457
  %v460 = vshll.u32 %v342, 16
  %v462 = vrot.slane %v460, 1
  %v463 = vsel %vm367, %v458, %v462
  %v465 = vshrl.u32 %v247, 16
  %v467 = vshll.u32 %v247, 16
  %v469 = vrot.slane %v467, 1
  %v470 = vor.u32 %v465, %v469
  %v472 = vshll.u32 %v343, 16
  %v474 = vrot.slane %v472, 1
  %v475 = vsel %vm367, %v470, %v474
  %v477 = vshrl.u32 %v248, 16
  %v479 = vshll.u32 %v248, 16
  %v481 = vrot.slane %v479, 1
  %v482 = vor.u32 %v477, %v481
  %v484 = vshll.u32 %v344, 16
  %v486 = vrot.slane %v484, 1
  %v487 = vsel %vm367, %v482, %v486
  %v489 = vshrl.u32 %v249, 16
  %v491 = vshll.u32 %v249, 16
  %v493 = vrot.slane %v491, 1
  %v494 = vor.u32 %v489, %v493
  %v496 = vshll.u32 %v345, 16
  %v498 = vrot.slane %v496, 1
  %v499 = vsel %vm367, %v494, %v498
  %v501 = vshrl.u32 %v250, 16
  %v503 = vshll.u32 %v250, 16
  %v505 = vrot.slane %v503, 1
  %v506 = vor.u32 %v501, %v505
  %v508 = vshll.u32 %v346, 16
  %v510 = vrot.slane %v508, 1
  %v511 = vsel %vm367, %v506, %v510
  %v513 = vshrl.u32 %v251, 16
  %v515 = vshll.u32 %v251, 16
  %v517 = vrot.slane %v515, 1
  %v518 = vor.u32 %v513, %v517
  %v520 = vshll.u32 %v347, 16
  %v522 = vrot.slane %v520, 1
  %v523 = vsel %vm367, %v518, %v522
  %v525 = vshrl.u32 %v252, 16
  %v527 = vshll.u32 %v252, 16
  %v529 = vrot.slane %v527, 1
  %v530 = vor.u32 %v525, %v529
  %v532 = vshll.u32 %v348, 16
  %v534 = vrot.slane %v532, 1
  %v535 = vsel %vm367, %v530, %v534
  %v537 = vshrl.u32 %v253, 16
  %v539 = vshll.u32 %v253, 16
  %v541 = vrot.slane %v539, 1
  %v542 = vor.u32 %v537, %v541
  %v544 = vshll.u32 %v349, 16
  %v546 = vrot.slane %v544, 1
  %v547 = vsel %vm367, %v542, %v546
  %v549 = vshrl.u32 %v254, 16
  %v551 = vshll.u32 %v254, 16
  %v553 = vrot.slane %v551, 1
  %v554 = vor.u32 %v549, %v553
  %v556 = vshll.u32 %v350, 16
  %v558 = vrot.slane %v556, 1
  %v559 = vsel %vm367, %v554, %v558
  %v561 = vshrl.u32 %v255, 16
  %v563 = vshll.u32 %v255, 16
  %v565 = vrot.slane %v563, 1
  %v566 = vor.u32 %v561, %v565
  %v568 = vshll.u32 %v351, 16
  %v570 = vrot.slane %v568, 1
  %v571 = vsel %vm367, %v566, %v570
  %v573 = vshrl.u32 %v256, 16
  %v575 = vshll.u32 %v256, 16
  %v577 = vrot.slane %v575, 1
  %v578 = vor.u32 %v573, %v577
  %v580 = vshll.u32 %v352, 16
  %v582 = vrot.slane %v580, 1
  %v583 = vsel %vm367, %v578, %v582
  %v585 = vshrl.u32 %v257, 16
  %v587 = vshll.u32 %v257, 16
  %v589 = vrot.slane %v587, 1
  %v590 = vor.u32 %v585, %v589
  %v592 = vshll.u32 %v353, 16
  %v594 = vrot.slane %v592, 1
  %v595 = vsel %vm367, %v590, %v594
  %v597 = vshrl.u32 %v258, 16
  %v599 = vshll.u32 %v258, 16
  %v601 = vrot.slane %v599, 1
  %v602 = vor.u32 %v597, %v601
  %v604 = vshll.u32 %v354, 16
  %v606 = vrot.slane %v604, 1
  %v607 = vsel %vm367, %v602, %v606
  %v609 = vshrl.u32 %v259, 16
  %v611 = vshll.u32 %v259, 16
  %v613 = vrot.slane %v611, 1
  %v614 = vor.u32 %v609, %v613
  %v616 = vshll.u32 %v355, 16
  %v618 = vrot.slane %v616, 1
  %v619 = vsel %vm367, %v614, %v618
  %v621 = vshrl.u32 %v260, 16
  %v623 = vshll.u32 %v260, 16
  %v625 = vrot.slane %v623, 1
  %v626 = vor.u32 %v621, %v625
  %v628 = vshll.u32 %v356, 16
  %v630 = vrot.slane %v628, 1
  %v631 = vsel %vm367, %v626, %v630
  %v633 = vshrl.u32 %v261, 16
  %v635 = vshll.u32 %v261, 16
  %v637 = vrot.slane %v635, 1
  %v638 = vor.u32 %v633, %v637
  %v640 = vshll.u32 %v357, 16
  %v642 = vrot.slane %v640, 1
  %v643 = vsel %vm367, %v638, %v642
  %v645 = vshrl.u32 %v262, 16
  %v647 = vshll.u32 %v262, 16
  %v649 = vrot.slane %v647, 1
  %v650 = vor.u32 %v645, %v649
  %v652 = vshll.u32 %v358, 16
  %v654 = vrot.slane %v652, 1
  %v655 = vsel %vm367, %v650, %v654
  %v657 = vshrl.u32 %v263, 16
  %v659 = vshll.u32 %v263, 16
  %v661 = vrot.slane %v659, 1
  %v662 = vor.u32 %v657, %v661
  %v664 = vshll.u32 %v359, 16
  %v666 = vrot.slane %v664, 1
  %v667 = vsel %vm367, %v662, %v666
  %v669 = vshrl.u32 %v264, 16
  %v671 = vshll.u32 %v264, 16
  %v673 = vrot.slane %v671, 1
  %v674 = vor.u32 %v669, %v673
  %v676 = vshll.u32 %v360, 16
  %v678 = vrot.slane %v676, 1
  %v679 = vsel %vm367, %v674, %v678
  %v681 = vshrl.u32 %v265, 16
  %v683 = vshll.u32 %v265, 16
  %v685 = vrot.slane %v683, 1
  %v686 = vor.u32 %v681, %v685
  %v688 = vshll.u32 %v361, 16
  %v690 = vrot.slane %v688, 1
  %v691 = vsel %vm367, %v686, %v690
  %v693 = vshrl.u32 %v266, 16
  %v695 = vshll.u32 %v266, 16
  %v697 = vrot.slane %v695, 1
  %v698 = vor.u32 %v693, %v697
  %v700 = vshll.u32 %v362, 16
  %v702 = vrot.slane %v700, 1
  %v703 = vsel %vm367, %v698, %v702
  %v705 = vshrl.u32 %v267, 16
  %v707 = vshll.u32 %v267, 16
  %v709 = vrot.slane %v707, 1
  %v710 = vor.u32 %v705, %v709
  %v712 = vshll.u32 %v363, 16
  %v714 = vrot.slane %v712, 1
  %v715 = vsel %vm367, %v710, %v714
  %v717 = vshrl.u32 %v268, 16
  %v719 = vshll.u32 %v268, 16
  %v721 = vrot.slane %v719, 1
  %v722 = vor.u32 %v717, %v721
  %v724 = vshll.u32 %v364, 16
  %v726 = vrot.slane %v724, 1
  %v727 = vsel %vm367, %v722, %v726
  %v729 = vshrl.u32 %v269, 16
  %v731 = vshll.u32 %v269, 16
  %v733 = vrot.slane %v731, 1
  %v734 = vor.u32 %v729, %v733
  %v736 = vshll.u32 %v365, 16
  %v738 = vrot.slane %v736, 1
  %v739 = vsel %vm367, %v734, %v738
  %v741 = vshrl.u32 %v270, 16
  %v743 = vshll.u32 %v270, 16
  %v745 = vrot.slane %v743, 1
  %v746 = vor.u32 %v741, %v745
  %v748 = vshll.u32 %v366, 16
  %v750 = vrot.slane %v748, 1
  %v751 = vsel %vm367, %v746, %v750
  %752 = vrot.lane.b32.xlu0 %v379, 4
  %v753 = vpop.permute.xlu0 %752
  %754 = vrot.lane.b32.xlu0 %v391, 4
  %v755 = vpop.permute.xlu0 %754
  %756 = vrot.lane.b32.xlu0 %v403, 4
  %v757 = vpop.permute.xlu0 %756
  %758 = vrot.lane.b32.xlu0 %v415, 4
  %v759 = vpop.permute.xlu0 %758
  %760 = vrot.lane.b32.xlu0 %v427, 4
  %v761 = vpop.permute.xlu0 %760
  %762 = vrot.lane.b32.xlu0 %v439, 4
  %v763 = vpop.permute.xlu0 %762
  %764 = vrot.lane.b32.xlu0 %v451, 4
  %v765 = vpop.permute.xlu0 %764
  %766 = vrot.lane.b32.xlu0 %v463, 4
  %v767 = vpop.permute.xlu0 %766
  %768 = vrot.lane.b32.xlu0 %v475, 4
  %v769 = vpop.permute.xlu0 %768
  %770 = vrot.lane.b32.xlu0 %v487, 4
  %v771 = vpop.permute.xlu0 %770
  %772 = vrot.lane.b32.xlu0 %v499, 4
  %v773 = vpop.permute.xlu0 %772
  %774 = vrot.lane.b32.xlu0 %v511, 4
  %v775 = vpop.permute.xlu0 %774
  %776 = vrot.lane.b32.xlu0 %v523, 4
  %v777 = vpop.permute.xlu0 %776
  %778 = vrot.lane.b32.xlu0 %v535, 4
  %v779 = vpop.permute.xlu0 %778
  %780 = vrot.lane.b32.xlu0 %v547, 4
  %v781 = vpop.permute.xlu0 %780
  %782 = vrot.lane.b32.xlu0 %v559, 4
  %v783 = vpop.permute.xlu0 %782
  %784 = vrot.lane.b32.xlu0 %v571, 4
  %v785 = vpop.permute.xlu0 %784
  %786 = vrot.lane.b32.xlu0 %v583, 4
  %v787 = vpop.permute.xlu0 %786
  %788 = vrot.lane.b32.xlu0 %v595, 4
  %v789 = vpop.permute.xlu0 %788
  %790 = vrot.lane.b32.xlu0 %v607, 4
  %v791 = vpop.permute.xlu0 %790
  %792 = vrot.lane.b32.xlu0 %v619, 4
  %v793 = vpop.permute.xlu0 %792
  %794 = vrot.lane.b32.xlu0 %v631, 4
  %v795 = vpop.permute.xlu0 %794
  %796 = vrot.lane.b32.xlu0 %v643, 4
  %v797 = vpop.permute.xlu0 %796
  %798 = vrot.lane.b32.xlu0 %v655, 4
  %v799 = vpop.permute.xlu0 %798
  %800 = vrot.lane.b32.xlu0 %v667, 4
  %v801 = vpop.permute.xlu0 %800
  %802 = vrot.lane.b32.xlu0 %v679, 4
  %v803 = vpop.permute.xlu0 %802
  %804 = vrot.lane.b32.xlu0 %v691, 4
  %v805 = vpop.permute.xlu0 %804
  %806 = vrot.lane.b32.xlu0 %v703, 4
  %v807 = vpop.permute.xlu0 %806
  %808 = vrot.lane.b32.xlu0 %v715, 4
  %v809 = vpop.permute.xlu0 %808
  %810 = vrot.lane.b32.xlu0 %v727, 4
  %v811 = vpop.permute.xlu0 %810
  %812 = vrot.lane.b32.xlu0 %v739, 4
  %v813 = vpop.permute.xlu0 %812
  %814 = vrot.lane.b32.xlu0 %v751, 4
  %v815 = vpop.permute.xlu0 %814
  %vm816 = vcmask 1046528
  %v817 = vrot.slane %v239, 1
  %v818 = vrot.slane %v335, 1
  %v819 = vsel %vm816, %v817, %v818
  %v820 = vrot.slane %v240, 1
  %v821 = vrot.slane %v336, 1
  %v822 = vsel %vm816, %v820, %v821
  %v823 = vrot.slane %v241, 1
  %v824 = vrot.slane %v337, 1
  %v825 = vsel %vm816, %v823, %v824
  %v826 = vrot.slane %v242, 1
  %v827 = vrot.slane %v338, 1
  %v828 = vsel %vm816, %v826, %v827
  %v829 = vrot.slane %v243, 1
  %v830 = vrot.slane %v339, 1
  %v831 = vsel %vm816, %v829, %v830
  %v832 = vrot.slane %v244, 1
  %v833 = vrot.slane %v340, 1
  %v834 = vsel %vm816, %v832, %v833
  %v835 = vrot.slane %v245, 1
  %v836 = vrot.slane %v341, 1
  %v837 = vsel %vm816, %v835, %v836
  %v838 = vrot.slane %v246, 1
  %v839 = vrot.slane %v342, 1
  %v840 = vsel %vm816, %v838, %v839
  %v841 = vrot.slane %v247, 1
  %v842 = vrot.slane %v343, 1
  %v843 = vsel %vm816, %v841, %v842
  %v844 = vrot.slane %v248, 1
  %v845 = vrot.slane %v344, 1
  %v846 = vsel %vm816, %v844, %v845
  %v847 = vrot.slane %v249, 1
  %v848 = vrot.slane %v345, 1
  %v849 = vsel %vm816, %v847, %v848
  %v850 = vrot.slane %v250, 1
  %v851 = vrot.slane %v346, 1
  %v852 = vsel %vm816, %v850, %v851
  %v853 = vrot.slane %v251, 1
  %v854 = vrot.slane %v347, 1
  %v855 = vsel %vm816, %v853, %v854
  %v856 = vrot.slane %v252, 1
  %v857 = vrot.slane %v348, 1
  %v858 = vsel %vm816, %v856, %v857
  %v859 = vrot.slane %v253, 1
  %v860 = vrot.slane %v349, 1
  %v861 = vsel %vm816, %v859, %v860
  %v862 = vrot.slane %v254, 1
  %v863 = vrot.slane %v350, 1
  %v864 = vsel %vm816, %v862, %v863
  %v865 = vrot.slane %v255, 1
  %v866 = vrot.slane %v351, 1
  %v867 = vsel %vm816, %v865, %v866
  %v868 = vrot.slane %v256, 1
  %v869 = vrot.slane %v352, 1
  %v870 = vsel %vm816, %v868, %v869
  %v871 = vrot.slane %v257, 1
  %v872 = vrot.slane %v353, 1
  %v873 = vsel %vm816, %v871, %v872
  %v874 = vrot.slane %v258, 1
  %v875 = vrot.slane %v354, 1
  %v876 = vsel %vm816, %v874, %v875
  %v877 = vrot.slane %v259, 1
  %v878 = vrot.slane %v355, 1
  %v879 = vsel %vm816, %v877, %v878
  %v880 = vrot.slane %v260, 1
  %v881 = vrot.slane %v356, 1
  %v882 = vsel %vm816, %v880, %v881
  %v883 = vrot.slane %v261, 1
  %v884 = vrot.slane %v357, 1
  %v885 = vsel %vm816, %v883, %v884
  %v886 = vrot.slane %v262, 1
  %v887 = vrot.slane %v358, 1
  %v888 = vsel %vm816, %v886, %v887
  %v889 = vrot.slane %v263, 1
  %v890 = vrot.slane %v359, 1
  %v891 = vsel %vm816, %v889, %v890
  %v892 = vrot.slane %v264, 1
  %v893 = vrot.slane %v360, 1
  %v894 = vsel %vm816, %v892, %v893
  %v895 = vrot.slane %v265, 1
  %v896 = vrot.slane %v361, 1
  %v897 = vsel %vm816, %v895, %v896
  %v898 = vrot.slane %v266, 1
  %v899 = vrot.slane %v362, 1
  %v900 = vsel %vm816, %v898, %v899
  %v901 = vrot.slane %v267, 1
  %v902 = vrot.slane %v363, 1
  %v903 = vsel %vm816, %v901, %v902
  %v904 = vrot.slane %v268, 1
  %v905 = vrot.slane %v364, 1
  %v906 = vsel %vm816, %v904, %v905
  %v907 = vrot.slane %v269, 1
  %v908 = vrot.slane %v365, 1
  %v909 = vsel %vm816, %v907, %v908
  %v910 = vrot.slane %v270, 1
  %v911 = vrot.slane %v366, 1
  %v912 = vsel %vm816, %v910, %v911
  %913 = vrot.lane.b32.xlu0 %v819, 8
  %v914 = vpop.permute.xlu0 %913
  %915 = vrot.lane.b32.xlu0 %v822, 8
  %v916 = vpop.permute.xlu0 %915
  %917 = vrot.lane.b32.xlu0 %v825, 8
  %v918 = vpop.permute.xlu0 %917
  %919 = vrot.lane.b32.xlu0 %v828, 8
  %v920 = vpop.permute.xlu0 %919
  %921 = vrot.lane.b32.xlu0 %v831, 8
  %v922 = vpop.permute.xlu0 %921
  %923 = vrot.lane.b32.xlu0 %v834, 8
  %v924 = vpop.permute.xlu0 %923
  %925 = vrot.lane.b32.xlu0 %v837, 8
  %v926 = vpop.permute.xlu0 %925
  %927 = vrot.lane.b32.xlu0 %v840, 8
  %v928 = vpop.permute.xlu0 %927
  %929 = vrot.lane.b32.xlu0 %v843, 8
  %v930 = vpop.permute.xlu0 %929
  %931 = vrot.lane.b32.xlu0 %v846, 8
  %v932 = vpop.permute.xlu0 %931
  %933 = vrot.lane.b32.xlu0 %v849, 8
  %v934 = vpop.permute.xlu0 %933
  %935 = vrot.lane.b32.xlu0 %v852, 8
  %v936 = vpop.permute.xlu0 %935
  %937 = vrot.lane.b32.xlu0 %v855, 8
  %v938 = vpop.permute.xlu0 %937
  %939 = vrot.lane.b32.xlu0 %v858, 8
  %v940 = vpop.permute.xlu0 %939
  %941 = vrot.lane.b32.xlu0 %v861, 8
  %v942 = vpop.permute.xlu0 %941
  %943 = vrot.lane.b32.xlu0 %v864, 8
  %v944 = vpop.permute.xlu0 %943
  %945 = vrot.lane.b32.xlu0 %v867, 8
  %v946 = vpop.permute.xlu0 %945
  %947 = vrot.lane.b32.xlu0 %v870, 8
  %v948 = vpop.permute.xlu0 %947
  %949 = vrot.lane.b32.xlu0 %v873, 8
  %v950 = vpop.permute.xlu0 %949
  %951 = vrot.lane.b32.xlu0 %v876, 8
  %v952 = vpop.permute.xlu0 %951
  %953 = vrot.lane.b32.xlu0 %v879, 8
  %v954 = vpop.permute.xlu0 %953
  %955 = vrot.lane.b32.xlu0 %v882, 8
  %v956 = vpop.permute.xlu0 %955
  %957 = vrot.lane.b32.xlu0 %v885, 8
  %v958 = vpop.permute.xlu0 %957
  %959 = vrot.lane.b32.xlu0 %v888, 8
  %v960 = vpop.permute.xlu0 %959
  %961 = vrot.lane.b32.xlu0 %v891, 8
  %v962 = vpop.permute.xlu0 %961
  %963 = vrot.lane.b32.xlu0 %v894, 8
  %v964 = vpop.permute.xlu0 %963
  %965 = vrot.lane.b32.xlu0 %v897, 8
  %v966 = vpop.permute.xlu0 %965
  %967 = vrot.lane.b32.xlu0 %v900, 8
  %v968 = vpop.permute.xlu0 %967
  %969 = vrot.lane.b32.xlu0 %v903, 8
  %v970 = vpop.permute.xlu0 %969
  %971 = vrot.lane.b32.xlu0 %v906, 8
  %v972 = vpop.permute.xlu0 %971
  %973 = vrot.lane.b32.xlu0 %v909, 8
  %v974 = vpop.permute.xlu0 %973
  %975 = vrot.lane.b32.xlu0 %v912, 8
  %v976 = vpop.permute.xlu0 %975
  %vm977 = vcmask 31744
  %v979 = vsel %vm977, %v239, %v753
  %v981 = vsel %vm977, %v240, %v755
  %v983 = vsel %vm977, %v241, %v757
  %v985 = vsel %vm977, %v242, %v759
  %v987 = vsel %vm977, %v243, %v761
  %v989 = vsel %vm977, %v244, %v763
  %v991 = vsel %vm977, %v245, %v765
  %v993 = vsel %vm977, %v246, %v767
  %v995 = vsel %vm977, %v247, %v769
  %v997 = vsel %vm977, %v248, %v771
  %v999 = vsel %vm977, %v249, %v773
  %v1001 = vsel %vm977, %v250, %v775
  %v1003 = vsel %vm977, %v251, %v777
  %v1005 = vsel %vm977, %v252, %v779
  %v1007 = vsel %vm977, %v253, %v781
  %v1009 = vsel %vm977, %v254, %v783
  %v1011 = vsel %vm977, %v255, %v785
  %v1013 = vsel %vm977, %v256, %v787
  %v1015 = vsel %vm977, %v257, %v789
  %v1017 = vsel %vm977, %v258, %v791
  %v1019 = vsel %vm977, %v259, %v793
  %v1021 = vsel %vm977, %v260, %v795
  %v1023 = vsel %vm977, %v261, %v797
  %v1025 = vsel %vm977, %v262, %v799
  %v1027 = vsel %vm977, %v263, %v801
  %v1029 = vsel %vm977, %v264, %v803
  %v1031 = vsel %vm977, %v265, %v805
  %v1033 = vsel %vm977, %v266, %v807
  %v1035 = vsel %vm977, %v267, %v809
  %v1037 = vsel %vm977, %v268, %v811
  %v1039 = vsel %vm977, %v269, %v813
  %v1041 = vsel %vm977, %v270, %v815
  %vm1042 = vcmask 64512
  %v1044 = vsel %vm1042, %v979, %v914
  %v1046 = vsel %vm1042, %v981, %v916
  %v1048 = vsel %vm1042, %v983, %v918
  %v1050 = vsel %vm1042, %v985, %v920
  %v1052 = vsel %vm1042, %v987, %v922
  %v1054 = vsel %vm1042, %v989, %v924
  %v1056 = vsel %vm1042, %v991, %v926
  %v1058 = vsel %vm1042, %v993, %v928
  %v1060 = vsel %vm1042, %v995, %v930
  %v1062 = vsel %vm1042, %v997, %v932
  %v1064 = vsel %vm1042, %v999, %v934
  %v1066 = vsel %vm1042, %v1001, %v936
  %v1068 = vsel %vm1042, %v1003, %v938
  %v1070 = vsel %vm1042, %v1005, %v940
  %v1072 = vsel %vm1042, %v1007, %v942
  %v1074 = vsel %vm1042, %v1009, %v944
  %v1076 = vsel %vm1042, %v1011, %v946
  %v1078 = vsel %vm1042, %v1013, %v948
  %v1080 = vsel %vm1042, %v1015, %v950
  %v1082 = vsel %vm1042, %v1017, %v952
  %v1084 = vsel %vm1042, %v1019, %v954
  %v1086 = vsel %vm1042, %v1021, %v956
  %v1088 = vsel %vm1042, %v1023, %v958
  %v1090 = vsel %vm1042, %v1025, %v960
  %v1092 = vsel %vm1042, %v1027, %v962
  %v1094 = vsel %vm1042, %v1029, %v964
  %v1096 = vsel %vm1042, %v1031, %v966
  %v1098 = vsel %vm1042, %v1033, %v968
  %v1100 = vsel %vm1042, %v1035, %v970
  %v1102 = vsel %vm1042, %v1037, %v972
  %v1104 = vsel %vm1042, %v1039, %v974
  %v1106 = vsel %vm1042, %v1041, %v976
  %v1107 = vld [vmem:[%s1] sm:$0xf]
  %v1108 = vld [vmem:[%s1 + $0x4] sm:$0x3]
  %s1109 = scalar_lea.vmem %s0, 12
  %v1110 = vld [vmem:[%s1109] sm:$0xf]
  %v1111 = vld [vmem:[%s1109 + $0x4] sm:$0xf]
  %v1112 = vld [vmem:[%s1109 + $0x8] sm:$0x1]
  %v1113 = vld [vmem:[%s1109 + $0xc] sm:$0xf]
  %v1114 = vld [vmem:[%s1109 + $0x10] sm:$0xf]
  %v1115 = vld [vmem:[%s1109 + $0x14] sm:$0x1]
  %v1116 = vld [vmem:[%s1109 + $0x18] sm:$0xf]
  %v1117 = vld [vmem:[%s1109 + $0x1c] sm:$0xf]
  %v1118 = vld [vmem:[%s1109 + $0x20] sm:$0x1]
  %v1119 = vld [vmem:[%s1109 + $0x24] sm:$0xf]
  %v1120 = vld [vmem:[%s1109 + $0x28] sm:$0xf]
  %v1121 = vld [vmem:[%s1109 + $0x2c] sm:$0x1]
  %v1122 = vld [vmem:[%s1109 + $0x30] sm:$0xf]
  %v1123 = vld [vmem:[%s1109 + $0x34] sm:$0xf]
  %v1124 = vld [vmem:[%s1109 + $0x38] sm:$0x1]
  %v1125 = vld [vmem:[%s1109 + $0x3c] sm:$0xf]
  %v1126 = vld [vmem:[%s1109 + $0x40] sm:$0xf]
  %v1127 = vld [vmem:[%s1109 + $0x44] sm:$0x1]
  %v1128 = vld [vmem:[%s1109 + $0x48] sm:$0xf]
  %v1129 = vld [vmem:[%s1109 + $0x4c] sm:$0xf]
  %v1130 = vld [vmem:[%s1109 + $0x50] sm:$0x1]
  %v1131 = vld [vmem:[%s1109 + $0x54] sm:$0xf]
  %v1132 = vld [vmem:[%s1109 + $0x58] sm:$0xf]
  %v1133 = vld [vmem:[%s1109 + $0x5c] sm:$0x1]
  %v1134 = vld [vmem:[%s1109 + $0x60] sm:$0xf]
  %v1135 = vld [vmem:[%s1109 + $0x64] sm:$0xf]
  %v1136 = vld [vmem:[%s1109 + $0x68] sm:$0x1]
  %v1137 = vld [vmem:[%s1109 + $0x6c] sm:$0xf]
  %v1138 = vld [vmem:[%s1109 + $0x70] sm:$0xf]
  %v1139 = vld [vmem:[%s1109 + $0x74] sm:$0x1]
  %v1140 = vld [vmem:[%s1109 + $0x78] sm:$0xf]
  %v1141 = vld [vmem:[%s1109 + $0x7c] sm:$0xf]
  %v1142 = vld [vmem:[%s1109 + $0x80] sm:$0x1]
  %v1143 = vld [vmem:[%s1109 + $0x84] sm:$0xf]
  %v1144 = vld [vmem:[%s1109 + $0x88] sm:$0xf]
  %v1145 = vld [vmem:[%s1109 + $0x8c] sm:$0x1]
  %v1146 = vld [vmem:[%s1109 + $0x90] sm:$0xf]
  %v1147 = vld [vmem:[%s1109 + $0x94] sm:$0xf]
  %v1148 = vld [vmem:[%s1109 + $0x98] sm:$0x1]
  %v1149 = vld [vmem:[%s1109 + $0x9c] sm:$0xf]
  %v1150 = vld [vmem:[%s1109 + $0xa0] sm:$0xf]
  %v1151 = vld [vmem:[%s1109 + $0xa4] sm:$0x1]
  %v1152 = vld [vmem:[%s1109 + $0xa8] sm:$0xf]
  %v1153 = vld [vmem:[%s1109 + $0xac] sm:$0xf]
  %v1154 = vld [vmem:[%s1109 + $0xb0] sm:$0x1]
  %v1155 = vld [vmem:[%s1109 + $0xb4] sm:$0xf]
  %v1156 = vld [vmem:[%s1109 + $0xb8] sm:$0xf]
  %v1157 = vld [vmem:[%s1109 + $0xbc] sm:$0x1]
  %v1158 = vld [vmem:[%s1109 + $0xd8] sm:$0xf]
  %v1159 = vld [vmem:[%s1109 + $0xdc] sm:$0xf]
  %v1160 = vld [vmem:[%s1109 + $0xe0] sm:$0x1]
  %v1161 = vld [vmem:[%s1109 + $0xe4] sm:$0xf]
  %v1162 = vld [vmem:[%s1109 + $0xe8] sm:$0xf]
  %v1163 = vld [vmem:[%s1109 + $0xec] sm:$0x1]
  %v1164 = vld [vmem:[%s1109 + $0xf0] sm:$0xf]
  %v1165 = vld [vmem:[%s1109 + $0xf4] sm:$0xf]
  %v1166 = vld [vmem:[%s1109 + $0xf8] sm:$0x1]
  %v1167 = vld [vmem:[%s1109 + $0xfc] sm:$0xf]
  %v1168 = vld [vmem:[%s1109 + $0x100] sm:$0xf]
  %v1169 = vld [vmem:[%s1109 + $0x104] sm:$0x1]
  %v1170 = vld [vmem:[%s1109 + $0x108] sm:$0xf]
  %v1171 = vld [vmem:[%s1109 + $0x10c] sm:$0xf]
  %v1172 = vld [vmem:[%s1109 + $0x110] sm:$0x1]
  %v1173 = vld [vmem:[%s1109 + $0x114] sm:$0xf]
  %v1174 = vld [vmem:[%s1109 + $0x118] sm:$0xf]
  %v1175 = vld [vmem:[%s1109 + $0x11c] sm:$0x1]
  %v1176 = vld [vmem:[%s1109 + $0x120] sm:$0xf]
  %v1177 = vld [vmem:[%s1109 + $0x124] sm:$0xf]
  %v1178 = vld [vmem:[%s1109 + $0x128] sm:$0x1]
  %v1179 = vld [vmem:[%s1109 + $0x12c] sm:$0xf]
  %v1180 = vld [vmem:[%s1109 + $0x130] sm:$0xf]
  %v1181 = vld [vmem:[%s1109 + $0x134] sm:$0x1]
  %v1182 = vld [vmem:[%s1109 + $0x138] sm:$0xf]
  %v1183 = vld [vmem:[%s1109 + $0x13c] sm:$0xf]
  %v1184 = vld [vmem:[%s1109 + $0x140] sm:$0x1]
  %v1185 = vld [vmem:[%s1109 + $0x144] sm:$0xf]
  %v1186 = vld [vmem:[%s1109 + $0x148] sm:$0xf]
  %v1187 = vld [vmem:[%s1109 + $0x14c] sm:$0x1]
  %v1188 = vld [vmem:[%s1109 + $0x150] sm:$0xf]
  %v1189 = vld [vmem:[%s1109 + $0x154] sm:$0xf]
  %v1190 = vld [vmem:[%s1109 + $0x158] sm:$0x1]
  %v1191 = vld [vmem:[%s1109 + $0x15c] sm:$0xf]
  %v1192 = vld [vmem:[%s1109 + $0x160] sm:$0xf]
  %v1193 = vld [vmem:[%s1109 + $0x164] sm:$0x1]
  %v1194 = vld [vmem:[%s1109 + $0x168] sm:$0xf]
  %v1195 = vld [vmem:[%s1109 + $0x16c] sm:$0xf]
  %v1196 = vld [vmem:[%s1109 + $0x170] sm:$0x1]
  %v1197 = vld [vmem:[%s1109 + $0x174] sm:$0xf]
  %v1198 = vld [vmem:[%s1109 + $0x178] sm:$0xf]
  %v1199 = vld [vmem:[%s1109 + $0x17c] sm:$0x1]
  %v1200 = vld [vmem:[%s1109 + $0x180] sm:$0xf]
  %v1201 = vld [vmem:[%s1109 + $0x184] sm:$0xf]
  %v1202 = vld [vmem:[%s1109 + $0x188] sm:$0x1]
  %v1203 = vld [vmem:[%s1109 + $0x18c] sm:$0xf]
  %v1204 = vld [vmem:[%s1109 + $0x190] sm:$0xf]
  %v1205 = vld [vmem:[%s1109 + $0x194] sm:$0x1]
  %v1270 = vunpack.c.l.b16 %v1110
  %v1271 = vunpack.c.l.b16 %v1111
  %v1272 = vunpack.c.l.b16 %v1113
  %v1273 = vunpack.c.l.b16 %v1114
  %v1274 = vunpack.c.l.b16 %v1116
  %v1275 = vunpack.c.l.b16 %v1117
  %v1276 = vunpack.c.l.b16 %v1119
  %v1277 = vunpack.c.l.b16 %v1120
  %v1278 = vunpack.c.l.b16 %v1122
  %v1279 = vunpack.c.l.b16 %v1123
  %v1280 = vunpack.c.l.b16 %v1125
  %v1281 = vunpack.c.l.b16 %v1126
  %v1282 = vunpack.c.l.b16 %v1128
  %v1283 = vunpack.c.l.b16 %v1129
  %v1284 = vunpack.c.l.b16 %v1131
  %v1285 = vunpack.c.l.b16 %v1132
  %v1286 = vunpack.c.l.b16 %v1134
  %v1287 = vunpack.c.l.b16 %v1135
  %v1288 = vunpack.c.l.b16 %v1137
  %v1289 = vunpack.c.l.b16 %v1138
  %v1290 = vunpack.c.l.b16 %v1140
  %v1291 = vunpack.c.l.b16 %v1141
  %v1292 = vunpack.c.l.b16 %v1143
  %v1293 = vunpack.c.l.b16 %v1144
  %v1294 = vunpack.c.l.b16 %v1146
  %v1295 = vunpack.c.l.b16 %v1147
  %v1296 = vunpack.c.l.b16 %v1149
  %v1297 = vunpack.c.l.b16 %v1150
  %v1298 = vunpack.c.l.b16 %v1152
  %v1299 = vunpack.c.l.b16 %v1153
  %v1300 = vunpack.c.l.b16 %v1155
  %v1301 = vunpack.c.l.b16 %v1156
  %v1302 = vunpack.c.l.b16 %v1158
  %v1303 = vunpack.c.l.b16 %v1159
  %v1304 = vunpack.c.l.b16 %v1161
  %v1305 = vunpack.c.l.b16 %v1162
  %v1306 = vunpack.c.l.b16 %v1164
  %v1307 = vunpack.c.l.b16 %v1165
  %v1308 = vunpack.c.l.b16 %v1167
  %v1309 = vunpack.c.l.b16 %v1168
  %v1310 = vunpack.c.l.b16 %v1170
  %v1311 = vunpack.c.l.b16 %v1171
  %v1312 = vunpack.c.l.b16 %v1173
  %v1313 = vunpack.c.l.b16 %v1174
  %v1314 = vunpack.c.l.b16 %v1176
  %v1315 = vunpack.c.l.b16 %v1177
  %v1316 = vunpack.c.l.b16 %v1179
  %v1317 = vunpack.c.l.b16 %v1180
  %v1318 = vunpack.c.l.b16 %v1182
  %v1319 = vunpack.c.l.b16 %v1183
  %v1320 = vunpack.c.l.b16 %v1185
  %v1321 = vunpack.c.l.b16 %v1186
  %v1322 = vunpack.c.l.b16 %v1188
  %v1323 = vunpack.c.l.b16 %v1189
  %v1324 = vunpack.c.l.b16 %v1191
  %v1325 = vunpack.c.l.b16 %v1192
  %v1326 = vunpack.c.l.b16 %v1194
  %v1327 = vunpack.c.l.b16 %v1195
  %v1328 = vunpack.c.l.b16 %v1197
  %v1329 = vunpack.c.l.b16 %v1198
  %v1330 = vunpack.c.l.b16 %v1200
  %v1331 = vunpack.c.l.b16 %v1201
  %v1332 = vunpack.c.l.b16 %v1203
  %v1333 = vunpack.c.l.b16 %v1204
  %v1334 = vpack.c.b16 %v1271, %v1270
  %v1335 = vpack.c.b16 %v1273, %v1272
  %v1336 = vpack.c.b16 %v1275, %v1274
  %v1337 = vpack.c.b16 %v1277, %v1276
  %v1338 = vpack.c.b16 %v1279, %v1278
  %v1339 = vpack.c.b16 %v1281, %v1280
  %v1340 = vpack.c.b16 %v1283, %v1282
  %v1341 = vpack.c.b16 %v1285, %v1284
  %v1342 = vpack.c.b16 %v1287, %v1286
  %v1343 = vpack.c.b16 %v1289, %v1288
  %v1344 = vpack.c.b16 %v1291, %v1290
  %v1345 = vpack.c.b16 %v1293, %v1292
  %v1346 = vpack.c.b16 %v1295, %v1294
  %v1347 = vpack.c.b16 %v1297, %v1296
  %v1348 = vpack.c.b16 %v1299, %v1298
  %v1349 = vpack.c.b16 %v1301, %v1300
  %v1350 = vpack.c.b16 %v1303, %v1302
  %v1351 = vpack.c.b16 %v1305, %v1304
  %v1352 = vpack.c.b16 %v1307, %v1306
  %v1353 = vpack.c.b16 %v1309, %v1308
  %v1354 = vpack.c.b16 %v1311, %v1310
  %v1355 = vpack.c.b16 %v1313, %v1312
  %v1356 = vpack.c.b16 %v1315, %v1314
  %v1357 = vpack.c.b16 %v1317, %v1316
  %v1358 = vpack.c.b16 %v1319, %v1318
  %v1359 = vpack.c.b16 %v1321, %v1320
  %v1360 = vpack.c.b16 %v1323, %v1322
  %v1361 = vpack.c.b16 %v1325, %v1324
  %v1362 = vpack.c.b16 %v1327, %v1326
  %v1363 = vpack.c.b16 %v1329, %v1328
  %v1364 = vpack.c.b16 %v1331, %v1330
  %v1365 = vpack.c.b16 %v1333, %v1332
  %v1398 = vunpack.c.l.b16 %v1112
  %v1399 = vunpack.c.l.b16 %v1115
  %v1400 = vunpack.c.l.b16 %v1118
  %v1401 = vunpack.c.l.b16 %v1121
  %v1402 = vunpack.c.l.b16 %v1124
  %v1403 = vunpack.c.l.b16 %v1127
  %v1404 = vunpack.c.l.b16 %v1130
  %v1405 = vunpack.c.l.b16 %v1133
  %v1406 = vunpack.c.l.b16 %v1136
  %v1407 = vunpack.c.l.b16 %v1139
  %v1408 = vunpack.c.l.b16 %v1142
  %v1409 = vunpack.c.l.b16 %v1145
  %v1410 = vunpack.c.l.b16 %v1148
  %v1411 = vunpack.c.l.b16 %v1151
  %v1412 = vunpack.c.l.b16 %v1154
  %v1413 = vunpack.c.l.b16 %v1157
  %v1414 = vunpack.c.l.b16 %v1160
  %v1415 = vunpack.c.l.b16 %v1163
  %v1416 = vunpack.c.l.b16 %v1166
  %v1417 = vunpack.c.l.b16 %v1169
  %v1418 = vunpack.c.l.b16 %v1172
  %v1419 = vunpack.c.l.b16 %v1175
  %v1420 = vunpack.c.l.b16 %v1178
  %v1421 = vunpack.c.l.b16 %v1181
  %v1422 = vunpack.c.l.b16 %v1184
  %v1423 = vunpack.c.l.b16 %v1187
  %v1424 = vunpack.c.l.b16 %v1190
  %v1425 = vunpack.c.l.b16 %v1193
  %v1426 = vunpack.c.l.b16 %v1196
  %v1427 = vunpack.c.l.b16 %v1199
  %v1428 = vunpack.c.l.b16 %v1202
  %v1429 = vunpack.c.l.b16 %v1205
  %v1430 = vpack.c.b16 %v1398, %v1398
  %v1431 = vpack.c.b16 %v1399, %v1399
  %v1432 = vpack.c.b16 %v1400, %v1400
  %v1433 = vpack.c.b16 %v1401, %v1401
  %v1434 = vpack.c.b16 %v1402, %v1402
  %v1435 = vpack.c.b16 %v1403, %v1403
  %v1436 = vpack.c.b16 %v1404, %v1404
  %v1437 = vpack.c.b16 %v1405, %v1405
  %v1438 = vpack.c.b16 %v1406, %v1406
  %v1439 = vpack.c.b16 %v1407, %v1407
  %v1440 = vpack.c.b16 %v1408, %v1408
  %v1441 = vpack.c.b16 %v1409, %v1409
  %v1442 = vpack.c.b16 %v1410, %v1410
  %v1443 = vpack.c.b16 %v1411, %v1411
  %v1444 = vpack.c.b16 %v1412, %v1412
  %v1445 = vpack.c.b16 %v1413, %v1413
  %v1446 = vpack.c.b16 %v1414, %v1414
  %v1447 = vpack.c.b16 %v1415, %v1415
  %v1448 = vpack.c.b16 %v1416, %v1416
  %v1449 = vpack.c.b16 %v1417, %v1417
  %v1450 = vpack.c.b16 %v1418, %v1418
  %v1451 = vpack.c.b16 %v1419, %v1419
  %v1452 = vpack.c.b16 %v1420, %v1420
  %v1453 = vpack.c.b16 %v1421, %v1421
  %v1454 = vpack.c.b16 %v1422, %v1422
  %v1455 = vpack.c.b16 %v1423, %v1423
  %v1456 = vpack.c.b16 %v1424, %v1424
  %v1457 = vpack.c.b16 %v1425, %v1425
  %v1458 = vpack.c.b16 %v1426, %v1426
  %v1459 = vpack.c.b16 %v1427, %v1427
  %v1460 = vpack.c.b16 %v1428, %v1428
  %v1461 = vpack.c.b16 %v1429, %v1429
  %v1463 = vshrl.u32 %v1334, 16
  %v1465 = vshll.u32 %v1334, 16
  %v1467 = vrot.slane %v1465, 1
  %v1468 = vor.u32 %v1463, %v1467
  %v1470 = vshll.u32 %v1430, 16
  %v1472 = vrot.slane %v1470, 1
  %v1473 = vsel %vm367, %v1468, %v1472
  %v1475 = vshrl.u32 %v1335, 16
  %v1477 = vshll.u32 %v1335, 16
  %v1479 = vrot.slane %v1477, 1
  %v1480 = vor.u32 %v1475, %v1479
  %v1482 = vshll.u32 %v1431, 16
  %v1484 = vrot.slane %v1482, 1
  %v1485 = vsel %vm367, %v1480, %v1484
  %v1487 = vshrl.u32 %v1336, 16
  %v1489 = vshll.u32 %v1336, 16
  %v1491 = vrot.slane %v1489, 1
  %v1492 = vor.u32 %v1487, %v1491
  %v1494 = vshll.u32 %v1432, 16
  %v1496 = vrot.slane %v1494, 1
  %v1497 = vsel %vm367, %v1492, %v1496
  %v1499 = vshrl.u32 %v1337, 16
  %v1501 = vshll.u32 %v1337, 16
  %v1503 = vrot.slane %v1501, 1
  %v1504 = vor.u32 %v1499, %v1503
  %v1506 = vshll.u32 %v1433, 16
  %v1508 = vrot.slane %v1506, 1
  %v1509 = vsel %vm367, %v1504, %v1508
  %v1511 = vshrl.u32 %v1338, 16
  %v1513 = vshll.u32 %v1338, 16
  %v1515 = vrot.slane %v1513, 1
  %v1516 = vor.u32 %v1511, %v1515
  %v1518 = vshll.u32 %v1434, 16
  %v1520 = vrot.slane %v1518, 1
  %v1521 = vsel %vm367, %v1516, %v1520
  %v1523 = vshrl.u32 %v1339, 16
  %v1525 = vshll.u32 %v1339, 16
  %v1527 = vrot.slane %v1525, 1
  %v1528 = vor.u32 %v1523, %v1527
  %v1530 = vshll.u32 %v1435, 16
  %v1532 = vrot.slane %v1530, 1
  %v1533 = vsel %vm367, %v1528, %v1532
  %v1535 = vshrl.u32 %v1340, 16
  %v1537 = vshll.u32 %v1340, 16
  %v1539 = vrot.slane %v1537, 1
  %v1540 = vor.u32 %v1535, %v1539
  %v1542 = vshll.u32 %v1436, 16
  %v1544 = vrot.slane %v1542, 1
  %v1545 = vsel %vm367, %v1540, %v1544
  %v1547 = vshrl.u32 %v1341, 16
  %v1549 = vshll.u32 %v1341, 16
  %v1551 = vrot.slane %v1549, 1
  %v1552 = vor.u32 %v1547, %v1551
  %v1554 = vshll.u32 %v1437, 16
  %v1556 = vrot.slane %v1554, 1
  %v1557 = vsel %vm367, %v1552, %v1556
  %v1559 = vshrl.u32 %v1342, 16
  %v1561 = vshll.u32 %v1342, 16
  %v1563 = vrot.slane %v1561, 1
  %v1564 = vor.u32 %v1559, %v1563
  %v1566 = vshll.u32 %v1438, 16
  %v1568 = vrot.slane %v1566, 1
  %v1569 = vsel %vm367, %v1564, %v1568
  %v1571 = vshrl.u32 %v1343, 16
  %v1573 = vshll.u32 %v1343, 16
  %v1575 = vrot.slane %v1573, 1
  %v1576 = vor.u32 %v1571, %v1575
  %v1578 = vshll.u32 %v1439, 16
  %v1580 = vrot.slane %v1578, 1
  %v1581 = vsel %vm367, %v1576, %v1580
  %v1583 = vshrl.u32 %v1344, 16
  %v1585 = vshll.u32 %v1344, 16
  %v1587 = vrot.slane %v1585, 1
  %v1588 = vor.u32 %v1583, %v1587
  %v1590 = vshll.u32 %v1440, 16
  %v1592 = vrot.slane %v1590, 1
  %v1593 = vsel %vm367, %v1588, %v1592
  %v1595 = vshrl.u32 %v1345, 16
  %v1597 = vshll.u32 %v1345, 16
  %v1599 = vrot.slane %v1597, 1
  %v1600 = vor.u32 %v1595, %v1599
  %v1602 = vshll.u32 %v1441, 16
  %v1604 = vrot.slane %v1602, 1
  %v1605 = vsel %vm367, %v1600, %v1604
  %v1607 = vshrl.u32 %v1346, 16
  %v1609 = vshll.u32 %v1346, 16
  %v1611 = vrot.slane %v1609, 1
  %v1612 = vor.u32 %v1607, %v1611
  %v1614 = vshll.u32 %v1442, 16
  %v1616 = vrot.slane %v1614, 1
  %v1617 = vsel %vm367, %v1612, %v1616
  %v1619 = vshrl.u32 %v1347, 16
  %v1621 = vshll.u32 %v1347, 16
  %v1623 = vrot.slane %v1621, 1
  %v1624 = vor.u32 %v1619, %v1623
  %v1626 = vshll.u32 %v1443, 16
  %v1628 = vrot.slane %v1626, 1
  %v1629 = vsel %vm367, %v1624, %v1628
  %v1631 = vshrl.u32 %v1348, 16
  %v1633 = vshll.u32 %v1348, 16
  %v1635 = vrot.slane %v1633, 1
  %v1636 = vor.u32 %v1631, %v1635
  %v1638 = vshll.u32 %v1444, 16
  %v1640 = vrot.slane %v1638, 1
  %v1641 = vsel %vm367, %v1636, %v1640
  %v1643 = vshrl.u32 %v1349, 16
  %v1645 = vshll.u32 %v1349, 16
  %v1647 = vrot.slane %v1645, 1
  %v1648 = vor.u32 %v1643, %v1647
  %v1650 = vshll.u32 %v1445, 16
  %v1652 = vrot.slane %v1650, 1
  %v1653 = vsel %vm367, %v1648, %v1652
  %v1655 = vshrl.u32 %v1350, 16
  %v1657 = vshll.u32 %v1350, 16
  %v1659 = vrot.slane %v1657, 1
  %v1660 = vor.u32 %v1655, %v1659
  %v1662 = vshll.u32 %v1446, 16
  %v1664 = vrot.slane %v1662, 1
  %v1665 = vsel %vm367, %v1660, %v1664
  %v1667 = vshrl.u32 %v1351, 16
  %v1669 = vshll.u32 %v1351, 16
  %v1671 = vrot.slane %v1669, 1
  %v1672 = vor.u32 %v1667, %v1671
  %v1674 = vshll.u32 %v1447, 16
  %v1676 = vrot.slane %v1674, 1
  %v1677 = vsel %vm367, %v1672, %v1676
  %v1679 = vshrl.u32 %v1352, 16
  %v1681 = vshll.u32 %v1352, 16
  %v1683 = vrot.slane %v1681, 1
  %v1684 = vor.u32 %v1679, %v1683
  %v1686 = vshll.u32 %v1448, 16
  %v1688 = vrot.slane %v1686, 1
  %v1689 = vsel %vm367, %v1684, %v1688
  %v1691 = vshrl.u32 %v1353, 16
  %v1693 = vshll.u32 %v1353, 16
  %v1695 = vrot.slane %v1693, 1
  %v1696 = vor.u32 %v1691, %v1695
  %v1698 = vshll.u32 %v1449, 16
  %v1700 = vrot.slane %v1698, 1
  %v1701 = vsel %vm367, %v1696, %v1700
  %v1703 = vshrl.u32 %v1354, 16
  %v1705 = vshll.u32 %v1354, 16
  %v1707 = vrot.slane %v1705, 1
  %v1708 = vor.u32 %v1703, %v1707
  %v1710 = vshll.u32 %v1450, 16
  %v1712 = vrot.slane %v1710, 1
  %v1713 = vsel %vm367, %v1708, %v1712
  %v1715 = vshrl.u32 %v1355, 16
  %v1717 = vshll.u32 %v1355, 16
  %v1719 = vrot.slane %v1717, 1
  %v1720 = vor.u32 %v1715, %v1719
  %v1722 = vshll.u32 %v1451, 16
  %v1724 = vrot.slane %v1722, 1
  %v1725 = vsel %vm367, %v1720, %v1724
  %v1727 = vshrl.u32 %v1356, 16
  %v1729 = vshll.u32 %v1356, 16
  %v1731 = vrot.slane %v1729, 1
  %v1732 = vor.u32 %v1727, %v1731
  %v1734 = vshll.u32 %v1452, 16
  %v1736 = vrot.slane %v1734, 1
  %v1737 = vsel %vm367, %v1732, %v1736
  %v1739 = vshrl.u32 %v1357, 16
  %v1741 = vshll.u32 %v1357, 16
  %v1743 = vrot.slane %v1741, 1
  %v1744 = vor.u32 %v1739, %v1743
  %v1746 = vshll.u32 %v1453, 16
  %v1748 = vrot.slane %v1746, 1
  %v1749 = vsel %vm367, %v1744, %v1748
  %v1751 = vshrl.u32 %v1358, 16
  %v1753 = vshll.u32 %v1358, 16
  %v1755 = vrot.slane %v1753, 1
  %v1756 = vor.u32 %v1751, %v1755
  %v1758 = vshll.u32 %v1454, 16
  %v1760 = vrot.slane %v1758, 1
  %v1761 = vsel %vm367, %v1756, %v1760
  %v1763 = vshrl.u32 %v1359, 16
  %v1765 = vshll.u32 %v1359, 16
  %v1767 = vrot.slane %v1765, 1
  %v1768 = vor.u32 %v1763, %v1767
  %v1770 = vshll.u32 %v1455, 16
  %v1772 = vrot.slane %v1770, 1
  %v1773 = vsel %vm367, %v1768, %v1772
  %v1775 = vshrl.u32 %v1360, 16
  %v1777 = vshll.u32 %v1360, 16
  %v1779 = vrot.slane %v1777, 1
  %v1780 = vor.u32 %v1775, %v1779
  %v1782 = vshll.u32 %v1456, 16
  %v1784 = vrot.slane %v1782, 1
  %v1785 = vsel %vm367, %v1780, %v1784
  %v1787 = vshrl.u32 %v1361, 16
  %v1789 = vshll.u32 %v1361, 16
  %v1791 = vrot.slane %v1789, 1
  %v1792 = vor.u32 %v1787, %v1791
  %v1794 = vshll.u32 %v1457, 16
  %v1796 = vrot.slane %v1794, 1
  %v1797 = vsel %vm367, %v1792, %v1796
  %v1799 = vshrl.u32 %v1362, 16
  %v1801 = vshll.u32 %v1362, 16
  %v1803 = vrot.slane %v1801, 1
  %v1804 = vor.u32 %v1799, %v1803
  %v1806 = vshll.u32 %v1458, 16
  %v1808 = vrot.slane %v1806, 1
  %v1809 = vsel %vm367, %v1804, %v1808
  %v1811 = vshrl.u32 %v1363, 16
  %v1813 = vshll.u32 %v1363, 16
  %v1815 = vrot.slane %v1813, 1
  %v1816 = vor.u32 %v1811, %v1815
  %v1818 = vshll.u32 %v1459, 16
  %v1820 = vrot.slane %v1818, 1
  %v1821 = vsel %vm367, %v1816, %v1820
  %v1823 = vshrl.u32 %v1364, 16
  %v1825 = vshll.u32 %v1364, 16
  %v1827 = vrot.slane %v1825, 1
  %v1828 = vor.u32 %v1823, %v1827
  %v1830 = vshll.u32 %v1460, 16
  %v1832 = vrot.slane %v1830, 1
  %v1833 = vsel %vm367, %v1828, %v1832
  %v1835 = vshrl.u32 %v1365, 16
  %v1837 = vshll.u32 %v1365, 16
  %v1839 = vrot.slane %v1837, 1
  %v1840 = vor.u32 %v1835, %v1839
  %v1842 = vshll.u32 %v1461, 16
  %v1844 = vrot.slane %v1842, 1
  %v1845 = vsel %vm367, %v1840, %v1844
  %1846 = vrot.lane.b32.xlu0 %v1473, 4
  %v1847 = vpop.permute.xlu0 %1846
  %1848 = vrot.lane.b32.xlu0 %v1485, 4
  %v1849 = vpop.permute.xlu0 %1848
  %1850 = vrot.lane.b32.xlu0 %v1497, 4
  %v1851 = vpop.permute.xlu0 %1850
  %1852 = vrot.lane.b32.xlu0 %v1509, 4
  %v1853 = vpop.permute.xlu0 %1852
  %1854 = vrot.lane.b32.xlu0 %v1521, 4
  %v1855 = vpop.permute.xlu0 %1854
  %1856 = vrot.lane.b32.xlu0 %v1533, 4
  %v1857 = vpop.permute.xlu0 %1856
  %1858 = vrot.lane.b32.xlu0 %v1545, 4
  %v1859 = vpop.permute.xlu0 %1858
  %1860 = vrot.lane.b32.xlu0 %v1557, 4
  %v1861 = vpop.permute.xlu0 %1860
  %1862 = vrot.lane.b32.xlu0 %v1569, 4
  %v1863 = vpop.permute.xlu0 %1862
  %1864 = vrot.lane.b32.xlu0 %v1581, 4
  %v1865 = vpop.permute.xlu0 %1864
  %1866 = vrot.lane.b32.xlu0 %v1593, 4
  %v1867 = vpop.permute.xlu0 %1866
  %1868 = vrot.lane.b32.xlu0 %v1605, 4
  %v1869 = vpop.permute.xlu0 %1868
  %1870 = vrot.lane.b32.xlu0 %v1617, 4
  %v1871 = vpop.permute.xlu0 %1870
  %1872 = vrot.lane.b32.xlu0 %v1629, 4
  %v1873 = vpop.permute.xlu0 %1872
  %1874 = vrot.lane.b32.xlu0 %v1641, 4
  %v1875 = vpop.permute.xlu0 %1874
  %1876 = vrot.lane.b32.xlu0 %v1653, 4
  %v1877 = vpop.permute.xlu0 %1876
  %1878 = vrot.lane.b32.xlu0 %v1665, 4
  %v1879 = vpop.permute.xlu0 %1878
  %1880 = vrot.lane.b32.xlu0 %v1677, 4
  %v1881 = vpop.permute.xlu0 %1880
  %1882 = vrot.lane.b32.xlu0 %v1689, 4
  %v1883 = vpop.permute.xlu0 %1882
  %1884 = vrot.lane.b32.xlu0 %v1701, 4
  %v1885 = vpop.permute.xlu0 %1884
  %1886 = vrot.lane.b32.xlu0 %v1713, 4
  %v1887 = vpop.permute.xlu0 %1886
  %1888 = vrot.lane.b32.xlu0 %v1725, 4
  %v1889 = vpop.permute.xlu0 %1888
  %1890 = vrot.lane.b32.xlu0 %v1737, 4
  %v1891 = vpop.permute.xlu0 %1890
  %1892 = vrot.lane.b32.xlu0 %v1749, 4
  %v1893 = vpop.permute.xlu0 %1892
  %1894 = vrot.lane.b32.xlu0 %v1761, 4
  %v1895 = vpop.permute.xlu0 %1894
  %1896 = vrot.lane.b32.xlu0 %v1773, 4
  %v1897 = vpop.permute.xlu0 %1896
  %1898 = vrot.lane.b32.xlu0 %v1785, 4
  %v1899 = vpop.permute.xlu0 %1898
  %1900 = vrot.lane.b32.xlu0 %v1797, 4
  %v1901 = vpop.permute.xlu0 %1900
  %1902 = vrot.lane.b32.xlu0 %v1809, 4
  %v1903 = vpop.permute.xlu0 %1902
  %1904 = vrot.lane.b32.xlu0 %v1821, 4
  %v1905 = vpop.permute.xlu0 %1904
  %1906 = vrot.lane.b32.xlu0 %v1833, 4
  %v1907 = vpop.permute.xlu0 %1906
  %1908 = vrot.lane.b32.xlu0 %v1845, 4
  %v1909 = vpop.permute.xlu0 %1908
  %v1910 = vrot.slane %v1334, 1
  %v1911 = vrot.slane %v1430, 1
  %v1912 = vsel %vm816, %v1910, %v1911
  %v1913 = vrot.slane %v1335, 1
  %v1914 = vrot.slane %v1431, 1
  %v1915 = vsel %vm816, %v1913, %v1914
  %v1916 = vrot.slane %v1336, 1
  %v1917 = vrot.slane %v1432, 1
  %v1918 = vsel %vm816, %v1916, %v1917
  %v1919 = vrot.slane %v1337, 1
  %v1920 = vrot.slane %v1433, 1
  %v1921 = vsel %vm816, %v1919, %v1920
  %v1922 = vrot.slane %v1338, 1
  %v1923 = vrot.slane %v1434, 1
  %v1924 = vsel %vm816, %v1922, %v1923
  %v1925 = vrot.slane %v1339, 1
  %v1926 = vrot.slane %v1435, 1
  %v1927 = vsel %vm816, %v1925, %v1926
  %v1928 = vrot.slane %v1340, 1
  %v1929 = vrot.slane %v1436, 1
  %v1930 = vsel %vm816, %v1928, %v1929
  %v1931 = vrot.slane %v1341, 1
  %v1932 = vrot.slane %v1437, 1
  %v1933 = vsel %vm816, %v1931, %v1932
  %v1934 = vrot.slane %v1342, 1
  %v1935 = vrot.slane %v1438, 1
  %v1936 = vsel %vm816, %v1934, %v1935
  %v1937 = vrot.slane %v1343, 1
  %v1938 = vrot.slane %v1439, 1
  %v1939 = vsel %vm816, %v1937, %v1938
  %v1940 = vrot.slane %v1344, 1
  %v1941 = vrot.slane %v1440, 1
  %v1942 = vsel %vm816, %v1940, %v1941
  %v1943 = vrot.slane %v1345, 1
  %v1944 = vrot.slane %v1441, 1
  %v1945 = vsel %vm816, %v1943, %v1944
  %v1946 = vrot.slane %v1346, 1
  %v1947 = vrot.slane %v1442, 1
  %v1948 = vsel %vm816, %v1946, %v1947
  %v1949 = vrot.slane %v1347, 1
  %v1950 = vrot.slane %v1443, 1
  %v1951 = vsel %vm816, %v1949, %v1950
  %v1952 = vrot.slane %v1348, 1
  %v1953 = vrot.slane %v1444, 1
  %v1954 = vsel %vm816, %v1952, %v1953
  %v1955 = vrot.slane %v1349, 1
  %v1956 = vrot.slane %v1445, 1
  %v1957 = vsel %vm816, %v1955, %v1956
  %v1958 = vrot.slane %v1350, 1
  %v1959 = vrot.slane %v1446, 1
  %v1960 = vsel %vm816, %v1958, %v1959
  %v1961 = vrot.slane %v1351, 1
  %v1962 = vrot.slane %v1447, 1
  %v1963 = vsel %vm816, %v1961, %v1962
  %v1964 = vrot.slane %v1352, 1
  %v1965 = vrot.slane %v1448, 1
  %v1966 = vsel %vm816, %v1964, %v1965
  %v1967 = vrot.slane %v1353, 1
  %v1968 = vrot.slane %v1449, 1
  %v1969 = vsel %vm816, %v1967, %v1968
  %v1970 = vrot.slane %v1354, 1
  %v1971 = vrot.slane %v1450, 1
  %v1972 = vsel %vm816, %v1970, %v1971
  %v1973 = vrot.slane %v1355, 1
  %v1974 = vrot.slane %v1451, 1
  %v1975 = vsel %vm816, %v1973, %v1974
  %v1976 = vrot.slane %v1356, 1
  %v1977 = vrot.slane %v1452, 1
  %v1978 = vsel %vm816, %v1976, %v1977
  %v1979 = vrot.slane %v1357, 1
  %v1980 = vrot.slane %v1453, 1
  %v1981 = vsel %vm816, %v1979, %v1980
  %v1982 = vrot.slane %v1358, 1
  %v1983 = vrot.slane %v1454, 1
  %v1984 = vsel %vm816, %v1982, %v1983
  %v1985 = vrot.slane %v1359, 1
  %v1986 = vrot.slane %v1455, 1
  %v1987 = vsel %vm816, %v1985, %v1986
  %v1988 = vrot.slane %v1360, 1
  %v1989 = vrot.slane %v1456, 1
  %v1990 = vsel %vm816, %v1988, %v1989
  %v1991 = vrot.slane %v1361, 1
  %v1992 = vrot.slane %v1457, 1
  %v1993 = vsel %vm816, %v1991, %v1992
  %v1994 = vrot.slane %v1362, 1
  %v1995 = vrot.slane %v1458, 1
  %v1996 = vsel %vm816, %v1994, %v1995
  %v1997 = vrot.slane %v1363, 1
  %v1998 = vrot.slane %v1459, 1
  %v1999 = vsel %vm816, %v1997, %v1998
  %v2000 = vrot.slane %v1364, 1
  %v2001 = vrot.slane %v1460, 1
  %v2002 = vsel %vm816, %v2000, %v2001
  %v2003 = vrot.slane %v1365, 1
  %v2004 = vrot.slane %v1461, 1
  %v2005 = vsel %vm816, %v2003, %v2004
  %2006 = vrot.lane.b32.xlu0 %v1912, 8
  %v2007 = vpop.permute.xlu0 %2006
  %2008 = vrot.lane.b32.xlu0 %v1915, 8
  %v2009 = vpop.permute.xlu0 %2008
  %2010 = vrot.lane.b32.xlu0 %v1918, 8
  %v2011 = vpop.permute.xlu0 %2010
  %2012 = vrot.lane.b32.xlu0 %v1921, 8
  %v2013 = vpop.permute.xlu0 %2012
  %2014 = vrot.lane.b32.xlu0 %v1924, 8
  %v2015 = vpop.permute.xlu0 %2014
  %2016 = vrot.lane.b32.xlu0 %v1927, 8
  %v2017 = vpop.permute.xlu0 %2016
  %2018 = vrot.lane.b32.xlu0 %v1930, 8
  %v2019 = vpop.permute.xlu0 %2018
  %2020 = vrot.lane.b32.xlu0 %v1933, 8
  %v2021 = vpop.permute.xlu0 %2020
  %2022 = vrot.lane.b32.xlu0 %v1936, 8
  %v2023 = vpop.permute.xlu0 %2022
  %2024 = vrot.lane.b32.xlu0 %v1939, 8
  %v2025 = vpop.permute.xlu0 %2024
  %2026 = vrot.lane.b32.xlu0 %v1942, 8
  %v2027 = vpop.permute.xlu0 %2026
  %2028 = vrot.lane.b32.xlu0 %v1945, 8
  %v2029 = vpop.permute.xlu0 %2028
  %2030 = vrot.lane.b32.xlu0 %v1948, 8
  %v2031 = vpop.permute.xlu0 %2030
  %2032 = vrot.lane.b32.xlu0 %v1951, 8
  %v2033 = vpop.permute.xlu0 %2032
  %2034 = vrot.lane.b32.xlu0 %v1954, 8
  %v2035 = vpop.permute.xlu0 %2034
  %2036 = vrot.lane.b32.xlu0 %v1957, 8
  %v2037 = vpop.permute.xlu0 %2036
  %2038 = vrot.lane.b32.xlu0 %v1960, 8
  %v2039 = vpop.permute.xlu0 %2038
  %2040 = vrot.lane.b32.xlu0 %v1963, 8
  %v2041 = vpop.permute.xlu0 %2040
  %2042 = vrot.lane.b32.xlu0 %v1966, 8
  %v2043 = vpop.permute.xlu0 %2042
  %2044 = vrot.lane.b32.xlu0 %v1969, 8
  %v2045 = vpop.permute.xlu0 %2044
  %2046 = vrot.lane.b32.xlu0 %v1972, 8
  %v2047 = vpop.permute.xlu0 %2046
  %2048 = vrot.lane.b32.xlu0 %v1975, 8
  %v2049 = vpop.permute.xlu0 %2048
  %2050 = vrot.lane.b32.xlu0 %v1978, 8
  %v2051 = vpop.permute.xlu0 %2050
  %2052 = vrot.lane.b32.xlu0 %v1981, 8
  %v2053 = vpop.permute.xlu0 %2052
  %2054 = vrot.lane.b32.xlu0 %v1984, 8
  %v2055 = vpop.permute.xlu0 %2054
  %2056 = vrot.lane.b32.xlu0 %v1987, 8
  %v2057 = vpop.permute.xlu0 %2056
  %2058 = vrot.lane.b32.xlu0 %v1990, 8
  %v2059 = vpop.permute.xlu0 %2058
  %2060 = vrot.lane.b32.xlu0 %v1993, 8
  %v2061 = vpop.permute.xlu0 %2060
  %2062 = vrot.lane.b32.xlu0 %v1996, 8
  %v2063 = vpop.permute.xlu0 %2062
  %2064 = vrot.lane.b32.xlu0 %v1999, 8
  %v2065 = vpop.permute.xlu0 %2064
  %2066 = vrot.lane.b32.xlu0 %v2002, 8
  %v2067 = vpop.permute.xlu0 %2066
  %2068 = vrot.lane.b32.xlu0 %v2005, 8
  %v2069 = vpop.permute.xlu0 %2068
  %v2071 = vsel %vm977, %v1334, %v1847
  %v2073 = vsel %vm977, %v1335, %v1849
  %v2075 = vsel %vm977, %v1336, %v1851
  %v2077 = vsel %vm977, %v1337, %v1853
  %v2079 = vsel %vm977, %v1338, %v1855
  %v2081 = vsel %vm977, %v1339, %v1857
  %v2083 = vsel %vm977, %v1340, %v1859
  %v2085 = vsel %vm977, %v1341, %v1861
  %v2087 = vsel %vm977, %v1342, %v1863
  %v2089 = vsel %vm977, %v1343, %v1865
  %v2091 = vsel %vm977, %v1344, %v1867
  %v2093 = vsel %vm977, %v1345, %v1869
  %v2095 = vsel %vm977, %v1346, %v1871
  %v2097 = vsel %vm977, %v1347, %v1873
  %v2099 = vsel %vm977, %v1348, %v1875
  %v2101 = vsel %vm977, %v1349, %v1877
  %v2103 = vsel %vm977, %v1350, %v1879
  %v2105 = vsel %vm977, %v1351, %v1881
  %v2107 = vsel %vm977, %v1352, %v1883
  %v2109 = vsel %vm977, %v1353, %v1885
  %v2111 = vsel %vm977, %v1354, %v1887
  %v2113 = vsel %vm977, %v1355, %v1889
  %v2115 = vsel %vm977, %v1356, %v1891
  %v2117 = vsel %vm977, %v1357, %v1893
  %v2119 = vsel %vm977, %v1358, %v1895
  %v2121 = vsel %vm977, %v1359, %v1897
  %v2123 = vsel %vm977, %v1360, %v1899
  %v2125 = vsel %vm977, %v1361, %v1901
  %v2127 = vsel %vm977, %v1362, %v1903
  %v2129 = vsel %vm977, %v1363, %v1905
  %v2131 = vsel %vm977, %v1364, %v1907
  %v2133 = vsel %vm977, %v1365, %v1909
  %v2135 = vsel %vm1042, %v2071, %v2007
  %v2137 = vsel %vm1042, %v2073, %v2009
  %v2139 = vsel %vm1042, %v2075, %v2011
  %v2141 = vsel %vm1042, %v2077, %v2013
  %v2143 = vsel %vm1042, %v2079, %v2015
  %v2145 = vsel %vm1042, %v2081, %v2017
  %v2147 = vsel %vm1042, %v2083, %v2019
  %v2149 = vsel %vm1042, %v2085, %v2021
  %v2151 = vsel %vm1042, %v2087, %v2023
  %v2153 = vsel %vm1042, %v2089, %v2025
  %v2155 = vsel %vm1042, %v2091, %v2027
  %v2157 = vsel %vm1042, %v2093, %v2029
  %v2159 = vsel %vm1042, %v2095, %v2031
  %v2161 = vsel %vm1042, %v2097, %v2033
  %v2163 = vsel %vm1042, %v2099, %v2035
  %v2165 = vsel %vm1042, %v2101, %v2037
  %v2167 = vsel %vm1042, %v2103, %v2039
  %v2169 = vsel %vm1042, %v2105, %v2041
  %v2171 = vsel %vm1042, %v2107, %v2043
  %v2173 = vsel %vm1042, %v2109, %v2045
  %v2175 = vsel %vm1042, %v2111, %v2047
  %v2177 = vsel %vm1042, %v2113, %v2049
  %v2179 = vsel %vm1042, %v2115, %v2051
  %v2181 = vsel %vm1042, %v2117, %v2053
  %v2183 = vsel %vm1042, %v2119, %v2055
  %v2185 = vsel %vm1042, %v2121, %v2057
  %v2187 = vsel %vm1042, %v2123, %v2059
  %v2189 = vsel %vm1042, %v2125, %v2061
  %v2191 = vsel %vm1042, %v2127, %v2063
  %v2193 = vsel %vm1042, %v2129, %v2065
  %v2195 = vsel %vm1042, %v2131, %v2067
  %v2197 = vsel %vm1042, %v2133, %v2069
  %s2198 = scalar_lea.vmem %s1, 8
  %v2199 = vld [vmem:[%s2198] sm:$0xf]
  %v2200 = vld [vmem:[%s2198 + $0x4] sm:$0x3]
  %v2203 = vunpack.c.l.b16 %v2199
  %v2204 = vunpack.c.l.b16 %v2200
  %v2205 = vpack.c.b16 %v2204, %v2203
  %vm2206 = vcmask 97280
  %v2207 = vsel %vm2206, %v2135, 0
  %v2209 = vsel %vm2206, %v2137, 0
  %v2211 = vsel %vm2206, %v2139, 0
  %v2213 = vsel %vm2206, %v2141, 0
  %v2215 = vsel %vm2206, %v2143, 0
  %v2217 = vsel %vm2206, %v2145, 0
  %v2219 = vsel %vm2206, %v2147, 0
  %v2221 = vsel %vm2206, %v2149, 0
  %v2223 = vsel %vm2206, %v2151, 0
  %v2225 = vsel %vm2206, %v2153, 0
  %v2227 = vsel %vm2206, %v2155, 0
  %v2229 = vsel %vm2206, %v2157, 0
  %v2231 = vsel %vm2206, %v2159, 0
  %v2233 = vsel %vm2206, %v2161, 0
  %v2235 = vsel %vm2206, %v2163, 0
  %v2237 = vsel %vm2206, %v2165, 0
  %v2239 = vsel %vm2206, %v2167, 0
  %v2241 = vsel %vm2206, %v2169, 0
  %v2243 = vsel %vm2206, %v2171, 0
  %v2245 = vsel %vm2206, %v2173, 0
  %v2247 = vsel %vm2206, %v2175, 0
  %v2249 = vsel %vm2206, %v2177, 0
  %v2251 = vsel %vm2206, %v2179, 0
  %v2253 = vsel %vm2206, %v2181, 0
  %v2255 = vsel %vm2206, %v2183, 0
  %v2257 = vsel %vm2206, %v2185, 0
  %v2259 = vsel %vm2206, %v2187, 0
  %v2261 = vsel %vm2206, %v2189, 0
  %v2263 = vsel %vm2206, %v2191, 0
  %v2265 = vsel %vm2206, %v2193, 0
  %v2267 = vsel %vm2206, %v2195, 0
  %v2269 = vsel %vm2206, %v2197, 0
  %vm2271 = vcmask 1045504
  %v2273 = vsel %vm2271, %v2205, 0
  %2275 = vmatprep.subr.bf16.mxu0 0
  %2276 = vmatpush1.bf16.msra.mxu0 0
  %2277 = vmatprep.subr.bf16.mxu0 0
  %2278 = vmatpush1.bf16.msra.mxu0 0
  %2279 = vmatprep.subr.bf16.mxu0 0
  %2280 = vmatpush1.bf16.msra.mxu0 0
  %2281 = vmatprep.subr.bf16.mxu0 0
  %2282 = vmatpush1.bf16.msra.mxu0 0
  %2283 = vmatprep.subr.bf16.mxu0 0
  %2284 = vmatpush1.bf16.msra.mxu0 0
  %2285 = vmatprep.subr.bf16.mxu0 0
  %2286 = vmatpush1.bf16.msra.mxu0 0
  %2287 = vmatprep.subr.bf16.mxu0 0
  %2288 = vmatpush1.bf16.msra.mxu0 0
  %2289 = vmatprep.subr.bf16.mxu0 0
  %2290 = vmatpush1.bf16.msra.mxu0 %v2273
  %2291 = vmatprep.subr.bf16.mxu0 0
  %2292 = vmatpush2.bf16.msra.mxu0 0
  %2293 = vmatprep.subr.bf16.mxu0 0
  %2294 = vmatpush2.bf16.msra.mxu0 0
  %2295 = vmatprep.subr.bf16.mxu0 0
  %2296 = vmatpush2.bf16.msra.mxu0 0
  %2297 = vmatprep.subr.bf16.mxu0 0
  %2298 = vmatpush2.bf16.msra.mxu0 0
  %2299 = vmatprep.subr.bf16.mxu0 0
  %2300 = vmatpush2.bf16.msra.mxu0 0
  %2301 = vmatprep.subr.bf16.mxu0 0
  %2302 = vmatpush2.bf16.msra.mxu0 0
  %2303 = vmatprep.subr.bf16.mxu0 0
  %2304 = vmatpush2.bf16.msra.mxu0 0
  %2305 = vmatprep.subr.bf16.mxu0 0
  %2306 = vmatpush2.bf16.msra.mxu0 0
  %2307 = vmatprep.mubr.bf16.mxu0 0
  %2308 = vmatmul.mubr.bf16.gmra.mxu0 %v2207
  %v2309 = vpop.f32.mrf.mxu0
  %v2310 = vadd.f32 0.0, %v2309
  %v2311 = vpop.f32.mrf.mxu0
  %v2312 = vpop.f32.mrf.mxu0
  %v2313 = vadd.f32 0.0, %v2312
  %v2314 = vpop.f32.mrf.mxu0
  %2315 = vmatprep.mubr.bf16.mxu0 0
  %2316 = vmatmul.mubr.bf16.gmra.mxu0 %v2209
  %v2317 = vpop.f32.mrf.mxu0
  %v2318 = vadd.f32 0.0, %v2317
  %v2319 = vpop.f32.mrf.mxu0
  %v2320 = vpop.f32.mrf.mxu0
  %v2321 = vadd.f32 0.0, %v2320
  %v2322 = vpop.f32.mrf.mxu0
  %2323 = vmatprep.mubr.bf16.mxu0 0
  %2324 = vmatmul.mubr.bf16.gmra.mxu0 %v2211
  %v2325 = vpop.f32.mrf.mxu0
  %v2326 = vadd.f32 0.0, %v2325
  %v2327 = vpop.f32.mrf.mxu0
  %v2328 = vpop.f32.mrf.mxu0
  %v2329 = vadd.f32 0.0, %v2328
  %v2330 = vpop.f32.mrf.mxu0
  %2331 = vmatprep.mubr.bf16.mxu0 0
  %2332 = vmatmul.mubr.bf16.gmra.mxu0 %v2213
  %v2333 = vpop.f32.mrf.mxu0
  %v2334 = vadd.f32 0.0, %v2333
  %v2335 = vpop.f32.mrf.mxu0
  %v2336 = vpop.f32.mrf.mxu0
  %v2337 = vadd.f32 0.0, %v2336
  %v2338 = vpop.f32.mrf.mxu0
  %2339 = vmatprep.mubr.bf16.mxu0 0
  %2340 = vmatmul.mubr.bf16.gmra.mxu0 %v2215
  %v2341 = vpop.f32.mrf.mxu0
  %v2342 = vadd.f32 0.0, %v2341
  %v2343 = vpop.f32.mrf.mxu0
  %v2344 = vpop.f32.mrf.mxu0
  %v2345 = vadd.f32 0.0, %v2344
  %v2346 = vpop.f32.mrf.mxu0
  %2347 = vmatprep.mubr.bf16.mxu0 0
  %2348 = vmatmul.mubr.bf16.gmra.mxu0 %v2217
  %v2349 = vpop.f32.mrf.mxu0
  %v2350 = vadd.f32 0.0, %v2349
  %v2351 = vpop.f32.mrf.mxu0
  %v2352 = vpop.f32.mrf.mxu0
  %v2353 = vadd.f32 0.0, %v2352
  %v2354 = vpop.f32.mrf.mxu0
  %2355 = vmatprep.mubr.bf16.mxu0 0
  %2356 = vmatmul.mubr.bf16.gmra.mxu0 %v2219
  %v2357 = vpop.f32.mrf.mxu0
  %v2358 = vadd.f32 0.0, %v2357
  %v2359 = vpop.f32.mrf.mxu0
  %v2360 = vpop.f32.mrf.mxu0
  %v2361 = vadd.f32 0.0, %v2360
  %v2362 = vpop.f32.mrf.mxu0
  %2363 = vmatprep.mubr.bf16.mxu0 0
  %2364 = vmatmul.mubr.bf16.gmra.mxu0 %v2221
  %v2365 = vpop.f32.mrf.mxu0
  %v2366 = vadd.f32 0.0, %v2365
  %v2367 = vpop.f32.mrf.mxu0
  %v2368 = vpop.f32.mrf.mxu0
  %v2369 = vadd.f32 0.0, %v2368
  %v2370 = vpop.f32.mrf.mxu0
  %2371 = vmatprep.mubr.bf16.mxu0 0
  %2372 = vmatmul.mubr.bf16.gmra.mxu0 %v2223
  %v2373 = vpop.f32.mrf.mxu0
  %v2374 = vadd.f32 0.0, %v2373
  %v2375 = vpop.f32.mrf.mxu0
  %v2376 = vpop.f32.mrf.mxu0
  %v2377 = vadd.f32 0.0, %v2376
  %v2378 = vpop.f32.mrf.mxu0
  %2379 = vmatprep.mubr.bf16.mxu0 0
  %2380 = vmatmul.mubr.bf16.gmra.mxu0 %v2225
  %v2381 = vpop.f32.mrf.mxu0
  %v2382 = vadd.f32 0.0, %v2381
  %v2383 = vpop.f32.mrf.mxu0
  %v2384 = vpop.f32.mrf.mxu0
  %v2385 = vadd.f32 0.0, %v2384
  %v2386 = vpop.f32.mrf.mxu0
  %2387 = vmatprep.mubr.bf16.mxu0 0
  %2388 = vmatmul.mubr.bf16.gmra.mxu0 %v2227
  %v2389 = vpop.f32.mrf.mxu0
  %v2390 = vadd.f32 0.0, %v2389
  %v2391 = vpop.f32.mrf.mxu0
  %v2392 = vpop.f32.mrf.mxu0
  %v2393 = vadd.f32 0.0, %v2392
  %v2394 = vpop.f32.mrf.mxu0
  %2395 = vmatprep.mubr.bf16.mxu0 0
  %2396 = vmatmul.mubr.bf16.gmra.mxu0 %v2229
  %v2397 = vpop.f32.mrf.mxu0
  %v2398 = vadd.f32 0.0, %v2397
  %v2399 = vpop.f32.mrf.mxu0
  %v2400 = vpop.f32.mrf.mxu0
  %v2401 = vadd.f32 0.0, %v2400
  %v2402 = vpop.f32.mrf.mxu0
  %2403 = vmatprep.mubr.bf16.mxu0 0
  %2404 = vmatmul.mubr.bf16.gmra.mxu0 %v2231
  %v2405 = vpop.f32.mrf.mxu0
  %v2406 = vadd.f32 0.0, %v2405
  %v2407 = vpop.f32.mrf.mxu0
  %v2408 = vpop.f32.mrf.mxu0
  %v2409 = vadd.f32 0.0, %v2408
  %v2410 = vpop.f32.mrf.mxu0
  %2411 = vmatprep.mubr.bf16.mxu0 0
  %2412 = vmatmul.mubr.bf16.gmra.mxu0 %v2233
  %v2413 = vpop.f32.mrf.mxu0
  %v2414 = vadd.f32 0.0, %v2413
  %v2415 = vpop.f32.mrf.mxu0
  %v2416 = vpop.f32.mrf.mxu0
  %v2417 = vadd.f32 0.0, %v2416
  %v2418 = vpop.f32.mrf.mxu0
  %2419 = vmatprep.mubr.bf16.mxu0 0
  %2420 = vmatmul.mubr.bf16.gmra.mxu0 %v2235
  %v2421 = vpop.f32.mrf.mxu0
  %v2422 = vadd.f32 0.0, %v2421
  %v2423 = vpop.f32.mrf.mxu0
  %v2424 = vpop.f32.mrf.mxu0
  %v2425 = vadd.f32 0.0, %v2424
  %v2426 = vpop.f32.mrf.mxu0
  %2427 = vmatprep.mubr.bf16.mxu0 0
  %2428 = vmatmul.mubr.bf16.gmra.mxu0 %v2237
  %v2429 = vpop.f32.mrf.mxu0
  %v2430 = vadd.f32 0.0, %v2429
  %v2431 = vpop.f32.mrf.mxu0
  %v2432 = vpop.f32.mrf.mxu0
  %v2433 = vadd.f32 0.0, %v2432
  %v2434 = vpop.f32.mrf.mxu0
  %2435 = vmatprep.mubr.bf16.mxu0 0
  %2436 = vmatmul.mubr.bf16.gmra.mxu0 %v2239
  %v2437 = vpop.f32.mrf.mxu0
  %v2438 = vadd.f32 0.0, %v2437
  %v2439 = vpop.f32.mrf.mxu0
  %v2440 = vpop.f32.mrf.mxu0
  %v2441 = vadd.f32 0.0, %v2440
  %v2442 = vpop.f32.mrf.mxu0
  %2443 = vmatprep.mubr.bf16.mxu0 0
  %2444 = vmatmul.mubr.bf16.gmra.mxu0 %v2241
  %v2445 = vpop.f32.mrf.mxu0
  %v2446 = vadd.f32 0.0, %v2445
  %v2447 = vpop.f32.mrf.mxu0
  %v2448 = vpop.f32.mrf.mxu0
  %v2449 = vadd.f32 0.0, %v2448
  %v2450 = vpop.f32.mrf.mxu0
  %2451 = vmatprep.mubr.bf16.mxu0 0
  %2452 = vmatmul.mubr.bf16.gmra.mxu0 %v2243
  %v2453 = vpop.f32.mrf.mxu0
  %v2454 = vadd.f32 0.0, %v2453
  %v2455 = vpop.f32.mrf.mxu0
  %v2456 = vpop.f32.mrf.mxu0
  %v2457 = vadd.f32 0.0, %v2456
  %v2458 = vpop.f32.mrf.mxu0
  %2459 = vmatprep.mubr.bf16.mxu0 0
  %2460 = vmatmul.mubr.bf16.gmra.mxu0 %v2245
  %v2461 = vpop.f32.mrf.mxu0
  %v2462 = vadd.f32 0.0, %v2461
  %v2463 = vpop.f32.mrf.mxu0
  %v2464 = vpop.f32.mrf.mxu0
  %v2465 = vadd.f32 0.0, %v2464
  %v2466 = vpop.f32.mrf.mxu0
  %2467 = vmatprep.mubr.bf16.mxu0 0
  %2468 = vmatmul.mubr.bf16.gmra.mxu0 %v2247
  %v2469 = vpop.f32.mrf.mxu0
  %v2470 = vadd.f32 0.0, %v2469
  %v2471 = vpop.f32.mrf.mxu0
  %v2472 = vpop.f32.mrf.mxu0
  %v2473 = vadd.f32 0.0, %v2472
  %v2474 = vpop.f32.mrf.mxu0
  %2475 = vmatprep.mubr.bf16.mxu0 0
  %2476 = vmatmul.mubr.bf16.gmra.mxu0 %v2249
  %v2477 = vpop.f32.mrf.mxu0
  %v2478 = vadd.f32 0.0, %v2477
  %v2479 = vpop.f32.mrf.mxu0
  %v2480 = vpop.f32.mrf.mxu0
  %v2481 = vadd.f32 0.0, %v2480
  %v2482 = vpop.f32.mrf.mxu0
  %2483 = vmatprep.mubr.bf16.mxu0 0
  %2484 = vmatmul.mubr.bf16.gmra.mxu0 %v2251
  %v2485 = vpop.f32.mrf.mxu0
  %v2486 = vadd.f32 0.0, %v2485
  %v2487 = vpop.f32.mrf.mxu0
  %v2488 = vpop.f32.mrf.mxu0
  %v2489 = vadd.f32 0.0, %v2488
  %v2490 = vpop.f32.mrf.mxu0
  %2491 = vmatprep.mubr.bf16.mxu0 0
  %2492 = vmatmul.mubr.bf16.gmra.mxu0 %v2253
  %v2493 = vpop.f32.mrf.mxu0
  %v2494 = vadd.f32 0.0, %v2493
  %v2495 = vpop.f32.mrf.mxu0
  %v2496 = vpop.f32.mrf.mxu0
  %v2497 = vadd.f32 0.0, %v2496
  %v2498 = vpop.f32.mrf.mxu0
  %2499 = vmatprep.mubr.bf16.mxu0 0
  %2500 = vmatmul.mubr.bf16.gmra.mxu0 %v2255
  %v2501 = vpop.f32.mrf.mxu0
  %v2502 = vadd.f32 0.0, %v2501
  %v2503 = vpop.f32.mrf.mxu0
  %v2504 = vpop.f32.mrf.mxu0
  %v2505 = vadd.f32 0.0, %v2504
  %v2506 = vpop.f32.mrf.mxu0
  %2507 = vmatprep.mubr.bf16.mxu0 0
  %2508 = vmatmul.mubr.bf16.gmra.mxu0 %v2257
  %v2509 = vpop.f32.mrf.mxu0
  %v2510 = vadd.f32 0.0, %v2509
  %v2511 = vpop.f32.mrf.mxu0
  %v2512 = vpop.f32.mrf.mxu0
  %v2513 = vadd.f32 0.0, %v2512
  %v2514 = vpop.f32.mrf.mxu0
  %2515 = vmatprep.mubr.bf16.mxu0 0
  %2516 = vmatmul.mubr.bf16.gmra.mxu0 %v2259
  %v2517 = vpop.f32.mrf.mxu0
  %v2518 = vadd.f32 0.0, %v2517
  %v2519 = vpop.f32.mrf.mxu0
  %v2520 = vpop.f32.mrf.mxu0
  %v2521 = vadd.f32 0.0, %v2520
  %v2522 = vpop.f32.mrf.mxu0
  %2523 = vmatprep.mubr.bf16.mxu0 0
  %2524 = vmatmul.mubr.bf16.gmra.mxu0 %v2261
  %v2525 = vpop.f32.mrf.mxu0
  %v2526 = vadd.f32 0.0, %v2525
  %v2527 = vpop.f32.mrf.mxu0
  %v2528 = vpop.f32.mrf.mxu0
  %v2529 = vadd.f32 0.0, %v2528
  %v2530 = vpop.f32.mrf.mxu0
  %2531 = vmatprep.mubr.bf16.mxu0 0
  %2532 = vmatmul.mubr.bf16.gmra.mxu0 %v2263
  %v2533 = vpop.f32.mrf.mxu0
  %v2534 = vadd.f32 0.0, %v2533
  %v2535 = vpop.f32.mrf.mxu0
  %v2536 = vpop.f32.mrf.mxu0
  %v2537 = vadd.f32 0.0, %v2536
  %v2538 = vpop.f32.mrf.mxu0
  %2539 = vmatprep.mubr.bf16.mxu0 0
  %2540 = vmatmul.mubr.bf16.gmra.mxu0 %v2265
  %v2541 = vpop.f32.mrf.mxu0
  %v2542 = vadd.f32 0.0, %v2541
  %v2543 = vpop.f32.mrf.mxu0
  %v2544 = vpop.f32.mrf.mxu0
  %v2545 = vadd.f32 0.0, %v2544
  %v2546 = vpop.f32.mrf.mxu0
  %2547 = vmatprep.mubr.bf16.mxu0 0
  %2548 = vmatmul.mubr.bf16.gmra.mxu0 %v2267
  %v2549 = vpop.f32.mrf.mxu0
  %v2550 = vadd.f32 0.0, %v2549
  %v2551 = vpop.f32.mrf.mxu0
  %v2552 = vpop.f32.mrf.mxu0
  %v2553 = vadd.f32 0.0, %v2552
  %v2554 = vpop.f32.mrf.mxu0
  %2555 = vmatprep.mubr.bf16.mxu0 0
  %2556 = vmatmul.mubr.bf16.gmra.mxu0 %v2269
  %v2557 = vpop.f32.mrf.mxu0
  %v2558 = vadd.f32 0.0, %v2557
  %v2559 = vpop.f32.mrf.mxu0
  %v2560 = vpop.f32.mrf.mxu0
  %v2561 = vadd.f32 0.0, %v2560
  %v2562 = vpop.f32.mrf.mxu0
  %2563 = vdwg.mxu0
  %v2566 = vunpack.c.l.b16 %v1107
  %v2567 = vunpack.c.l.b16 %v1108
  %v2568 = vpack.c.b16 %v2567, %v2566
  %v2569 = vsel %vm2206, %v1044, 0
  %v2571 = vsel %vm2206, %v1046, 0
  %v2573 = vsel %vm2206, %v1048, 0
  %v2575 = vsel %vm2206, %v1050, 0
  %v2577 = vsel %vm2206, %v1052, 0
  %v2579 = vsel %vm2206, %v1054, 0
  %v2581 = vsel %vm2206, %v1056, 0
  %v2583 = vsel %vm2206, %v1058, 0
  %v2585 = vsel %vm2206, %v1060, 0
  %v2587 = vsel %vm2206, %v1062, 0
  %v2589 = vsel %vm2206, %v1064, 0
  %v2591 = vsel %vm2206, %v1066, 0
  %v2593 = vsel %vm2206, %v1068, 0
  %v2595 = vsel %vm2206, %v1070, 0
  %v2597 = vsel %vm2206, %v1072, 0
  %v2599 = vsel %vm2206, %v1074, 0
  %v2601 = vsel %vm2206, %v1076, 0
  %v2603 = vsel %vm2206, %v1078, 0
  %v2605 = vsel %vm2206, %v1080, 0
  %v2607 = vsel %vm2206, %v1082, 0
  %v2609 = vsel %vm2206, %v1084, 0
  %v2611 = vsel %vm2206, %v1086, 0
  %v2613 = vsel %vm2206, %v1088, 0
  %v2615 = vsel %vm2206, %v1090, 0
  %v2617 = vsel %vm2206, %v1092, 0
  %v2619 = vsel %vm2206, %v1094, 0
  %v2621 = vsel %vm2206, %v1096, 0
  %v2623 = vsel %vm2206, %v1098, 0
  %v2625 = vsel %vm2206, %v1100, 0
  %v2627 = vsel %vm2206, %v1102, 0
  %v2629 = vsel %vm2206, %v1104, 0
  %v2631 = vsel %vm2206, %v1106, 0
  %v2634 = vsel %vm2271, %v2568, 0
  %2636 = vmatprep.subr.bf16.mxu0 0
  %2637 = vmatpush1.bf16.msra.mxu0 0
  %2638 = vmatprep.subr.bf16.mxu0 0
  %2639 = vmatpush1.bf16.msra.mxu0 0
  %2640 = vmatprep.subr.bf16.mxu0 0
  %2641 = vmatpush1.bf16.msra.mxu0 0
  %2642 = vmatprep.subr.bf16.mxu0 0
  %2643 = vmatpush1.bf16.msra.mxu0 0
  %2644 = vmatprep.subr.bf16.mxu0 0
  %2645 = vmatpush1.bf16.msra.mxu0 0
  %2646 = vmatprep.subr.bf16.mxu0 0
  %2647 = vmatpush1.bf16.msra.mxu0 0
  %2648 = vmatprep.subr.bf16.mxu0 0
  %2649 = vmatpush1.bf16.msra.mxu0 0
  %2650 = vmatprep.subr.bf16.mxu0 0
  %2651 = vmatpush1.bf16.msra.mxu0 %v2634
  %2652 = vmatprep.subr.bf16.mxu0 0
  %2653 = vmatpush2.bf16.msra.mxu0 0
  %2654 = vmatprep.subr.bf16.mxu0 0
  %2655 = vmatpush2.bf16.msra.mxu0 0
  %2656 = vmatprep.subr.bf16.mxu0 0
  %2657 = vmatpush2.bf16.msra.mxu0 0
  %2658 = vmatprep.subr.bf16.mxu0 0
  %2659 = vmatpush2.bf16.msra.mxu0 0
  %2660 = vmatprep.subr.bf16.mxu0 0
  %2661 = vmatpush2.bf16.msra.mxu0 0
  %2662 = vmatprep.subr.bf16.mxu0 0
  %2663 = vmatpush2.bf16.msra.mxu0 0
  %2664 = vmatprep.subr.bf16.mxu0 0
  %2665 = vmatpush2.bf16.msra.mxu0 0
  %2666 = vmatprep.subr.bf16.mxu0 0
  %2667 = vmatpush2.bf16.msra.mxu0 0
  %2668 = vmatprep.mubr.bf16.mxu0 0
  %2669 = vmatmul.mubr.bf16.gmra.mxu0 %v2569
  %v2670 = vpop.f32.mrf.mxu0
  %v2671 = vadd.f32 %v2310, %v2670
  %v2672 = vpop.f32.mrf.mxu0
  %v2673 = vpop.f32.mrf.mxu0
  %v2674 = vadd.f32 %v2313, %v2673
  %v2675 = vpop.f32.mrf.mxu0
  %2676 = vmatprep.mubr.bf16.mxu0 0
  %2677 = vmatmul.mubr.bf16.gmra.mxu0 %v2571
  %v2678 = vpop.f32.mrf.mxu0
  %v2679 = vadd.f32 %v2318, %v2678
  %v2680 = vpop.f32.mrf.mxu0
  %v2681 = vpop.f32.mrf.mxu0
  %v2682 = vadd.f32 %v2321, %v2681
  %v2683 = vpop.f32.mrf.mxu0
  %2684 = vmatprep.mubr.bf16.mxu0 0
  %2685 = vmatmul.mubr.bf16.gmra.mxu0 %v2573
  %v2686 = vpop.f32.mrf.mxu0
  %v2687 = vadd.f32 %v2326, %v2686
  %v2688 = vpop.f32.mrf.mxu0
  %v2689 = vpop.f32.mrf.mxu0
  %v2690 = vadd.f32 %v2329, %v2689
  %v2691 = vpop.f32.mrf.mxu0
  %2692 = vmatprep.mubr.bf16.mxu0 0
  %2693 = vmatmul.mubr.bf16.gmra.mxu0 %v2575
  %v2694 = vpop.f32.mrf.mxu0
  %v2695 = vadd.f32 %v2334, %v2694
  %v2696 = vpop.f32.mrf.mxu0
  %v2697 = vpop.f32.mrf.mxu0
  %v2698 = vadd.f32 %v2337, %v2697
  %v2699 = vpop.f32.mrf.mxu0
  %2700 = vmatprep.mubr.bf16.mxu0 0
  %2701 = vmatmul.mubr.bf16.gmra.mxu0 %v2577
  %v2702 = vpop.f32.mrf.mxu0
  %v2703 = vadd.f32 %v2342, %v2702
  %v2704 = vpop.f32.mrf.mxu0
  %v2705 = vpop.f32.mrf.mxu0
  %v2706 = vadd.f32 %v2345, %v2705
  %v2707 = vpop.f32.mrf.mxu0
  %2708 = vmatprep.mubr.bf16.mxu0 0
  %2709 = vmatmul.mubr.bf16.gmra.mxu0 %v2579
  %v2710 = vpop.f32.mrf.mxu0
  %v2711 = vadd.f32 %v2350, %v2710
  %v2712 = vpop.f32.mrf.mxu0
  %v2713 = vpop.f32.mrf.mxu0
  %v2714 = vadd.f32 %v2353, %v2713
  %v2715 = vpop.f32.mrf.mxu0
  %2716 = vmatprep.mubr.bf16.mxu0 0
  %2717 = vmatmul.mubr.bf16.gmra.mxu0 %v2581
  %v2718 = vpop.f32.mrf.mxu0
  %v2719 = vadd.f32 %v2358, %v2718
  %v2720 = vpop.f32.mrf.mxu0
  %v2721 = vpop.f32.mrf.mxu0
  %v2722 = vadd.f32 %v2361, %v2721
  %v2723 = vpop.f32.mrf.mxu0
  %2724 = vmatprep.mubr.bf16.mxu0 0
  %2725 = vmatmul.mubr.bf16.gmra.mxu0 %v2583
  %v2726 = vpop.f32.mrf.mxu0
  %v2727 = vadd.f32 %v2366, %v2726
  %v2728 = vpop.f32.mrf.mxu0
  %v2729 = vpop.f32.mrf.mxu0
  %v2730 = vadd.f32 %v2369, %v2729
  %v2731 = vpop.f32.mrf.mxu0
  %2732 = vmatprep.mubr.bf16.mxu0 0
  %2733 = vmatmul.mubr.bf16.gmra.mxu0 %v2585
  %v2734 = vpop.f32.mrf.mxu0
  %v2735 = vadd.f32 %v2374, %v2734
  %v2736 = vpop.f32.mrf.mxu0
  %v2737 = vpop.f32.mrf.mxu0
  %v2738 = vadd.f32 %v2377, %v2737
  %v2739 = vpop.f32.mrf.mxu0
  %2740 = vmatprep.mubr.bf16.mxu0 0
  %2741 = vmatmul.mubr.bf16.gmra.mxu0 %v2587
  %v2742 = vpop.f32.mrf.mxu0
  %v2743 = vadd.f32 %v2382, %v2742
  %v2744 = vpop.f32.mrf.mxu0
  %v2745 = vpop.f32.mrf.mxu0
  %v2746 = vadd.f32 %v2385, %v2745
  %v2747 = vpop.f32.mrf.mxu0
  %2748 = vmatprep.mubr.bf16.mxu0 0
  %2749 = vmatmul.mubr.bf16.gmra.mxu0 %v2589
  %v2750 = vpop.f32.mrf.mxu0
  %v2751 = vadd.f32 %v2390, %v2750
  %v2752 = vpop.f32.mrf.mxu0
  %v2753 = vpop.f32.mrf.mxu0
  %v2754 = vadd.f32 %v2393, %v2753
  %v2755 = vpop.f32.mrf.mxu0
  %2756 = vmatprep.mubr.bf16.mxu0 0
  %2757 = vmatmul.mubr.bf16.gmra.mxu0 %v2591
  %v2758 = vpop.f32.mrf.mxu0
  %v2759 = vadd.f32 %v2398, %v2758
  %v2760 = vpop.f32.mrf.mxu0
  %v2761 = vpop.f32.mrf.mxu0
  %v2762 = vadd.f32 %v2401, %v2761
  %v2763 = vpop.f32.mrf.mxu0
  %2764 = vmatprep.mubr.bf16.mxu0 0
  %2765 = vmatmul.mubr.bf16.gmra.mxu0 %v2593
  %v2766 = vpop.f32.mrf.mxu0
  %v2767 = vadd.f32 %v2406, %v2766
  %v2768 = vpop.f32.mrf.mxu0
  %v2769 = vpop.f32.mrf.mxu0
  %v2770 = vadd.f32 %v2409, %v2769
  %v2771 = vpop.f32.mrf.mxu0
  %2772 = vmatprep.mubr.bf16.mxu0 0
  %2773 = vmatmul.mubr.bf16.gmra.mxu0 %v2595
  %v2774 = vpop.f32.mrf.mxu0
  %v2775 = vadd.f32 %v2414, %v2774
  %v2776 = vpop.f32.mrf.mxu0
  %v2777 = vpop.f32.mrf.mxu0
  %v2778 = vadd.f32 %v2417, %v2777
  %v2779 = vpop.f32.mrf.mxu0
  %2780 = vmatprep.mubr.bf16.mxu0 0
  %2781 = vmatmul.mubr.bf16.gmra.mxu0 %v2597
  %v2782 = vpop.f32.mrf.mxu0
  %v2783 = vadd.f32 %v2422, %v2782
  %v2784 = vpop.f32.mrf.mxu0
  %v2785 = vpop.f32.mrf.mxu0
  %v2786 = vadd.f32 %v2425, %v2785
  %v2787 = vpop.f32.mrf.mxu0
  %2788 = vmatprep.mubr.bf16.mxu0 0
  %2789 = vmatmul.mubr.bf16.gmra.mxu0 %v2599
  %v2790 = vpop.f32.mrf.mxu0
  %v2791 = vadd.f32 %v2430, %v2790
  %v2792 = vpop.f32.mrf.mxu0
  %v2793 = vpop.f32.mrf.mxu0
  %v2794 = vadd.f32 %v2433, %v2793
  %v2795 = vpop.f32.mrf.mxu0
  %2796 = vmatprep.mubr.bf16.mxu0 0
  %2797 = vmatmul.mubr.bf16.gmra.mxu0 %v2601
  %v2798 = vpop.f32.mrf.mxu0
  %v2799 = vadd.f32 %v2438, %v2798
  %v2800 = vpop.f32.mrf.mxu0
  %v2801 = vpop.f32.mrf.mxu0
  %v2802 = vadd.f32 %v2441, %v2801
  %v2803 = vpop.f32.mrf.mxu0
  %2804 = vmatprep.mubr.bf16.mxu0 0
  %2805 = vmatmul.mubr.bf16.gmra.mxu0 %v2603
  %v2806 = vpop.f32.mrf.mxu0
  %v2807 = vadd.f32 %v2446, %v2806
  %v2808 = vpop.f32.mrf.mxu0
  %v2809 = vpop.f32.mrf.mxu0
  %v2810 = vadd.f32 %v2449, %v2809
  %v2811 = vpop.f32.mrf.mxu0
  %2812 = vmatprep.mubr.bf16.mxu0 0
  %2813 = vmatmul.mubr.bf16.gmra.mxu0 %v2605
  %v2814 = vpop.f32.mrf.mxu0
  %v2815 = vadd.f32 %v2454, %v2814
  %v2816 = vpop.f32.mrf.mxu0
  %v2817 = vpop.f32.mrf.mxu0
  %v2818 = vadd.f32 %v2457, %v2817
  %v2819 = vpop.f32.mrf.mxu0
  %2820 = vmatprep.mubr.bf16.mxu0 0
  %2821 = vmatmul.mubr.bf16.gmra.mxu0 %v2607
  %v2822 = vpop.f32.mrf.mxu0
  %v2823 = vadd.f32 %v2462, %v2822
  %v2824 = vpop.f32.mrf.mxu0
  %v2825 = vpop.f32.mrf.mxu0
  %v2826 = vadd.f32 %v2465, %v2825
  %v2827 = vpop.f32.mrf.mxu0
  %2828 = vmatprep.mubr.bf16.mxu0 0
  %2829 = vmatmul.mubr.bf16.gmra.mxu0 %v2609
  %v2830 = vpop.f32.mrf.mxu0
  %v2831 = vadd.f32 %v2470, %v2830
  %v2832 = vpop.f32.mrf.mxu0
  %v2833 = vpop.f32.mrf.mxu0
  %v2834 = vadd.f32 %v2473, %v2833
  %v2835 = vpop.f32.mrf.mxu0
  %2836 = vmatprep.mubr.bf16.mxu0 0
  %2837 = vmatmul.mubr.bf16.gmra.mxu0 %v2611
  %v2838 = vpop.f32.mrf.mxu0
  %v2839 = vadd.f32 %v2478, %v2838
  %v2840 = vpop.f32.mrf.mxu0
  %v2841 = vpop.f32.mrf.mxu0
  %v2842 = vadd.f32 %v2481, %v2841
  %v2843 = vpop.f32.mrf.mxu0
  %2844 = vmatprep.mubr.bf16.mxu0 0
  %2845 = vmatmul.mubr.bf16.gmra.mxu0 %v2613
  %v2846 = vpop.f32.mrf.mxu0
  %v2847 = vadd.f32 %v2486, %v2846
  %v2848 = vpop.f32.mrf.mxu0
  %v2849 = vpop.f32.mrf.mxu0
  %v2850 = vadd.f32 %v2489, %v2849
  %v2851 = vpop.f32.mrf.mxu0
  %2852 = vmatprep.mubr.bf16.mxu0 0
  %2853 = vmatmul.mubr.bf16.gmra.mxu0 %v2615
  %v2854 = vpop.f32.mrf.mxu0
  %v2855 = vadd.f32 %v2494, %v2854
  %v2856 = vpop.f32.mrf.mxu0
  %v2857 = vpop.f32.mrf.mxu0
  %v2858 = vadd.f32 %v2497, %v2857
  %v2859 = vpop.f32.mrf.mxu0
  %2860 = vmatprep.mubr.bf16.mxu0 0
  %2861 = vmatmul.mubr.bf16.gmra.mxu0 %v2617
  %v2862 = vpop.f32.mrf.mxu0
  %v2863 = vadd.f32 %v2502, %v2862
  %v2864 = vpop.f32.mrf.mxu0
  %v2865 = vpop.f32.mrf.mxu0
  %v2866 = vadd.f32 %v2505, %v2865
  %v2867 = vpop.f32.mrf.mxu0
  %2868 = vmatprep.mubr.bf16.mxu0 0
  %2869 = vmatmul.mubr.bf16.gmra.mxu0 %v2619
  %v2870 = vpop.f32.mrf.mxu0
  %v2871 = vadd.f32 %v2510, %v2870
  %v2872 = vpop.f32.mrf.mxu0
  %v2873 = vpop.f32.mrf.mxu0
  %v2874 = vadd.f32 %v2513, %v2873
  %v2875 = vpop.f32.mrf.mxu0
  %2876 = vmatprep.mubr.bf16.mxu0 0
  %2877 = vmatmul.mubr.bf16.gmra.mxu0 %v2621
  %v2878 = vpop.f32.mrf.mxu0
  %v2879 = vadd.f32 %v2518, %v2878
  %v2880 = vpop.f32.mrf.mxu0
  %v2881 = vpop.f32.mrf.mxu0
  %v2882 = vadd.f32 %v2521, %v2881
  %v2883 = vpop.f32.mrf.mxu0
  %2884 = vmatprep.mubr.bf16.mxu0 0
  %2885 = vmatmul.mubr.bf16.gmra.mxu0 %v2623
  %v2886 = vpop.f32.mrf.mxu0
  %v2887 = vadd.f32 %v2526, %v2886
  %v2888 = vpop.f32.mrf.mxu0
  %v2889 = vpop.f32.mrf.mxu0
  %v2890 = vadd.f32 %v2529, %v2889
  %v2891 = vpop.f32.mrf.mxu0
  %2892 = vmatprep.mubr.bf16.mxu0 0
  %2893 = vmatmul.mubr.bf16.gmra.mxu0 %v2625
  %v2894 = vpop.f32.mrf.mxu0
  %v2895 = vadd.f32 %v2534, %v2894
  %v2896 = vpop.f32.mrf.mxu0
  %v2897 = vpop.f32.mrf.mxu0
  %v2898 = vadd.f32 %v2537, %v2897
  %v2899 = vpop.f32.mrf.mxu0
  %2900 = vmatprep.mubr.bf16.mxu0 0
  %2901 = vmatmul.mubr.bf16.gmra.mxu0 %v2627
  %v2902 = vpop.f32.mrf.mxu0
  %v2903 = vadd.f32 %v2542, %v2902
  %v2904 = vpop.f32.mrf.mxu0
  %v2905 = vpop.f32.mrf.mxu0
  %v2906 = vadd.f32 %v2545, %v2905
  %v2907 = vpop.f32.mrf.mxu0
  %2908 = vmatprep.mubr.bf16.mxu0 0
  %2909 = vmatmul.mubr.bf16.gmra.mxu0 %v2629
  %v2910 = vpop.f32.mrf.mxu0
  %v2911 = vadd.f32 %v2550, %v2910
  %v2912 = vpop.f32.mrf.mxu0
  %v2913 = vpop.f32.mrf.mxu0
  %v2914 = vadd.f32 %v2553, %v2913
  %v2915 = vpop.f32.mrf.mxu0
  %2916 = vmatprep.mubr.bf16.mxu0 0
  %2917 = vmatmul.mubr.bf16.gmra.mxu0 %v2631
  %v2918 = vpop.f32.mrf.mxu0
  %v2919 = vadd.f32 %v2558, %v2918
  %v2920 = vpop.f32.mrf.mxu0
  %v2921 = vpop.f32.mrf.mxu0
  %v2922 = vadd.f32 %v2561, %v2921
  %v2923 = vpop.f32.mrf.mxu0
  %2924 = vdwg.mxu0
  %s2925 = scalar_lea.vmem %s0, 24
  %v2926 = vld [vmem:[%s2925] sm:$0xf]
  %v2927 = vld [vmem:[%s2925 + $0x4] sm:$0xf]
  %v2928 = vld [vmem:[%s2925 + $0x8] sm:$0x1]
  %v2929 = vld [vmem:[%s2925 + $0xc] sm:$0xf]
  %v2930 = vld [vmem:[%s2925 + $0x10] sm:$0xf]
  %v2931 = vld [vmem:[%s2925 + $0x14] sm:$0x1]
  %v2932 = vld [vmem:[%s2925 + $0x18] sm:$0xf]
  %v2933 = vld [vmem:[%s2925 + $0x1c] sm:$0xf]
  %v2934 = vld [vmem:[%s2925 + $0x20] sm:$0x1]
  %v2935 = vld [vmem:[%s2925 + $0x24] sm:$0xf]
  %v2936 = vld [vmem:[%s2925 + $0x28] sm:$0xf]
  %v2937 = vld [vmem:[%s2925 + $0x2c] sm:$0x1]
  %v2938 = vld [vmem:[%s2925 + $0x30] sm:$0xf]
  %v2939 = vld [vmem:[%s2925 + $0x34] sm:$0xf]
  %v2940 = vld [vmem:[%s2925 + $0x38] sm:$0x1]
  %v2941 = vld [vmem:[%s2925 + $0x3c] sm:$0xf]
  %v2942 = vld [vmem:[%s2925 + $0x40] sm:$0xf]
  %v2943 = vld [vmem:[%s2925 + $0x44] sm:$0x1]
  %v2944 = vld [vmem:[%s2925 + $0x48] sm:$0xf]
  %v2945 = vld [vmem:[%s2925 + $0x4c] sm:$0xf]
  %v2946 = vld [vmem:[%s2925 + $0x50] sm:$0x1]
  %v2947 = vld [vmem:[%s2925 + $0x54] sm:$0xf]
  %v2948 = vld [vmem:[%s2925 + $0x58] sm:$0xf]
  %v2949 = vld [vmem:[%s2925 + $0x5c] sm:$0x1]
  %v2950 = vld [vmem:[%s2925 + $0x60] sm:$0xf]
  %v2951 = vld [vmem:[%s2925 + $0x64] sm:$0xf]
  %v2952 = vld [vmem:[%s2925 + $0x68] sm:$0x1]
  %v2953 = vld [vmem:[%s2925 + $0x6c] sm:$0xf]
  %v2954 = vld [vmem:[%s2925 + $0x70] sm:$0xf]
  %v2955 = vld [vmem:[%s2925 + $0x74] sm:$0x1]
  %v2956 = vld [vmem:[%s2925 + $0x78] sm:$0xf]
  %v2957 = vld [vmem:[%s2925 + $0x7c] sm:$0xf]
  %v2958 = vld [vmem:[%s2925 + $0x80] sm:$0x1]
  %v2959 = vld [vmem:[%s2925 + $0x84] sm:$0xf]
  %v2960 = vld [vmem:[%s2925 + $0x88] sm:$0xf]
  %v2961 = vld [vmem:[%s2925 + $0x8c] sm:$0x1]
  %v2962 = vld [vmem:[%s2925 + $0x90] sm:$0xf]
  %v2963 = vld [vmem:[%s2925 + $0x94] sm:$0xf]
  %v2964 = vld [vmem:[%s2925 + $0x98] sm:$0x1]
  %v2965 = vld [vmem:[%s2925 + $0x9c] sm:$0xf]
  %v2966 = vld [vmem:[%s2925 + $0xa0] sm:$0xf]
  %v2967 = vld [vmem:[%s2925 + $0xa4] sm:$0x1]
  %v2968 = vld [vmem:[%s2925 + $0xa8] sm:$0xf]
  %v2969 = vld [vmem:[%s2925 + $0xac] sm:$0xf]
  %v2970 = vld [vmem:[%s2925 + $0xb0] sm:$0x1]
  %v2971 = vld [vmem:[%s2925 + $0xb4] sm:$0xf]
  %v2972 = vld [vmem:[%s2925 + $0xb8] sm:$0xf]
  %v2973 = vld [vmem:[%s2925 + $0xbc] sm:$0x1]
  %v2974 = vld [vmem:[%s2925 + $0xd8] sm:$0xf]
  %v2975 = vld [vmem:[%s2925 + $0xdc] sm:$0xf]
  %v2976 = vld [vmem:[%s2925 + $0xe0] sm:$0x1]
  %v2977 = vld [vmem:[%s2925 + $0xe4] sm:$0xf]
  %v2978 = vld [vmem:[%s2925 + $0xe8] sm:$0xf]
  %v2979 = vld [vmem:[%s2925 + $0xec] sm:$0x1]
  %v2980 = vld [vmem:[%s2925 + $0xf0] sm:$0xf]
  %v2981 = vld [vmem:[%s2925 + $0xf4] sm:$0xf]
  %v2982 = vld [vmem:[%s2925 + $0xf8] sm:$0x1]
  %v2983 = vld [vmem:[%s2925 + $0xfc] sm:$0xf]
  %v2984 = vld [vmem:[%s2925 + $0x100] sm:$0xf]
  %v2985 = vld [vmem:[%s2925 + $0x104] sm:$0x1]
  %v2986 = vld [vmem:[%s2925 + $0x108] sm:$0xf]
  %v2987 = vld [vmem:[%s2925 + $0x10c] sm:$0xf]
  %v2988 = vld [vmem:[%s2925 + $0x110] sm:$0x1]
  %v2989 = vld [vmem:[%s2925 + $0x114] sm:$0xf]
  %v2990 = vld [vmem:[%s2925 + $0x118] sm:$0xf]
  %v2991 = vld [vmem:[%s2925 + $0x11c] sm:$0x1]
  %v2992 = vld [vmem:[%s2925 + $0x120] sm:$0xf]
  %v2993 = vld [vmem:[%s2925 + $0x124] sm:$0xf]
  %v2994 = vld [vmem:[%s2925 + $0x128] sm:$0x1]
  %v2995 = vld [vmem:[%s2925 + $0x12c] sm:$0xf]
  %v2996 = vld [vmem:[%s2925 + $0x130] sm:$0xf]
  %v2997 = vld [vmem:[%s2925 + $0x134] sm:$0x1]
  %v2998 = vld [vmem:[%s2925 + $0x138] sm:$0xf]
  %v2999 = vld [vmem:[%s2925 + $0x13c] sm:$0xf]
  %v3000 = vld [vmem:[%s2925 + $0x140] sm:$0x1]
  %v3001 = vld [vmem:[%s2925 + $0x144] sm:$0xf]
  %v3002 = vld [vmem:[%s2925 + $0x148] sm:$0xf]
  %v3003 = vld [vmem:[%s2925 + $0x14c] sm:$0x1]
  %v3004 = vld [vmem:[%s2925 + $0x150] sm:$0xf]
  %v3005 = vld [vmem:[%s2925 + $0x154] sm:$0xf]
  %v3006 = vld [vmem:[%s2925 + $0x158] sm:$0x1]
  %v3007 = vld [vmem:[%s2925 + $0x15c] sm:$0xf]
  %v3008 = vld [vmem:[%s2925 + $0x160] sm:$0xf]
  %v3009 = vld [vmem:[%s2925 + $0x164] sm:$0x1]
  %v3010 = vld [vmem:[%s2925 + $0x168] sm:$0xf]
  %v3011 = vld [vmem:[%s2925 + $0x16c] sm:$0xf]
  %v3012 = vld [vmem:[%s2925 + $0x170] sm:$0x1]
  %v3013 = vld [vmem:[%s2925 + $0x174] sm:$0xf]
  %v3014 = vld [vmem:[%s2925 + $0x178] sm:$0xf]
  %v3015 = vld [vmem:[%s2925 + $0x17c] sm:$0x1]
  %v3016 = vld [vmem:[%s2925 + $0x180] sm:$0xf]
  %v3017 = vld [vmem:[%s2925 + $0x184] sm:$0xf]
  %v3018 = vld [vmem:[%s2925 + $0x188] sm:$0x1]
  %v3019 = vld [vmem:[%s2925 + $0x18c] sm:$0xf]
  %v3020 = vld [vmem:[%s2925 + $0x190] sm:$0xf]
  %v3021 = vld [vmem:[%s2925 + $0x194] sm:$0x1]
  %v3086 = vunpack.c.l.b16 %v2926
  %v3087 = vunpack.c.l.b16 %v2927
  %v3088 = vunpack.c.l.b16 %v2929
  %v3089 = vunpack.c.l.b16 %v2930
  %v3090 = vunpack.c.l.b16 %v2932
  %v3091 = vunpack.c.l.b16 %v2933
  %v3092 = vunpack.c.l.b16 %v2935
  %v3093 = vunpack.c.l.b16 %v2936
  %v3094 = vunpack.c.l.b16 %v2938
  %v3095 = vunpack.c.l.b16 %v2939
  %v3096 = vunpack.c.l.b16 %v2941
  %v3097 = vunpack.c.l.b16 %v2942
  %v3098 = vunpack.c.l.b16 %v2944
  %v3099 = vunpack.c.l.b16 %v2945
  %v3100 = vunpack.c.l.b16 %v2947
  %v3101 = vunpack.c.l.b16 %v2948
  %v3102 = vunpack.c.l.b16 %v2950
  %v3103 = vunpack.c.l.b16 %v2951
  %v3104 = vunpack.c.l.b16 %v2953
  %v3105 = vunpack.c.l.b16 %v2954
  %v3106 = vunpack.c.l.b16 %v2956
  %v3107 = vunpack.c.l.b16 %v2957
  %v3108 = vunpack.c.l.b16 %v2959
  %v3109 = vunpack.c.l.b16 %v2960
  %v3110 = vunpack.c.l.b16 %v2962
  %v3111 = vunpack.c.l.b16 %v2963
  %v3112 = vunpack.c.l.b16 %v2965
  %v3113 = vunpack.c.l.b16 %v2966
  %v3114 = vunpack.c.l.b16 %v2968
  %v3115 = vunpack.c.l.b16 %v2969
  %v3116 = vunpack.c.l.b16 %v2971
  %v3117 = vunpack.c.l.b16 %v2972
  %v3118 = vunpack.c.l.b16 %v2974
  %v3119 = vunpack.c.l.b16 %v2975
  %v3120 = vunpack.c.l.b16 %v2977
  %v3121 = vunpack.c.l.b16 %v2978
  %v3122 = vunpack.c.l.b16 %v2980
  %v3123 = vunpack.c.l.b16 %v2981
  %v3124 = vunpack.c.l.b16 %v2983
  %v3125 = vunpack.c.l.b16 %v2984
  %v3126 = vunpack.c.l.b16 %v2986
  %v3127 = vunpack.c.l.b16 %v2987
  %v3128 = vunpack.c.l.b16 %v2989
  %v3129 = vunpack.c.l.b16 %v2990
  %v3130 = vunpack.c.l.b16 %v2992
  %v3131 = vunpack.c.l.b16 %v2993
  %v3132 = vunpack.c.l.b16 %v2995
  %v3133 = vunpack.c.l.b16 %v2996
  %v3134 = vunpack.c.l.b16 %v2998
  %v3135 = vunpack.c.l.b16 %v2999
  %v3136 = vunpack.c.l.b16 %v3001
  %v3137 = vunpack.c.l.b16 %v3002
  %v3138 = vunpack.c.l.b16 %v3004
  %v3139 = vunpack.c.l.b16 %v3005
  %v3140 = vunpack.c.l.b16 %v3007
  %v3141 = vunpack.c.l.b16 %v3008
  %v3142 = vunpack.c.l.b16 %v3010
  %v3143 = vunpack.c.l.b16 %v3011
  %v3144 = vunpack.c.l.b16 %v3013
  %v3145 = vunpack.c.l.b16 %v3014
  %v3146 = vunpack.c.l.b16 %v3016
  %v3147 = vunpack.c.l.b16 %v3017
  %v3148 = vunpack.c.l.b16 %v3019
  %v3149 = vunpack.c.l.b16 %v3020
  %v3150 = vpack.c.b16 %v3087, %v3086
  %v3151 = vpack.c.b16 %v3089, %v3088
  %v3152 = vpack.c.b16 %v3091, %v3090
  %v3153 = vpack.c.b16 %v3093, %v3092
  %v3154 = vpack.c.b16 %v3095, %v3094
  %v3155 = vpack.c.b16 %v3097, %v3096
  %v3156 = vpack.c.b16 %v3099, %v3098
  %v3157 = vpack.c.b16 %v3101, %v3100
  %v3158 = vpack.c.b16 %v3103, %v3102
  %v3159 = vpack.c.b16 %v3105, %v3104
  %v3160 = vpack.c.b16 %v3107, %v3106
  %v3161 = vpack.c.b16 %v3109, %v3108
  %v3162 = vpack.c.b16 %v3111, %v3110
  %v3163 = vpack.c.b16 %v3113, %v3112
  %v3164 = vpack.c.b16 %v3115, %v3114
  %v3165 = vpack.c.b16 %v3117, %v3116
  %v3166 = vpack.c.b16 %v3119, %v3118
  %v3167 = vpack.c.b16 %v3121, %v3120
  %v3168 = vpack.c.b16 %v3123, %v3122
  %v3169 = vpack.c.b16 %v3125, %v3124
  %v3170 = vpack.c.b16 %v3127, %v3126
  %v3171 = vpack.c.b16 %v3129, %v3128
  %v3172 = vpack.c.b16 %v3131, %v3130
  %v3173 = vpack.c.b16 %v3133, %v3132
  %v3174 = vpack.c.b16 %v3135, %v3134
  %v3175 = vpack.c.b16 %v3137, %v3136
  %v3176 = vpack.c.b16 %v3139, %v3138
  %v3177 = vpack.c.b16 %v3141, %v3140
  %v3178 = vpack.c.b16 %v3143, %v3142
  %v3179 = vpack.c.b16 %v3145, %v3144
  %v3180 = vpack.c.b16 %v3147, %v3146
  %v3181 = vpack.c.b16 %v3149, %v3148
  %v3214 = vunpack.c.l.b16 %v2928
  %v3215 = vunpack.c.l.b16 %v2931
  %v3216 = vunpack.c.l.b16 %v2934
  %v3217 = vunpack.c.l.b16 %v2937
  %v3218 = vunpack.c.l.b16 %v2940
  %v3219 = vunpack.c.l.b16 %v2943
  %v3220 = vunpack.c.l.b16 %v2946
  %v3221 = vunpack.c.l.b16 %v2949
  %v3222 = vunpack.c.l.b16 %v2952
  %v3223 = vunpack.c.l.b16 %v2955
  %v3224 = vunpack.c.l.b16 %v2958
  %v3225 = vunpack.c.l.b16 %v2961
  %v3226 = vunpack.c.l.b16 %v2964
  %v3227 = vunpack.c.l.b16 %v2967
  %v3228 = vunpack.c.l.b16 %v2970
  %v3229 = vunpack.c.l.b16 %v2973
  %v3230 = vunpack.c.l.b16 %v2976
  %v3231 = vunpack.c.l.b16 %v2979
  %v3232 = vunpack.c.l.b16 %v2982
  %v3233 = vunpack.c.l.b16 %v2985
  %v3234 = vunpack.c.l.b16 %v2988
  %v3235 = vunpack.c.l.b16 %v2991
  %v3236 = vunpack.c.l.b16 %v2994
  %v3237 = vunpack.c.l.b16 %v2997
  %v3238 = vunpack.c.l.b16 %v3000
  %v3239 = vunpack.c.l.b16 %v3003
  %v3240 = vunpack.c.l.b16 %v3006
  %v3241 = vunpack.c.l.b16 %v3009
  %v3242 = vunpack.c.l.b16 %v3012
  %v3243 = vunpack.c.l.b16 %v3015
  %v3244 = vunpack.c.l.b16 %v3018
  %v3245 = vunpack.c.l.b16 %v3021
  %v3246 = vpack.c.b16 %v3214, %v3214
  %v3247 = vpack.c.b16 %v3215, %v3215
  %v3248 = vpack.c.b16 %v3216, %v3216
  %v3249 = vpack.c.b16 %v3217, %v3217
  %v3250 = vpack.c.b16 %v3218, %v3218
  %v3251 = vpack.c.b16 %v3219, %v3219
  %v3252 = vpack.c.b16 %v3220, %v3220
  %v3253 = vpack.c.b16 %v3221, %v3221
  %v3254 = vpack.c.b16 %v3222, %v3222
  %v3255 = vpack.c.b16 %v3223, %v3223
  %v3256 = vpack.c.b16 %v3224, %v3224
  %v3257 = vpack.c.b16 %v3225, %v3225
  %v3258 = vpack.c.b16 %v3226, %v3226
  %v3259 = vpack.c.b16 %v3227, %v3227
  %v3260 = vpack.c.b16 %v3228, %v3228
  %v3261 = vpack.c.b16 %v3229, %v3229
  %v3262 = vpack.c.b16 %v3230, %v3230
  %v3263 = vpack.c.b16 %v3231, %v3231
  %v3264 = vpack.c.b16 %v3232, %v3232
  %v3265 = vpack.c.b16 %v3233, %v3233
  %v3266 = vpack.c.b16 %v3234, %v3234
  %v3267 = vpack.c.b16 %v3235, %v3235
  %v3268 = vpack.c.b16 %v3236, %v3236
  %v3269 = vpack.c.b16 %v3237, %v3237
  %v3270 = vpack.c.b16 %v3238, %v3238
  %v3271 = vpack.c.b16 %v3239, %v3239
  %v3272 = vpack.c.b16 %v3240, %v3240
  %v3273 = vpack.c.b16 %v3241, %v3241
  %v3274 = vpack.c.b16 %v3242, %v3242
  %v3275 = vpack.c.b16 %v3243, %v3243
  %v3276 = vpack.c.b16 %v3244, %v3244
  %v3277 = vpack.c.b16 %v3245, %v3245
  %v3279 = vshrl.u32 %v3150, 16
  %v3281 = vshll.u32 %v3150, 16
  %v3283 = vrot.slane %v3281, 1
  %v3284 = vor.u32 %v3279, %v3283
  %v3286 = vshll.u32 %v3246, 16
  %v3288 = vrot.slane %v3286, 1
  %v3289 = vsel %vm367, %v3284, %v3288
  %v3291 = vshrl.u32 %v3151, 16
  %v3293 = vshll.u32 %v3151, 16
  %v3295 = vrot.slane %v3293, 1
  %v3296 = vor.u32 %v3291, %v3295
  %v3298 = vshll.u32 %v3247, 16
  %v3300 = vrot.slane %v3298, 1
  %v3301 = vsel %vm367, %v3296, %v3300
  %v3303 = vshrl.u32 %v3152, 16
  %v3305 = vshll.u32 %v3152, 16
  %v3307 = vrot.slane %v3305, 1
  %v3308 = vor.u32 %v3303, %v3307
  %v3310 = vshll.u32 %v3248, 16
  %v3312 = vrot.slane %v3310, 1
  %v3313 = vsel %vm367, %v3308, %v3312
  %v3315 = vshrl.u32 %v3153, 16
  %v3317 = vshll.u32 %v3153, 16
  %v3319 = vrot.slane %v3317, 1
  %v3320 = vor.u32 %v3315, %v3319
  %v3322 = vshll.u32 %v3249, 16
  %v3324 = vrot.slane %v3322, 1
  %v3325 = vsel %vm367, %v3320, %v3324
  %v3327 = vshrl.u32 %v3154, 16
  %v3329 = vshll.u32 %v3154, 16
  %v3331 = vrot.slane %v3329, 1
  %v3332 = vor.u32 %v3327, %v3331
  %v3334 = vshll.u32 %v3250, 16
  %v3336 = vrot.slane %v3334, 1
  %v3337 = vsel %vm367, %v3332, %v3336
  %v3339 = vshrl.u32 %v3155, 16
  %v3341 = vshll.u32 %v3155, 16
  %v3343 = vrot.slane %v3341, 1
  %v3344 = vor.u32 %v3339, %v3343
  %v3346 = vshll.u32 %v3251, 16
  %v3348 = vrot.slane %v3346, 1
  %v3349 = vsel %vm367, %v3344, %v3348
  %v3351 = vshrl.u32 %v3156, 16
  %v3353 = vshll.u32 %v3156, 16
  %v3355 = vrot.slane %v3353, 1
  %v3356 = vor.u32 %v3351, %v3355
  %v3358 = vshll.u32 %v3252, 16
  %v3360 = vrot.slane %v3358, 1
  %v3361 = vsel %vm367, %v3356, %v3360
  %v3363 = vshrl.u32 %v3157, 16
  %v3365 = vshll.u32 %v3157, 16
  %v3367 = vrot.slane %v3365, 1
  %v3368 = vor.u32 %v3363, %v3367
  %v3370 = vshll.u32 %v3253, 16
  %v3372 = vrot.slane %v3370, 1
  %v3373 = vsel %vm367, %v3368, %v3372
  %v3375 = vshrl.u32 %v3158, 16
  %v3377 = vshll.u32 %v3158, 16
  %v3379 = vrot.slane %v3377, 1
  %v3380 = vor.u32 %v3375, %v3379
  %v3382 = vshll.u32 %v3254, 16
  %v3384 = vrot.slane %v3382, 1
  %v3385 = vsel %vm367, %v3380, %v3384
  %v3387 = vshrl.u32 %v3159, 16
  %v3389 = vshll.u32 %v3159, 16
  %v3391 = vrot.slane %v3389, 1
  %v3392 = vor.u32 %v3387, %v3391
  %v3394 = vshll.u32 %v3255, 16
  %v3396 = vrot.slane %v3394, 1
  %v3397 = vsel %vm367, %v3392, %v3396
  %v3399 = vshrl.u32 %v3160, 16
  %v3401 = vshll.u32 %v3160, 16
  %v3403 = vrot.slane %v3401, 1
  %v3404 = vor.u32 %v3399, %v3403
  %v3406 = vshll.u32 %v3256, 16
  %v3408 = vrot.slane %v3406, 1
  %v3409 = vsel %vm367, %v3404, %v3408
  %v3411 = vshrl.u32 %v3161, 16
  %v3413 = vshll.u32 %v3161, 16
  %v3415 = vrot.slane %v3413, 1
  %v3416 = vor.u32 %v3411, %v3415
  %v3418 = vshll.u32 %v3257, 16
  %v3420 = vrot.slane %v3418, 1
  %v3421 = vsel %vm367, %v3416, %v3420
  %v3423 = vshrl.u32 %v3162, 16
  %v3425 = vshll.u32 %v3162, 16
  %v3427 = vrot.slane %v3425, 1
  %v3428 = vor.u32 %v3423, %v3427
  %v3430 = vshll.u32 %v3258, 16
  %v3432 = vrot.slane %v3430, 1
  %v3433 = vsel %vm367, %v3428, %v3432
  %v3435 = vshrl.u32 %v3163, 16
  %v3437 = vshll.u32 %v3163, 16
  %v3439 = vrot.slane %v3437, 1
  %v3440 = vor.u32 %v3435, %v3439
  %v3442 = vshll.u32 %v3259, 16
  %v3444 = vrot.slane %v3442, 1
  %v3445 = vsel %vm367, %v3440, %v3444
  %v3447 = vshrl.u32 %v3164, 16
  %v3449 = vshll.u32 %v3164, 16
  %v3451 = vrot.slane %v3449, 1
  %v3452 = vor.u32 %v3447, %v3451
  %v3454 = vshll.u32 %v3260, 16
  %v3456 = vrot.slane %v3454, 1
  %v3457 = vsel %vm367, %v3452, %v3456
  %v3459 = vshrl.u32 %v3165, 16
  %v3461 = vshll.u32 %v3165, 16
  %v3463 = vrot.slane %v3461, 1
  %v3464 = vor.u32 %v3459, %v3463
  %v3466 = vshll.u32 %v3261, 16
  %v3468 = vrot.slane %v3466, 1
  %v3469 = vsel %vm367, %v3464, %v3468
  %v3471 = vshrl.u32 %v3166, 16
  %v3473 = vshll.u32 %v3166, 16
  %v3475 = vrot.slane %v3473, 1
  %v3476 = vor.u32 %v3471, %v3475
  %v3478 = vshll.u32 %v3262, 16
  %v3480 = vrot.slane %v3478, 1
  %v3481 = vsel %vm367, %v3476, %v3480
  %v3483 = vshrl.u32 %v3167, 16
  %v3485 = vshll.u32 %v3167, 16
  %v3487 = vrot.slane %v3485, 1
  %v3488 = vor.u32 %v3483, %v3487
  %v3490 = vshll.u32 %v3263, 16
  %v3492 = vrot.slane %v3490, 1
  %v3493 = vsel %vm367, %v3488, %v3492
  %v3495 = vshrl.u32 %v3168, 16
  %v3497 = vshll.u32 %v3168, 16
  %v3499 = vrot.slane %v3497, 1
  %v3500 = vor.u32 %v3495, %v3499
  %v3502 = vshll.u32 %v3264, 16
  %v3504 = vrot.slane %v3502, 1
  %v3505 = vsel %vm367, %v3500, %v3504
  %v3507 = vshrl.u32 %v3169, 16
  %v3509 = vshll.u32 %v3169, 16
  %v3511 = vrot.slane %v3509, 1
  %v3512 = vor.u32 %v3507, %v3511
  %v3514 = vshll.u32 %v3265, 16
  %v3516 = vrot.slane %v3514, 1
  %v3517 = vsel %vm367, %v3512, %v3516
  %v3519 = vshrl.u32 %v3170, 16
  %v3521 = vshll.u32 %v3170, 16
  %v3523 = vrot.slane %v3521, 1
  %v3524 = vor.u32 %v3519, %v3523
  %v3526 = vshll.u32 %v3266, 16
  %v3528 = vrot.slane %v3526, 1
  %v3529 = vsel %vm367, %v3524, %v3528
  %v3531 = vshrl.u32 %v3171, 16
  %v3533 = vshll.u32 %v3171, 16
  %v3535 = vrot.slane %v3533, 1
  %v3536 = vor.u32 %v3531, %v3535
  %v3538 = vshll.u32 %v3267, 16
  %v3540 = vrot.slane %v3538, 1
  %v3541 = vsel %vm367, %v3536, %v3540
  %v3543 = vshrl.u32 %v3172, 16
  %v3545 = vshll.u32 %v3172, 16
  %v3547 = vrot.slane %v3545, 1
  %v3548 = vor.u32 %v3543, %v3547
  %v3550 = vshll.u32 %v3268, 16
  %v3552 = vrot.slane %v3550, 1
  %v3553 = vsel %vm367, %v3548, %v3552
  %v3555 = vshrl.u32 %v3173, 16
  %v3557 = vshll.u32 %v3173, 16
  %v3559 = vrot.slane %v3557, 1
  %v3560 = vor.u32 %v3555, %v3559
  %v3562 = vshll.u32 %v3269, 16
  %v3564 = vrot.slane %v3562, 1
  %v3565 = vsel %vm367, %v3560, %v3564
  %v3567 = vshrl.u32 %v3174, 16
  %v3569 = vshll.u32 %v3174, 16
  %v3571 = vrot.slane %v3569, 1
  %v3572 = vor.u32 %v3567, %v3571
  %v3574 = vshll.u32 %v3270, 16
  %v3576 = vrot.slane %v3574, 1
  %v3577 = vsel %vm367, %v3572, %v3576
  %v3579 = vshrl.u32 %v3175, 16
  %v3581 = vshll.u32 %v3175, 16
  %v3583 = vrot.slane %v3581, 1
  %v3584 = vor.u32 %v3579, %v3583
  %v3586 = vshll.u32 %v3271, 16
  %v3588 = vrot.slane %v3586, 1
  %v3589 = vsel %vm367, %v3584, %v3588
  %v3591 = vshrl.u32 %v3176, 16
  %v3593 = vshll.u32 %v3176, 16
  %v3595 = vrot.slane %v3593, 1
  %v3596 = vor.u32 %v3591, %v3595
  %v3598 = vshll.u32 %v3272, 16
  %v3600 = vrot.slane %v3598, 1
  %v3601 = vsel %vm367, %v3596, %v3600
  %v3603 = vshrl.u32 %v3177, 16
  %v3605 = vshll.u32 %v3177, 16
  %v3607 = vrot.slane %v3605, 1
  %v3608 = vor.u32 %v3603, %v3607
  %v3610 = vshll.u32 %v3273, 16
  %v3612 = vrot.slane %v3610, 1
  %v3613 = vsel %vm367, %v3608, %v3612
  %v3615 = vshrl.u32 %v3178, 16
  %v3617 = vshll.u32 %v3178, 16
  %v3619 = vrot.slane %v3617, 1
  %v3620 = vor.u32 %v3615, %v3619
  %v3622 = vshll.u32 %v3274, 16
  %v3624 = vrot.slane %v3622, 1
  %v3625 = vsel %vm367, %v3620, %v3624
  %v3627 = vshrl.u32 %v3179, 16
  %v3629 = vshll.u32 %v3179, 16
  %v3631 = vrot.slane %v3629, 1
  %v3632 = vor.u32 %v3627, %v3631
  %v3634 = vshll.u32 %v3275, 16
  %v3636 = vrot.slane %v3634, 1
  %v3637 = vsel %vm367, %v3632, %v3636
  %v3639 = vshrl.u32 %v3180, 16
  %v3641 = vshll.u32 %v3180, 16
  %v3643 = vrot.slane %v3641, 1
  %v3644 = vor.u32 %v3639, %v3643
  %v3646 = vshll.u32 %v3276, 16
  %v3648 = vrot.slane %v3646, 1
  %v3649 = vsel %vm367, %v3644, %v3648
  %v3651 = vshrl.u32 %v3181, 16
  %v3653 = vshll.u32 %v3181, 16
  %v3655 = vrot.slane %v3653, 1
  %v3656 = vor.u32 %v3651, %v3655
  %v3658 = vshll.u32 %v3277, 16
  %v3660 = vrot.slane %v3658, 1
  %v3661 = vsel %vm367, %v3656, %v3660
  %3662 = vrot.lane.b32.xlu0 %v3289, 4
  %v3663 = vpop.permute.xlu0 %3662
  %3664 = vrot.lane.b32.xlu0 %v3301, 4
  %v3665 = vpop.permute.xlu0 %3664
  %3666 = vrot.lane.b32.xlu0 %v3313, 4
  %v3667 = vpop.permute.xlu0 %3666
  %3668 = vrot.lane.b32.xlu0 %v3325, 4
  %v3669 = vpop.permute.xlu0 %3668
  %3670 = vrot.lane.b32.xlu0 %v3337, 4
  %v3671 = vpop.permute.xlu0 %3670
  %3672 = vrot.lane.b32.xlu0 %v3349, 4
  %v3673 = vpop.permute.xlu0 %3672
  %3674 = vrot.lane.b32.xlu0 %v3361, 4
  %v3675 = vpop.permute.xlu0 %3674
  %3676 = vrot.lane.b32.xlu0 %v3373, 4
  %v3677 = vpop.permute.xlu0 %3676
  %3678 = vrot.lane.b32.xlu0 %v3385, 4
  %v3679 = vpop.permute.xlu0 %3678
  %3680 = vrot.lane.b32.xlu0 %v3397, 4
  %v3681 = vpop.permute.xlu0 %3680
  %3682 = vrot.lane.b32.xlu0 %v3409, 4
  %v3683 = vpop.permute.xlu0 %3682
  %3684 = vrot.lane.b32.xlu0 %v3421, 4
  %v3685 = vpop.permute.xlu0 %3684
  %3686 = vrot.lane.b32.xlu0 %v3433, 4
  %v3687 = vpop.permute.xlu0 %3686
  %3688 = vrot.lane.b32.xlu0 %v3445, 4
  %v3689 = vpop.permute.xlu0 %3688
  %3690 = vrot.lane.b32.xlu0 %v3457, 4
  %v3691 = vpop.permute.xlu0 %3690
  %3692 = vrot.lane.b32.xlu0 %v3469, 4
  %v3693 = vpop.permute.xlu0 %3692
  %3694 = vrot.lane.b32.xlu0 %v3481, 4
  %v3695 = vpop.permute.xlu0 %3694
  %3696 = vrot.lane.b32.xlu0 %v3493, 4
  %v3697 = vpop.permute.xlu0 %3696
  %3698 = vrot.lane.b32.xlu0 %v3505, 4
  %v3699 = vpop.permute.xlu0 %3698
  %3700 = vrot.lane.b32.xlu0 %v3517, 4
  %v3701 = vpop.permute.xlu0 %3700
  %3702 = vrot.lane.b32.xlu0 %v3529, 4
  %v3703 = vpop.permute.xlu0 %3702
  %3704 = vrot.lane.b32.xlu0 %v3541, 4
  %v3705 = vpop.permute.xlu0 %3704
  %3706 = vrot.lane.b32.xlu0 %v3553, 4
  %v3707 = vpop.permute.xlu0 %3706
  %3708 = vrot.lane.b32.xlu0 %v3565, 4
  %v3709 = vpop.permute.xlu0 %3708
  %3710 = vrot.lane.b32.xlu0 %v3577, 4
  %v3711 = vpop.permute.xlu0 %3710
  %3712 = vrot.lane.b32.xlu0 %v3589, 4
  %v3713 = vpop.permute.xlu0 %3712
  %3714 = vrot.lane.b32.xlu0 %v3601, 4
  %v3715 = vpop.permute.xlu0 %3714
  %3716 = vrot.lane.b32.xlu0 %v3613, 4
  %v3717 = vpop.permute.xlu0 %3716
  %3718 = vrot.lane.b32.xlu0 %v3625, 4
  %v3719 = vpop.permute.xlu0 %3718
  %3720 = vrot.lane.b32.xlu0 %v3637, 4
  %v3721 = vpop.permute.xlu0 %3720
  %3722 = vrot.lane.b32.xlu0 %v3649, 4
  %v3723 = vpop.permute.xlu0 %3722
  %3724 = vrot.lane.b32.xlu0 %v3661, 4
  %v3725 = vpop.permute.xlu0 %3724
  %v3726 = vrot.slane %v3150, 1
  %v3727 = vrot.slane %v3246, 1
  %v3728 = vsel %vm816, %v3726, %v3727
  %v3729 = vrot.slane %v3151, 1
  %v3730 = vrot.slane %v3247, 1
  %v3731 = vsel %vm816, %v3729, %v3730
  %v3732 = vrot.slane %v3152, 1
  %v3733 = vrot.slane %v3248, 1
  %v3734 = vsel %vm816, %v3732, %v3733
  %v3735 = vrot.slane %v3153, 1
  %v3736 = vrot.slane %v3249, 1
  %v3737 = vsel %vm816, %v3735, %v3736
  %v3738 = vrot.slane %v3154, 1
  %v3739 = vrot.slane %v3250, 1
  %v3740 = vsel %vm816, %v3738, %v3739
  %v3741 = vrot.slane %v3155, 1
  %v3742 = vrot.slane %v3251, 1
  %v3743 = vsel %vm816, %v3741, %v3742
  %v3744 = vrot.slane %v3156, 1
  %v3745 = vrot.slane %v3252, 1
  %v3746 = vsel %vm816, %v3744, %v3745
  %v3747 = vrot.slane %v3157, 1
  %v3748 = vrot.slane %v3253, 1
  %v3749 = vsel %vm816, %v3747, %v3748
  %v3750 = vrot.slane %v3158, 1
  %v3751 = vrot.slane %v3254, 1
  %v3752 = vsel %vm816, %v3750, %v3751
  %v3753 = vrot.slane %v3159, 1
  %v3754 = vrot.slane %v3255, 1
  %v3755 = vsel %vm816, %v3753, %v3754
  %v3756 = vrot.slane %v3160, 1
  %v3757 = vrot.slane %v3256, 1
  %v3758 = vsel %vm816, %v3756, %v3757
  %v3759 = vrot.slane %v3161, 1
  %v3760 = vrot.slane %v3257, 1
  %v3761 = vsel %vm816, %v3759, %v3760
  %v3762 = vrot.slane %v3162, 1
  %v3763 = vrot.slane %v3258, 1
  %v3764 = vsel %vm816, %v3762, %v3763
  %v3765 = vrot.slane %v3163, 1
  %v3766 = vrot.slane %v3259, 1
  %v3767 = vsel %vm816, %v3765, %v3766
  %v3768 = vrot.slane %v3164, 1
  %v3769 = vrot.slane %v3260, 1
  %v3770 = vsel %vm816, %v3768, %v3769
  %v3771 = vrot.slane %v3165, 1
  %v3772 = vrot.slane %v3261, 1
  %v3773 = vsel %vm816, %v3771, %v3772
  %v3774 = vrot.slane %v3166, 1
  %v3775 = vrot.slane %v3262, 1
  %v3776 = vsel %vm816, %v3774, %v3775
  %v3777 = vrot.slane %v3167, 1
  %v3778 = vrot.slane %v3263, 1
  %v3779 = vsel %vm816, %v3777, %v3778
  %v3780 = vrot.slane %v3168, 1
  %v3781 = vrot.slane %v3264, 1
  %v3782 = vsel %vm816, %v3780, %v3781
  %v3783 = vrot.slane %v3169, 1
  %v3784 = vrot.slane %v3265, 1
  %v3785 = vsel %vm816, %v3783, %v3784
  %v3786 = vrot.slane %v3170, 1
  %v3787 = vrot.slane %v3266, 1
  %v3788 = vsel %vm816, %v3786, %v3787
  %v3789 = vrot.slane %v3171, 1
  %v3790 = vrot.slane %v3267, 1
  %v3791 = vsel %vm816, %v3789, %v3790
  %v3792 = vrot.slane %v3172, 1
  %v3793 = vrot.slane %v3268, 1
  %v3794 = vsel %vm816, %v3792, %v3793
  %v3795 = vrot.slane %v3173, 1
  %v3796 = vrot.slane %v3269, 1
  %v3797 = vsel %vm816, %v3795, %v3796
  %v3798 = vrot.slane %v3174, 1
  %v3799 = vrot.slane %v3270, 1
  %v3800 = vsel %vm816, %v3798, %v3799
  %v3801 = vrot.slane %v3175, 1
  %v3802 = vrot.slane %v3271, 1
  %v3803 = vsel %vm816, %v3801, %v3802
  %v3804 = vrot.slane %v3176, 1
  %v3805 = vrot.slane %v3272, 1
  %v3806 = vsel %vm816, %v3804, %v3805
  %v3807 = vrot.slane %v3177, 1
  %v3808 = vrot.slane %v3273, 1
  %v3809 = vsel %vm816, %v3807, %v3808
  %v3810 = vrot.slane %v3178, 1
  %v3811 = vrot.slane %v3274, 1
  %v3812 = vsel %vm816, %v3810, %v3811
  %v3813 = vrot.slane %v3179, 1
  %v3814 = vrot.slane %v3275, 1
  %v3815 = vsel %vm816, %v3813, %v3814
  %v3816 = vrot.slane %v3180, 1
  %v3817 = vrot.slane %v3276, 1
  %v3818 = vsel %vm816, %v3816, %v3817
  %v3819 = vrot.slane %v3181, 1
  %v3820 = vrot.slane %v3277, 1
  %v3821 = vsel %vm816, %v3819, %v3820
  %3822 = vrot.lane.b32.xlu0 %v3728, 8
  %v3823 = vpop.permute.xlu0 %3822
  %3824 = vrot.lane.b32.xlu0 %v3731, 8
  %v3825 = vpop.permute.xlu0 %3824
  %3826 = vrot.lane.b32.xlu0 %v3734, 8
  %v3827 = vpop.permute.xlu0 %3826
  %3828 = vrot.lane.b32.xlu0 %v3737, 8
  %v3829 = vpop.permute.xlu0 %3828
  %3830 = vrot.lane.b32.xlu0 %v3740, 8
  %v3831 = vpop.permute.xlu0 %3830
  %3832 = vrot.lane.b32.xlu0 %v3743, 8
  %v3833 = vpop.permute.xlu0 %3832
  %3834 = vrot.lane.b32.xlu0 %v3746, 8
  %v3835 = vpop.permute.xlu0 %3834
  %3836 = vrot.lane.b32.xlu0 %v3749, 8
  %v3837 = vpop.permute.xlu0 %3836
  %3838 = vrot.lane.b32.xlu0 %v3752, 8
  %v3839 = vpop.permute.xlu0 %3838
  %3840 = vrot.lane.b32.xlu0 %v3755, 8
  %v3841 = vpop.permute.xlu0 %3840
  %3842 = vrot.lane.b32.xlu0 %v3758, 8
  %v3843 = vpop.permute.xlu0 %3842
  %3844 = vrot.lane.b32.xlu0 %v3761, 8
  %v3845 = vpop.permute.xlu0 %3844
  %3846 = vrot.lane.b32.xlu0 %v3764, 8
  %v3847 = vpop.permute.xlu0 %3846
  %3848 = vrot.lane.b32.xlu0 %v3767, 8
  %v3849 = vpop.permute.xlu0 %3848
  %3850 = vrot.lane.b32.xlu0 %v3770, 8
  %v3851 = vpop.permute.xlu0 %3850
  %3852 = vrot.lane.b32.xlu0 %v3773, 8
  %v3853 = vpop.permute.xlu0 %3852
  %3854 = vrot.lane.b32.xlu0 %v3776, 8
  %v3855 = vpop.permute.xlu0 %3854
  %3856 = vrot.lane.b32.xlu0 %v3779, 8
  %v3857 = vpop.permute.xlu0 %3856
  %3858 = vrot.lane.b32.xlu0 %v3782, 8
  %v3859 = vpop.permute.xlu0 %3858
  %3860 = vrot.lane.b32.xlu0 %v3785, 8
  %v3861 = vpop.permute.xlu0 %3860
  %3862 = vrot.lane.b32.xlu0 %v3788, 8
  %v3863 = vpop.permute.xlu0 %3862
  %3864 = vrot.lane.b32.xlu0 %v3791, 8
  %v3865 = vpop.permute.xlu0 %3864
  %3866 = vrot.lane.b32.xlu0 %v3794, 8
  %v3867 = vpop.permute.xlu0 %3866
  %3868 = vrot.lane.b32.xlu0 %v3797, 8
  %v3869 = vpop.permute.xlu0 %3868
  %3870 = vrot.lane.b32.xlu0 %v3800, 8
  %v3871 = vpop.permute.xlu0 %3870
  %3872 = vrot.lane.b32.xlu0 %v3803, 8
  %v3873 = vpop.permute.xlu0 %3872
  %3874 = vrot.lane.b32.xlu0 %v3806, 8
  %v3875 = vpop.permute.xlu0 %3874
  %3876 = vrot.lane.b32.xlu0 %v3809, 8
  %v3877 = vpop.permute.xlu0 %3876
  %3878 = vrot.lane.b32.xlu0 %v3812, 8
  %v3879 = vpop.permute.xlu0 %3878
  %3880 = vrot.lane.b32.xlu0 %v3815, 8
  %v3881 = vpop.permute.xlu0 %3880
  %3882 = vrot.lane.b32.xlu0 %v3818, 8
  %v3883 = vpop.permute.xlu0 %3882
  %3884 = vrot.lane.b32.xlu0 %v3821, 8
  %v3885 = vpop.permute.xlu0 %3884
  %v3887 = vsel %vm977, %v3150, %v3663
  %v3889 = vsel %vm977, %v3151, %v3665
  %v3891 = vsel %vm977, %v3152, %v3667
  %v3893 = vsel %vm977, %v3153, %v3669
  %v3895 = vsel %vm977, %v3154, %v3671
  %v3897 = vsel %vm977, %v3155, %v3673
  %v3899 = vsel %vm977, %v3156, %v3675
  %v3901 = vsel %vm977, %v3157, %v3677
  %v3903 = vsel %vm977, %v3158, %v3679
  %v3905 = vsel %vm977, %v3159, %v3681
  %v3907 = vsel %vm977, %v3160, %v3683
  %v3909 = vsel %vm977, %v3161, %v3685
  %v3911 = vsel %vm977, %v3162, %v3687
  %v3913 = vsel %vm977, %v3163, %v3689
  %v3915 = vsel %vm977, %v3164, %v3691
  %v3917 = vsel %vm977, %v3165, %v3693
  %v3919 = vsel %vm977, %v3166, %v3695
  %v3921 = vsel %vm977, %v3167, %v3697
  %v3923 = vsel %vm977, %v3168, %v3699
  %v3925 = vsel %vm977, %v3169, %v3701
  %v3927 = vsel %vm977, %v3170, %v3703
  %v3929 = vsel %vm977, %v3171, %v3705
  %v3931 = vsel %vm977, %v3172, %v3707
  %v3933 = vsel %vm977, %v3173, %v3709
  %v3935 = vsel %vm977, %v3174, %v3711
  %v3937 = vsel %vm977, %v3175, %v3713
  %v3939 = vsel %vm977, %v3176, %v3715
  %v3941 = vsel %vm977, %v3177, %v3717
  %v3943 = vsel %vm977, %v3178, %v3719
  %v3945 = vsel %vm977, %v3179, %v3721
  %v3947 = vsel %vm977, %v3180, %v3723
  %v3949 = vsel %vm977, %v3181, %v3725
  %v3951 = vsel %vm1042, %v3887, %v3823
  %v3953 = vsel %vm1042, %v3889, %v3825
  %v3955 = vsel %vm1042, %v3891, %v3827
  %v3957 = vsel %vm1042, %v3893, %v3829
  %v3959 = vsel %vm1042, %v3895, %v3831
  %v3961 = vsel %vm1042, %v3897, %v3833
  %v3963 = vsel %vm1042, %v3899, %v3835
  %v3965 = vsel %vm1042, %v3901, %v3837
  %v3967 = vsel %vm1042, %v3903, %v3839
  %v3969 = vsel %vm1042, %v3905, %v3841
  %v3971 = vsel %vm1042, %v3907, %v3843
  %v3973 = vsel %vm1042, %v3909, %v3845
  %v3975 = vsel %vm1042, %v3911, %v3847
  %v3977 = vsel %vm1042, %v3913, %v3849
  %v3979 = vsel %vm1042, %v3915, %v3851
  %v3981 = vsel %vm1042, %v3917, %v3853
  %v3983 = vsel %vm1042, %v3919, %v3855
  %v3985 = vsel %vm1042, %v3921, %v3857
  %v3987 = vsel %vm1042, %v3923, %v3859
  %v3989 = vsel %vm1042, %v3925, %v3861
  %v3991 = vsel %vm1042, %v3927, %v3863
  %v3993 = vsel %vm1042, %v3929, %v3865
  %v3995 = vsel %vm1042, %v3931, %v3867
  %v3997 = vsel %vm1042, %v3933, %v3869
  %v3999 = vsel %vm1042, %v3935, %v3871
  %v4001 = vsel %vm1042, %v3937, %v3873
  %v4003 = vsel %vm1042, %v3939, %v3875
  %v4005 = vsel %vm1042, %v3941, %v3877
  %v4007 = vsel %vm1042, %v3943, %v3879
  %v4009 = vsel %vm1042, %v3945, %v3881
  %v4011 = vsel %vm1042, %v3947, %v3883
  %v4013 = vsel %vm1042, %v3949, %v3885
  %s4014 = scalar_lea.vmem %s1, 16
  %v4015 = vld [vmem:[%s4014] sm:$0xf]
  %v4016 = vld [vmem:[%s4014 + $0x4] sm:$0x3]
  %v4019 = vunpack.c.l.b16 %v4015
  %v4020 = vunpack.c.l.b16 %v4016
  %v4021 = vpack.c.b16 %v4020, %v4019
  %v4022 = vsel %vm2206, %v3951, 0
  %v4024 = vsel %vm2206, %v3953, 0
  %v4026 = vsel %vm2206, %v3955, 0
  %v4028 = vsel %vm2206, %v3957, 0
  %v4030 = vsel %vm2206, %v3959, 0
  %v4032 = vsel %vm2206, %v3961, 0
  %v4034 = vsel %vm2206, %v3963, 0
  %v4036 = vsel %vm2206, %v3965, 0
  %v4038 = vsel %vm2206, %v3967, 0
  %v4040 = vsel %vm2206, %v3969, 0
  %v4042 = vsel %vm2206, %v3971, 0
  %v4044 = vsel %vm2206, %v3973, 0
  %v4046 = vsel %vm2206, %v3975, 0
  %v4048 = vsel %vm2206, %v3977, 0
  %v4050 = vsel %vm2206, %v3979, 0
  %v4052 = vsel %vm2206, %v3981, 0
  %v4054 = vsel %vm2206, %v3983, 0
  %v4056 = vsel %vm2206, %v3985, 0
  %v4058 = vsel %vm2206, %v3987, 0
  %v4060 = vsel %vm2206, %v3989, 0
  %v4062 = vsel %vm2206, %v3991, 0
  %v4064 = vsel %vm2206, %v3993, 0
  %v4066 = vsel %vm2206, %v3995, 0
  %v4068 = vsel %vm2206, %v3997, 0
  %v4070 = vsel %vm2206, %v3999, 0
  %v4072 = vsel %vm2206, %v4001, 0
  %v4074 = vsel %vm2206, %v4003, 0
  %v4076 = vsel %vm2206, %v4005, 0
  %v4078 = vsel %vm2206, %v4007, 0
  %v4080 = vsel %vm2206, %v4009, 0
  %v4082 = vsel %vm2206, %v4011, 0
  %v4084 = vsel %vm2206, %v4013, 0
  %v4087 = vsel %vm2271, %v4021, 0
  %4089 = vmatprep.subr.bf16.mxu0 0
  %4090 = vmatpush1.bf16.msra.mxu0 0
  %4091 = vmatprep.subr.bf16.mxu0 0
  %4092 = vmatpush1.bf16.msra.mxu0 0
  %4093 = vmatprep.subr.bf16.mxu0 0
  %4094 = vmatpush1.bf16.msra.mxu0 0
  %4095 = vmatprep.subr.bf16.mxu0 0
  %4096 = vmatpush1.bf16.msra.mxu0 0
  %4097 = vmatprep.subr.bf16.mxu0 0
  %4098 = vmatpush1.bf16.msra.mxu0 0
  %4099 = vmatprep.subr.bf16.mxu0 0
  %4100 = vmatpush1.bf16.msra.mxu0 0
  %4101 = vmatprep.subr.bf16.mxu0 0
  %4102 = vmatpush1.bf16.msra.mxu0 0
  %4103 = vmatprep.subr.bf16.mxu0 0
  %4104 = vmatpush1.bf16.msra.mxu0 %v4087
  %4105 = vmatprep.subr.bf16.mxu0 0
  %4106 = vmatpush2.bf16.msra.mxu0 0
  %4107 = vmatprep.subr.bf16.mxu0 0
  %4108 = vmatpush2.bf16.msra.mxu0 0
  %4109 = vmatprep.subr.bf16.mxu0 0
  %4110 = vmatpush2.bf16.msra.mxu0 0
  %4111 = vmatprep.subr.bf16.mxu0 0
  %4112 = vmatpush2.bf16.msra.mxu0 0
  %4113 = vmatprep.subr.bf16.mxu0 0
  %4114 = vmatpush2.bf16.msra.mxu0 0
  %4115 = vmatprep.subr.bf16.mxu0 0
  %4116 = vmatpush2.bf16.msra.mxu0 0
  %4117 = vmatprep.subr.bf16.mxu0 0
  %4118 = vmatpush2.bf16.msra.mxu0 0
  %4119 = vmatprep.subr.bf16.mxu0 0
  %4120 = vmatpush2.bf16.msra.mxu0 0
  %4121 = vmatprep.mubr.bf16.mxu0 0
  %4122 = vmatmul.mubr.bf16.gmra.mxu0 %v4022
  %v4123 = vpop.f32.mrf.mxu0
  %v4124 = vadd.f32 0.0, %v4123
  %v4125 = vpop.f32.mrf.mxu0
  %v4126 = vpop.f32.mrf.mxu0
  %v4127 = vadd.f32 0.0, %v4126
  %v4128 = vpop.f32.mrf.mxu0
  %4129 = vmatprep.mubr.bf16.mxu0 0
  %4130 = vmatmul.mubr.bf16.gmra.mxu0 %v4024
  %v4131 = vpop.f32.mrf.mxu0
  %v4132 = vadd.f32 0.0, %v4131
  %v4133 = vpop.f32.mrf.mxu0
  %v4134 = vpop.f32.mrf.mxu0
  %v4135 = vadd.f32 0.0, %v4134
  %v4136 = vpop.f32.mrf.mxu0
  %4137 = vmatprep.mubr.bf16.mxu0 0
  %4138 = vmatmul.mubr.bf16.gmra.mxu0 %v4026
  %v4139 = vpop.f32.mrf.mxu0
  %v4140 = vadd.f32 0.0, %v4139
  %v4141 = vpop.f32.mrf.mxu0
  %v4142 = vpop.f32.mrf.mxu0
  %v4143 = vadd.f32 0.0, %v4142
  %v4144 = vpop.f32.mrf.mxu0
  %4145 = vmatprep.mubr.bf16.mxu0 0
  %4146 = vmatmul.mubr.bf16.gmra.mxu0 %v4028
  %v4147 = vpop.f32.mrf.mxu0
  %v4148 = vadd.f32 0.0, %v4147
  %v4149 = vpop.f32.mrf.mxu0
  %v4150 = vpop.f32.mrf.mxu0
  %v4151 = vadd.f32 0.0, %v4150
  %v4152 = vpop.f32.mrf.mxu0
  %4153 = vmatprep.mubr.bf16.mxu0 0
  %4154 = vmatmul.mubr.bf16.gmra.mxu0 %v4030
  %v4155 = vpop.f32.mrf.mxu0
  %v4156 = vadd.f32 0.0, %v4155
  %v4157 = vpop.f32.mrf.mxu0
  %v4158 = vpop.f32.mrf.mxu0
  %v4159 = vadd.f32 0.0, %v4158
  %v4160 = vpop.f32.mrf.mxu0
  %4161 = vmatprep.mubr.bf16.mxu0 0
  %4162 = vmatmul.mubr.bf16.gmra.mxu0 %v4032
  %v4163 = vpop.f32.mrf.mxu0
  %v4164 = vadd.f32 0.0, %v4163
  %v4165 = vpop.f32.mrf.mxu0
  %v4166 = vpop.f32.mrf.mxu0
  %v4167 = vadd.f32 0.0, %v4166
  %v4168 = vpop.f32.mrf.mxu0
  %4169 = vmatprep.mubr.bf16.mxu0 0
  %4170 = vmatmul.mubr.bf16.gmra.mxu0 %v4034
  %v4171 = vpop.f32.mrf.mxu0
  %v4172 = vadd.f32 0.0, %v4171
  %v4173 = vpop.f32.mrf.mxu0
  %v4174 = vpop.f32.mrf.mxu0
  %v4175 = vadd.f32 0.0, %v4174
  %v4176 = vpop.f32.mrf.mxu0
  %4177 = vmatprep.mubr.bf16.mxu0 0
  %4178 = vmatmul.mubr.bf16.gmra.mxu0 %v4036
  %v4179 = vpop.f32.mrf.mxu0
  %v4180 = vadd.f32 0.0, %v4179
  %v4181 = vpop.f32.mrf.mxu0
  %v4182 = vpop.f32.mrf.mxu0
  %v4183 = vadd.f32 0.0, %v4182
  %v4184 = vpop.f32.mrf.mxu0
  %4185 = vmatprep.mubr.bf16.mxu0 0
  %4186 = vmatmul.mubr.bf16.gmra.mxu0 %v4038
  %v4187 = vpop.f32.mrf.mxu0
  %v4188 = vadd.f32 0.0, %v4187
  %v4189 = vpop.f32.mrf.mxu0
  %v4190 = vpop.f32.mrf.mxu0
  %v4191 = vadd.f32 0.0, %v4190
  %v4192 = vpop.f32.mrf.mxu0
  %4193 = vmatprep.mubr.bf16.mxu0 0
  %4194 = vmatmul.mubr.bf16.gmra.mxu0 %v4040
  %v4195 = vpop.f32.mrf.mxu0
  %v4196 = vadd.f32 0.0, %v4195
  %v4197 = vpop.f32.mrf.mxu0
  %v4198 = vpop.f32.mrf.mxu0
  %v4199 = vadd.f32 0.0, %v4198
  %v4200 = vpop.f32.mrf.mxu0
  %4201 = vmatprep.mubr.bf16.mxu0 0
  %4202 = vmatmul.mubr.bf16.gmra.mxu0 %v4042
  %v4203 = vpop.f32.mrf.mxu0
  %v4204 = vadd.f32 0.0, %v4203
  %v4205 = vpop.f32.mrf.mxu0
  %v4206 = vpop.f32.mrf.mxu0
  %v4207 = vadd.f32 0.0, %v4206
  %v4208 = vpop.f32.mrf.mxu0
  %4209 = vmatprep.mubr.bf16.mxu0 0
  %4210 = vmatmul.mubr.bf16.gmra.mxu0 %v4044
  %v4211 = vpop.f32.mrf.mxu0
  %v4212 = vadd.f32 0.0, %v4211
  %v4213 = vpop.f32.mrf.mxu0
  %v4214 = vpop.f32.mrf.mxu0
  %v4215 = vadd.f32 0.0, %v4214
  %v4216 = vpop.f32.mrf.mxu0
  %4217 = vmatprep.mubr.bf16.mxu0 0
  %4218 = vmatmul.mubr.bf16.gmra.mxu0 %v4046
  %v4219 = vpop.f32.mrf.mxu0
  %v4220 = vadd.f32 0.0, %v4219
  %v4221 = vpop.f32.mrf.mxu0
  %v4222 = vpop.f32.mrf.mxu0
  %v4223 = vadd.f32 0.0, %v4222
  %v4224 = vpop.f32.mrf.mxu0
  %4225 = vmatprep.mubr.bf16.mxu0 0
  %4226 = vmatmul.mubr.bf16.gmra.mxu0 %v4048
  %v4227 = vpop.f32.mrf.mxu0
  %v4228 = vadd.f32 0.0, %v4227
  %v4229 = vpop.f32.mrf.mxu0
  %v4230 = vpop.f32.mrf.mxu0
  %v4231 = vadd.f32 0.0, %v4230
  %v4232 = vpop.f32.mrf.mxu0
  %4233 = vmatprep.mubr.bf16.mxu0 0
  %4234 = vmatmul.mubr.bf16.gmra.mxu0 %v4050
  %v4235 = vpop.f32.mrf.mxu0
  %v4236 = vadd.f32 0.0, %v4235
  %v4237 = vpop.f32.mrf.mxu0
  %v4238 = vpop.f32.mrf.mxu0
  %v4239 = vadd.f32 0.0, %v4238
  %v4240 = vpop.f32.mrf.mxu0
  %4241 = vmatprep.mubr.bf16.mxu0 0
  %4242 = vmatmul.mubr.bf16.gmra.mxu0 %v4052
  %v4243 = vpop.f32.mrf.mxu0
  %v4244 = vadd.f32 0.0, %v4243
  %v4245 = vpop.f32.mrf.mxu0
  %v4246 = vpop.f32.mrf.mxu0
  %v4247 = vadd.f32 0.0, %v4246
  %v4248 = vpop.f32.mrf.mxu0
  %4249 = vmatprep.mubr.bf16.mxu0 0
  %4250 = vmatmul.mubr.bf16.gmra.mxu0 %v4054
  %v4251 = vpop.f32.mrf.mxu0
  %v4252 = vadd.f32 0.0, %v4251
  %v4253 = vpop.f32.mrf.mxu0
  %v4254 = vpop.f32.mrf.mxu0
  %v4255 = vadd.f32 0.0, %v4254
  %v4256 = vpop.f32.mrf.mxu0
  %4257 = vmatprep.mubr.bf16.mxu0 0
  %4258 = vmatmul.mubr.bf16.gmra.mxu0 %v4056
  %v4259 = vpop.f32.mrf.mxu0
  %v4260 = vadd.f32 0.0, %v4259
  %v4261 = vpop.f32.mrf.mxu0
  %v4262 = vpop.f32.mrf.mxu0
  %v4263 = vadd.f32 0.0, %v4262
  %v4264 = vpop.f32.mrf.mxu0
  %4265 = vmatprep.mubr.bf16.mxu0 0
  %4266 = vmatmul.mubr.bf16.gmra.mxu0 %v4058
  %v4267 = vpop.f32.mrf.mxu0
  %v4268 = vadd.f32 0.0, %v4267
  %v4269 = vpop.f32.mrf.mxu0
  %v4270 = vpop.f32.mrf.mxu0
  %v4271 = vadd.f32 0.0, %v4270
  %v4272 = vpop.f32.mrf.mxu0
  %4273 = vmatprep.mubr.bf16.mxu0 0
  %4274 = vmatmul.mubr.bf16.gmra.mxu0 %v4060
  %v4275 = vpop.f32.mrf.mxu0
  %v4276 = vadd.f32 0.0, %v4275
  %v4277 = vpop.f32.mrf.mxu0
  %v4278 = vpop.f32.mrf.mxu0
  %v4279 = vadd.f32 0.0, %v4278
  %v4280 = vpop.f32.mrf.mxu0
  %4281 = vmatprep.mubr.bf16.mxu0 0
  %4282 = vmatmul.mubr.bf16.gmra.mxu0 %v4062
  %v4283 = vpop.f32.mrf.mxu0
  %v4284 = vadd.f32 0.0, %v4283
  %v4285 = vpop.f32.mrf.mxu0
  %v4286 = vpop.f32.mrf.mxu0
  %v4287 = vadd.f32 0.0, %v4286
  %v4288 = vpop.f32.mrf.mxu0
  %4289 = vmatprep.mubr.bf16.mxu0 0
  %4290 = vmatmul.mubr.bf16.gmra.mxu0 %v4064
  %v4291 = vpop.f32.mrf.mxu0
  %v4292 = vadd.f32 0.0, %v4291
  %v4293 = vpop.f32.mrf.mxu0
  %v4294 = vpop.f32.mrf.mxu0
  %v4295 = vadd.f32 0.0, %v4294
  %v4296 = vpop.f32.mrf.mxu0
  %4297 = vmatprep.mubr.bf16.mxu0 0
  %4298 = vmatmul.mubr.bf16.gmra.mxu0 %v4066
  %v4299 = vpop.f32.mrf.mxu0
  %v4300 = vadd.f32 0.0, %v4299
  %v4301 = vpop.f32.mrf.mxu0
  %v4302 = vpop.f32.mrf.mxu0
  %v4303 = vadd.f32 0.0, %v4302
  %v4304 = vpop.f32.mrf.mxu0
  %4305 = vmatprep.mubr.bf16.mxu0 0
  %4306 = vmatmul.mubr.bf16.gmra.mxu0 %v4068
  %v4307 = vpop.f32.mrf.mxu0
  %v4308 = vadd.f32 0.0, %v4307
  %v4309 = vpop.f32.mrf.mxu0
  %v4310 = vpop.f32.mrf.mxu0
  %v4311 = vadd.f32 0.0, %v4310
  %v4312 = vpop.f32.mrf.mxu0
  %4313 = vmatprep.mubr.bf16.mxu0 0
  %4314 = vmatmul.mubr.bf16.gmra.mxu0 %v4070
  %v4315 = vpop.f32.mrf.mxu0
  %v4316 = vadd.f32 0.0, %v4315
  %v4317 = vpop.f32.mrf.mxu0
  %v4318 = vpop.f32.mrf.mxu0
  %v4319 = vadd.f32 0.0, %v4318
  %v4320 = vpop.f32.mrf.mxu0
  %4321 = vmatprep.mubr.bf16.mxu0 0
  %4322 = vmatmul.mubr.bf16.gmra.mxu0 %v4072
  %v4323 = vpop.f32.mrf.mxu0
  %v4324 = vadd.f32 0.0, %v4323
  %v4325 = vpop.f32.mrf.mxu0
  %v4326 = vpop.f32.mrf.mxu0
  %v4327 = vadd.f32 0.0, %v4326
  %v4328 = vpop.f32.mrf.mxu0
  %4329 = vmatprep.mubr.bf16.mxu0 0
  %4330 = vmatmul.mubr.bf16.gmra.mxu0 %v4074
  %v4331 = vpop.f32.mrf.mxu0
  %v4332 = vadd.f32 0.0, %v4331
  %v4333 = vpop.f32.mrf.mxu0
  %v4334 = vpop.f32.mrf.mxu0
  %v4335 = vadd.f32 0.0, %v4334
  %v4336 = vpop.f32.mrf.mxu0
  %4337 = vmatprep.mubr.bf16.mxu0 0
  %4338 = vmatmul.mubr.bf16.gmra.mxu0 %v4076
  %v4339 = vpop.f32.mrf.mxu0
  %v4340 = vadd.f32 0.0, %v4339
  %v4341 = vpop.f32.mrf.mxu0
  %v4342 = vpop.f32.mrf.mxu0
  %v4343 = vadd.f32 0.0, %v4342
  %v4344 = vpop.f32.mrf.mxu0
  %4345 = vmatprep.mubr.bf16.mxu0 0
  %4346 = vmatmul.mubr.bf16.gmra.mxu0 %v4078
  %v4347 = vpop.f32.mrf.mxu0
  %v4348 = vadd.f32 0.0, %v4347
  %v4349 = vpop.f32.mrf.mxu0
  %v4350 = vpop.f32.mrf.mxu0
  %v4351 = vadd.f32 0.0, %v4350
  %v4352 = vpop.f32.mrf.mxu0
  %4353 = vmatprep.mubr.bf16.mxu0 0
  %4354 = vmatmul.mubr.bf16.gmra.mxu0 %v4080
  %v4355 = vpop.f32.mrf.mxu0
  %v4356 = vadd.f32 0.0, %v4355
  %v4357 = vpop.f32.mrf.mxu0
  %v4358 = vpop.f32.mrf.mxu0
  %v4359 = vadd.f32 0.0, %v4358
  %v4360 = vpop.f32.mrf.mxu0
  %4361 = vmatprep.mubr.bf16.mxu0 0
  %4362 = vmatmul.mubr.bf16.gmra.mxu0 %v4082
  %v4363 = vpop.f32.mrf.mxu0
  %v4364 = vadd.f32 0.0, %v4363
  %v4365 = vpop.f32.mrf.mxu0
  %v4366 = vpop.f32.mrf.mxu0
  %v4367 = vadd.f32 0.0, %v4366
  %v4368 = vpop.f32.mrf.mxu0
  %4369 = vmatprep.mubr.bf16.mxu0 0
  %4370 = vmatmul.mubr.bf16.gmra.mxu0 %v4084
  %v4371 = vpop.f32.mrf.mxu0
  %v4372 = vadd.f32 0.0, %v4371
  %v4373 = vpop.f32.mrf.mxu0
  %v4374 = vpop.f32.mrf.mxu0
  %v4375 = vadd.f32 0.0, %v4374
  %v4376 = vpop.f32.mrf.mxu0
  %4377 = vdwg.mxu0
  %v4378 = vadd.f32 %v2671, %v4124
  %v4379 = vadd.f32 %v2674, %v4127
  %v4380 = vadd.f32 %v2679, %v4132
  %v4381 = vadd.f32 %v2682, %v4135
  %v4382 = vadd.f32 %v2687, %v4140
  %v4383 = vadd.f32 %v2690, %v4143
  %v4384 = vadd.f32 %v2695, %v4148
  %v4385 = vadd.f32 %v2698, %v4151
  %v4386 = vadd.f32 %v2703, %v4156
  %v4387 = vadd.f32 %v2706, %v4159
  %v4388 = vadd.f32 %v2711, %v4164
  %v4389 = vadd.f32 %v2714, %v4167
  %v4390 = vadd.f32 %v2719, %v4172
  %v4391 = vadd.f32 %v2722, %v4175
  %v4392 = vadd.f32 %v2727, %v4180
  %v4393 = vadd.f32 %v2730, %v4183
  %v4394 = vadd.f32 %v2735, %v4188
  %v4395 = vadd.f32 %v2738, %v4191
  %v4396 = vadd.f32 %v2743, %v4196
  %v4397 = vadd.f32 %v2746, %v4199
  %v4398 = vadd.f32 %v2751, %v4204
  %v4399 = vadd.f32 %v2754, %v4207
  %v4400 = vadd.f32 %v2759, %v4212
  %v4401 = vadd.f32 %v2762, %v4215
  %v4402 = vadd.f32 %v2767, %v4220
  %v4403 = vadd.f32 %v2770, %v4223
  %v4404 = vadd.f32 %v2775, %v4228
  %v4405 = vadd.f32 %v2778, %v4231
  %v4406 = vadd.f32 %v2783, %v4236
  %v4407 = vadd.f32 %v2786, %v4239
  %v4408 = vadd.f32 %v2791, %v4244
  %v4409 = vadd.f32 %v2794, %v4247
  %v4410 = vadd.f32 %v2799, %v4252
  %v4411 = vadd.f32 %v2802, %v4255
  %v4412 = vadd.f32 %v2807, %v4260
  %v4413 = vadd.f32 %v2810, %v4263
  %v4414 = vadd.f32 %v2815, %v4268
  %v4415 = vadd.f32 %v2818, %v4271
  %v4416 = vadd.f32 %v2823, %v4276
  %v4417 = vadd.f32 %v2826, %v4279
  %v4418 = vadd.f32 %v2831, %v4284
  %v4419 = vadd.f32 %v2834, %v4287
  %v4420 = vadd.f32 %v2839, %v4292
  %v4421 = vadd.f32 %v2842, %v4295
  %v4422 = vadd.f32 %v2847, %v4300
  %v4423 = vadd.f32 %v2850, %v4303
  %v4424 = vadd.f32 %v2855, %v4308
  %v4425 = vadd.f32 %v2858, %v4311
  %v4426 = vadd.f32 %v2863, %v4316
  %v4427 = vadd.f32 %v2866, %v4319
  %v4428 = vadd.f32 %v2871, %v4324
  %v4429 = vadd.f32 %v2874, %v4327
  %v4430 = vadd.f32 %v2879, %v4332
  %v4431 = vadd.f32 %v2882, %v4335
  %v4432 = vadd.f32 %v2887, %v4340
  %v4433 = vadd.f32 %v2890, %v4343
  %v4434 = vadd.f32 %v2895, %v4348
  %v4435 = vadd.f32 %v2898, %v4351
  %v4436 = vadd.f32 %v2903, %v4356
  %v4437 = vadd.f32 %v2906, %v4359
  %v4438 = vadd.f32 %v2911, %v4364
  %v4439 = vadd.f32 %v2914, %v4367
  %v4440 = vadd.f32 %v2919, %v4372
  %v4441 = vadd.f32 %v2922, %v4375
  %v4442 = vld [vmem:[%s2] sm:$0x1]
  %v4444 = vlaneseq
  %v4445 = vshrl.u32 %v4444, 7
  %v4446 = vsub.s32 0, %v4445
  %v4447 = vrot.slane %v4442, %v4446
  %v4449 = vadd.f32 %v4378, %v4447
  %v4450 = vadd.f32 %v4379, %v4447
  %v4451 = vadd.f32 %v4380, %v4447
  %v4452 = vadd.f32 %v4381, %v4447
  %v4453 = vadd.f32 %v4382, %v4447
  %v4454 = vadd.f32 %v4383, %v4447
  %v4455 = vadd.f32 %v4384, %v4447
  %v4456 = vadd.f32 %v4385, %v4447
  %v4457 = vadd.f32 %v4386, %v4447
  %v4458 = vadd.f32 %v4387, %v4447
  %v4459 = vadd.f32 %v4388, %v4447
  %v4460 = vadd.f32 %v4389, %v4447
  %v4461 = vadd.f32 %v4390, %v4447
  %v4462 = vadd.f32 %v4391, %v4447
  %v4463 = vadd.f32 %v4392, %v4447
  %v4464 = vadd.f32 %v4393, %v4447
  %v4465 = vadd.f32 %v4394, %v4447
  %v4466 = vadd.f32 %v4395, %v4447
  %v4467 = vadd.f32 %v4396, %v4447
  %v4468 = vadd.f32 %v4397, %v4447
  %v4469 = vadd.f32 %v4398, %v4447
  %v4470 = vadd.f32 %v4399, %v4447
  %v4471 = vadd.f32 %v4400, %v4447
  %v4472 = vadd.f32 %v4401, %v4447
  %v4473 = vadd.f32 %v4402, %v4447
  %v4474 = vadd.f32 %v4403, %v4447
  %v4475 = vadd.f32 %v4404, %v4447
  %v4476 = vadd.f32 %v4405, %v4447
  %v4477 = vadd.f32 %v4406, %v4447
  %v4478 = vadd.f32 %v4407, %v4447
  %v4479 = vadd.f32 %v4408, %v4447
  %v4480 = vadd.f32 %v4409, %v4447
  %v4481 = vadd.f32 %v4410, %v4447
  %v4482 = vadd.f32 %v4411, %v4447
  %v4483 = vadd.f32 %v4412, %v4447
  %v4484 = vadd.f32 %v4413, %v4447
  %v4485 = vadd.f32 %v4414, %v4447
  %v4486 = vadd.f32 %v4415, %v4447
  %v4487 = vadd.f32 %v4416, %v4447
  %v4488 = vadd.f32 %v4417, %v4447
  %v4489 = vadd.f32 %v4418, %v4447
  %v4490 = vadd.f32 %v4419, %v4447
  %v4491 = vadd.f32 %v4420, %v4447
  %v4492 = vadd.f32 %v4421, %v4447
  %v4493 = vadd.f32 %v4422, %v4447
  %v4494 = vadd.f32 %v4423, %v4447
  %v4495 = vadd.f32 %v4424, %v4447
  %v4496 = vadd.f32 %v4425, %v4447
  %v4497 = vadd.f32 %v4426, %v4447
  %v4498 = vadd.f32 %v4427, %v4447
  %v4499 = vadd.f32 %v4428, %v4447
  %v4500 = vadd.f32 %v4429, %v4447
  %v4501 = vadd.f32 %v4430, %v4447
  %v4502 = vadd.f32 %v4431, %v4447
  %v4503 = vadd.f32 %v4432, %v4447
  %v4504 = vadd.f32 %v4433, %v4447
  %v4505 = vadd.f32 %v4434, %v4447
  %v4506 = vadd.f32 %v4435, %v4447
  %v4507 = vadd.f32 %v4436, %v4447
  %v4508 = vadd.f32 %v4437, %v4447
  %v4509 = vadd.f32 %v4438, %v4447
  %v4510 = vadd.f32 %v4439, %v4447
  %v4511 = vadd.f32 %v4440, %v4447
  %v4512 = vadd.f32 %v4441, %v4447
  %v4513 = vmax.f32 %v4449, 0.0
  %v4514 = vmax.f32 %v4450, 0.0
  %v4515 = vmax.f32 %v4451, 0.0
  %v4516 = vmax.f32 %v4452, 0.0
  %v4517 = vmax.f32 %v4453, 0.0
  %v4518 = vmax.f32 %v4454, 0.0
  %v4519 = vmax.f32 %v4455, 0.0
  %v4520 = vmax.f32 %v4456, 0.0
  %v4521 = vmax.f32 %v4457, 0.0
  %v4522 = vmax.f32 %v4458, 0.0
  %v4523 = vmax.f32 %v4459, 0.0
  %v4524 = vmax.f32 %v4460, 0.0
  %v4525 = vmax.f32 %v4461, 0.0
  %v4526 = vmax.f32 %v4462, 0.0
  %v4527 = vmax.f32 %v4463, 0.0
  %v4528 = vmax.f32 %v4464, 0.0
  %v4529 = vmax.f32 %v4465, 0.0
  %v4530 = vmax.f32 %v4466, 0.0
  %v4531 = vmax.f32 %v4467, 0.0
  %v4532 = vmax.f32 %v4468, 0.0
  %v4533 = vmax.f32 %v4469, 0.0
  %v4534 = vmax.f32 %v4470, 0.0
  %v4535 = vmax.f32 %v4471, 0.0
  %v4536 = vmax.f32 %v4472, 0.0
  %v4537 = vmax.f32 %v4473, 0.0
  %v4538 = vmax.f32 %v4474, 0.0
  %v4539 = vmax.f32 %v4475, 0.0
  %v4540 = vmax.f32 %v4476, 0.0
  %v4541 = vmax.f32 %v4477, 0.0
  %v4542 = vmax.f32 %v4478, 0.0
  %v4543 = vmax.f32 %v4479, 0.0
  %v4544 = vmax.f32 %v4480, 0.0
  %v4545 = vmax.f32 %v4481, 0.0
  %v4546 = vmax.f32 %v4482, 0.0
  %v4547 = vmax.f32 %v4483, 0.0
  %v4548 = vmax.f32 %v4484, 0.0
  %v4549 = vmax.f32 %v4485, 0.0
  %v4550 = vmax.f32 %v4486, 0.0
  %v4551 = vmax.f32 %v4487, 0.0
  %v4552 = vmax.f32 %v4488, 0.0
  %v4553 = vmax.f32 %v4489, 0.0
  %v4554 = vmax.f32 %v4490, 0.0
  %v4555 = vmax.f32 %v4491, 0.0
  %v4556 = vmax.f32 %v4492, 0.0
  %v4557 = vmax.f32 %v4493, 0.0
  %v4558 = vmax.f32 %v4494, 0.0
  %v4559 = vmax.f32 %v4495, 0.0
  %v4560 = vmax.f32 %v4496, 0.0
  %v4561 = vmax.f32 %v4497, 0.0
  %v4562 = vmax.f32 %v4498, 0.0
  %v4563 = vmax.f32 %v4499, 0.0
  %v4564 = vmax.f32 %v4500, 0.0
  %v4565 = vmax.f32 %v4501, 0.0
  %v4566 = vmax.f32 %v4502, 0.0
  %v4567 = vmax.f32 %v4503, 0.0
  %v4568 = vmax.f32 %v4504, 0.0
  %v4569 = vmax.f32 %v4505, 0.0
  %v4570 = vmax.f32 %v4506, 0.0
  %v4571 = vmax.f32 %v4507, 0.0
  %v4572 = vmax.f32 %v4508, 0.0
  %v4573 = vmax.f32 %v4509, 0.0
  %v4574 = vmax.f32 %v4510, 0.0
  %v4575 = vmax.f32 %v4511, 0.0
  %v4576 = vmax.f32 %v4512, 0.0
  %v4577 = vpack.c.bf16 %v4514, %v4513
  %v4578 = vpack.c.bf16 %v4516, %v4515
  %v4579 = vpack.c.bf16 %v4518, %v4517
  %v4580 = vpack.c.bf16 %v4520, %v4519
  %v4581 = vpack.c.bf16 %v4522, %v4521
  %v4582 = vpack.c.bf16 %v4524, %v4523
  %v4583 = vpack.c.bf16 %v4526, %v4525
  %v4584 = vpack.c.bf16 %v4528, %v4527
  %v4585 = vpack.c.bf16 %v4530, %v4529
  %v4586 = vpack.c.bf16 %v4532, %v4531
  %v4587 = vpack.c.bf16 %v4534, %v4533
  %v4588 = vpack.c.bf16 %v4536, %v4535
  %v4589 = vpack.c.bf16 %v4538, %v4537
  %v4590 = vpack.c.bf16 %v4540, %v4539
  %v4591 = vpack.c.bf16 %v4542, %v4541
  %v4592 = vpack.c.bf16 %v4544, %v4543
  %v4593 = vpack.c.bf16 %v4546, %v4545
  %v4594 = vpack.c.bf16 %v4548, %v4547
  %v4595 = vpack.c.bf16 %v4550, %v4549
  %v4596 = vpack.c.bf16 %v4552, %v4551
  %v4597 = vpack.c.bf16 %v4554, %v4553
  %v4598 = vpack.c.bf16 %v4556, %v4555
  %v4599 = vpack.c.bf16 %v4558, %v4557
  %v4600 = vpack.c.bf16 %v4560, %v4559
  %v4601 = vpack.c.bf16 %v4562, %v4561
  %v4602 = vpack.c.bf16 %v4564, %v4563
  %v4603 = vpack.c.bf16 %v4566, %v4565
  %v4604 = vpack.c.bf16 %v4568, %v4567
  %v4605 = vpack.c.bf16 %v4570, %v4569
  %v4606 = vpack.c.bf16 %v4572, %v4571
  %v4607 = vpack.c.bf16 %v4574, %v4573
  %v4608 = vpack.c.bf16 %v4576, %v4575
  %v4641 = vunpack.c.l.b16 %v4577
  %v4642 = vunpack.c.h.b16 %v4577
  %v4643 = vunpack.c.l.b16 %v4578
  %v4644 = vunpack.c.h.b16 %v4578
  %v4645 = vunpack.c.l.b16 %v4579
  %v4646 = vunpack.c.h.b16 %v4579
  %v4647 = vunpack.c.l.b16 %v4580
  %v4648 = vunpack.c.h.b16 %v4580
  %v4649 = vunpack.c.l.b16 %v4581
  %v4650 = vunpack.c.h.b16 %v4581
  %v4651 = vunpack.c.l.b16 %v4582
  %v4652 = vunpack.c.h.b16 %v4582
  %v4653 = vunpack.c.l.b16 %v4583
  %v4654 = vunpack.c.h.b16 %v4583
  %v4655 = vunpack.c.l.b16 %v4584
  %v4656 = vunpack.c.h.b16 %v4584
  %v4657 = vunpack.c.l.b16 %v4585
  %v4658 = vunpack.c.h.b16 %v4585
  %v4659 = vunpack.c.l.b16 %v4586
  %v4660 = vunpack.c.h.b16 %v4586
  %v4661 = vunpack.c.l.b16 %v4587
  %v4662 = vunpack.c.h.b16 %v4587
  %v4663 = vunpack.c.l.b16 %v4588
  %v4664 = vunpack.c.h.b16 %v4588
  %v4665 = vunpack.c.l.b16 %v4589
  %v4666 = vunpack.c.h.b16 %v4589
  %v4667 = vunpack.c.l.b16 %v4590
  %v4668 = vunpack.c.h.b16 %v4590
  %v4669 = vunpack.c.l.b16 %v4591
  %v4670 = vunpack.c.h.b16 %v4591
  %v4671 = vunpack.c.l.b16 %v4592
  %v4672 = vunpack.c.h.b16 %v4592
  %v4673 = vunpack.c.l.b16 %v4593
  %v4674 = vunpack.c.h.b16 %v4593
  %v4675 = vunpack.c.l.b16 %v4594
  %v4676 = vunpack.c.h.b16 %v4594
  %v4677 = vunpack.c.l.b16 %v4595
  %v4678 = vunpack.c.h.b16 %v4595
  %v4679 = vunpack.c.l.b16 %v4596
  %v4680 = vunpack.c.h.b16 %v4596
  %v4681 = vunpack.c.l.b16 %v4597
  %v4682 = vunpack.c.h.b16 %v4597
  %v4683 = vunpack.c.l.b16 %v4598
  %v4684 = vunpack.c.h.b16 %v4598
  %v4685 = vunpack.c.l.b16 %v4599
  %v4686 = vunpack.c.h.b16 %v4599
  %v4687 = vunpack.c.l.b16 %v4600
  %v4688 = vunpack.c.h.b16 %v4600
  %v4689 = vunpack.c.l.b16 %v4601
  %v4690 = vunpack.c.h.b16 %v4601
  %v4691 = vunpack.c.l.b16 %v4602
  %v4692 = vunpack.c.h.b16 %v4602
  %v4693 = vunpack.c.l.b16 %v4603
  %v4694 = vunpack.c.h.b16 %v4603
  %v4695 = vunpack.c.l.b16 %v4604
  %v4696 = vunpack.c.h.b16 %v4604
  %v4697 = vunpack.c.l.b16 %v4605
  %v4698 = vunpack.c.h.b16 %v4605
  %v4699 = vunpack.c.l.b16 %v4606
  %v4700 = vunpack.c.h.b16 %v4606
  %v4701 = vunpack.c.l.b16 %v4607
  %v4702 = vunpack.c.h.b16 %v4607
  %v4703 = vunpack.c.l.b16 %v4608
  %v4704 = vunpack.c.h.b16 %v4608
  %v4705 = vpack.c.b16 %v4641, %v4641
  %v4706 = vpack.c.b16 %v4642, %v4642
  %v4707 = vpack.c.b16 %v4643, %v4643
  %v4708 = vpack.c.b16 %v4644, %v4644
  %v4709 = vpack.c.b16 %v4645, %v4645
  %v4710 = vpack.c.b16 %v4646, %v4646
  %v4711 = vpack.c.b16 %v4647, %v4647
  %v4712 = vpack.c.b16 %v4648, %v4648
  %v4713 = vpack.c.b16 %v4649, %v4649
  %v4714 = vpack.c.b16 %v4650, %v4650
  %v4715 = vpack.c.b16 %v4651, %v4651
  %v4716 = vpack.c.b16 %v4652, %v4652
  %v4717 = vpack.c.b16 %v4653, %v4653
  %v4718 = vpack.c.b16 %v4654, %v4654
  %v4719 = vpack.c.b16 %v4655, %v4655
  %v4720 = vpack.c.b16 %v4656, %v4656
  %v4721 = vpack.c.b16 %v4657, %v4657
  %v4722 = vpack.c.b16 %v4658, %v4658
  %v4723 = vpack.c.b16 %v4659, %v4659
  %v4724 = vpack.c.b16 %v4660, %v4660
  %v4725 = vpack.c.b16 %v4661, %v4661
  %v4726 = vpack.c.b16 %v4662, %v4662
  %v4727 = vpack.c.b16 %v4663, %v4663
  %v4728 = vpack.c.b16 %v4664, %v4664
  %v4729 = vpack.c.b16 %v4665, %v4665
  %v4730 = vpack.c.b16 %v4666, %v4666
  %v4731 = vpack.c.b16 %v4667, %v4667
  %v4732 = vpack.c.b16 %v4668, %v4668
  %v4733 = vpack.c.b16 %v4669, %v4669
  %v4734 = vpack.c.b16 %v4670, %v4670
  %v4735 = vpack.c.b16 %v4671, %v4671
  %v4736 = vpack.c.b16 %v4672, %v4672
  %v4737 = vpack.c.b16 %v4673, %v4673
  %v4738 = vpack.c.b16 %v4674, %v4674
  %v4739 = vpack.c.b16 %v4675, %v4675
  %v4740 = vpack.c.b16 %v4676, %v4676
  %v4741 = vpack.c.b16 %v4677, %v4677
  %v4742 = vpack.c.b16 %v4678, %v4678
  %v4743 = vpack.c.b16 %v4679, %v4679
  %v4744 = vpack.c.b16 %v4680, %v4680
  %v4745 = vpack.c.b16 %v4681, %v4681
  %v4746 = vpack.c.b16 %v4682, %v4682
  %v4747 = vpack.c.b16 %v4683, %v4683
  %v4748 = vpack.c.b16 %v4684, %v4684
  %v4749 = vpack.c.b16 %v4685, %v4685
  %v4750 = vpack.c.b16 %v4686, %v4686
  %v4751 = vpack.c.b16 %v4687, %v4687
  %v4752 = vpack.c.b16 %v4688, %v4688
  %v4753 = vpack.c.b16 %v4689, %v4689
  %v4754 = vpack.c.b16 %v4690, %v4690
  %v4755 = vpack.c.b16 %v4691, %v4691
  %v4756 = vpack.c.b16 %v4692, %v4692
  %v4757 = vpack.c.b16 %v4693, %v4693
  %v4758 = vpack.c.b16 %v4694, %v4694
  %v4759 = vpack.c.b16 %v4695, %v4695
  %v4760 = vpack.c.b16 %v4696, %v4696
  %v4761 = vpack.c.b16 %v4697, %v4697
  %v4762 = vpack.c.b16 %v4698, %v4698
  %v4763 = vpack.c.b16 %v4699, %v4699
  %v4764 = vpack.c.b16 %v4700, %v4700
  %v4765 = vpack.c.b16 %v4701, %v4701
  %v4766 = vpack.c.b16 %v4702, %v4702
  %v4767 = vpack.c.b16 %v4703, %v4703
  %v4768 = vpack.c.b16 %v4704, %v4704
  %4833 = vst [vmem:[%s3] sm:$0xf] %v4705
  %4834 = vst [vmem:[%s3 + $0x4] sm:$0xf] %v4706
  %4835 = vst [vmem:[%s3 + $0x8] sm:$0xf] %v4707
  %4836 = vst [vmem:[%s3 + $0xc] sm:$0xf] %v4708
  %4837 = vst [vmem:[%s3 + $0x10] sm:$0xf] %v4709
  %4838 = vst [vmem:[%s3 + $0x14] sm:$0xf] %v4710
  %4839 = vst [vmem:[%s3 + $0x18] sm:$0xf] %v4711
  %4840 = vst [vmem:[%s3 + $0x1c] sm:$0xf] %v4712
  %4841 = vst [vmem:[%s3 + $0x20] sm:$0xf] %v4713
  %4842 = vst [vmem:[%s3 + $0x24] sm:$0xf] %v4714
  %4843 = vst [vmem:[%s3 + $0x28] sm:$0xf] %v4715
  %4844 = vst [vmem:[%s3 + $0x2c] sm:$0xf] %v4716
  %4845 = vst [vmem:[%s3 + $0x30] sm:$0xf] %v4717
  %4846 = vst [vmem:[%s3 + $0x34] sm:$0xf] %v4718
  %4847 = vst [vmem:[%s3 + $0x38] sm:$0xf] %v4719
  %4848 = vst [vmem:[%s3 + $0x3c] sm:$0xf] %v4720
  %4849 = vst [vmem:[%s3 + $0x40] sm:$0xf] %v4721
  %4850 = vst [vmem:[%s3 + $0x44] sm:$0xf] %v4722
  %4851 = vst [vmem:[%s3 + $0x48] sm:$0xf] %v4723
  %4852 = vst [vmem:[%s3 + $0x4c] sm:$0xf] %v4724
  %4853 = vst [vmem:[%s3 + $0x50] sm:$0xf] %v4725
  %4854 = vst [vmem:[%s3 + $0x54] sm:$0xf] %v4726
  %4855 = vst [vmem:[%s3 + $0x58] sm:$0xf] %v4727
  %4856 = vst [vmem:[%s3 + $0x5c] sm:$0xf] %v4728
  %4857 = vst [vmem:[%s3 + $0x60] sm:$0xf] %v4729
  %4858 = vst [vmem:[%s3 + $0x64] sm:$0xf] %v4730
  %4859 = vst [vmem:[%s3 + $0x68] sm:$0xf] %v4731
  %4860 = vst [vmem:[%s3 + $0x6c] sm:$0xf] %v4732
  %4861 = vst [vmem:[%s3 + $0x70] sm:$0xf] %v4733
  %4862 = vst [vmem:[%s3 + $0x74] sm:$0xf] %v4734
  %4863 = vst [vmem:[%s3 + $0x78] sm:$0xf] %v4735
  %4864 = vst [vmem:[%s3 + $0x7c] sm:$0xf] %v4736
  %4865 = vst [vmem:[%s3 + $0x80] sm:$0xf] %v4737
  %4866 = vst [vmem:[%s3 + $0x84] sm:$0xf] %v4738
  %4867 = vst [vmem:[%s3 + $0x88] sm:$0xf] %v4739
  %4868 = vst [vmem:[%s3 + $0x8c] sm:$0xf] %v4740
  %4869 = vst [vmem:[%s3 + $0x90] sm:$0xf] %v4741
  %4870 = vst [vmem:[%s3 + $0x94] sm:$0xf] %v4742
  %4871 = vst [vmem:[%s3 + $0x98] sm:$0xf] %v4743
  %4872 = vst [vmem:[%s3 + $0x9c] sm:$0xf] %v4744
  %4873 = vst [vmem:[%s3 + $0xa0] sm:$0xf] %v4745
  %4874 = vst [vmem:[%s3 + $0xa4] sm:$0xf] %v4746
  %4875 = vst [vmem:[%s3 + $0xa8] sm:$0xf] %v4747
  %4876 = vst [vmem:[%s3 + $0xac] sm:$0xf] %v4748
  %4877 = vst [vmem:[%s3 + $0xb0] sm:$0xf] %v4749
  %4878 = vst [vmem:[%s3 + $0xb4] sm:$0xf] %v4750
  %4879 = vst [vmem:[%s3 + $0xb8] sm:$0xf] %v4751
  %4880 = vst [vmem:[%s3 + $0xbc] sm:$0xf] %v4752
  %4881 = vst [vmem:[%s3 + $0xc0] sm:$0xf] %v4753
  %4882 = vst [vmem:[%s3 + $0xc4] sm:$0xf] %v4754
  %4883 = vst [vmem:[%s3 + $0xc8] sm:$0xf] %v4755
  %4884 = vst [vmem:[%s3 + $0xcc] sm:$0xf] %v4756
  %4885 = vst [vmem:[%s3 + $0xd0] sm:$0xf] %v4757
  %4886 = vst [vmem:[%s3 + $0xd4] sm:$0xf] %v4758
  %4887 = vst [vmem:[%s3 + $0xd8] sm:$0xf] %v4759
  %4888 = vst [vmem:[%s3 + $0xdc] sm:$0xf] %v4760
  %4889 = vst [vmem:[%s3 + $0xe0] sm:$0xf] %v4761
  %4890 = vst [vmem:[%s3 + $0xe4] sm:$0xf] %v4762
  %4891 = vst [vmem:[%s3 + $0xe8] sm:$0xf] %v4763
  %4892 = vst [vmem:[%s3 + $0xec] sm:$0xf] %v4764
  %4893 = vst [vmem:[%s3 + $0xf0] sm:$0xf] %v4765
  %4894 = vst [vmem:[%s3 + $0xf4] sm:$0xf] %v4766
  %4895 = vst [vmem:[%s3 + $0xf8] sm:$0xf] %v4767
  %4896 = vst [vmem:[%s3 + $0xfc] sm:$0xf] %v4768
  // Predicated region
  $region14: #{basic_block_forward.2} parent=0 // pred_check
    _
  $region15: #{basic_block_forward.2} parent=0 // pred_check_branch
    %4898 = sbr.rel (0) target = $region17
  $region16: #{basic_block_forward.2} parent=0 // pred_region
    _
  $region17: #{basic_block_forward.2} parent=0 // pred_fallthru
    _
  // Predicated region
  $region18: #{basic_block_forward.2} parent=0 // pred_check
    _
  $region19: #{basic_block_forward.2} parent=0 // pred_check_branch
    %4900 = sbr.rel (0) target = $region21
  $region20: #{basic_block_forward.2} parent=0 // pred_region
    _
  $region21: #{basic_block_forward.2} parent=0 // pred_fallthru
    _

// kernel: basic_block_forward.3
$region0: #{basic_block_forward.3}
  #allocation0 [shape = 'u32[]', space=smem, size = 0x4, offset = 0x4, fixed_abs, tag = 'smem constant byte address 0x4 - core index']
  #allocation1 [shape = 'u32[144,128]{1,0:T(1,128)}', space=vmem, size = 0x12000, scoped, tag = 'internal scratch']
  %s0 = inlined_call_operand.vmem [shape: bf16[2,18,18,128], index: 0, kind: input, shape index: {}]
  %s1 = inlined_call_operand.vmem [shape: bf16[3,384,128], index: 1, kind: input, shape index: {}]
  %s2 = inlined_call_operand.vmem [shape: f32[1,128], index: 2, kind: input, shape index: {}]
  %s3 = inlined_call_operand.vmem [shape: bf16[512,128], index: 3, kind: input, shape index: {}]
  %s4 = inlined_call_operand.vmem [shape: bf16[128,128], index: 4, kind: input, shape index: {}]
  %s5 = inlined_call_operand.vmem [shape: f32[1,128], index: 5, kind: input, shape index: {}]
  %s6 = inlined_call_operand.vmem [shape: bf16[512,128], index: 6, kind: output, shape index: {}]
  %s7 = sld [smem:[#allocation0]]
  $region34: #{basic_block_forward.3} parent=0
    _
  %s9 = ssub.s32 1, %s7
  %s10 = scalar_select 0, %s9, %s7
  // Predicated region
  $region2: #{basic_block_forward.3} parent=0 // pred_check
    _
  $region3: #{basic_block_forward.3} parent=0 // pred_check_branch
    %12 = sbr.rel (0) target = $region5
  $region4: #{basic_block_forward.3} parent=0 // pred_region
    _
  $region5: #{basic_block_forward.3} parent=0 // pred_fallthru
    _
  // Predicated region
  $region6: #{basic_block_forward.3} parent=0 // pred_check
    _
  $region7: #{basic_block_forward.3} parent=0 // pred_check_branch
    %14 = sbr.rel (0) target = $region9
  $region8: #{basic_block_forward.3} parent=0 // pred_region
    _
  $region9: #{basic_block_forward.3} parent=0 // pred_fallthru
    _
  // Predicated region
  $region10: #{basic_block_forward.3} parent=0 // pred_check
    _
  $region11: #{basic_block_forward.3} parent=0 // pred_check_branch
    %16 = sbr.rel (0) target = $region13
  $region12: #{basic_block_forward.3} parent=0 // pred_region
    _
  $region13: #{basic_block_forward.3} parent=0 // pred_fallthru
    _
  // Predicated region
  $region14: #{basic_block_forward.3} parent=0 // pred_check
    _
  $region15: #{basic_block_forward.3} parent=0 // pred_check_branch
    %18 = sbr.rel (0) target = $region17
  $region16: #{basic_block_forward.3} parent=0 // pred_region
    _
  $region17: #{basic_block_forward.3} parent=0 // pred_fallthru
    _
  // Predicated region
  $region18: #{basic_block_forward.3} parent=0 // pred_check
    _
  $region19: #{basic_block_forward.3} parent=0 // pred_check_branch
    %20 = sbr.rel (0) target = $region21
  $region20: #{basic_block_forward.3} parent=0 // pred_region
    _
  $region21: #{basic_block_forward.3} parent=0 // pred_fallthru
    _
  // Predicated region
  $region22: #{basic_block_forward.3} parent=0 // pred_check
    _
  $region23: #{basic_block_forward.3} parent=0 // pred_check_branch
    %22 = sbr.rel (0) target = $region25
  $region24: #{basic_block_forward.3} parent=0 // pred_region
    _
  $region25: #{basic_block_forward.3} parent=0 // pred_fallthru
    _
  %v24 = vld [vmem:[%s0] sm:$0xf]
  %v25 = vld [vmem:[%s0 + $0x4] sm:$0xf]
  %v26 = vld [vmem:[%s0 + $0x8] sm:$0x1]
  %v27 = vld [vmem:[%s0 + $0xc] sm:$0xf]
  %v28 = vld [vmem:[%s0 + $0x10] sm:$0xf]
  %v29 = vld [vmem:[%s0 + $0x14] sm:$0x1]
  %v30 = vld [vmem:[%s0 + $0x18] sm:$0xf]
  %v31 = vld [vmem:[%s0 + $0x1c] sm:$0xf]
  %v32 = vld [vmem:[%s0 + $0x20] sm:$0x1]
  %v33 = vld [vmem:[%s0 + $0x24] sm:$0xf]
  %v34 = vld [vmem:[%s0 + $0x28] sm:$0xf]
  %v35 = vld [vmem:[%s0 + $0x2c] sm:$0x1]
  %v36 = vld [vmem:[%s0 + $0x30] sm:$0xf]
  %v37 = vld [vmem:[%s0 + $0x34] sm:$0xf]
  %v38 = vld [vmem:[%s0 + $0x38] sm:$0x1]
  %v39 = vld [vmem:[%s0 + $0x3c] sm:$0xf]
  %v40 = vld [vmem:[%s0 + $0x40] sm:$0xf]
  %v41 = vld [vmem:[%s0 + $0x44] sm:$0x1]
  %v42 = vld [vmem:[%s0 + $0x48] sm:$0xf]
  %v43 = vld [vmem:[%s0 + $0x4c] sm:$0xf]
  %v44 = vld [vmem:[%s0 + $0x50] sm:$0x1]
  %v45 = vld [vmem:[%s0 + $0x54] sm:$0xf]
  %v46 = vld [vmem:[%s0 + $0x58] sm:$0xf]
  %v47 = vld [vmem:[%s0 + $0x5c] sm:$0x1]
  %v48 = vld [vmem:[%s0 + $0x60] sm:$0xf]
  %v49 = vld [vmem:[%s0 + $0x64] sm:$0xf]
  %v50 = vld [vmem:[%s0 + $0x68] sm:$0x1]
  %v51 = vld [vmem:[%s0 + $0x6c] sm:$0xf]
  %v52 = vld [vmem:[%s0 + $0x70] sm:$0xf]
  %v53 = vld [vmem:[%s0 + $0x74] sm:$0x1]
  %v54 = vld [vmem:[%s0 + $0x78] sm:$0xf]
  %v55 = vld [vmem:[%s0 + $0x7c] sm:$0xf]
  %v56 = vld [vmem:[%s0 + $0x80] sm:$0x1]
  %v57 = vld [vmem:[%s0 + $0x84] sm:$0xf]
  %v58 = vld [vmem:[%s0 + $0x88] sm:$0xf]
  %v59 = vld [vmem:[%s0 + $0x8c] sm:$0x1]
  %v60 = vld [vmem:[%s0 + $0x90] sm:$0xf]
  %v61 = vld [vmem:[%s0 + $0x94] sm:$0xf]
  %v62 = vld [vmem:[%s0 + $0x98] sm:$0x1]
  %v63 = vld [vmem:[%s0 + $0x9c] sm:$0xf]
  %v64 = vld [vmem:[%s0 + $0xa0] sm:$0xf]
  %v65 = vld [vmem:[%s0 + $0xa4] sm:$0x1]
  %v66 = vld [vmem:[%s0 + $0xa8] sm:$0xf]
  %v67 = vld [vmem:[%s0 + $0xac] sm:$0xf]
  %v68 = vld [vmem:[%s0 + $0xb0] sm:$0x1]
  %v69 = vld [vmem:[%s0 + $0xb4] sm:$0xf]
  %v70 = vld [vmem:[%s0 + $0xb8] sm:$0xf]
  %v71 = vld [vmem:[%s0 + $0xbc] sm:$0x1]
  %v72 = vld [vmem:[%s0 + $0xd8] sm:$0xf]
  %v73 = vld [vmem:[%s0 + $0xdc] sm:$0xf]
  %v74 = vld [vmem:[%s0 + $0xe0] sm:$0x1]
  %v75 = vld [vmem:[%s0 + $0xe4] sm:$0xf]
  %v76 = vld [vmem:[%s0 + $0xe8] sm:$0xf]
  %v77 = vld [vmem:[%s0 + $0xec] sm:$0x1]
  %v78 = vld [vmem:[%s0 + $0xf0] sm:$0xf]
  %v79 = vld [vmem:[%s0 + $0xf4] sm:$0xf]
  %v80 = vld [vmem:[%s0 + $0xf8] sm:$0x1]
  %v81 = vld [vmem:[%s0 + $0xfc] sm:$0xf]
  %v82 = vld [vmem:[%s0 + $0x100] sm:$0xf]
  %v83 = vld [vmem:[%s0 + $0x104] sm:$0x1]
  %v84 = vld [vmem:[%s0 + $0x108] sm:$0xf]
  %v85 = vld [vmem:[%s0 + $0x10c] sm:$0xf]
  %v86 = vld [vmem:[%s0 + $0x110] sm:$0x1]
  %v87 = vld [vmem:[%s0 + $0x114] sm:$0xf]
  %v88 = vld [vmem:[%s0 + $0x118] sm:$0xf]
  %v89 = vld [vmem:[%s0 + $0x11c] sm:$0x1]
  %v90 = vld [vmem:[%s0 + $0x120] sm:$0xf]
  %v91 = vld [vmem:[%s0 + $0x124] sm:$0xf]
  %v92 = vld [vmem:[%s0 + $0x128] sm:$0x1]
  %v93 = vld [vmem:[%s0 + $0x12c] sm:$0xf]
  %v94 = vld [vmem:[%s0 + $0x130] sm:$0xf]
  %v95 = vld [vmem:[%s0 + $0x134] sm:$0x1]
  %v96 = vld [vmem:[%s0 + $0x138] sm:$0xf]
  %v97 = vld [vmem:[%s0 + $0x13c] sm:$0xf]
  %v98 = vld [vmem:[%s0 + $0x140] sm:$0x1]
  %v99 = vld [vmem:[%s0 + $0x144] sm:$0xf]
  %v100 = vld [vmem:[%s0 + $0x148] sm:$0xf]
  %v101 = vld [vmem:[%s0 + $0x14c] sm:$0x1]
  %v102 = vld [vmem:[%s0 + $0x150] sm:$0xf]
  %v103 = vld [vmem:[%s0 + $0x154] sm:$0xf]
  %v104 = vld [vmem:[%s0 + $0x158] sm:$0x1]
  %v105 = vld [vmem:[%s0 + $0x15c] sm:$0xf]
  %v106 = vld [vmem:[%s0 + $0x160] sm:$0xf]
  %v107 = vld [vmem:[%s0 + $0x164] sm:$0x1]
  %v108 = vld [vmem:[%s0 + $0x168] sm:$0xf]
  %v109 = vld [vmem:[%s0 + $0x16c] sm:$0xf]
  %v110 = vld [vmem:[%s0 + $0x170] sm:$0x1]
  %v111 = vld [vmem:[%s0 + $0x174] sm:$0xf]
  %v112 = vld [vmem:[%s0 + $0x178] sm:$0xf]
  %v113 = vld [vmem:[%s0 + $0x17c] sm:$0x1]
  %v114 = vld [vmem:[%s0 + $0x180] sm:$0xf]
  %v115 = vld [vmem:[%s0 + $0x184] sm:$0xf]
  %v116 = vld [vmem:[%s0 + $0x188] sm:$0x1]
  %v117 = vld [vmem:[%s0 + $0x18c] sm:$0xf]
  %v118 = vld [vmem:[%s0 + $0x190] sm:$0xf]
  %v119 = vld [vmem:[%s0 + $0x194] sm:$0x1]
  %v184 = vunpack.c.l.b16 %v24
  %v185 = vunpack.c.l.b16 %v25
  %v186 = vunpack.c.l.b16 %v27
  %v187 = vunpack.c.l.b16 %v28
  %v188 = vunpack.c.l.b16 %v30
  %v189 = vunpack.c.l.b16 %v31
  %v190 = vunpack.c.l.b16 %v33
  %v191 = vunpack.c.l.b16 %v34
  %v192 = vunpack.c.l.b16 %v36
  %v193 = vunpack.c.l.b16 %v37
  %v194 = vunpack.c.l.b16 %v39
  %v195 = vunpack.c.l.b16 %v40
  %v196 = vunpack.c.l.b16 %v42
  %v197 = vunpack.c.l.b16 %v43
  %v198 = vunpack.c.l.b16 %v45
  %v199 = vunpack.c.l.b16 %v46
  %v200 = vunpack.c.l.b16 %v48
  %v201 = vunpack.c.l.b16 %v49
  %v202 = vunpack.c.l.b16 %v51
  %v203 = vunpack.c.l.b16 %v52
  %v204 = vunpack.c.l.b16 %v54
  %v205 = vunpack.c.l.b16 %v55
  %v206 = vunpack.c.l.b16 %v57
  %v207 = vunpack.c.l.b16 %v58
  %v208 = vunpack.c.l.b16 %v60
  %v209 = vunpack.c.l.b16 %v61
  %v210 = vunpack.c.l.b16 %v63
  %v211 = vunpack.c.l.b16 %v64
  %v212 = vunpack.c.l.b16 %v66
  %v213 = vunpack.c.l.b16 %v67
  %v214 = vunpack.c.l.b16 %v69
  %v215 = vunpack.c.l.b16 %v70
  %v216 = vunpack.c.l.b16 %v72
  %v217 = vunpack.c.l.b16 %v73
  %v218 = vunpack.c.l.b16 %v75
  %v219 = vunpack.c.l.b16 %v76
  %v220 = vunpack.c.l.b16 %v78
  %v221 = vunpack.c.l.b16 %v79
  %v222 = vunpack.c.l.b16 %v81
  %v223 = vunpack.c.l.b16 %v82
  %v224 = vunpack.c.l.b16 %v84
  %v225 = vunpack.c.l.b16 %v85
  %v226 = vunpack.c.l.b16 %v87
  %v227 = vunpack.c.l.b16 %v88
  %v228 = vunpack.c.l.b16 %v90
  %v229 = vunpack.c.l.b16 %v91
  %v230 = vunpack.c.l.b16 %v93
  %v231 = vunpack.c.l.b16 %v94
  %v232 = vunpack.c.l.b16 %v96
  %v233 = vunpack.c.l.b16 %v97
  %v234 = vunpack.c.l.b16 %v99
  %v235 = vunpack.c.l.b16 %v100
  %v236 = vunpack.c.l.b16 %v102
  %v237 = vunpack.c.l.b16 %v103
  %v238 = vunpack.c.l.b16 %v105
  %v239 = vunpack.c.l.b16 %v106
  %v240 = vunpack.c.l.b16 %v108
  %v241 = vunpack.c.l.b16 %v109
  %v242 = vunpack.c.l.b16 %v111
  %v243 = vunpack.c.l.b16 %v112
  %v244 = vunpack.c.l.b16 %v114
  %v245 = vunpack.c.l.b16 %v115
  %v246 = vunpack.c.l.b16 %v117
  %v247 = vunpack.c.l.b16 %v118
  %v248 = vpack.c.b16 %v185, %v184
  %v249 = vpack.c.b16 %v187, %v186
  %v250 = vpack.c.b16 %v189, %v188
  %v251 = vpack.c.b16 %v191, %v190
  %v252 = vpack.c.b16 %v193, %v192
  %v253 = vpack.c.b16 %v195, %v194
  %v254 = vpack.c.b16 %v197, %v196
  %v255 = vpack.c.b16 %v199, %v198
  %v256 = vpack.c.b16 %v201, %v200
  %v257 = vpack.c.b16 %v203, %v202
  %v258 = vpack.c.b16 %v205, %v204
  %v259 = vpack.c.b16 %v207, %v206
  %v260 = vpack.c.b16 %v209, %v208
  %v261 = vpack.c.b16 %v211, %v210
  %v262 = vpack.c.b16 %v213, %v212
  %v263 = vpack.c.b16 %v215, %v214
  %v264 = vpack.c.b16 %v217, %v216
  %v265 = vpack.c.b16 %v219, %v218
  %v266 = vpack.c.b16 %v221, %v220
  %v267 = vpack.c.b16 %v223, %v222
  %v268 = vpack.c.b16 %v225, %v224
  %v269 = vpack.c.b16 %v227, %v226
  %v270 = vpack.c.b16 %v229, %v228
  %v271 = vpack.c.b16 %v231, %v230
  %v272 = vpack.c.b16 %v233, %v232
  %v273 = vpack.c.b16 %v235, %v234
  %v274 = vpack.c.b16 %v237, %v236
  %v275 = vpack.c.b16 %v239, %v238
  %v276 = vpack.c.b16 %v241, %v240
  %v277 = vpack.c.b16 %v243, %v242
  %v278 = vpack.c.b16 %v245, %v244
  %v279 = vpack.c.b16 %v247, %v246
  %v344 = vunpack.c.l.b16 %v26
  %v345 = vunpack.c.l.b16 %v29
  %v346 = vunpack.c.l.b16 %v32
  %v347 = vunpack.c.l.b16 %v35
  %v348 = vunpack.c.l.b16 %v38
  %v349 = vunpack.c.l.b16 %v41
  %v350 = vunpack.c.l.b16 %v44
  %v351 = vunpack.c.l.b16 %v47
  %v352 = vunpack.c.l.b16 %v50
  %v353 = vunpack.c.l.b16 %v53
  %v354 = vunpack.c.l.b16 %v56
  %v355 = vunpack.c.l.b16 %v59
  %v356 = vunpack.c.l.b16 %v62
  %v357 = vunpack.c.l.b16 %v65
  %v358 = vunpack.c.l.b16 %v68
  %v359 = vunpack.c.l.b16 %v71
  %v360 = vunpack.c.l.b16 %v74
  %v361 = vunpack.c.l.b16 %v77
  %v362 = vunpack.c.l.b16 %v80
  %v363 = vunpack.c.l.b16 %v83
  %v364 = vunpack.c.l.b16 %v86
  %v365 = vunpack.c.l.b16 %v89
  %v366 = vunpack.c.l.b16 %v92
  %v367 = vunpack.c.l.b16 %v95
  %v368 = vunpack.c.l.b16 %v98
  %v369 = vunpack.c.l.b16 %v101
  %v370 = vunpack.c.l.b16 %v104
  %v371 = vunpack.c.l.b16 %v107
  %v372 = vunpack.c.l.b16 %v110
  %v373 = vunpack.c.l.b16 %v113
  %v374 = vunpack.c.l.b16 %v116
  %v375 = vunpack.c.l.b16 %v119
  %v376 = vpack.c.b16 %v344, %v344
  %v377 = vpack.c.b16 %v345, %v345
  %v378 = vpack.c.b16 %v346, %v346
  %v379 = vpack.c.b16 %v347, %v347
  %v380 = vpack.c.b16 %v348, %v348
  %v381 = vpack.c.b16 %v349, %v349
  %v382 = vpack.c.b16 %v350, %v350
  %v383 = vpack.c.b16 %v351, %v351
  %v384 = vpack.c.b16 %v352, %v352
  %v385 = vpack.c.b16 %v353, %v353
  %v386 = vpack.c.b16 %v354, %v354
  %v387 = vpack.c.b16 %v355, %v355
  %v388 = vpack.c.b16 %v356, %v356
  %v389 = vpack.c.b16 %v357, %v357
  %v390 = vpack.c.b16 %v358, %v358
  %v391 = vpack.c.b16 %v359, %v359
  %v392 = vpack.c.b16 %v360, %v360
  %v393 = vpack.c.b16 %v361, %v361
  %v394 = vpack.c.b16 %v362, %v362
  %v395 = vpack.c.b16 %v363, %v363
  %v396 = vpack.c.b16 %v364, %v364
  %v397 = vpack.c.b16 %v365, %v365
  %v398 = vpack.c.b16 %v366, %v366
  %v399 = vpack.c.b16 %v367, %v367
  %v400 = vpack.c.b16 %v368, %v368
  %v401 = vpack.c.b16 %v369, %v369
  %v402 = vpack.c.b16 %v370, %v370
  %v403 = vpack.c.b16 %v371, %v371
  %v404 = vpack.c.b16 %v372, %v372
  %v405 = vpack.c.b16 %v373, %v373
  %v406 = vpack.c.b16 %v374, %v374
  %v407 = vpack.c.b16 %v375, %v375
  %vm408 = vsmask.f32 7424
  %v410 = vshrl.u32 %v248, 16
  %v412 = vshll.u32 %v248, 16
  %v414 = vrot.slane %v412, 1
  %v415 = vor.u32 %v410, %v414
  %v417 = vshll.u32 %v376, 16
  %v419 = vrot.slane %v417, 1
  %v420 = vsel %vm408, %v415, %v419
  %v422 = vshrl.u32 %v249, 16
  %v424 = vshll.u32 %v249, 16
  %v426 = vrot.slane %v424, 1
  %v427 = vor.u32 %v422, %v426
  %v429 = vshll.u32 %v377, 16
  %v431 = vrot.slane %v429, 1
  %v432 = vsel %vm408, %v427, %v431
  %v434 = vshrl.u32 %v250, 16
  %v436 = vshll.u32 %v250, 16
  %v438 = vrot.slane %v436, 1
  %v439 = vor.u32 %v434, %v438
  %v441 = vshll.u32 %v378, 16
  %v443 = vrot.slane %v441, 1
  %v444 = vsel %vm408, %v439, %v443
  %v446 = vshrl.u32 %v251, 16
  %v448 = vshll.u32 %v251, 16
  %v450 = vrot.slane %v448, 1
  %v451 = vor.u32 %v446, %v450
  %v453 = vshll.u32 %v379, 16
  %v455 = vrot.slane %v453, 1
  %v456 = vsel %vm408, %v451, %v455
  %v458 = vshrl.u32 %v252, 16
  %v460 = vshll.u32 %v252, 16
  %v462 = vrot.slane %v460, 1
  %v463 = vor.u32 %v458, %v462
  %v465 = vshll.u32 %v380, 16
  %v467 = vrot.slane %v465, 1
  %v468 = vsel %vm408, %v463, %v467
  %v470 = vshrl.u32 %v253, 16
  %v472 = vshll.u32 %v253, 16
  %v474 = vrot.slane %v472, 1
  %v475 = vor.u32 %v470, %v474
  %v477 = vshll.u32 %v381, 16
  %v479 = vrot.slane %v477, 1
  %v480 = vsel %vm408, %v475, %v479
  %v482 = vshrl.u32 %v254, 16
  %v484 = vshll.u32 %v254, 16
  %v486 = vrot.slane %v484, 1
  %v487 = vor.u32 %v482, %v486
  %v489 = vshll.u32 %v382, 16
  %v491 = vrot.slane %v489, 1
  %v492 = vsel %vm408, %v487, %v491
  %v494 = vshrl.u32 %v255, 16
  %v496 = vshll.u32 %v255, 16
  %v498 = vrot.slane %v496, 1
  %v499 = vor.u32 %v494, %v498
  %v501 = vshll.u32 %v383, 16
  %v503 = vrot.slane %v501, 1
  %v504 = vsel %vm408, %v499, %v503
  %v506 = vshrl.u32 %v256, 16
  %v508 = vshll.u32 %v256, 16
  %v510 = vrot.slane %v508, 1
  %v511 = vor.u32 %v506, %v510
  %v513 = vshll.u32 %v384, 16
  %v515 = vrot.slane %v513, 1
  %v516 = vsel %vm408, %v511, %v515
  %v518 = vshrl.u32 %v257, 16
  %v520 = vshll.u32 %v257, 16
  %v522 = vrot.slane %v520, 1
  %v523 = vor.u32 %v518, %v522
  %v525 = vshll.u32 %v385, 16
  %v527 = vrot.slane %v525, 1
  %v528 = vsel %vm408, %v523, %v527
  %v530 = vshrl.u32 %v258, 16
  %v532 = vshll.u32 %v258, 16
  %v534 = vrot.slane %v532, 1
  %v535 = vor.u32 %v530, %v534
  %v537 = vshll.u32 %v386, 16
  %v539 = vrot.slane %v537, 1
  %v540 = vsel %vm408, %v535, %v539
  %v542 = vshrl.u32 %v259, 16
  %v544 = vshll.u32 %v259, 16
  %v546 = vrot.slane %v544, 1
  %v547 = vor.u32 %v542, %v546
  %v549 = vshll.u32 %v387, 16
  %v551 = vrot.slane %v549, 1
  %v552 = vsel %vm408, %v547, %v551
  %v554 = vshrl.u32 %v260, 16
  %v556 = vshll.u32 %v260, 16
  %v558 = vrot.slane %v556, 1
  %v559 = vor.u32 %v554, %v558
  %v561 = vshll.u32 %v388, 16
  %v563 = vrot.slane %v561, 1
  %v564 = vsel %vm408, %v559, %v563
  %v566 = vshrl.u32 %v261, 16
  %v568 = vshll.u32 %v261, 16
  %v570 = vrot.slane %v568, 1
  %v571 = vor.u32 %v566, %v570
  %v573 = vshll.u32 %v389, 16
  %v575 = vrot.slane %v573, 1
  %v576 = vsel %vm408, %v571, %v575
  %v578 = vshrl.u32 %v262, 16
  %v580 = vshll.u32 %v262, 16
  %v582 = vrot.slane %v580, 1
  %v583 = vor.u32 %v578, %v582
  %v585 = vshll.u32 %v390, 16
  %v587 = vrot.slane %v585, 1
  %v588 = vsel %vm408, %v583, %v587
  %v590 = vshrl.u32 %v263, 16
  %v592 = vshll.u32 %v263, 16
  %v594 = vrot.slane %v592, 1
  %v595 = vor.u32 %v590, %v594
  %v597 = vshll.u32 %v391, 16
  %v599 = vrot.slane %v597, 1
  %v600 = vsel %vm408, %v595, %v599
  %v602 = vshrl.u32 %v264, 16
  %v604 = vshll.u32 %v264, 16
  %v606 = vrot.slane %v604, 1
  %v607 = vor.u32 %v602, %v606
  %v609 = vshll.u32 %v392, 16
  %v611 = vrot.slane %v609, 1
  %v612 = vsel %vm408, %v607, %v611
  %v614 = vshrl.u32 %v265, 16
  %v616 = vshll.u32 %v265, 16
  %v618 = vrot.slane %v616, 1
  %v619 = vor.u32 %v614, %v618
  %v621 = vshll.u32 %v393, 16
  %v623 = vrot.slane %v621, 1
  %v624 = vsel %vm408, %v619, %v623
  %v626 = vshrl.u32 %v266, 16
  %v628 = vshll.u32 %v266, 16
  %v630 = vrot.slane %v628, 1
  %v631 = vor.u32 %v626, %v630
  %v633 = vshll.u32 %v394, 16
  %v635 = vrot.slane %v633, 1
  %v636 = vsel %vm408, %v631, %v635
  %v638 = vshrl.u32 %v267, 16
  %v640 = vshll.u32 %v267, 16
  %v642 = vrot.slane %v640, 1
  %v643 = vor.u32 %v638, %v642
  %v645 = vshll.u32 %v395, 16
  %v647 = vrot.slane %v645, 1
  %v648 = vsel %vm408, %v643, %v647
  %v650 = vshrl.u32 %v268, 16
  %v652 = vshll.u32 %v268, 16
  %v654 = vrot.slane %v652, 1
  %v655 = vor.u32 %v650, %v654
  %v657 = vshll.u32 %v396, 16
  %v659 = vrot.slane %v657, 1
  %v660 = vsel %vm408, %v655, %v659
  %v662 = vshrl.u32 %v269, 16
  %v664 = vshll.u32 %v269, 16
  %v666 = vrot.slane %v664, 1
  %v667 = vor.u32 %v662, %v666
  %v669 = vshll.u32 %v397, 16
  %v671 = vrot.slane %v669, 1
  %v672 = vsel %vm408, %v667, %v671
  %v674 = vshrl.u32 %v270, 16
  %v676 = vshll.u32 %v270, 16
  %v678 = vrot.slane %v676, 1
  %v679 = vor.u32 %v674, %v678
  %v681 = vshll.u32 %v398, 16
  %v683 = vrot.slane %v681, 1
  %v684 = vsel %vm408, %v679, %v683
  %v686 = vshrl.u32 %v271, 16
  %v688 = vshll.u32 %v271, 16
  %v690 = vrot.slane %v688, 1
  %v691 = vor.u32 %v686, %v690
  %v693 = vshll.u32 %v399, 16
  %v695 = vrot.slane %v693, 1
  %v696 = vsel %vm408, %v691, %v695
  %v698 = vshrl.u32 %v272, 16
  %v700 = vshll.u32 %v272, 16
  %v702 = vrot.slane %v700, 1
  %v703 = vor.u32 %v698, %v702
  %v705 = vshll.u32 %v400, 16
  %v707 = vrot.slane %v705, 1
  %v708 = vsel %vm408, %v703, %v707
  %v710 = vshrl.u32 %v273, 16
  %v712 = vshll.u32 %v273, 16
  %v714 = vrot.slane %v712, 1
  %v715 = vor.u32 %v710, %v714
  %v717 = vshll.u32 %v401, 16
  %v719 = vrot.slane %v717, 1
  %v720 = vsel %vm408, %v715, %v719
  %v722 = vshrl.u32 %v274, 16
  %v724 = vshll.u32 %v274, 16
  %v726 = vrot.slane %v724, 1
  %v727 = vor.u32 %v722, %v726
  %v729 = vshll.u32 %v402, 16
  %v731 = vrot.slane %v729, 1
  %v732 = vsel %vm408, %v727, %v731
  %v734 = vshrl.u32 %v275, 16
  %v736 = vshll.u32 %v275, 16
  %v738 = vrot.slane %v736, 1
  %v739 = vor.u32 %v734, %v738
  %v741 = vshll.u32 %v403, 16
  %v743 = vrot.slane %v741, 1
  %v744 = vsel %vm408, %v739, %v743
  %v746 = vshrl.u32 %v276, 16
  %v748 = vshll.u32 %v276, 16
  %v750 = vrot.slane %v748, 1
  %v751 = vor.u32 %v746, %v750
  %v753 = vshll.u32 %v404, 16
  %v755 = vrot.slane %v753, 1
  %v756 = vsel %vm408, %v751, %v755
  %v758 = vshrl.u32 %v277, 16
  %v760 = vshll.u32 %v277, 16
  %v762 = vrot.slane %v760, 1
  %v763 = vor.u32 %v758, %v762
  %v765 = vshll.u32 %v405, 16
  %v767 = vrot.slane %v765, 1
  %v768 = vsel %vm408, %v763, %v767
  %v770 = vshrl.u32 %v278, 16
  %v772 = vshll.u32 %v278, 16
  %v774 = vrot.slane %v772, 1
  %v775 = vor.u32 %v770, %v774
  %v777 = vshll.u32 %v406, 16
  %v779 = vrot.slane %v777, 1
  %v780 = vsel %vm408, %v775, %v779
  %v782 = vshrl.u32 %v279, 16
  %v784 = vshll.u32 %v279, 16
  %v786 = vrot.slane %v784, 1
  %v787 = vor.u32 %v782, %v786
  %v789 = vshll.u32 %v407, 16
  %v791 = vrot.slane %v789, 1
  %v792 = vsel %vm408, %v787, %v791
  %vm825 = vcmask 1046528
  %v826 = vrot.slane %v248, 1
  %v827 = vrot.slane %v376, 1
  %v828 = vsel %vm825, %v826, %v827
  %v829 = vrot.slane %v249, 1
  %v830 = vrot.slane %v377, 1
  %v831 = vsel %vm825, %v829, %v830
  %v832 = vrot.slane %v250, 1
  %v833 = vrot.slane %v378, 1
  %v834 = vsel %vm825, %v832, %v833
  %v835 = vrot.slane %v251, 1
  %v836 = vrot.slane %v379, 1
  %v837 = vsel %vm825, %v835, %v836
  %v838 = vrot.slane %v252, 1
  %v839 = vrot.slane %v380, 1
  %v840 = vsel %vm825, %v838, %v839
  %v841 = vrot.slane %v253, 1
  %v842 = vrot.slane %v381, 1
  %v843 = vsel %vm825, %v841, %v842
  %v844 = vrot.slane %v254, 1
  %v845 = vrot.slane %v382, 1
  %v846 = vsel %vm825, %v844, %v845
  %v847 = vrot.slane %v255, 1
  %v848 = vrot.slane %v383, 1
  %v849 = vsel %vm825, %v847, %v848
  %v850 = vrot.slane %v256, 1
  %v851 = vrot.slane %v384, 1
  %v852 = vsel %vm825, %v850, %v851
  %v853 = vrot.slane %v257, 1
  %v854 = vrot.slane %v385, 1
  %v855 = vsel %vm825, %v853, %v854
  %v856 = vrot.slane %v258, 1
  %v857 = vrot.slane %v386, 1
  %v858 = vsel %vm825, %v856, %v857
  %v859 = vrot.slane %v259, 1
  %v860 = vrot.slane %v387, 1
  %v861 = vsel %vm825, %v859, %v860
  %v862 = vrot.slane %v260, 1
  %v863 = vrot.slane %v388, 1
  %v864 = vsel %vm825, %v862, %v863
  %v865 = vrot.slane %v261, 1
  %v866 = vrot.slane %v389, 1
  %v867 = vsel %vm825, %v865, %v866
  %v868 = vrot.slane %v262, 1
  %v869 = vrot.slane %v390, 1
  %v870 = vsel %vm825, %v868, %v869
  %v871 = vrot.slane %v263, 1
  %v872 = vrot.slane %v391, 1
  %v873 = vsel %vm825, %v871, %v872
  %v874 = vrot.slane %v264, 1
  %v875 = vrot.slane %v392, 1
  %v876 = vsel %vm825, %v874, %v875
  %v877 = vrot.slane %v265, 1
  %v878 = vrot.slane %v393, 1
  %v879 = vsel %vm825, %v877, %v878
  %v880 = vrot.slane %v266, 1
  %v881 = vrot.slane %v394, 1
  %v882 = vsel %vm825, %v880, %v881
  %v883 = vrot.slane %v267, 1
  %v884 = vrot.slane %v395, 1
  %v885 = vsel %vm825, %v883, %v884
  %v886 = vrot.slane %v268, 1
  %v887 = vrot.slane %v396, 1
  %v888 = vsel %vm825, %v886, %v887
  %v889 = vrot.slane %v269, 1
  %v890 = vrot.slane %v397, 1
  %v891 = vsel %vm825, %v889, %v890
  %v892 = vrot.slane %v270, 1
  %v893 = vrot.slane %v398, 1
  %v894 = vsel %vm825, %v892, %v893
  %v895 = vrot.slane %v271, 1
  %v896 = vrot.slane %v399, 1
  %v897 = vsel %vm825, %v895, %v896
  %v898 = vrot.slane %v272, 1
  %v899 = vrot.slane %v400, 1
  %v900 = vsel %vm825, %v898, %v899
  %v901 = vrot.slane %v273, 1
  %v902 = vrot.slane %v401, 1
  %v903 = vsel %vm825, %v901, %v902
  %v904 = vrot.slane %v274, 1
  %v905 = vrot.slane %v402, 1
  %v906 = vsel %vm825, %v904, %v905
  %v907 = vrot.slane %v275, 1
  %v908 = vrot.slane %v403, 1
  %v909 = vsel %vm825, %v907, %v908
  %v910 = vrot.slane %v276, 1
  %v911 = vrot.slane %v404, 1
  %v912 = vsel %vm825, %v910, %v911
  %v913 = vrot.slane %v277, 1
  %v914 = vrot.slane %v405, 1
  %v915 = vsel %vm825, %v913, %v914
  %v916 = vrot.slane %v278, 1
  %v917 = vrot.slane %v406, 1
  %v918 = vsel %vm825, %v916, %v917
  %v919 = vrot.slane %v279, 1
  %v920 = vrot.slane %v407, 1
  %v921 = vsel %vm825, %v919, %v920
  %v954 = vld [vmem:[%s1] sm:$0xf]
  %v955 = vld [vmem:[%s1 + $0x4] sm:$0xf]
  %v956 = vld [vmem:[%s1 + $0x8] sm:$0xf]
  %v957 = vld [vmem:[%s1 + $0xc] sm:$0xf]
  %v958 = vld [vmem:[%s1 + $0x10] sm:$0xf]
  %v959 = vld [vmem:[%s1 + $0x14] sm:$0xf]
  %v960 = vld [vmem:[%s1 + $0x18] sm:$0xf]
  %v961 = vld [vmem:[%s1 + $0x1c] sm:$0xf]
  %v962 = vld [vmem:[%s1 + $0x20] sm:$0xf]
  %v963 = vld [vmem:[%s1 + $0x24] sm:$0xf]
  %v964 = vld [vmem:[%s1 + $0x28] sm:$0xf]
  %v965 = vld [vmem:[%s1 + $0x2c] sm:$0xf]
  %v966 = vld [vmem:[%s1 + $0x30] sm:$0xf]
  %v967 = vld [vmem:[%s1 + $0x34] sm:$0xf]
  %v968 = vld [vmem:[%s1 + $0x38] sm:$0xf]
  %v969 = vld [vmem:[%s1 + $0x3c] sm:$0xf]
  %v970 = vld [vmem:[%s1 + $0x40] sm:$0xf]
  %v971 = vld [vmem:[%s1 + $0x44] sm:$0xf]
  %v972 = vld [vmem:[%s1 + $0x48] sm:$0xf]
  %v973 = vld [vmem:[%s1 + $0x4c] sm:$0xf]
  %v974 = vld [vmem:[%s1 + $0x50] sm:$0xf]
  %v975 = vld [vmem:[%s1 + $0x54] sm:$0xf]
  %v976 = vld [vmem:[%s1 + $0x58] sm:$0xf]
  %v977 = vld [vmem:[%s1 + $0x5c] sm:$0xf]
  %v978 = vld [vmem:[%s1 + $0x60] sm:$0xf]
  %v979 = vld [vmem:[%s1 + $0x64] sm:$0xf]
  %v980 = vld [vmem:[%s1 + $0x68] sm:$0xf]
  %v981 = vld [vmem:[%s1 + $0x6c] sm:$0xf]
  %v982 = vld [vmem:[%s1 + $0x70] sm:$0xf]
  %v983 = vld [vmem:[%s1 + $0x74] sm:$0xf]
  %v984 = vld [vmem:[%s1 + $0x78] sm:$0xf]
  %v985 = vld [vmem:[%s1 + $0x7c] sm:$0xf]
  %v986 = vld [vmem:[%s1 + $0x80] sm:$0xf]
  %v987 = vld [vmem:[%s1 + $0x84] sm:$0xf]
  %v988 = vld [vmem:[%s1 + $0x88] sm:$0xf]
  %v989 = vld [vmem:[%s1 + $0x8c] sm:$0xf]
  %v990 = vld [vmem:[%s1 + $0x90] sm:$0xf]
  %v991 = vld [vmem:[%s1 + $0x94] sm:$0xf]
  %v992 = vld [vmem:[%s1 + $0x98] sm:$0xf]
  %v993 = vld [vmem:[%s1 + $0x9c] sm:$0xf]
  %v994 = vld [vmem:[%s1 + $0xa0] sm:$0xf]
  %v995 = vld [vmem:[%s1 + $0xa4] sm:$0xf]
  %v996 = vld [vmem:[%s1 + $0xa8] sm:$0xf]
  %v997 = vld [vmem:[%s1 + $0xac] sm:$0xf]
  %v998 = vld [vmem:[%s1 + $0xb0] sm:$0xf]
  %v999 = vld [vmem:[%s1 + $0xb4] sm:$0xf]
  %v1000 = vld [vmem:[%s1 + $0xb8] sm:$0xf]
  %v1001 = vld [vmem:[%s1 + $0xbc] sm:$0xf]
  %s1002 = scalar_lea.vmem %s0, 12
  %v1003 = vld [vmem:[%s1002] sm:$0xf]
  %v1004 = vld [vmem:[%s1002 + $0x4] sm:$0xf]
  %v1005 = vld [vmem:[%s1002 + $0x8] sm:$0x1]
  %v1006 = vld [vmem:[%s1002 + $0xc] sm:$0xf]
  %v1007 = vld [vmem:[%s1002 + $0x10] sm:$0xf]
  %v1008 = vld [vmem:[%s1002 + $0x14] sm:$0x1]
  %v1009 = vld [vmem:[%s1002 + $0x18] sm:$0xf]
  %v1010 = vld [vmem:[%s1002 + $0x1c] sm:$0xf]
  %v1011 = vld [vmem:[%s1002 + $0x20] sm:$0x1]
  %v1012 = vld [vmem:[%s1002 + $0x24] sm:$0xf]
  %v1013 = vld [vmem:[%s1002 + $0x28] sm:$0xf]
  %v1014 = vld [vmem:[%s1002 + $0x2c] sm:$0x1]
  %v1015 = vld [vmem:[%s1002 + $0x30] sm:$0xf]
  %v1016 = vld [vmem:[%s1002 + $0x34] sm:$0xf]
  %v1017 = vld [vmem:[%s1002 + $0x38] sm:$0x1]
  %v1018 = vld [vmem:[%s1002 + $0x3c] sm:$0xf]
  %v1019 = vld [vmem:[%s1002 + $0x40] sm:$0xf]
  %v1020 = vld [vmem:[%s1002 + $0x44] sm:$0x1]
  %v1021 = vld [vmem:[%s1002 + $0x48] sm:$0xf]
  %v1022 = vld [vmem:[%s1002 + $0x4c] sm:$0xf]
  %v1023 = vld [vmem:[%s1002 + $0x50] sm:$0x1]
  %v1024 = vld [vmem:[%s1002 + $0x54] sm:$0xf]
  %v1025 = vld [vmem:[%s1002 + $0x58] sm:$0xf]
  %v1026 = vld [vmem:[%s1002 + $0x5c] sm:$0x1]
  %v1027 = vld [vmem:[%s1002 + $0x60] sm:$0xf]
  %v1028 = vld [vmem:[%s1002 + $0x64] sm:$0xf]
  %v1029 = vld [vmem:[%s1002 + $0x68] sm:$0x1]
  %v1030 = vld [vmem:[%s1002 + $0x6c] sm:$0xf]
  %v1031 = vld [vmem:[%s1002 + $0x70] sm:$0xf]
  %v1032 = vld [vmem:[%s1002 + $0x74] sm:$0x1]
  %v1033 = vld [vmem:[%s1002 + $0x78] sm:$0xf]
  %v1034 = vld [vmem:[%s1002 + $0x7c] sm:$0xf]
  %v1035 = vld [vmem:[%s1002 + $0x80] sm:$0x1]
  %v1036 = vld [vmem:[%s1002 + $0x84] sm:$0xf]
  %v1037 = vld [vmem:[%s1002 + $0x88] sm:$0xf]
  %v1038 = vld [vmem:[%s1002 + $0x8c] sm:$0x1]
  %v1039 = vld [vmem:[%s1002 + $0x90] sm:$0xf]
  %v1040 = vld [vmem:[%s1002 + $0x94] sm:$0xf]
  %v1041 = vld [vmem:[%s1002 + $0x98] sm:$0x1]
  %v1042 = vld [vmem:[%s1002 + $0x9c] sm:$0xf]
  %v1043 = vld [vmem:[%s1002 + $0xa0] sm:$0xf]
  %v1044 = vld [vmem:[%s1002 + $0xa4] sm:$0x1]
  %v1045 = vld [vmem:[%s1002 + $0xa8] sm:$0xf]
  %v1046 = vld [vmem:[%s1002 + $0xac] sm:$0xf]
  %v1047 = vld [vmem:[%s1002 + $0xb0] sm:$0x1]
  %v1048 = vld [vmem:[%s1002 + $0xb4] sm:$0xf]
  %v1049 = vld [vmem:[%s1002 + $0xb8] sm:$0xf]
  %v1050 = vld [vmem:[%s1002 + $0xbc] sm:$0x1]
  %v1051 = vld [vmem:[%s1002 + $0xd8] sm:$0xf]
  %v1052 = vld [vmem:[%s1002 + $0xdc] sm:$0xf]
  %v1053 = vld [vmem:[%s1002 + $0xe0] sm:$0x1]
  %v1054 = vld [vmem:[%s1002 + $0xe4] sm:$0xf]
  %v1055 = vld [vmem:[%s1002 + $0xe8] sm:$0xf]
  %v1056 = vld [vmem:[%s1002 + $0xec] sm:$0x1]
  %v1057 = vld [vmem:[%s1002 + $0xf0] sm:$0xf]
  %v1058 = vld [vmem:[%s1002 + $0xf4] sm:$0xf]
  %v1059 = vld [vmem:[%s1002 + $0xf8] sm:$0x1]
  %v1060 = vld [vmem:[%s1002 + $0xfc] sm:$0xf]
  %v1061 = vld [vmem:[%s1002 + $0x100] sm:$0xf]
  %v1062 = vld [vmem:[%s1002 + $0x104] sm:$0x1]
  %v1063 = vld [vmem:[%s1002 + $0x108] sm:$0xf]
  %v1064 = vld [vmem:[%s1002 + $0x10c] sm:$0xf]
  %v1065 = vld [vmem:[%s1002 + $0x110] sm:$0x1]
  %v1066 = vld [vmem:[%s1002 + $0x114] sm:$0xf]
  %v1067 = vld [vmem:[%s1002 + $0x118] sm:$0xf]
  %v1068 = vld [vmem:[%s1002 + $0x11c] sm:$0x1]
  %v1069 = vld [vmem:[%s1002 + $0x120] sm:$0xf]
  %v1070 = vld [vmem:[%s1002 + $0x124] sm:$0xf]
  %v1071 = vld [vmem:[%s1002 + $0x128] sm:$0x1]
  %v1072 = vld [vmem:[%s1002 + $0x12c] sm:$0xf]
  %v1073 = vld [vmem:[%s1002 + $0x130] sm:$0xf]
  %v1074 = vld [vmem:[%s1002 + $0x134] sm:$0x1]
  %v1075 = vld [vmem:[%s1002 + $0x138] sm:$0xf]
  %v1076 = vld [vmem:[%s1002 + $0x13c] sm:$0xf]
  %v1077 = vld [vmem:[%s1002 + $0x140] sm:$0x1]
  %v1078 = vld [vmem:[%s1002 + $0x144] sm:$0xf]
  %v1079 = vld [vmem:[%s1002 + $0x148] sm:$0xf]
  %v1080 = vld [vmem:[%s1002 + $0x14c] sm:$0x1]
  %v1081 = vld [vmem:[%s1002 + $0x150] sm:$0xf]
  %v1082 = vld [vmem:[%s1002 + $0x154] sm:$0xf]
  %v1083 = vld [vmem:[%s1002 + $0x158] sm:$0x1]
  %v1084 = vld [vmem:[%s1002 + $0x15c] sm:$0xf]
  %v1085 = vld [vmem:[%s1002 + $0x160] sm:$0xf]
  %v1086 = vld [vmem:[%s1002 + $0x164] sm:$0x1]
  %v1087 = vld [vmem:[%s1002 + $0x168] sm:$0xf]
  %v1088 = vld [vmem:[%s1002 + $0x16c] sm:$0xf]
  %v1089 = vld [vmem:[%s1002 + $0x170] sm:$0x1]
  %v1090 = vld [vmem:[%s1002 + $0x174] sm:$0xf]
  %v1091 = vld [vmem:[%s1002 + $0x178] sm:$0xf]
  %v1092 = vld [vmem:[%s1002 + $0x17c] sm:$0x1]
  %v1093 = vld [vmem:[%s1002 + $0x180] sm:$0xf]
  %v1094 = vld [vmem:[%s1002 + $0x184] sm:$0xf]
  %v1095 = vld [vmem:[%s1002 + $0x188] sm:$0x1]
  %v1096 = vld [vmem:[%s1002 + $0x18c] sm:$0xf]
  %v1097 = vld [vmem:[%s1002 + $0x190] sm:$0xf]
  %v1098 = vld [vmem:[%s1002 + $0x194] sm:$0x1]
  %v1163 = vunpack.c.l.b16 %v1003
  %v1164 = vunpack.c.l.b16 %v1004
  %v1165 = vunpack.c.l.b16 %v1006
  %v1166 = vunpack.c.l.b16 %v1007
  %v1167 = vunpack.c.l.b16 %v1009
  %v1168 = vunpack.c.l.b16 %v1010
  %v1169 = vunpack.c.l.b16 %v1012
  %v1170 = vunpack.c.l.b16 %v1013
  %v1171 = vunpack.c.l.b16 %v1015
  %v1172 = vunpack.c.l.b16 %v1016
  %v1173 = vunpack.c.l.b16 %v1018
  %v1174 = vunpack.c.l.b16 %v1019
  %v1175 = vunpack.c.l.b16 %v1021
  %v1176 = vunpack.c.l.b16 %v1022
  %v1177 = vunpack.c.l.b16 %v1024
  %v1178 = vunpack.c.l.b16 %v1025
  %v1179 = vunpack.c.l.b16 %v1027
  %v1180 = vunpack.c.l.b16 %v1028
  %v1181 = vunpack.c.l.b16 %v1030
  %v1182 = vunpack.c.l.b16 %v1031
  %v1183 = vunpack.c.l.b16 %v1033
  %v1184 = vunpack.c.l.b16 %v1034
  %v1185 = vunpack.c.l.b16 %v1036
  %v1186 = vunpack.c.l.b16 %v1037
  %v1187 = vunpack.c.l.b16 %v1039
  %v1188 = vunpack.c.l.b16 %v1040
  %v1189 = vunpack.c.l.b16 %v1042
  %v1190 = vunpack.c.l.b16 %v1043
  %v1191 = vunpack.c.l.b16 %v1045
  %v1192 = vunpack.c.l.b16 %v1046
  %v1193 = vunpack.c.l.b16 %v1048
  %v1194 = vunpack.c.l.b16 %v1049
  %v1195 = vunpack.c.l.b16 %v1051
  %v1196 = vunpack.c.l.b16 %v1052
  %v1197 = vunpack.c.l.b16 %v1054
  %v1198 = vunpack.c.l.b16 %v1055
  %v1199 = vunpack.c.l.b16 %v1057
  %v1200 = vunpack.c.l.b16 %v1058
  %v1201 = vunpack.c.l.b16 %v1060
  %v1202 = vunpack.c.l.b16 %v1061
  %v1203 = vunpack.c.l.b16 %v1063
  %v1204 = vunpack.c.l.b16 %v1064
  %v1205 = vunpack.c.l.b16 %v1066
  %v1206 = vunpack.c.l.b16 %v1067
  %v1207 = vunpack.c.l.b16 %v1069
  %v1208 = vunpack.c.l.b16 %v1070
  %v1209 = vunpack.c.l.b16 %v1072
  %v1210 = vunpack.c.l.b16 %v1073
  %v1211 = vunpack.c.l.b16 %v1075
  %v1212 = vunpack.c.l.b16 %v1076
  %v1213 = vunpack.c.l.b16 %v1078
  %v1214 = vunpack.c.l.b16 %v1079
  %v1215 = vunpack.c.l.b16 %v1081
  %v1216 = vunpack.c.l.b16 %v1082
  %v1217 = vunpack.c.l.b16 %v1084
  %v1218 = vunpack.c.l.b16 %v1085
  %v1219 = vunpack.c.l.b16 %v1087
  %v1220 = vunpack.c.l.b16 %v1088
  %v1221 = vunpack.c.l.b16 %v1090
  %v1222 = vunpack.c.l.b16 %v1091
  %v1223 = vunpack.c.l.b16 %v1093
  %v1224 = vunpack.c.l.b16 %v1094
  %v1225 = vunpack.c.l.b16 %v1096
  %v1226 = vunpack.c.l.b16 %v1097
  %v1227 = vpack.c.b16 %v1164, %v1163
  %v1228 = vpack.c.b16 %v1166, %v1165
  %v1229 = vpack.c.b16 %v1168, %v1167
  %v1230 = vpack.c.b16 %v1170, %v1169
  %v1231 = vpack.c.b16 %v1172, %v1171
  %v1232 = vpack.c.b16 %v1174, %v1173
  %v1233 = vpack.c.b16 %v1176, %v1175
  %v1234 = vpack.c.b16 %v1178, %v1177
  %v1235 = vpack.c.b16 %v1180, %v1179
  %v1236 = vpack.c.b16 %v1182, %v1181
  %v1237 = vpack.c.b16 %v1184, %v1183
  %v1238 = vpack.c.b16 %v1186, %v1185
  %v1239 = vpack.c.b16 %v1188, %v1187
  %v1240 = vpack.c.b16 %v1190, %v1189
  %v1241 = vpack.c.b16 %v1192, %v1191
  %v1242 = vpack.c.b16 %v1194, %v1193
  %v1243 = vpack.c.b16 %v1196, %v1195
  %v1244 = vpack.c.b16 %v1198, %v1197
  %v1245 = vpack.c.b16 %v1200, %v1199
  %v1246 = vpack.c.b16 %v1202, %v1201
  %v1247 = vpack.c.b16 %v1204, %v1203
  %v1248 = vpack.c.b16 %v1206, %v1205
  %v1249 = vpack.c.b16 %v1208, %v1207
  %v1250 = vpack.c.b16 %v1210, %v1209
  %v1251 = vpack.c.b16 %v1212, %v1211
  %v1252 = vpack.c.b16 %v1214, %v1213
  %v1253 = vpack.c.b16 %v1216, %v1215
  %v1254 = vpack.c.b16 %v1218, %v1217
  %v1255 = vpack.c.b16 %v1220, %v1219
  %v1256 = vpack.c.b16 %v1222, %v1221
  %v1257 = vpack.c.b16 %v1224, %v1223
  %v1258 = vpack.c.b16 %v1226, %v1225
  %v1323 = vunpack.c.l.b16 %v1005
  %v1324 = vunpack.c.l.b16 %v1008
  %v1325 = vunpack.c.l.b16 %v1011
  %v1326 = vunpack.c.l.b16 %v1014
  %v1327 = vunpack.c.l.b16 %v1017
  %v1328 = vunpack.c.l.b16 %v1020
  %v1329 = vunpack.c.l.b16 %v1023
  %v1330 = vunpack.c.l.b16 %v1026
  %v1331 = vunpack.c.l.b16 %v1029
  %v1332 = vunpack.c.l.b16 %v1032
  %v1333 = vunpack.c.l.b16 %v1035
  %v1334 = vunpack.c.l.b16 %v1038
  %v1335 = vunpack.c.l.b16 %v1041
  %v1336 = vunpack.c.l.b16 %v1044
  %v1337 = vunpack.c.l.b16 %v1047
  %v1338 = vunpack.c.l.b16 %v1050
  %v1339 = vunpack.c.l.b16 %v1053
  %v1340 = vunpack.c.l.b16 %v1056
  %v1341 = vunpack.c.l.b16 %v1059
  %v1342 = vunpack.c.l.b16 %v1062
  %v1343 = vunpack.c.l.b16 %v1065
  %v1344 = vunpack.c.l.b16 %v1068
  %v1345 = vunpack.c.l.b16 %v1071
  %v1346 = vunpack.c.l.b16 %v1074
  %v1347 = vunpack.c.l.b16 %v1077
  %v1348 = vunpack.c.l.b16 %v1080
  %v1349 = vunpack.c.l.b16 %v1083
  %v1350 = vunpack.c.l.b16 %v1086
  %v1351 = vunpack.c.l.b16 %v1089
  %v1352 = vunpack.c.l.b16 %v1092
  %v1353 = vunpack.c.l.b16 %v1095
  %v1354 = vunpack.c.l.b16 %v1098
  %v1355 = vpack.c.b16 %v1323, %v1323
  %v1356 = vpack.c.b16 %v1324, %v1324
  %v1357 = vpack.c.b16 %v1325, %v1325
  %v1358 = vpack.c.b16 %v1326, %v1326
  %v1359 = vpack.c.b16 %v1327, %v1327
  %v1360 = vpack.c.b16 %v1328, %v1328
  %v1361 = vpack.c.b16 %v1329, %v1329
  %v1362 = vpack.c.b16 %v1330, %v1330
  %v1363 = vpack.c.b16 %v1331, %v1331
  %v1364 = vpack.c.b16 %v1332, %v1332
  %v1365 = vpack.c.b16 %v1333, %v1333
  %v1366 = vpack.c.b16 %v1334, %v1334
  %v1367 = vpack.c.b16 %v1335, %v1335
  %v1368 = vpack.c.b16 %v1336, %v1336
  %v1369 = vpack.c.b16 %v1337, %v1337
  %v1370 = vpack.c.b16 %v1338, %v1338
  %v1371 = vpack.c.b16 %v1339, %v1339
  %v1372 = vpack.c.b16 %v1340, %v1340
  %v1373 = vpack.c.b16 %v1341, %v1341
  %v1374 = vpack.c.b16 %v1342, %v1342
  %v1375 = vpack.c.b16 %v1343, %v1343
  %v1376 = vpack.c.b16 %v1344, %v1344
  %v1377 = vpack.c.b16 %v1345, %v1345
  %v1378 = vpack.c.b16 %v1346, %v1346
  %v1379 = vpack.c.b16 %v1347, %v1347
  %v1380 = vpack.c.b16 %v1348, %v1348
  %v1381 = vpack.c.b16 %v1349, %v1349
  %v1382 = vpack.c.b16 %v1350, %v1350
  %v1383 = vpack.c.b16 %v1351, %v1351
  %v1384 = vpack.c.b16 %v1352, %v1352
  %v1385 = vpack.c.b16 %v1353, %v1353
  %v1386 = vpack.c.b16 %v1354, %v1354
  %v1388 = vshrl.u32 %v1227, 16
  %v1390 = vshll.u32 %v1227, 16
  %v1392 = vrot.slane %v1390, 1
  %v1393 = vor.u32 %v1388, %v1392
  %v1395 = vshll.u32 %v1355, 16
  %v1397 = vrot.slane %v1395, 1
  %v1398 = vsel %vm408, %v1393, %v1397
  %v1400 = vshrl.u32 %v1228, 16
  %v1402 = vshll.u32 %v1228, 16
  %v1404 = vrot.slane %v1402, 1
  %v1405 = vor.u32 %v1400, %v1404
  %v1407 = vshll.u32 %v1356, 16
  %v1409 = vrot.slane %v1407, 1
  %v1410 = vsel %vm408, %v1405, %v1409
  %v1412 = vshrl.u32 %v1229, 16
  %v1414 = vshll.u32 %v1229, 16
  %v1416 = vrot.slane %v1414, 1
  %v1417 = vor.u32 %v1412, %v1416
  %v1419 = vshll.u32 %v1357, 16
  %v1421 = vrot.slane %v1419, 1
  %v1422 = vsel %vm408, %v1417, %v1421
  %v1424 = vshrl.u32 %v1230, 16
  %v1426 = vshll.u32 %v1230, 16
  %v1428 = vrot.slane %v1426, 1
  %v1429 = vor.u32 %v1424, %v1428
  %v1431 = vshll.u32 %v1358, 16
  %v1433 = vrot.slane %v1431, 1
  %v1434 = vsel %vm408, %v1429, %v1433
  %v1436 = vshrl.u32 %v1231, 16
  %v1438 = vshll.u32 %v1231, 16
  %v1440 = vrot.slane %v1438, 1
  %v1441 = vor.u32 %v1436, %v1440
  %v1443 = vshll.u32 %v1359, 16
  %v1445 = vrot.slane %v1443, 1
  %v1446 = vsel %vm408, %v1441, %v1445
  %v1448 = vshrl.u32 %v1232, 16
  %v1450 = vshll.u32 %v1232, 16
  %v1452 = vrot.slane %v1450, 1
  %v1453 = vor.u32 %v1448, %v1452
  %v1455 = vshll.u32 %v1360, 16
  %v1457 = vrot.slane %v1455, 1
  %v1458 = vsel %vm408, %v1453, %v1457
  %v1460 = vshrl.u32 %v1233, 16
  %v1462 = vshll.u32 %v1233, 16
  %v1464 = vrot.slane %v1462, 1
  %v1465 = vor.u32 %v1460, %v1464
  %v1467 = vshll.u32 %v1361, 16
  %v1469 = vrot.slane %v1467, 1
  %v1470 = vsel %vm408, %v1465, %v1469
  %v1472 = vshrl.u32 %v1234, 16
  %v1474 = vshll.u32 %v1234, 16
  %v1476 = vrot.slane %v1474, 1
  %v1477 = vor.u32 %v1472, %v1476
  %v1479 = vshll.u32 %v1362, 16
  %v1481 = vrot.slane %v1479, 1
  %v1482 = vsel %vm408, %v1477, %v1481
  %v1484 = vshrl.u32 %v1235, 16
  %v1486 = vshll.u32 %v1235, 16
  %v1488 = vrot.slane %v1486, 1
  %v1489 = vor.u32 %v1484, %v1488
  %v1491 = vshll.u32 %v1363, 16
  %v1493 = vrot.slane %v1491, 1
  %v1494 = vsel %vm408, %v1489, %v1493
  %v1496 = vshrl.u32 %v1236, 16
  %v1498 = vshll.u32 %v1236, 16
  %v1500 = vrot.slane %v1498, 1
  %v1501 = vor.u32 %v1496, %v1500
  %v1503 = vshll.u32 %v1364, 16
  %v1505 = vrot.slane %v1503, 1
  %v1506 = vsel %vm408, %v1501, %v1505
  %v1508 = vshrl.u32 %v1237, 16
  %v1510 = vshll.u32 %v1237, 16
  %v1512 = vrot.slane %v1510, 1
  %v1513 = vor.u32 %v1508, %v1512
  %v1515 = vshll.u32 %v1365, 16
  %v1517 = vrot.slane %v1515, 1
  %v1518 = vsel %vm408, %v1513, %v1517
  %v1520 = vshrl.u32 %v1238, 16
  %v1522 = vshll.u32 %v1238, 16
  %v1524 = vrot.slane %v1522, 1
  %v1525 = vor.u32 %v1520, %v1524
  %v1527 = vshll.u32 %v1366, 16
  %v1529 = vrot.slane %v1527, 1
  %v1530 = vsel %vm408, %v1525, %v1529
  %v1532 = vshrl.u32 %v1239, 16
  %v1534 = vshll.u32 %v1239, 16
  %v1536 = vrot.slane %v1534, 1
  %v1537 = vor.u32 %v1532, %v1536
  %v1539 = vshll.u32 %v1367, 16
  %v1541 = vrot.slane %v1539, 1
  %v1542 = vsel %vm408, %v1537, %v1541
  %v1544 = vshrl.u32 %v1240, 16
  %v1546 = vshll.u32 %v1240, 16
  %v1548 = vrot.slane %v1546, 1
  %v1549 = vor.u32 %v1544, %v1548
  %v1551 = vshll.u32 %v1368, 16
  %v1553 = vrot.slane %v1551, 1
  %v1554 = vsel %vm408, %v1549, %v1553
  %v1556 = vshrl.u32 %v1241, 16
  %v1558 = vshll.u32 %v1241, 16
  %v1560 = vrot.slane %v1558, 1
  %v1561 = vor.u32 %v1556, %v1560
  %v1563 = vshll.u32 %v1369, 16
  %v1565 = vrot.slane %v1563, 1
  %v1566 = vsel %vm408, %v1561, %v1565
  %v1568 = vshrl.u32 %v1242, 16
  %v1570 = vshll.u32 %v1242, 16
  %v1572 = vrot.slane %v1570, 1
  %v1573 = vor.u32 %v1568, %v1572
  %v1575 = vshll.u32 %v1370, 16
  %v1577 = vrot.slane %v1575, 1
  %v1578 = vsel %vm408, %v1573, %v1577
  %v1580 = vshrl.u32 %v1243, 16
  %v1582 = vshll.u32 %v1243, 16
  %v1584 = vrot.slane %v1582, 1
  %v1585 = vor.u32 %v1580, %v1584
  %v1587 = vshll.u32 %v1371, 16
  %v1589 = vrot.slane %v1587, 1
  %v1590 = vsel %vm408, %v1585, %v1589
  %v1592 = vshrl.u32 %v1244, 16
  %v1594 = vshll.u32 %v1244, 16
  %v1596 = vrot.slane %v1594, 1
  %v1597 = vor.u32 %v1592, %v1596
  %v1599 = vshll.u32 %v1372, 16
  %v1601 = vrot.slane %v1599, 1
  %v1602 = vsel %vm408, %v1597, %v1601
  %v1604 = vshrl.u32 %v1245, 16
  %v1606 = vshll.u32 %v1245, 16
  %v1608 = vrot.slane %v1606, 1
  %v1609 = vor.u32 %v1604, %v1608
  %v1611 = vshll.u32 %v1373, 16
  %v1613 = vrot.slane %v1611, 1
  %v1614 = vsel %vm408, %v1609, %v1613
  %v1616 = vshrl.u32 %v1246, 16
  %v1618 = vshll.u32 %v1246, 16
  %v1620 = vrot.slane %v1618, 1
  %v1621 = vor.u32 %v1616, %v1620
  %v1623 = vshll.u32 %v1374, 16
  %v1625 = vrot.slane %v1623, 1
  %v1626 = vsel %vm408, %v1621, %v1625
  %v1628 = vshrl.u32 %v1247, 16
  %v1630 = vshll.u32 %v1247, 16
  %v1632 = vrot.slane %v1630, 1
  %v1633 = vor.u32 %v1628, %v1632
  %v1635 = vshll.u32 %v1375, 16
  %v1637 = vrot.slane %v1635, 1
  %v1638 = vsel %vm408, %v1633, %v1637
  %v1640 = vshrl.u32 %v1248, 16
  %v1642 = vshll.u32 %v1248, 16
  %v1644 = vrot.slane %v1642, 1
  %v1645 = vor.u32 %v1640, %v1644
  %v1647 = vshll.u32 %v1376, 16
  %v1649 = vrot.slane %v1647, 1
  %v1650 = vsel %vm408, %v1645, %v1649
  %v1652 = vshrl.u32 %v1249, 16
  %v1654 = vshll.u32 %v1249, 16
  %v1656 = vrot.slane %v1654, 1
  %v1657 = vor.u32 %v1652, %v1656
  %v1659 = vshll.u32 %v1377, 16
  %v1661 = vrot.slane %v1659, 1
  %v1662 = vsel %vm408, %v1657, %v1661
  %v1664 = vshrl.u32 %v1250, 16
  %v1666 = vshll.u32 %v1250, 16
  %v1668 = vrot.slane %v1666, 1
  %v1669 = vor.u32 %v1664, %v1668
  %v1671 = vshll.u32 %v1378, 16
  %v1673 = vrot.slane %v1671, 1
  %v1674 = vsel %vm408, %v1669, %v1673
  %v1676 = vshrl.u32 %v1251, 16
  %v1678 = vshll.u32 %v1251, 16
  %v1680 = vrot.slane %v1678, 1
  %v1681 = vor.u32 %v1676, %v1680
  %v1683 = vshll.u32 %v1379, 16
  %v1685 = vrot.slane %v1683, 1
  %v1686 = vsel %vm408, %v1681, %v1685
  %v1688 = vshrl.u32 %v1252, 16
  %v1690 = vshll.u32 %v1252, 16
  %v1692 = vrot.slane %v1690, 1
  %v1693 = vor.u32 %v1688, %v1692
  %v1695 = vshll.u32 %v1380, 16
  %v1697 = vrot.slane %v1695, 1
  %v1698 = vsel %vm408, %v1693, %v1697
  %v1700 = vshrl.u32 %v1253, 16
  %v1702 = vshll.u32 %v1253, 16
  %v1704 = vrot.slane %v1702, 1
  %v1705 = vor.u32 %v1700, %v1704
  %v1707 = vshll.u32 %v1381, 16
  %v1709 = vrot.slane %v1707, 1
  %v1710 = vsel %vm408, %v1705, %v1709
  %v1712 = vshrl.u32 %v1254, 16
  %v1714 = vshll.u32 %v1254, 16
  %v1716 = vrot.slane %v1714, 1
  %v1717 = vor.u32 %v1712, %v1716
  %v1719 = vshll.u32 %v1382, 16
  %v1721 = vrot.slane %v1719, 1
  %v1722 = vsel %vm408, %v1717, %v1721
  %v1724 = vshrl.u32 %v1255, 16
  %v1726 = vshll.u32 %v1255, 16
  %v1728 = vrot.slane %v1726, 1
  %v1729 = vor.u32 %v1724, %v1728
  %v1731 = vshll.u32 %v1383, 16
  %v1733 = vrot.slane %v1731, 1
  %v1734 = vsel %vm408, %v1729, %v1733
  %v1736 = vshrl.u32 %v1256, 16
  %v1738 = vshll.u32 %v1256, 16
  %v1740 = vrot.slane %v1738, 1
  %v1741 = vor.u32 %v1736, %v1740
  %v1743 = vshll.u32 %v1384, 16
  %v1745 = vrot.slane %v1743, 1
  %v1746 = vsel %vm408, %v1741, %v1745
  %v1748 = vshrl.u32 %v1257, 16
  %v1750 = vshll.u32 %v1257, 16
  %v1752 = vrot.slane %v1750, 1
  %v1753 = vor.u32 %v1748, %v1752
  %v1755 = vshll.u32 %v1385, 16
  %v1757 = vrot.slane %v1755, 1
  %v1758 = vsel %vm408, %v1753, %v1757
  %v1760 = vshrl.u32 %v1258, 16
  %v1762 = vshll.u32 %v1258, 16
  %v1764 = vrot.slane %v1762, 1
  %v1765 = vor.u32 %v1760, %v1764
  %v1767 = vshll.u32 %v1386, 16
  %v1769 = vrot.slane %v1767, 1
  %v1770 = vsel %vm408, %v1765, %v1769
  %v1803 = vrot.slane %v1227, 1
  %v1804 = vrot.slane %v1355, 1
  %v1805 = vsel %vm825, %v1803, %v1804
  %v1806 = vrot.slane %v1228, 1
  %v1807 = vrot.slane %v1356, 1
  %v1808 = vsel %vm825, %v1806, %v1807
  %v1809 = vrot.slane %v1229, 1
  %v1810 = vrot.slane %v1357, 1
  %v1811 = vsel %vm825, %v1809, %v1810
  %v1812 = vrot.slane %v1230, 1
  %v1813 = vrot.slane %v1358, 1
  %v1814 = vsel %vm825, %v1812, %v1813
  %v1815 = vrot.slane %v1231, 1
  %v1816 = vrot.slane %v1359, 1
  %v1817 = vsel %vm825, %v1815, %v1816
  %v1818 = vrot.slane %v1232, 1
  %v1819 = vrot.slane %v1360, 1
  %v1820 = vsel %vm825, %v1818, %v1819
  %v1821 = vrot.slane %v1233, 1
  %v1822 = vrot.slane %v1361, 1
  %v1823 = vsel %vm825, %v1821, %v1822
  %v1824 = vrot.slane %v1234, 1
  %v1825 = vrot.slane %v1362, 1
  %v1826 = vsel %vm825, %v1824, %v1825
  %v1827 = vrot.slane %v1235, 1
  %v1828 = vrot.slane %v1363, 1
  %v1829 = vsel %vm825, %v1827, %v1828
  %v1830 = vrot.slane %v1236, 1
  %v1831 = vrot.slane %v1364, 1
  %v1832 = vsel %vm825, %v1830, %v1831
  %v1833 = vrot.slane %v1237, 1
  %v1834 = vrot.slane %v1365, 1
  %v1835 = vsel %vm825, %v1833, %v1834
  %v1836 = vrot.slane %v1238, 1
  %v1837 = vrot.slane %v1366, 1
  %v1838 = vsel %vm825, %v1836, %v1837
  %v1839 = vrot.slane %v1239, 1
  %v1840 = vrot.slane %v1367, 1
  %v1841 = vsel %vm825, %v1839, %v1840
  %v1842 = vrot.slane %v1240, 1
  %v1843 = vrot.slane %v1368, 1
  %v1844 = vsel %vm825, %v1842, %v1843
  %v1845 = vrot.slane %v1241, 1
  %v1846 = vrot.slane %v1369, 1
  %v1847 = vsel %vm825, %v1845, %v1846
  %v1848 = vrot.slane %v1242, 1
  %v1849 = vrot.slane %v1370, 1
  %v1850 = vsel %vm825, %v1848, %v1849
  %v1851 = vrot.slane %v1243, 1
  %v1852 = vrot.slane %v1371, 1
  %v1853 = vsel %vm825, %v1851, %v1852
  %v1854 = vrot.slane %v1244, 1
  %v1855 = vrot.slane %v1372, 1
  %v1856 = vsel %vm825, %v1854, %v1855
  %v1857 = vrot.slane %v1245, 1
  %v1858 = vrot.slane %v1373, 1
  %v1859 = vsel %vm825, %v1857, %v1858
  %v1860 = vrot.slane %v1246, 1
  %v1861 = vrot.slane %v1374, 1
  %v1862 = vsel %vm825, %v1860, %v1861
  %v1863 = vrot.slane %v1247, 1
  %v1864 = vrot.slane %v1375, 1
  %v1865 = vsel %vm825, %v1863, %v1864
  %v1866 = vrot.slane %v1248, 1
  %v1867 = vrot.slane %v1376, 1
  %v1868 = vsel %vm825, %v1866, %v1867
  %v1869 = vrot.slane %v1249, 1
  %v1870 = vrot.slane %v1377, 1
  %v1871 = vsel %vm825, %v1869, %v1870
  %v1872 = vrot.slane %v1250, 1
  %v1873 = vrot.slane %v1378, 1
  %v1874 = vsel %vm825, %v1872, %v1873
  %v1875 = vrot.slane %v1251, 1
  %v1876 = vrot.slane %v1379, 1
  %v1877 = vsel %vm825, %v1875, %v1876
  %v1878 = vrot.slane %v1252, 1
  %v1879 = vrot.slane %v1380, 1
  %v1880 = vsel %vm825, %v1878, %v1879
  %v1881 = vrot.slane %v1253, 1
  %v1882 = vrot.slane %v1381, 1
  %v1883 = vsel %vm825, %v1881, %v1882
  %v1884 = vrot.slane %v1254, 1
  %v1885 = vrot.slane %v1382, 1
  %v1886 = vsel %vm825, %v1884, %v1885
  %v1887 = vrot.slane %v1255, 1
  %v1888 = vrot.slane %v1383, 1
  %v1889 = vsel %vm825, %v1887, %v1888
  %v1890 = vrot.slane %v1256, 1
  %v1891 = vrot.slane %v1384, 1
  %v1892 = vsel %vm825, %v1890, %v1891
  %v1893 = vrot.slane %v1257, 1
  %v1894 = vrot.slane %v1385, 1
  %v1895 = vsel %vm825, %v1893, %v1894
  %v1896 = vrot.slane %v1258, 1
  %v1897 = vrot.slane %v1386, 1
  %v1898 = vsel %vm825, %v1896, %v1897
  %s1931 = scalar_lea.vmem %s1, 192
  %v1932 = vld [vmem:[%s1931] sm:$0xf]
  %v1933 = vld [vmem:[%s1931 + $0x4] sm:$0xf]
  %v1934 = vld [vmem:[%s1931 + $0x8] sm:$0xf]
  %v1935 = vld [vmem:[%s1931 + $0xc] sm:$0xf]
  %v1936 = vld [vmem:[%s1931 + $0x10] sm:$0xf]
  %v1937 = vld [vmem:[%s1931 + $0x14] sm:$0xf]
  %v1938 = vld [vmem:[%s1931 + $0x18] sm:$0xf]
  %v1939 = vld [vmem:[%s1931 + $0x1c] sm:$0xf]
  %v1940 = vld [vmem:[%s1931 + $0x20] sm:$0xf]
  %v1941 = vld [vmem:[%s1931 + $0x24] sm:$0xf]
  %v1942 = vld [vmem:[%s1931 + $0x28] sm:$0xf]
  %v1943 = vld [vmem:[%s1931 + $0x2c] sm:$0xf]
  %v1944 = vld [vmem:[%s1931 + $0x30] sm:$0xf]
  %v1945 = vld [vmem:[%s1931 + $0x34] sm:$0xf]
  %v1946 = vld [vmem:[%s1931 + $0x38] sm:$0xf]
  %v1947 = vld [vmem:[%s1931 + $0x3c] sm:$0xf]
  %v1948 = vld [vmem:[%s1931 + $0x40] sm:$0xf]
  %v1949 = vld [vmem:[%s1931 + $0x44] sm:$0xf]
  %v1950 = vld [vmem:[%s1931 + $0x48] sm:$0xf]
  %v1951 = vld [vmem:[%s1931 + $0x4c] sm:$0xf]
  %v1952 = vld [vmem:[%s1931 + $0x50] sm:$0xf]
  %v1953 = vld [vmem:[%s1931 + $0x54] sm:$0xf]
  %v1954 = vld [vmem:[%s1931 + $0x58] sm:$0xf]
  %v1955 = vld [vmem:[%s1931 + $0x5c] sm:$0xf]
  %v1956 = vld [vmem:[%s1931 + $0x60] sm:$0xf]
  %v1957 = vld [vmem:[%s1931 + $0x64] sm:$0xf]
  %v1958 = vld [vmem:[%s1931 + $0x68] sm:$0xf]
  %v1959 = vld [vmem:[%s1931 + $0x6c] sm:$0xf]
  %v1960 = vld [vmem:[%s1931 + $0x70] sm:$0xf]
  %v1961 = vld [vmem:[%s1931 + $0x74] sm:$0xf]
  %v1962 = vld [vmem:[%s1931 + $0x78] sm:$0xf]
  %v1963 = vld [vmem:[%s1931 + $0x7c] sm:$0xf]
  %v1964 = vld [vmem:[%s1931 + $0x80] sm:$0xf]
  %v1965 = vld [vmem:[%s1931 + $0x84] sm:$0xf]
  %v1966 = vld [vmem:[%s1931 + $0x88] sm:$0xf]
  %v1967 = vld [vmem:[%s1931 + $0x8c] sm:$0xf]
  %v1968 = vld [vmem:[%s1931 + $0x90] sm:$0xf]
  %v1969 = vld [vmem:[%s1931 + $0x94] sm:$0xf]
  %v1970 = vld [vmem:[%s1931 + $0x98] sm:$0xf]
  %v1971 = vld [vmem:[%s1931 + $0x9c] sm:$0xf]
  %v1972 = vld [vmem:[%s1931 + $0xa0] sm:$0xf]
  %v1973 = vld [vmem:[%s1931 + $0xa4] sm:$0xf]
  %v1974 = vld [vmem:[%s1931 + $0xa8] sm:$0xf]
  %v1975 = vld [vmem:[%s1931 + $0xac] sm:$0xf]
  %v1976 = vld [vmem:[%s1931 + $0xb0] sm:$0xf]
  %v1977 = vld [vmem:[%s1931 + $0xb4] sm:$0xf]
  %v1978 = vld [vmem:[%s1931 + $0xb8] sm:$0xf]
  %v1979 = vld [vmem:[%s1931 + $0xbc] sm:$0xf]
  %v2028 = vunpack.c.l.b16 %v1932
  %v2029 = vunpack.c.l.b16 %v1933
  %v2030 = vunpack.c.l.b16 %v1934
  %v2031 = vunpack.c.l.b16 %v1935
  %v2032 = vunpack.c.l.b16 %v1936
  %v2033 = vunpack.c.l.b16 %v1937
  %v2034 = vunpack.c.l.b16 %v1938
  %v2035 = vunpack.c.l.b16 %v1939
  %v2036 = vunpack.c.l.b16 %v1940
  %v2037 = vunpack.c.l.b16 %v1941
  %v2038 = vunpack.c.l.b16 %v1942
  %v2039 = vunpack.c.l.b16 %v1943
  %v2040 = vunpack.c.l.b16 %v1944
  %v2041 = vunpack.c.l.b16 %v1945
  %v2042 = vunpack.c.l.b16 %v1946
  %v2043 = vunpack.c.l.b16 %v1947
  %v2044 = vunpack.c.l.b16 %v1948
  %v2045 = vunpack.c.l.b16 %v1949
  %v2046 = vunpack.c.l.b16 %v1950
  %v2047 = vunpack.c.l.b16 %v1951
  %v2048 = vunpack.c.l.b16 %v1952
  %v2049 = vunpack.c.l.b16 %v1953
  %v2050 = vunpack.c.l.b16 %v1954
  %v2051 = vunpack.c.l.b16 %v1955
  %v2052 = vunpack.c.l.b16 %v1956
  %v2053 = vunpack.c.l.b16 %v1957
  %v2054 = vunpack.c.l.b16 %v1958
  %v2055 = vunpack.c.l.b16 %v1959
  %v2056 = vunpack.c.l.b16 %v1960
  %v2057 = vunpack.c.l.b16 %v1961
  %v2058 = vunpack.c.l.b16 %v1962
  %v2059 = vunpack.c.l.b16 %v1963
  %v2060 = vunpack.c.l.b16 %v1964
  %v2061 = vunpack.c.l.b16 %v1965
  %v2062 = vunpack.c.l.b16 %v1966
  %v2063 = vunpack.c.l.b16 %v1967
  %v2064 = vunpack.c.l.b16 %v1968
  %v2065 = vunpack.c.l.b16 %v1969
  %v2066 = vunpack.c.l.b16 %v1970
  %v2067 = vunpack.c.l.b16 %v1971
  %v2068 = vunpack.c.l.b16 %v1972
  %v2069 = vunpack.c.l.b16 %v1973
  %v2070 = vunpack.c.l.b16 %v1974
  %v2071 = vunpack.c.l.b16 %v1975
  %v2072 = vunpack.c.l.b16 %v1976
  %v2073 = vunpack.c.l.b16 %v1977
  %v2074 = vunpack.c.l.b16 %v1978
  %v2075 = vunpack.c.l.b16 %v1979
  %v2076 = vpack.c.b16 %v2029, %v2028
  %v2077 = vpack.c.b16 %v2031, %v2030
  %v2078 = vpack.c.b16 %v2033, %v2032
  %v2079 = vpack.c.b16 %v2035, %v2034
  %v2080 = vpack.c.b16 %v2037, %v2036
  %v2081 = vpack.c.b16 %v2039, %v2038
  %v2082 = vpack.c.b16 %v2041, %v2040
  %v2083 = vpack.c.b16 %v2043, %v2042
  %v2084 = vpack.c.b16 %v2045, %v2044
  %v2085 = vpack.c.b16 %v2047, %v2046
  %v2086 = vpack.c.b16 %v2049, %v2048
  %v2087 = vpack.c.b16 %v2051, %v2050
  %v2088 = vpack.c.b16 %v2053, %v2052
  %v2089 = vpack.c.b16 %v2055, %v2054
  %v2090 = vpack.c.b16 %v2057, %v2056
  %v2091 = vpack.c.b16 %v2059, %v2058
  %v2092 = vpack.c.b16 %v2061, %v2060
  %v2093 = vpack.c.b16 %v2063, %v2062
  %v2094 = vpack.c.b16 %v2065, %v2064
  %v2095 = vpack.c.b16 %v2067, %v2066
  %v2096 = vpack.c.b16 %v2069, %v2068
  %v2097 = vpack.c.b16 %v2071, %v2070
  %v2098 = vpack.c.b16 %v2073, %v2072
  %v2099 = vpack.c.b16 %v2075, %v2074
  %2124 = vmatprep.subr.bf16.mxu0 0
  %2125 = vmatpush1.bf16.msra.mxu0 %v2083
  %2126 = vmatprep.subr.bf16.mxu0 0
  %2127 = vmatpush1.bf16.msra.mxu0 %v2082
  %2128 = vmatprep.subr.bf16.mxu0 0
  %2129 = vmatpush1.bf16.msra.mxu0 %v2081
  %2130 = vmatprep.subr.bf16.mxu0 0
  %2131 = vmatpush1.bf16.msra.mxu0 %v2080
  %2132 = vmatprep.subr.bf16.mxu0 0
  %2133 = vmatpush1.bf16.msra.mxu0 %v2079
  %2134 = vmatprep.subr.bf16.mxu0 0
  %2135 = vmatpush1.bf16.msra.mxu0 %v2078
  %2136 = vmatprep.subr.bf16.mxu0 0
  %2137 = vmatpush1.bf16.msra.mxu0 %v2077
  %2138 = vmatprep.subr.bf16.mxu0 0
  %2139 = vmatpush1.bf16.msra.mxu0 %v2076
  %2140 = vmatprep.subr.bf16.mxu0 0
  %2141 = vmatpush2.bf16.msra.mxu0 %v2091
  %2142 = vmatprep.subr.bf16.mxu0 0
  %2143 = vmatpush2.bf16.msra.mxu0 %v2090
  %2144 = vmatprep.subr.bf16.mxu0 0
  %2145 = vmatpush2.bf16.msra.mxu0 %v2089
  %2146 = vmatprep.subr.bf16.mxu0 0
  %2147 = vmatpush2.bf16.msra.mxu0 %v2088
  %2148 = vmatprep.subr.bf16.mxu0 0
  %2149 = vmatpush2.bf16.msra.mxu0 %v2087
  %2150 = vmatprep.subr.bf16.mxu0 0
  %2151 = vmatpush2.bf16.msra.mxu0 %v2086
  %2152 = vmatprep.subr.bf16.mxu0 0
  %2153 = vmatpush2.bf16.msra.mxu0 %v2085
  %2154 = vmatprep.subr.bf16.mxu0 0
  %2155 = vmatpush2.bf16.msra.mxu0 %v2084
  %2156 = vmatprep.mubr.bf16.mxu0 %v1398
  %2157 = vmatmul.mubr.bf16.gmra.mxu0 %v1227
  %v2158 = vpop.f32.mrf.mxu0
  %v2159 = vadd.f32 0.0, %v2158
  %v2160 = vpop.f32.mrf.mxu0
  %v2161 = vpop.f32.mrf.mxu0
  %v2162 = vadd.f32 0.0, %v2161
  %v2163 = vpop.f32.mrf.mxu0
  %2164 = vmatprep.mubr.bf16.mxu0 %v1410
  %2165 = vmatmul.mubr.bf16.gmra.mxu0 %v1228
  %v2166 = vpop.f32.mrf.mxu0
  %v2167 = vadd.f32 0.0, %v2166
  %v2168 = vpop.f32.mrf.mxu0
  %v2169 = vpop.f32.mrf.mxu0
  %v2170 = vadd.f32 0.0, %v2169
  %v2171 = vpop.f32.mrf.mxu0
  %2172 = vmatprep.mubr.bf16.mxu0 %v1422
  %2173 = vmatmul.mubr.bf16.gmra.mxu0 %v1229
  %v2174 = vpop.f32.mrf.mxu0
  %v2175 = vadd.f32 0.0, %v2174
  %v2176 = vpop.f32.mrf.mxu0
  %v2177 = vpop.f32.mrf.mxu0
  %v2178 = vadd.f32 0.0, %v2177
  %v2179 = vpop.f32.mrf.mxu0
  %2180 = vmatprep.mubr.bf16.mxu0 %v1434
  %2181 = vmatmul.mubr.bf16.gmra.mxu0 %v1230
  %v2182 = vpop.f32.mrf.mxu0
  %v2183 = vadd.f32 0.0, %v2182
  %v2184 = vpop.f32.mrf.mxu0
  %v2185 = vpop.f32.mrf.mxu0
  %v2186 = vadd.f32 0.0, %v2185
  %v2187 = vpop.f32.mrf.mxu0
  %2188 = vmatprep.mubr.bf16.mxu0 %v1446
  %2189 = vmatmul.mubr.bf16.gmra.mxu0 %v1231
  %v2190 = vpop.f32.mrf.mxu0
  %v2191 = vadd.f32 0.0, %v2190
  %v2192 = vpop.f32.mrf.mxu0
  %v2193 = vpop.f32.mrf.mxu0
  %v2194 = vadd.f32 0.0, %v2193
  %v2195 = vpop.f32.mrf.mxu0
  %2196 = vmatprep.mubr.bf16.mxu0 %v1458
  %2197 = vmatmul.mubr.bf16.gmra.mxu0 %v1232
  %v2198 = vpop.f32.mrf.mxu0
  %v2199 = vadd.f32 0.0, %v2198
  %v2200 = vpop.f32.mrf.mxu0
  %v2201 = vpop.f32.mrf.mxu0
  %v2202 = vadd.f32 0.0, %v2201
  %v2203 = vpop.f32.mrf.mxu0
  %2204 = vmatprep.mubr.bf16.mxu0 %v1470
  %2205 = vmatmul.mubr.bf16.gmra.mxu0 %v1233
  %v2206 = vpop.f32.mrf.mxu0
  %v2207 = vadd.f32 0.0, %v2206
  %v2208 = vpop.f32.mrf.mxu0
  %v2209 = vpop.f32.mrf.mxu0
  %v2210 = vadd.f32 0.0, %v2209
  %v2211 = vpop.f32.mrf.mxu0
  %2212 = vmatprep.mubr.bf16.mxu0 %v1482
  %2213 = vmatmul.mubr.bf16.gmra.mxu0 %v1234
  %v2214 = vpop.f32.mrf.mxu0
  %v2215 = vadd.f32 0.0, %v2214
  %v2216 = vpop.f32.mrf.mxu0
  %v2217 = vpop.f32.mrf.mxu0
  %v2218 = vadd.f32 0.0, %v2217
  %v2219 = vpop.f32.mrf.mxu0
  %2220 = vmatprep.mubr.bf16.mxu0 %v1494
  %2221 = vmatmul.mubr.bf16.gmra.mxu0 %v1235
  %v2222 = vpop.f32.mrf.mxu0
  %v2223 = vadd.f32 0.0, %v2222
  %v2224 = vpop.f32.mrf.mxu0
  %v2225 = vpop.f32.mrf.mxu0
  %v2226 = vadd.f32 0.0, %v2225
  %v2227 = vpop.f32.mrf.mxu0
  %2228 = vmatprep.mubr.bf16.mxu0 %v1506
  %2229 = vmatmul.mubr.bf16.gmra.mxu0 %v1236
  %v2230 = vpop.f32.mrf.mxu0
  %v2231 = vadd.f32 0.0, %v2230
  %v2232 = vpop.f32.mrf.mxu0
  %v2233 = vpop.f32.mrf.mxu0
  %v2234 = vadd.f32 0.0, %v2233
  %v2235 = vpop.f32.mrf.mxu0
  %2236 = vmatprep.mubr.bf16.mxu0 %v1518
  %2237 = vmatmul.mubr.bf16.gmra.mxu0 %v1237
  %v2238 = vpop.f32.mrf.mxu0
  %v2239 = vadd.f32 0.0, %v2238
  %v2240 = vpop.f32.mrf.mxu0
  %v2241 = vpop.f32.mrf.mxu0
  %v2242 = vadd.f32 0.0, %v2241
  %v2243 = vpop.f32.mrf.mxu0
  %2244 = vmatprep.mubr.bf16.mxu0 %v1530
  %2245 = vmatmul.mubr.bf16.gmra.mxu0 %v1238
  %v2246 = vpop.f32.mrf.mxu0
  %v2247 = vadd.f32 0.0, %v2246
  %v2248 = vpop.f32.mrf.mxu0
  %v2249 = vpop.f32.mrf.mxu0
  %v2250 = vadd.f32 0.0, %v2249
  %v2251 = vpop.f32.mrf.mxu0
  %2252 = vmatprep.mubr.bf16.mxu0 %v1542
  %2253 = vmatmul.mubr.bf16.gmra.mxu0 %v1239
  %v2254 = vpop.f32.mrf.mxu0
  %v2255 = vadd.f32 0.0, %v2254
  %v2256 = vpop.f32.mrf.mxu0
  %v2257 = vpop.f32.mrf.mxu0
  %v2258 = vadd.f32 0.0, %v2257
  %v2259 = vpop.f32.mrf.mxu0
  %2260 = vmatprep.mubr.bf16.mxu0 %v1554
  %2261 = vmatmul.mubr.bf16.gmra.mxu0 %v1240
  %v2262 = vpop.f32.mrf.mxu0
  %v2263 = vadd.f32 0.0, %v2262
  %v2264 = vpop.f32.mrf.mxu0
  %v2265 = vpop.f32.mrf.mxu0
  %v2266 = vadd.f32 0.0, %v2265
  %v2267 = vpop.f32.mrf.mxu0
  %2268 = vmatprep.mubr.bf16.mxu0 %v1566
  %2269 = vmatmul.mubr.bf16.gmra.mxu0 %v1241
  %v2270 = vpop.f32.mrf.mxu0
  %v2271 = vadd.f32 0.0, %v2270
  %v2272 = vpop.f32.mrf.mxu0
  %v2273 = vpop.f32.mrf.mxu0
  %v2274 = vadd.f32 0.0, %v2273
  %v2275 = vpop.f32.mrf.mxu0
  %2276 = vmatprep.mubr.bf16.mxu0 %v1578
  %2277 = vmatmul.mubr.bf16.gmra.mxu0 %v1242
  %v2278 = vpop.f32.mrf.mxu0
  %v2279 = vadd.f32 0.0, %v2278
  %v2280 = vpop.f32.mrf.mxu0
  %v2281 = vpop.f32.mrf.mxu0
  %v2282 = vadd.f32 0.0, %v2281
  %v2283 = vpop.f32.mrf.mxu0
  %2284 = vmatprep.mubr.bf16.mxu0 %v1590
  %2285 = vmatmul.mubr.bf16.gmra.mxu0 %v1243
  %v2286 = vpop.f32.mrf.mxu0
  %v2287 = vadd.f32 0.0, %v2286
  %v2288 = vpop.f32.mrf.mxu0
  %v2289 = vpop.f32.mrf.mxu0
  %v2290 = vadd.f32 0.0, %v2289
  %v2291 = vpop.f32.mrf.mxu0
  %2292 = vmatprep.mubr.bf16.mxu0 %v1602
  %2293 = vmatmul.mubr.bf16.gmra.mxu0 %v1244
  %v2294 = vpop.f32.mrf.mxu0
  %v2295 = vadd.f32 0.0, %v2294
  %v2296 = vpop.f32.mrf.mxu0
  %v2297 = vpop.f32.mrf.mxu0
  %v2298 = vadd.f32 0.0, %v2297
  %v2299 = vpop.f32.mrf.mxu0
  %2300 = vmatprep.mubr.bf16.mxu0 %v1614
  %2301 = vmatmul.mubr.bf16.gmra.mxu0 %v1245
  %v2302 = vpop.f32.mrf.mxu0
  %v2303 = vadd.f32 0.0, %v2302
  %v2304 = vpop.f32.mrf.mxu0
  %v2305 = vpop.f32.mrf.mxu0
  %v2306 = vadd.f32 0.0, %v2305
  %v2307 = vpop.f32.mrf.mxu0
  %2308 = vmatprep.mubr.bf16.mxu0 %v1626
  %2309 = vmatmul.mubr.bf16.gmra.mxu0 %v1246
  %v2310 = vpop.f32.mrf.mxu0
  %v2311 = vadd.f32 0.0, %v2310
  %v2312 = vpop.f32.mrf.mxu0
  %v2313 = vpop.f32.mrf.mxu0
  %v2314 = vadd.f32 0.0, %v2313
  %v2315 = vpop.f32.mrf.mxu0
  %2316 = vmatprep.mubr.bf16.mxu0 %v1638
  %2317 = vmatmul.mubr.bf16.gmra.mxu0 %v1247
  %v2318 = vpop.f32.mrf.mxu0
  %v2319 = vadd.f32 0.0, %v2318
  %v2320 = vpop.f32.mrf.mxu0
  %v2321 = vpop.f32.mrf.mxu0
  %v2322 = vadd.f32 0.0, %v2321
  %v2323 = vpop.f32.mrf.mxu0
  %2324 = vmatprep.mubr.bf16.mxu0 %v1650
  %2325 = vmatmul.mubr.bf16.gmra.mxu0 %v1248
  %v2326 = vpop.f32.mrf.mxu0
  %v2327 = vadd.f32 0.0, %v2326
  %v2328 = vpop.f32.mrf.mxu0
  %v2329 = vpop.f32.mrf.mxu0
  %v2330 = vadd.f32 0.0, %v2329
  %v2331 = vpop.f32.mrf.mxu0
  %2332 = vmatprep.mubr.bf16.mxu0 %v1662
  %2333 = vmatmul.mubr.bf16.gmra.mxu0 %v1249
  %v2334 = vpop.f32.mrf.mxu0
  %v2335 = vadd.f32 0.0, %v2334
  %v2336 = vpop.f32.mrf.mxu0
  %v2337 = vpop.f32.mrf.mxu0
  %v2338 = vadd.f32 0.0, %v2337
  %v2339 = vpop.f32.mrf.mxu0
  %2340 = vmatprep.mubr.bf16.mxu0 %v1674
  %2341 = vmatmul.mubr.bf16.gmra.mxu0 %v1250
  %v2342 = vpop.f32.mrf.mxu0
  %v2343 = vadd.f32 0.0, %v2342
  %v2344 = vpop.f32.mrf.mxu0
  %v2345 = vpop.f32.mrf.mxu0
  %v2346 = vadd.f32 0.0, %v2345
  %v2347 = vpop.f32.mrf.mxu0
  %2348 = vmatprep.mubr.bf16.mxu0 %v1686
  %2349 = vmatmul.mubr.bf16.gmra.mxu0 %v1251
  %v2350 = vpop.f32.mrf.mxu0
  %v2351 = vadd.f32 0.0, %v2350
  %v2352 = vpop.f32.mrf.mxu0
  %v2353 = vpop.f32.mrf.mxu0
  %v2354 = vadd.f32 0.0, %v2353
  %v2355 = vpop.f32.mrf.mxu0
  %2356 = vmatprep.mubr.bf16.mxu0 %v1698
  %2357 = vmatmul.mubr.bf16.gmra.mxu0 %v1252
  %v2358 = vpop.f32.mrf.mxu0
  %v2359 = vadd.f32 0.0, %v2358
  %v2360 = vpop.f32.mrf.mxu0
  %v2361 = vpop.f32.mrf.mxu0
  %v2362 = vadd.f32 0.0, %v2361
  %v2363 = vpop.f32.mrf.mxu0
  %2364 = vmatprep.mubr.bf16.mxu0 %v1710
  %2365 = vmatmul.mubr.bf16.gmra.mxu0 %v1253
  %v2366 = vpop.f32.mrf.mxu0
  %v2367 = vadd.f32 0.0, %v2366
  %v2368 = vpop.f32.mrf.mxu0
  %v2369 = vpop.f32.mrf.mxu0
  %v2370 = vadd.f32 0.0, %v2369
  %v2371 = vpop.f32.mrf.mxu0
  %2372 = vmatprep.mubr.bf16.mxu0 %v1722
  %2373 = vmatmul.mubr.bf16.gmra.mxu0 %v1254
  %v2374 = vpop.f32.mrf.mxu0
  %v2375 = vadd.f32 0.0, %v2374
  %v2376 = vpop.f32.mrf.mxu0
  %v2377 = vpop.f32.mrf.mxu0
  %v2378 = vadd.f32 0.0, %v2377
  %v2379 = vpop.f32.mrf.mxu0
  %2380 = vmatprep.mubr.bf16.mxu0 %v1734
  %2381 = vmatmul.mubr.bf16.gmra.mxu0 %v1255
  %v2382 = vpop.f32.mrf.mxu0
  %v2383 = vadd.f32 0.0, %v2382
  %v2384 = vpop.f32.mrf.mxu0
  %v2385 = vpop.f32.mrf.mxu0
  %v2386 = vadd.f32 0.0, %v2385
  %v2387 = vpop.f32.mrf.mxu0
  %2388 = vmatprep.mubr.bf16.mxu0 %v1746
  %2389 = vmatmul.mubr.bf16.gmra.mxu0 %v1256
  %v2390 = vpop.f32.mrf.mxu0
  %v2391 = vadd.f32 0.0, %v2390
  %v2392 = vpop.f32.mrf.mxu0
  %v2393 = vpop.f32.mrf.mxu0
  %v2394 = vadd.f32 0.0, %v2393
  %v2395 = vpop.f32.mrf.mxu0
  %2396 = vmatprep.mubr.bf16.mxu0 %v1758
  %2397 = vmatmul.mubr.bf16.gmra.mxu0 %v1257
  %v2398 = vpop.f32.mrf.mxu0
  %v2399 = vadd.f32 0.0, %v2398
  %v2400 = vpop.f32.mrf.mxu0
  %v2401 = vpop.f32.mrf.mxu0
  %v2402 = vadd.f32 0.0, %v2401
  %v2403 = vpop.f32.mrf.mxu0
  %2404 = vmatprep.mubr.bf16.mxu0 %v1770
  %2405 = vmatmul.mubr.bf16.gmra.mxu0 %v1258
  %v2406 = vpop.f32.mrf.mxu0
  %v2407 = vadd.f32 0.0, %v2406
  %v2408 = vpop.f32.mrf.mxu0
  %v2409 = vpop.f32.mrf.mxu0
  %v2410 = vadd.f32 0.0, %v2409
  %v2411 = vpop.f32.mrf.mxu0
  %2412 = vdwg.mxu0
  %2413 = vmatprep.subr.bf16.mxu0 0
  %2414 = vmatpush1.bf16.msra.mxu0 %v2099
  %2415 = vmatprep.subr.bf16.mxu0 0
  %2416 = vmatpush1.bf16.msra.mxu0 %v2098
  %2417 = vmatprep.subr.bf16.mxu0 0
  %2418 = vmatpush1.bf16.msra.mxu0 %v2097
  %2419 = vmatprep.subr.bf16.mxu0 0
  %2420 = vmatpush1.bf16.msra.mxu0 %v2096
  %2421 = vmatprep.subr.bf16.mxu0 0
  %2422 = vmatpush1.bf16.msra.mxu0 %v2095
  %2423 = vmatprep.subr.bf16.mxu0 0
  %2424 = vmatpush1.bf16.msra.mxu0 %v2094
  %2425 = vmatprep.subr.bf16.mxu0 0
  %2426 = vmatpush1.bf16.msra.mxu0 %v2093
  %2427 = vmatprep.subr.bf16.mxu0 0
  %2428 = vmatpush1.bf16.msra.mxu0 %v2092
  %2429 = vmatprep.subr.bf16.mxu0 0
  %2430 = vmatpush2.bf16.msra.mxu0 0
  %2431 = vmatprep.subr.bf16.mxu0 0
  %2432 = vmatpush2.bf16.msra.mxu0 0
  %2433 = vmatprep.subr.bf16.mxu0 0
  %2434 = vmatpush2.bf16.msra.mxu0 0
  %2435 = vmatprep.subr.bf16.mxu0 0
  %2436 = vmatpush2.bf16.msra.mxu0 0
  %2437 = vmatprep.subr.bf16.mxu0 0
  %2438 = vmatpush2.bf16.msra.mxu0 0
  %2439 = vmatprep.subr.bf16.mxu0 0
  %2440 = vmatpush2.bf16.msra.mxu0 0
  %2441 = vmatprep.subr.bf16.mxu0 0
  %2442 = vmatpush2.bf16.msra.mxu0 0
  %2443 = vmatprep.subr.bf16.mxu0 0
  %2444 = vmatpush2.bf16.msra.mxu0 0
  %2445 = vmatprep.mubr.bf16.mxu0 0
  %2446 = vmatmul.mubr.bf16.gmra.mxu0 %v1805
  %v2447 = vpop.f32.mrf.mxu0
  %v2448 = vadd.f32 %v2159, %v2447
  %v2449 = vpop.f32.mrf.mxu0
  %v2450 = vpop.f32.mrf.mxu0
  %v2451 = vadd.f32 %v2162, %v2450
  %v2452 = vpop.f32.mrf.mxu0
  %2453 = vmatprep.mubr.bf16.mxu0 0
  %2454 = vmatmul.mubr.bf16.gmra.mxu0 %v1808
  %v2455 = vpop.f32.mrf.mxu0
  %v2456 = vadd.f32 %v2167, %v2455
  %v2457 = vpop.f32.mrf.mxu0
  %v2458 = vpop.f32.mrf.mxu0
  %v2459 = vadd.f32 %v2170, %v2458
  %v2460 = vpop.f32.mrf.mxu0
  %2461 = vmatprep.mubr.bf16.mxu0 0
  %2462 = vmatmul.mubr.bf16.gmra.mxu0 %v1811
  %v2463 = vpop.f32.mrf.mxu0
  %v2464 = vadd.f32 %v2175, %v2463
  %v2465 = vpop.f32.mrf.mxu0
  %v2466 = vpop.f32.mrf.mxu0
  %v2467 = vadd.f32 %v2178, %v2466
  %v2468 = vpop.f32.mrf.mxu0
  %2469 = vmatprep.mubr.bf16.mxu0 0
  %2470 = vmatmul.mubr.bf16.gmra.mxu0 %v1814
  %v2471 = vpop.f32.mrf.mxu0
  %v2472 = vadd.f32 %v2183, %v2471
  %v2473 = vpop.f32.mrf.mxu0
  %v2474 = vpop.f32.mrf.mxu0
  %v2475 = vadd.f32 %v2186, %v2474
  %v2476 = vpop.f32.mrf.mxu0
  %2477 = vmatprep.mubr.bf16.mxu0 0
  %2478 = vmatmul.mubr.bf16.gmra.mxu0 %v1817
  %v2479 = vpop.f32.mrf.mxu0
  %v2480 = vadd.f32 %v2191, %v2479
  %v2481 = vpop.f32.mrf.mxu0
  %v2482 = vpop.f32.mrf.mxu0
  %v2483 = vadd.f32 %v2194, %v2482
  %v2484 = vpop.f32.mrf.mxu0
  %2485 = vmatprep.mubr.bf16.mxu0 0
  %2486 = vmatmul.mubr.bf16.gmra.mxu0 %v1820
  %v2487 = vpop.f32.mrf.mxu0
  %v2488 = vadd.f32 %v2199, %v2487
  %v2489 = vpop.f32.mrf.mxu0
  %v2490 = vpop.f32.mrf.mxu0
  %v2491 = vadd.f32 %v2202, %v2490
  %v2492 = vpop.f32.mrf.mxu0
  %2493 = vmatprep.mubr.bf16.mxu0 0
  %2494 = vmatmul.mubr.bf16.gmra.mxu0 %v1823
  %v2495 = vpop.f32.mrf.mxu0
  %v2496 = vadd.f32 %v2207, %v2495
  %v2497 = vpop.f32.mrf.mxu0
  %v2498 = vpop.f32.mrf.mxu0
  %v2499 = vadd.f32 %v2210, %v2498
  %v2500 = vpop.f32.mrf.mxu0
  %2501 = vmatprep.mubr.bf16.mxu0 0
  %2502 = vmatmul.mubr.bf16.gmra.mxu0 %v1826
  %v2503 = vpop.f32.mrf.mxu0
  %v2504 = vadd.f32 %v2215, %v2503
  %v2505 = vpop.f32.mrf.mxu0
  %v2506 = vpop.f32.mrf.mxu0
  %v2507 = vadd.f32 %v2218, %v2506
  %v2508 = vpop.f32.mrf.mxu0
  %2509 = vmatprep.mubr.bf16.mxu0 0
  %2510 = vmatmul.mubr.bf16.gmra.mxu0 %v1829
  %v2511 = vpop.f32.mrf.mxu0
  %v2512 = vadd.f32 %v2223, %v2511
  %v2513 = vpop.f32.mrf.mxu0
  %v2514 = vpop.f32.mrf.mxu0
  %v2515 = vadd.f32 %v2226, %v2514
  %v2516 = vpop.f32.mrf.mxu0
  %2517 = vmatprep.mubr.bf16.mxu0 0
  %2518 = vmatmul.mubr.bf16.gmra.mxu0 %v1832
  %v2519 = vpop.f32.mrf.mxu0
  %v2520 = vadd.f32 %v2231, %v2519
  %v2521 = vpop.f32.mrf.mxu0
  %v2522 = vpop.f32.mrf.mxu0
  %v2523 = vadd.f32 %v2234, %v2522
  %v2524 = vpop.f32.mrf.mxu0
  %2525 = vmatprep.mubr.bf16.mxu0 0
  %2526 = vmatmul.mubr.bf16.gmra.mxu0 %v1835
  %v2527 = vpop.f32.mrf.mxu0
  %v2528 = vadd.f32 %v2239, %v2527
  %v2529 = vpop.f32.mrf.mxu0
  %v2530 = vpop.f32.mrf.mxu0
  %v2531 = vadd.f32 %v2242, %v2530
  %v2532 = vpop.f32.mrf.mxu0
  %2533 = vmatprep.mubr.bf16.mxu0 0
  %2534 = vmatmul.mubr.bf16.gmra.mxu0 %v1838
  %v2535 = vpop.f32.mrf.mxu0
  %v2536 = vadd.f32 %v2247, %v2535
  %v2537 = vpop.f32.mrf.mxu0
  %v2538 = vpop.f32.mrf.mxu0
  %v2539 = vadd.f32 %v2250, %v2538
  %v2540 = vpop.f32.mrf.mxu0
  %2541 = vmatprep.mubr.bf16.mxu0 0
  %2542 = vmatmul.mubr.bf16.gmra.mxu0 %v1841
  %v2543 = vpop.f32.mrf.mxu0
  %v2544 = vadd.f32 %v2255, %v2543
  %v2545 = vpop.f32.mrf.mxu0
  %v2546 = vpop.f32.mrf.mxu0
  %v2547 = vadd.f32 %v2258, %v2546
  %v2548 = vpop.f32.mrf.mxu0
  %2549 = vmatprep.mubr.bf16.mxu0 0
  %2550 = vmatmul.mubr.bf16.gmra.mxu0 %v1844
  %v2551 = vpop.f32.mrf.mxu0
  %v2552 = vadd.f32 %v2263, %v2551
  %v2553 = vpop.f32.mrf.mxu0
  %v2554 = vpop.f32.mrf.mxu0
  %v2555 = vadd.f32 %v2266, %v2554
  %v2556 = vpop.f32.mrf.mxu0
  %2557 = vmatprep.mubr.bf16.mxu0 0
  %2558 = vmatmul.mubr.bf16.gmra.mxu0 %v1847
  %v2559 = vpop.f32.mrf.mxu0
  %v2560 = vadd.f32 %v2271, %v2559
  %v2561 = vpop.f32.mrf.mxu0
  %v2562 = vpop.f32.mrf.mxu0
  %v2563 = vadd.f32 %v2274, %v2562
  %v2564 = vpop.f32.mrf.mxu0
  %2565 = vmatprep.mubr.bf16.mxu0 0
  %2566 = vmatmul.mubr.bf16.gmra.mxu0 %v1850
  %v2567 = vpop.f32.mrf.mxu0
  %v2568 = vadd.f32 %v2279, %v2567
  %v2569 = vpop.f32.mrf.mxu0
  %v2570 = vpop.f32.mrf.mxu0
  %v2571 = vadd.f32 %v2282, %v2570
  %v2572 = vpop.f32.mrf.mxu0
  %2573 = vmatprep.mubr.bf16.mxu0 0
  %2574 = vmatmul.mubr.bf16.gmra.mxu0 %v1853
  %v2575 = vpop.f32.mrf.mxu0
  %v2576 = vadd.f32 %v2287, %v2575
  %v2577 = vpop.f32.mrf.mxu0
  %v2578 = vpop.f32.mrf.mxu0
  %v2579 = vadd.f32 %v2290, %v2578
  %v2580 = vpop.f32.mrf.mxu0
  %2581 = vmatprep.mubr.bf16.mxu0 0
  %2582 = vmatmul.mubr.bf16.gmra.mxu0 %v1856
  %v2583 = vpop.f32.mrf.mxu0
  %v2584 = vadd.f32 %v2295, %v2583
  %v2585 = vpop.f32.mrf.mxu0
  %v2586 = vpop.f32.mrf.mxu0
  %v2587 = vadd.f32 %v2298, %v2586
  %v2588 = vpop.f32.mrf.mxu0
  %2589 = vmatprep.mubr.bf16.mxu0 0
  %2590 = vmatmul.mubr.bf16.gmra.mxu0 %v1859
  %v2591 = vpop.f32.mrf.mxu0
  %v2592 = vadd.f32 %v2303, %v2591
  %v2593 = vpop.f32.mrf.mxu0
  %v2594 = vpop.f32.mrf.mxu0
  %v2595 = vadd.f32 %v2306, %v2594
  %v2596 = vpop.f32.mrf.mxu0
  %2597 = vmatprep.mubr.bf16.mxu0 0
  %2598 = vmatmul.mubr.bf16.gmra.mxu0 %v1862
  %v2599 = vpop.f32.mrf.mxu0
  %v2600 = vadd.f32 %v2311, %v2599
  %v2601 = vpop.f32.mrf.mxu0
  %v2602 = vpop.f32.mrf.mxu0
  %v2603 = vadd.f32 %v2314, %v2602
  %v2604 = vpop.f32.mrf.mxu0
  %2605 = vmatprep.mubr.bf16.mxu0 0
  %2606 = vmatmul.mubr.bf16.gmra.mxu0 %v1865
  %v2607 = vpop.f32.mrf.mxu0
  %v2608 = vadd.f32 %v2319, %v2607
  %v2609 = vpop.f32.mrf.mxu0
  %v2610 = vpop.f32.mrf.mxu0
  %v2611 = vadd.f32 %v2322, %v2610
  %v2612 = vpop.f32.mrf.mxu0
  %2613 = vmatprep.mubr.bf16.mxu0 0
  %2614 = vmatmul.mubr.bf16.gmra.mxu0 %v1868
  %v2615 = vpop.f32.mrf.mxu0
  %v2616 = vadd.f32 %v2327, %v2615
  %v2617 = vpop.f32.mrf.mxu0
  %v2618 = vpop.f32.mrf.mxu0
  %v2619 = vadd.f32 %v2330, %v2618
  %v2620 = vpop.f32.mrf.mxu0
  %2621 = vmatprep.mubr.bf16.mxu0 0
  %2622 = vmatmul.mubr.bf16.gmra.mxu0 %v1871
  %v2623 = vpop.f32.mrf.mxu0
  %v2624 = vadd.f32 %v2335, %v2623
  %v2625 = vpop.f32.mrf.mxu0
  %v2626 = vpop.f32.mrf.mxu0
  %v2627 = vadd.f32 %v2338, %v2626
  %v2628 = vpop.f32.mrf.mxu0
  %2629 = vmatprep.mubr.bf16.mxu0 0
  %2630 = vmatmul.mubr.bf16.gmra.mxu0 %v1874
  %v2631 = vpop.f32.mrf.mxu0
  %v2632 = vadd.f32 %v2343, %v2631
  %v2633 = vpop.f32.mrf.mxu0
  %v2634 = vpop.f32.mrf.mxu0
  %v2635 = vadd.f32 %v2346, %v2634
  %v2636 = vpop.f32.mrf.mxu0
  %2637 = vmatprep.mubr.bf16.mxu0 0
  %2638 = vmatmul.mubr.bf16.gmra.mxu0 %v1877
  %v2639 = vpop.f32.mrf.mxu0
  %v2640 = vadd.f32 %v2351, %v2639
  %v2641 = vpop.f32.mrf.mxu0
  %v2642 = vpop.f32.mrf.mxu0
  %v2643 = vadd.f32 %v2354, %v2642
  %v2644 = vpop.f32.mrf.mxu0
  %2645 = vmatprep.mubr.bf16.mxu0 0
  %2646 = vmatmul.mubr.bf16.gmra.mxu0 %v1880
  %v2647 = vpop.f32.mrf.mxu0
  %v2648 = vadd.f32 %v2359, %v2647
  %v2649 = vpop.f32.mrf.mxu0
  %v2650 = vpop.f32.mrf.mxu0
  %v2651 = vadd.f32 %v2362, %v2650
  %v2652 = vpop.f32.mrf.mxu0
  %2653 = vmatprep.mubr.bf16.mxu0 0
  %2654 = vmatmul.mubr.bf16.gmra.mxu0 %v1883
  %v2655 = vpop.f32.mrf.mxu0
  %v2656 = vadd.f32 %v2367, %v2655
  %v2657 = vpop.f32.mrf.mxu0
  %v2658 = vpop.f32.mrf.mxu0
  %v2659 = vadd.f32 %v2370, %v2658
  %v2660 = vpop.f32.mrf.mxu0
  %2661 = vmatprep.mubr.bf16.mxu0 0
  %2662 = vmatmul.mubr.bf16.gmra.mxu0 %v1886
  %v2663 = vpop.f32.mrf.mxu0
  %v2664 = vadd.f32 %v2375, %v2663
  %v2665 = vpop.f32.mrf.mxu0
  %v2666 = vpop.f32.mrf.mxu0
  %v2667 = vadd.f32 %v2378, %v2666
  %v2668 = vpop.f32.mrf.mxu0
  %2669 = vmatprep.mubr.bf16.mxu0 0
  %2670 = vmatmul.mubr.bf16.gmra.mxu0 %v1889
  %v2671 = vpop.f32.mrf.mxu0
  %v2672 = vadd.f32 %v2383, %v2671
  %v2673 = vpop.f32.mrf.mxu0
  %v2674 = vpop.f32.mrf.mxu0
  %v2675 = vadd.f32 %v2386, %v2674
  %v2676 = vpop.f32.mrf.mxu0
  %2677 = vmatprep.mubr.bf16.mxu0 0
  %2678 = vmatmul.mubr.bf16.gmra.mxu0 %v1892
  %v2679 = vpop.f32.mrf.mxu0
  %v2680 = vadd.f32 %v2391, %v2679
  %v2681 = vpop.f32.mrf.mxu0
  %v2682 = vpop.f32.mrf.mxu0
  %v2683 = vadd.f32 %v2394, %v2682
  %v2684 = vpop.f32.mrf.mxu0
  %2685 = vmatprep.mubr.bf16.mxu0 0
  %2686 = vmatmul.mubr.bf16.gmra.mxu0 %v1895
  %v2687 = vpop.f32.mrf.mxu0
  %v2688 = vadd.f32 %v2399, %v2687
  %v2689 = vpop.f32.mrf.mxu0
  %v2690 = vpop.f32.mrf.mxu0
  %v2691 = vadd.f32 %v2402, %v2690
  %v2692 = vpop.f32.mrf.mxu0
  %2693 = vmatprep.mubr.bf16.mxu0 0
  %2694 = vmatmul.mubr.bf16.gmra.mxu0 %v1898
  %v2695 = vpop.f32.mrf.mxu0
  %v2696 = vadd.f32 %v2407, %v2695
  %v2697 = vpop.f32.mrf.mxu0
  %v2698 = vpop.f32.mrf.mxu0
  %v2699 = vadd.f32 %v2410, %v2698
  %v2700 = vpop.f32.mrf.mxu0
  %2701 = vdwg.mxu0
  %v2750 = vunpack.c.l.b16 %v954
  %v2751 = vunpack.c.l.b16 %v955
  %v2752 = vunpack.c.l.b16 %v956
  %v2753 = vunpack.c.l.b16 %v957
  %v2754 = vunpack.c.l.b16 %v958
  %v2755 = vunpack.c.l.b16 %v959
  %v2756 = vunpack.c.l.b16 %v960
  %v2757 = vunpack.c.l.b16 %v961
  %v2758 = vunpack.c.l.b16 %v962
  %v2759 = vunpack.c.l.b16 %v963
  %v2760 = vunpack.c.l.b16 %v964
  %v2761 = vunpack.c.l.b16 %v965
  %v2762 = vunpack.c.l.b16 %v966
  %v2763 = vunpack.c.l.b16 %v967
  %v2764 = vunpack.c.l.b16 %v968
  %v2765 = vunpack.c.l.b16 %v969
  %v2766 = vunpack.c.l.b16 %v970
  %v2767 = vunpack.c.l.b16 %v971
  %v2768 = vunpack.c.l.b16 %v972
  %v2769 = vunpack.c.l.b16 %v973
  %v2770 = vunpack.c.l.b16 %v974
  %v2771 = vunpack.c.l.b16 %v975
  %v2772 = vunpack.c.l.b16 %v976
  %v2773 = vunpack.c.l.b16 %v977
  %v2774 = vunpack.c.l.b16 %v978
  %v2775 = vunpack.c.l.b16 %v979
  %v2776 = vunpack.c.l.b16 %v980
  %v2777 = vunpack.c.l.b16 %v981
  %v2778 = vunpack.c.l.b16 %v982
  %v2779 = vunpack.c.l.b16 %v983
  %v2780 = vunpack.c.l.b16 %v984
  %v2781 = vunpack.c.l.b16 %v985
  %v2782 = vunpack.c.l.b16 %v986
  %v2783 = vunpack.c.l.b16 %v987
  %v2784 = vunpack.c.l.b16 %v988
  %v2785 = vunpack.c.l.b16 %v989
  %v2786 = vunpack.c.l.b16 %v990
  %v2787 = vunpack.c.l.b16 %v991
  %v2788 = vunpack.c.l.b16 %v992
  %v2789 = vunpack.c.l.b16 %v993
  %v2790 = vunpack.c.l.b16 %v994
  %v2791 = vunpack.c.l.b16 %v995
  %v2792 = vunpack.c.l.b16 %v996
  %v2793 = vunpack.c.l.b16 %v997
  %v2794 = vunpack.c.l.b16 %v998
  %v2795 = vunpack.c.l.b16 %v999
  %v2796 = vunpack.c.l.b16 %v1000
  %v2797 = vunpack.c.l.b16 %v1001
  %v2798 = vpack.c.b16 %v2751, %v2750
  %v2799 = vpack.c.b16 %v2753, %v2752
  %v2800 = vpack.c.b16 %v2755, %v2754
  %v2801 = vpack.c.b16 %v2757, %v2756
  %v2802 = vpack.c.b16 %v2759, %v2758
  %v2803 = vpack.c.b16 %v2761, %v2760
  %v2804 = vpack.c.b16 %v2763, %v2762
  %v2805 = vpack.c.b16 %v2765, %v2764
  %v2806 = vpack.c.b16 %v2767, %v2766
  %v2807 = vpack.c.b16 %v2769, %v2768
  %v2808 = vpack.c.b16 %v2771, %v2770
  %v2809 = vpack.c.b16 %v2773, %v2772
  %v2810 = vpack.c.b16 %v2775, %v2774
  %v2811 = vpack.c.b16 %v2777, %v2776
  %v2812 = vpack.c.b16 %v2779, %v2778
  %v2813 = vpack.c.b16 %v2781, %v2780
  %v2814 = vpack.c.b16 %v2783, %v2782
  %v2815 = vpack.c.b16 %v2785, %v2784
  %v2816 = vpack.c.b16 %v2787, %v2786
  %v2817 = vpack.c.b16 %v2789, %v2788
  %v2818 = vpack.c.b16 %v2791, %v2790
  %v2819 = vpack.c.b16 %v2793, %v2792
  %v2820 = vpack.c.b16 %v2795, %v2794
  %v2821 = vpack.c.b16 %v2797, %v2796
  %2846 = vmatprep.subr.bf16.mxu0 0
  %2847 = vmatpush1.bf16.msra.mxu0 %v2805
  %2848 = vmatprep.subr.bf16.mxu0 0
  %2849 = vmatpush1.bf16.msra.mxu0 %v2804
  %2850 = vmatprep.subr.bf16.mxu0 0
  %2851 = vmatpush1.bf16.msra.mxu0 %v2803
  %2852 = vmatprep.subr.bf16.mxu0 0
  %2853 = vmatpush1.bf16.msra.mxu0 %v2802
  %2854 = vmatprep.subr.bf16.mxu0 0
  %2855 = vmatpush1.bf16.msra.mxu0 %v2801
  %2856 = vmatprep.subr.bf16.mxu0 0
  %2857 = vmatpush1.bf16.msra.mxu0 %v2800
  %2858 = vmatprep.subr.bf16.mxu0 0
  %2859 = vmatpush1.bf16.msra.mxu0 %v2799
  %2860 = vmatprep.subr.bf16.mxu0 0
  %2861 = vmatpush1.bf16.msra.mxu0 %v2798
  %2862 = vmatprep.subr.bf16.mxu0 0
  %2863 = vmatpush2.bf16.msra.mxu0 %v2813
  %2864 = vmatprep.subr.bf16.mxu0 0
  %2865 = vmatpush2.bf16.msra.mxu0 %v2812
  %2866 = vmatprep.subr.bf16.mxu0 0
  %2867 = vmatpush2.bf16.msra.mxu0 %v2811
  %2868 = vmatprep.subr.bf16.mxu0 0
  %2869 = vmatpush2.bf16.msra.mxu0 %v2810
  %2870 = vmatprep.subr.bf16.mxu0 0
  %2871 = vmatpush2.bf16.msra.mxu0 %v2809
  %2872 = vmatprep.subr.bf16.mxu0 0
  %2873 = vmatpush2.bf16.msra.mxu0 %v2808
  %2874 = vmatprep.subr.bf16.mxu0 0
  %2875 = vmatpush2.bf16.msra.mxu0 %v2807
  %2876 = vmatprep.subr.bf16.mxu0 0
  %2877 = vmatpush2.bf16.msra.mxu0 %v2806
  %2878 = vmatprep.mubr.bf16.mxu0 %v420
  %2879 = vmatmul.mubr.bf16.gmra.mxu0 %v248
  %v2880 = vpop.f32.mrf.mxu0
  %v2881 = vadd.f32 %v2448, %v2880
  %v2882 = vpop.f32.mrf.mxu0
  %v2883 = vpop.f32.mrf.mxu0
  %v2884 = vadd.f32 %v2451, %v2883
  %v2885 = vpop.f32.mrf.mxu0
  %2886 = vmatprep.mubr.bf16.mxu0 %v432
  %2887 = vmatmul.mubr.bf16.gmra.mxu0 %v249
  %v2888 = vpop.f32.mrf.mxu0
  %v2889 = vadd.f32 %v2456, %v2888
  %v2890 = vpop.f32.mrf.mxu0
  %v2891 = vpop.f32.mrf.mxu0
  %v2892 = vadd.f32 %v2459, %v2891
  %v2893 = vpop.f32.mrf.mxu0
  %2894 = vmatprep.mubr.bf16.mxu0 %v444
  %2895 = vmatmul.mubr.bf16.gmra.mxu0 %v250
  %v2896 = vpop.f32.mrf.mxu0
  %v2897 = vadd.f32 %v2464, %v2896
  %v2898 = vpop.f32.mrf.mxu0
  %v2899 = vpop.f32.mrf.mxu0
  %v2900 = vadd.f32 %v2467, %v2899
  %v2901 = vpop.f32.mrf.mxu0
  %2902 = vmatprep.mubr.bf16.mxu0 %v456
  %2903 = vmatmul.mubr.bf16.gmra.mxu0 %v251
  %v2904 = vpop.f32.mrf.mxu0
  %v2905 = vadd.f32 %v2472, %v2904
  %v2906 = vpop.f32.mrf.mxu0
  %v2907 = vpop.f32.mrf.mxu0
  %v2908 = vadd.f32 %v2475, %v2907
  %v2909 = vpop.f32.mrf.mxu0
  %2910 = vmatprep.mubr.bf16.mxu0 %v468
  %2911 = vmatmul.mubr.bf16.gmra.mxu0 %v252
  %v2912 = vpop.f32.mrf.mxu0
  %v2913 = vadd.f32 %v2480, %v2912
  %v2914 = vpop.f32.mrf.mxu0
  %v2915 = vpop.f32.mrf.mxu0
  %v2916 = vadd.f32 %v2483, %v2915
  %v2917 = vpop.f32.mrf.mxu0
  %2918 = vmatprep.mubr.bf16.mxu0 %v480
  %2919 = vmatmul.mubr.bf16.gmra.mxu0 %v253
  %v2920 = vpop.f32.mrf.mxu0
  %v2921 = vadd.f32 %v2488, %v2920
  %v2922 = vpop.f32.mrf.mxu0
  %v2923 = vpop.f32.mrf.mxu0
  %v2924 = vadd.f32 %v2491, %v2923
  %v2925 = vpop.f32.mrf.mxu0
  %2926 = vmatprep.mubr.bf16.mxu0 %v492
  %2927 = vmatmul.mubr.bf16.gmra.mxu0 %v254
  %v2928 = vpop.f32.mrf.mxu0
  %v2929 = vadd.f32 %v2496, %v2928
  %v2930 = vpop.f32.mrf.mxu0
  %v2931 = vpop.f32.mrf.mxu0
  %v2932 = vadd.f32 %v2499, %v2931
  %v2933 = vpop.f32.mrf.mxu0
  %2934 = vmatprep.mubr.bf16.mxu0 %v504
  %2935 = vmatmul.mubr.bf16.gmra.mxu0 %v255
  %v2936 = vpop.f32.mrf.mxu0
  %v2937 = vadd.f32 %v2504, %v2936
  %v2938 = vpop.f32.mrf.mxu0
  %v2939 = vpop.f32.mrf.mxu0
  %v2940 = vadd.f32 %v2507, %v2939
  %v2941 = vpop.f32.mrf.mxu0
  %2942 = vmatprep.mubr.bf16.mxu0 %v516
  %2943 = vmatmul.mubr.bf16.gmra.mxu0 %v256
  %v2944 = vpop.f32.mrf.mxu0
  %v2945 = vadd.f32 %v2512, %v2944
  %v2946 = vpop.f32.mrf.mxu0
  %v2947 = vpop.f32.mrf.mxu0
  %v2948 = vadd.f32 %v2515, %v2947
  %v2949 = vpop.f32.mrf.mxu0
  %2950 = vmatprep.mubr.bf16.mxu0 %v528
  %2951 = vmatmul.mubr.bf16.gmra.mxu0 %v257
  %v2952 = vpop.f32.mrf.mxu0
  %v2953 = vadd.f32 %v2520, %v2952
  %v2954 = vpop.f32.mrf.mxu0
  %v2955 = vpop.f32.mrf.mxu0
  %v2956 = vadd.f32 %v2523, %v2955
  %v2957 = vpop.f32.mrf.mxu0
  %2958 = vmatprep.mubr.bf16.mxu0 %v540
  %2959 = vmatmul.mubr.bf16.gmra.mxu0 %v258
  %v2960 = vpop.f32.mrf.mxu0
  %v2961 = vadd.f32 %v2528, %v2960
  %v2962 = vpop.f32.mrf.mxu0
  %v2963 = vpop.f32.mrf.mxu0
  %v2964 = vadd.f32 %v2531, %v2963
  %v2965 = vpop.f32.mrf.mxu0
  %2966 = vmatprep.mubr.bf16.mxu0 %v552
  %2967 = vmatmul.mubr.bf16.gmra.mxu0 %v259
  %v2968 = vpop.f32.mrf.mxu0
  %v2969 = vadd.f32 %v2536, %v2968
  %v2970 = vpop.f32.mrf.mxu0
  %v2971 = vpop.f32.mrf.mxu0
  %v2972 = vadd.f32 %v2539, %v2971
  %v2973 = vpop.f32.mrf.mxu0
  %2974 = vmatprep.mubr.bf16.mxu0 %v564
  %2975 = vmatmul.mubr.bf16.gmra.mxu0 %v260
  %v2976 = vpop.f32.mrf.mxu0
  %v2977 = vadd.f32 %v2544, %v2976
  %v2978 = vpop.f32.mrf.mxu0
  %v2979 = vpop.f32.mrf.mxu0
  %v2980 = vadd.f32 %v2547, %v2979
  %v2981 = vpop.f32.mrf.mxu0
  %2982 = vmatprep.mubr.bf16.mxu0 %v576
  %2983 = vmatmul.mubr.bf16.gmra.mxu0 %v261
  %v2984 = vpop.f32.mrf.mxu0
  %v2985 = vadd.f32 %v2552, %v2984
  %v2986 = vpop.f32.mrf.mxu0
  %v2987 = vpop.f32.mrf.mxu0
  %v2988 = vadd.f32 %v2555, %v2987
  %v2989 = vpop.f32.mrf.mxu0
  %2990 = vmatprep.mubr.bf16.mxu0 %v588
  %2991 = vmatmul.mubr.bf16.gmra.mxu0 %v262
  %v2992 = vpop.f32.mrf.mxu0
  %v2993 = vadd.f32 %v2560, %v2992
  %v2994 = vpop.f32.mrf.mxu0
  %v2995 = vpop.f32.mrf.mxu0
  %v2996 = vadd.f32 %v2563, %v2995
  %v2997 = vpop.f32.mrf.mxu0
  %2998 = vmatprep.mubr.bf16.mxu0 %v600
  %2999 = vmatmul.mubr.bf16.gmra.mxu0 %v263
  %v3000 = vpop.f32.mrf.mxu0
  %v3001 = vadd.f32 %v2568, %v3000
  %v3002 = vpop.f32.mrf.mxu0
  %v3003 = vpop.f32.mrf.mxu0
  %v3004 = vadd.f32 %v2571, %v3003
  %v3005 = vpop.f32.mrf.mxu0
  %3006 = vmatprep.mubr.bf16.mxu0 %v612
  %3007 = vmatmul.mubr.bf16.gmra.mxu0 %v264
  %v3008 = vpop.f32.mrf.mxu0
  %v3009 = vadd.f32 %v2576, %v3008
  %v3010 = vpop.f32.mrf.mxu0
  %v3011 = vpop.f32.mrf.mxu0
  %v3012 = vadd.f32 %v2579, %v3011
  %v3013 = vpop.f32.mrf.mxu0
  %3014 = vmatprep.mubr.bf16.mxu0 %v624
  %3015 = vmatmul.mubr.bf16.gmra.mxu0 %v265
  %v3016 = vpop.f32.mrf.mxu0
  %v3017 = vadd.f32 %v2584, %v3016
  %v3018 = vpop.f32.mrf.mxu0
  %v3019 = vpop.f32.mrf.mxu0
  %v3020 = vadd.f32 %v2587, %v3019
  %v3021 = vpop.f32.mrf.mxu0
  %3022 = vmatprep.mubr.bf16.mxu0 %v636
  %3023 = vmatmul.mubr.bf16.gmra.mxu0 %v266
  %v3024 = vpop.f32.mrf.mxu0
  %v3025 = vadd.f32 %v2592, %v3024
  %v3026 = vpop.f32.mrf.mxu0
  %v3027 = vpop.f32.mrf.mxu0
  %v3028 = vadd.f32 %v2595, %v3027
  %v3029 = vpop.f32.mrf.mxu0
  %3030 = vmatprep.mubr.bf16.mxu0 %v648
  %3031 = vmatmul.mubr.bf16.gmra.mxu0 %v267
  %v3032 = vpop.f32.mrf.mxu0
  %v3033 = vadd.f32 %v2600, %v3032
  %v3034 = vpop.f32.mrf.mxu0
  %v3035 = vpop.f32.mrf.mxu0
  %v3036 = vadd.f32 %v2603, %v3035
  %v3037 = vpop.f32.mrf.mxu0
  %3038 = vmatprep.mubr.bf16.mxu0 %v660
  %3039 = vmatmul.mubr.bf16.gmra.mxu0 %v268
  %v3040 = vpop.f32.mrf.mxu0
  %v3041 = vadd.f32 %v2608, %v3040
  %v3042 = vpop.f32.mrf.mxu0
  %v3043 = vpop.f32.mrf.mxu0
  %v3044 = vadd.f32 %v2611, %v3043
  %v3045 = vpop.f32.mrf.mxu0
  %3046 = vmatprep.mubr.bf16.mxu0 %v672
  %3047 = vmatmul.mubr.bf16.gmra.mxu0 %v269
  %v3048 = vpop.f32.mrf.mxu0
  %v3049 = vadd.f32 %v2616, %v3048
  %v3050 = vpop.f32.mrf.mxu0
  %v3051 = vpop.f32.mrf.mxu0
  %v3052 = vadd.f32 %v2619, %v3051
  %v3053 = vpop.f32.mrf.mxu0
  %3054 = vmatprep.mubr.bf16.mxu0 %v684
  %3055 = vmatmul.mubr.bf16.gmra.mxu0 %v270
  %v3056 = vpop.f32.mrf.mxu0
  %v3057 = vadd.f32 %v2624, %v3056
  %v3058 = vpop.f32.mrf.mxu0
  %v3059 = vpop.f32.mrf.mxu0
  %v3060 = vadd.f32 %v2627, %v3059
  %v3061 = vpop.f32.mrf.mxu0
  %3062 = vmatprep.mubr.bf16.mxu0 %v696
  %3063 = vmatmul.mubr.bf16.gmra.mxu0 %v271
  %v3064 = vpop.f32.mrf.mxu0
  %v3065 = vadd.f32 %v2632, %v3064
  %v3066 = vpop.f32.mrf.mxu0
  %v3067 = vpop.f32.mrf.mxu0
  %v3068 = vadd.f32 %v2635, %v3067
  %v3069 = vpop.f32.mrf.mxu0
  %3070 = vmatprep.mubr.bf16.mxu0 %v708
  %3071 = vmatmul.mubr.bf16.gmra.mxu0 %v272
  %v3072 = vpop.f32.mrf.mxu0
  %v3073 = vadd.f32 %v2640, %v3072
  %v3074 = vpop.f32.mrf.mxu0
  %v3075 = vpop.f32.mrf.mxu0
  %v3076 = vadd.f32 %v2643, %v3075
  %v3077 = vpop.f32.mrf.mxu0
  %3078 = vmatprep.mubr.bf16.mxu0 %v720
  %3079 = vmatmul.mubr.bf16.gmra.mxu0 %v273
  %v3080 = vpop.f32.mrf.mxu0
  %v3081 = vadd.f32 %v2648, %v3080
  %v3082 = vpop.f32.mrf.mxu0
  %v3083 = vpop.f32.mrf.mxu0
  %v3084 = vadd.f32 %v2651, %v3083
  %v3085 = vpop.f32.mrf.mxu0
  %3086 = vmatprep.mubr.bf16.mxu0 %v732
  %3087 = vmatmul.mubr.bf16.gmra.mxu0 %v274
  %v3088 = vpop.f32.mrf.mxu0
  %v3089 = vadd.f32 %v2656, %v3088
  %v3090 = vpop.f32.mrf.mxu0
  %v3091 = vpop.f32.mrf.mxu0
  %v3092 = vadd.f32 %v2659, %v3091
  %v3093 = vpop.f32.mrf.mxu0
  %3094 = vmatprep.mubr.bf16.mxu0 %v744
  %3095 = vmatmul.mubr.bf16.gmra.mxu0 %v275
  %v3096 = vpop.f32.mrf.mxu0
  %v3097 = vadd.f32 %v2664, %v3096
  %v3098 = vpop.f32.mrf.mxu0
  %v3099 = vpop.f32.mrf.mxu0
  %v3100 = vadd.f32 %v2667, %v3099
  %v3101 = vpop.f32.mrf.mxu0
  %3102 = vmatprep.mubr.bf16.mxu0 %v756
  %3103 = vmatmul.mubr.bf16.gmra.mxu0 %v276
  %v3104 = vpop.f32.mrf.mxu0
  %v3105 = vadd.f32 %v2672, %v3104
  %v3106 = vpop.f32.mrf.mxu0
  %v3107 = vpop.f32.mrf.mxu0
  %v3108 = vadd.f32 %v2675, %v3107
  %v3109 = vpop.f32.mrf.mxu0
  %3110 = vmatprep.mubr.bf16.mxu0 %v768
  %3111 = vmatmul.mubr.bf16.gmra.mxu0 %v277
  %v3112 = vpop.f32.mrf.mxu0
  %v3113 = vadd.f32 %v2680, %v3112
  %v3114 = vpop.f32.mrf.mxu0
  %v3115 = vpop.f32.mrf.mxu0
  %v3116 = vadd.f32 %v2683, %v3115
  %v3117 = vpop.f32.mrf.mxu0
  %3118 = vmatprep.mubr.bf16.mxu0 %v780
  %3119 = vmatmul.mubr.bf16.gmra.mxu0 %v278
  %v3120 = vpop.f32.mrf.mxu0
  %v3121 = vadd.f32 %v2688, %v3120
  %v3122 = vpop.f32.mrf.mxu0
  %v3123 = vpop.f32.mrf.mxu0
  %v3124 = vadd.f32 %v2691, %v3123
  %v3125 = vpop.f32.mrf.mxu0
  %3126 = vmatprep.mubr.bf16.mxu0 %v792
  %3127 = vmatmul.mubr.bf16.gmra.mxu0 %v279
  %v3128 = vpop.f32.mrf.mxu0
  %v3129 = vadd.f32 %v2696, %v3128
  %v3130 = vpop.f32.mrf.mxu0
  %v3131 = vpop.f32.mrf.mxu0
  %v3132 = vadd.f32 %v2699, %v3131
  %v3133 = vpop.f32.mrf.mxu0
  %3134 = vdwg.mxu0
  %3135 = vmatprep.subr.bf16.mxu0 0
  %3136 = vmatpush1.bf16.msra.mxu0 %v2821
  %3137 = vmatprep.subr.bf16.mxu0 0
  %3138 = vmatpush1.bf16.msra.mxu0 %v2820
  %3139 = vmatprep.subr.bf16.mxu0 0
  %3140 = vmatpush1.bf16.msra.mxu0 %v2819
  %3141 = vmatprep.subr.bf16.mxu0 0
  %3142 = vmatpush1.bf16.msra.mxu0 %v2818
  %3143 = vmatprep.subr.bf16.mxu0 0
  %3144 = vmatpush1.bf16.msra.mxu0 %v2817
  %3145 = vmatprep.subr.bf16.mxu0 0
  %3146 = vmatpush1.bf16.msra.mxu0 %v2816
  %3147 = vmatprep.subr.bf16.mxu0 0
  %3148 = vmatpush1.bf16.msra.mxu0 %v2815
  %3149 = vmatprep.subr.bf16.mxu0 0
  %3150 = vmatpush1.bf16.msra.mxu0 %v2814
  %3151 = vmatprep.subr.bf16.mxu0 0
  %3152 = vmatpush2.bf16.msra.mxu0 0
  %3153 = vmatprep.subr.bf16.mxu0 0
  %3154 = vmatpush2.bf16.msra.mxu0 0
  %3155 = vmatprep.subr.bf16.mxu0 0
  %3156 = vmatpush2.bf16.msra.mxu0 0
  %3157 = vmatprep.subr.bf16.mxu0 0
  %3158 = vmatpush2.bf16.msra.mxu0 0
  %3159 = vmatprep.subr.bf16.mxu0 0
  %3160 = vmatpush2.bf16.msra.mxu0 0
  %3161 = vmatprep.subr.bf16.mxu0 0
  %3162 = vmatpush2.bf16.msra.mxu0 0
  %3163 = vmatprep.subr.bf16.mxu0 0
  %3164 = vmatpush2.bf16.msra.mxu0 0
  %3165 = vmatprep.subr.bf16.mxu0 0
  %3166 = vmatpush2.bf16.msra.mxu0 0
  %3167 = vmatprep.mubr.bf16.mxu0 0
  %3168 = vmatmul.mubr.bf16.gmra.mxu0 %v828
  %v3169 = vpop.f32.mrf.mxu0
  %v3170 = vadd.f32 %v2881, %v3169
  %v3171 = vpop.f32.mrf.mxu0
  %v3172 = vpop.f32.mrf.mxu0
  %v3173 = vadd.f32 %v2884, %v3172
  %v3174 = vpop.f32.mrf.mxu0
  %3175 = vmatprep.mubr.bf16.mxu0 0
  %3176 = vmatmul.mubr.bf16.gmra.mxu0 %v831
  %v3177 = vpop.f32.mrf.mxu0
  %v3178 = vadd.f32 %v2889, %v3177
  %v3179 = vpop.f32.mrf.mxu0
  %v3180 = vpop.f32.mrf.mxu0
  %v3181 = vadd.f32 %v2892, %v3180
  %v3182 = vpop.f32.mrf.mxu0
  %3183 = vmatprep.mubr.bf16.mxu0 0
  %3184 = vmatmul.mubr.bf16.gmra.mxu0 %v834
  %v3185 = vpop.f32.mrf.mxu0
  %v3186 = vadd.f32 %v2897, %v3185
  %v3187 = vpop.f32.mrf.mxu0
  %v3188 = vpop.f32.mrf.mxu0
  %v3189 = vadd.f32 %v2900, %v3188
  %v3190 = vpop.f32.mrf.mxu0
  %3191 = vmatprep.mubr.bf16.mxu0 0
  %3192 = vmatmul.mubr.bf16.gmra.mxu0 %v837
  %v3193 = vpop.f32.mrf.mxu0
  %v3194 = vadd.f32 %v2905, %v3193
  %v3195 = vpop.f32.mrf.mxu0
  %v3196 = vpop.f32.mrf.mxu0
  %v3197 = vadd.f32 %v2908, %v3196
  %v3198 = vpop.f32.mrf.mxu0
  %3199 = vmatprep.mubr.bf16.mxu0 0
  %3200 = vmatmul.mubr.bf16.gmra.mxu0 %v840
  %v3201 = vpop.f32.mrf.mxu0
  %v3202 = vadd.f32 %v2913, %v3201
  %v3203 = vpop.f32.mrf.mxu0
  %v3204 = vpop.f32.mrf.mxu0
  %v3205 = vadd.f32 %v2916, %v3204
  %v3206 = vpop.f32.mrf.mxu0
  %3207 = vmatprep.mubr.bf16.mxu0 0
  %3208 = vmatmul.mubr.bf16.gmra.mxu0 %v843
  %v3209 = vpop.f32.mrf.mxu0
  %v3210 = vadd.f32 %v2921, %v3209
  %v3211 = vpop.f32.mrf.mxu0
  %v3212 = vpop.f32.mrf.mxu0
  %v3213 = vadd.f32 %v2924, %v3212
  %v3214 = vpop.f32.mrf.mxu0
  %3215 = vmatprep.mubr.bf16.mxu0 0
  %3216 = vmatmul.mubr.bf16.gmra.mxu0 %v846
  %v3217 = vpop.f32.mrf.mxu0
  %v3218 = vadd.f32 %v2929, %v3217
  %v3219 = vpop.f32.mrf.mxu0
  %v3220 = vpop.f32.mrf.mxu0
  %v3221 = vadd.f32 %v2932, %v3220
  %v3222 = vpop.f32.mrf.mxu0
  %3223 = vmatprep.mubr.bf16.mxu0 0
  %3224 = vmatmul.mubr.bf16.gmra.mxu0 %v849
  %v3225 = vpop.f32.mrf.mxu0
  %v3226 = vadd.f32 %v2937, %v3225
  %v3227 = vpop.f32.mrf.mxu0
  %v3228 = vpop.f32.mrf.mxu0
  %v3229 = vadd.f32 %v2940, %v3228
  %v3230 = vpop.f32.mrf.mxu0
  %3231 = vmatprep.mubr.bf16.mxu0 0
  %3232 = vmatmul.mubr.bf16.gmra.mxu0 %v852
  %v3233 = vpop.f32.mrf.mxu0
  %v3234 = vadd.f32 %v2945, %v3233
  %v3235 = vpop.f32.mrf.mxu0
  %v3236 = vpop.f32.mrf.mxu0
  %v3237 = vadd.f32 %v2948, %v3236
  %v3238 = vpop.f32.mrf.mxu0
  %3239 = vmatprep.mubr.bf16.mxu0 0
  %3240 = vmatmul.mubr.bf16.gmra.mxu0 %v855
  %v3241 = vpop.f32.mrf.mxu0
  %v3242 = vadd.f32 %v2953, %v3241
  %v3243 = vpop.f32.mrf.mxu0
  %v3244 = vpop.f32.mrf.mxu0
  %v3245 = vadd.f32 %v2956, %v3244
  %v3246 = vpop.f32.mrf.mxu0
  %3247 = vmatprep.mubr.bf16.mxu0 0
  %3248 = vmatmul.mubr.bf16.gmra.mxu0 %v858
  %v3249 = vpop.f32.mrf.mxu0
  %v3250 = vadd.f32 %v2961, %v3249
  %v3251 = vpop.f32.mrf.mxu0
  %v3252 = vpop.f32.mrf.mxu0
  %v3253 = vadd.f32 %v2964, %v3252
  %v3254 = vpop.f32.mrf.mxu0
  %3255 = vmatprep.mubr.bf16.mxu0 0
  %3256 = vmatmul.mubr.bf16.gmra.mxu0 %v861
  %v3257 = vpop.f32.mrf.mxu0
  %v3258 = vadd.f32 %v2969, %v3257
  %v3259 = vpop.f32.mrf.mxu0
  %v3260 = vpop.f32.mrf.mxu0
  %v3261 = vadd.f32 %v2972, %v3260
  %v3262 = vpop.f32.mrf.mxu0
  %3263 = vmatprep.mubr.bf16.mxu0 0
  %3264 = vmatmul.mubr.bf16.gmra.mxu0 %v864
  %v3265 = vpop.f32.mrf.mxu0
  %v3266 = vadd.f32 %v2977, %v3265
  %v3267 = vpop.f32.mrf.mxu0
  %v3268 = vpop.f32.mrf.mxu0
  %v3269 = vadd.f32 %v2980, %v3268
  %v3270 = vpop.f32.mrf.mxu0
  %3271 = vmatprep.mubr.bf16.mxu0 0
  %3272 = vmatmul.mubr.bf16.gmra.mxu0 %v867
  %v3273 = vpop.f32.mrf.mxu0
  %v3274 = vadd.f32 %v2985, %v3273
  %v3275 = vpop.f32.mrf.mxu0
  %v3276 = vpop.f32.mrf.mxu0
  %v3277 = vadd.f32 %v2988, %v3276
  %v3278 = vpop.f32.mrf.mxu0
  %3279 = vmatprep.mubr.bf16.mxu0 0
  %3280 = vmatmul.mubr.bf16.gmra.mxu0 %v870
  %v3281 = vpop.f32.mrf.mxu0
  %v3282 = vadd.f32 %v2993, %v3281
  %v3283 = vpop.f32.mrf.mxu0
  %v3284 = vpop.f32.mrf.mxu0
  %v3285 = vadd.f32 %v2996, %v3284
  %v3286 = vpop.f32.mrf.mxu0
  %3287 = vmatprep.mubr.bf16.mxu0 0
  %3288 = vmatmul.mubr.bf16.gmra.mxu0 %v873
  %v3289 = vpop.f32.mrf.mxu0
  %v3290 = vadd.f32 %v3001, %v3289
  %v3291 = vpop.f32.mrf.mxu0
  %v3292 = vpop.f32.mrf.mxu0
  %v3293 = vadd.f32 %v3004, %v3292
  %v3294 = vpop.f32.mrf.mxu0
  %3295 = vmatprep.mubr.bf16.mxu0 0
  %3296 = vmatmul.mubr.bf16.gmra.mxu0 %v876
  %v3297 = vpop.f32.mrf.mxu0
  %v3298 = vadd.f32 %v3009, %v3297
  %v3299 = vpop.f32.mrf.mxu0
  %v3300 = vpop.f32.mrf.mxu0
  %v3301 = vadd.f32 %v3012, %v3300
  %v3302 = vpop.f32.mrf.mxu0
  %3303 = vmatprep.mubr.bf16.mxu0 0
  %3304 = vmatmul.mubr.bf16.gmra.mxu0 %v879
  %v3305 = vpop.f32.mrf.mxu0
  %v3306 = vadd.f32 %v3017, %v3305
  %v3307 = vpop.f32.mrf.mxu0
  %v3308 = vpop.f32.mrf.mxu0
  %v3309 = vadd.f32 %v3020, %v3308
  %v3310 = vpop.f32.mrf.mxu0
  %3311 = vmatprep.mubr.bf16.mxu0 0
  %3312 = vmatmul.mubr.bf16.gmra.mxu0 %v882
  %v3313 = vpop.f32.mrf.mxu0
  %v3314 = vadd.f32 %v3025, %v3313
  %v3315 = vpop.f32.mrf.mxu0
  %v3316 = vpop.f32.mrf.mxu0
  %v3317 = vadd.f32 %v3028, %v3316
  %v3318 = vpop.f32.mrf.mxu0
  %3319 = vmatprep.mubr.bf16.mxu0 0
  %3320 = vmatmul.mubr.bf16.gmra.mxu0 %v885
  %v3321 = vpop.f32.mrf.mxu0
  %v3322 = vadd.f32 %v3033, %v3321
  %v3323 = vpop.f32.mrf.mxu0
  %v3324 = vpop.f32.mrf.mxu0
  %v3325 = vadd.f32 %v3036, %v3324
  %v3326 = vpop.f32.mrf.mxu0
  %3327 = vmatprep.mubr.bf16.mxu0 0
  %3328 = vmatmul.mubr.bf16.gmra.mxu0 %v888
  %v3329 = vpop.f32.mrf.mxu0
  %v3330 = vadd.f32 %v3041, %v3329
  %v3331 = vpop.f32.mrf.mxu0
  %v3332 = vpop.f32.mrf.mxu0
  %v3333 = vadd.f32 %v3044, %v3332
  %v3334 = vpop.f32.mrf.mxu0
  %3335 = vmatprep.mubr.bf16.mxu0 0
  %3336 = vmatmul.mubr.bf16.gmra.mxu0 %v891
  %v3337 = vpop.f32.mrf.mxu0
  %v3338 = vadd.f32 %v3049, %v3337
  %v3339 = vpop.f32.mrf.mxu0
  %v3340 = vpop.f32.mrf.mxu0
  %v3341 = vadd.f32 %v3052, %v3340
  %v3342 = vpop.f32.mrf.mxu0
  %3343 = vmatprep.mubr.bf16.mxu0 0
  %3344 = vmatmul.mubr.bf16.gmra.mxu0 %v894
  %v3345 = vpop.f32.mrf.mxu0
  %v3346 = vadd.f32 %v3057, %v3345
  %v3347 = vpop.f32.mrf.mxu0
  %v3348 = vpop.f32.mrf.mxu0
  %v3349 = vadd.f32 %v3060, %v3348
  %v3350 = vpop.f32.mrf.mxu0
  %3351 = vmatprep.mubr.bf16.mxu0 0
  %3352 = vmatmul.mubr.bf16.gmra.mxu0 %v897
  %v3353 = vpop.f32.mrf.mxu0
  %v3354 = vadd.f32 %v3065, %v3353
  %v3355 = vpop.f32.mrf.mxu0
  %v3356 = vpop.f32.mrf.mxu0
  %v3357 = vadd.f32 %v3068, %v3356
  %v3358 = vpop.f32.mrf.mxu0
  %3359 = vmatprep.mubr.bf16.mxu0 0
  %3360 = vmatmul.mubr.bf16.gmra.mxu0 %v900
  %v3361 = vpop.f32.mrf.mxu0
  %v3362 = vadd.f32 %v3073, %v3361
  %v3363 = vpop.f32.mrf.mxu0
  %v3364 = vpop.f32.mrf.mxu0
  %v3365 = vadd.f32 %v3076, %v3364
  %v3366 = vpop.f32.mrf.mxu0
  %3367 = vmatprep.mubr.bf16.mxu0 0
  %3368 = vmatmul.mubr.bf16.gmra.mxu0 %v903
  %v3369 = vpop.f32.mrf.mxu0
  %v3370 = vadd.f32 %v3081, %v3369
  %v3371 = vpop.f32.mrf.mxu0
  %v3372 = vpop.f32.mrf.mxu0
  %v3373 = vadd.f32 %v3084, %v3372
  %v3374 = vpop.f32.mrf.mxu0
  %3375 = vmatprep.mubr.bf16.mxu0 0
  %3376 = vmatmul.mubr.bf16.gmra.mxu0 %v906
  %v3377 = vpop.f32.mrf.mxu0
  %v3378 = vadd.f32 %v3089, %v3377
  %v3379 = vpop.f32.mrf.mxu0
  %v3380 = vpop.f32.mrf.mxu0
  %v3381 = vadd.f32 %v3092, %v3380
  %v3382 = vpop.f32.mrf.mxu0
  %3383 = vmatprep.mubr.bf16.mxu0 0
  %3384 = vmatmul.mubr.bf16.gmra.mxu0 %v909
  %v3385 = vpop.f32.mrf.mxu0
  %v3386 = vadd.f32 %v3097, %v3385
  %v3387 = vpop.f32.mrf.mxu0
  %v3388 = vpop.f32.mrf.mxu0
  %v3389 = vadd.f32 %v3100, %v3388
  %v3390 = vpop.f32.mrf.mxu0
  %3391 = vmatprep.mubr.bf16.mxu0 0
  %3392 = vmatmul.mubr.bf16.gmra.mxu0 %v912
  %v3393 = vpop.f32.mrf.mxu0
  %v3394 = vadd.f32 %v3105, %v3393
  %v3395 = vpop.f32.mrf.mxu0
  %v3396 = vpop.f32.mrf.mxu0
  %v3397 = vadd.f32 %v3108, %v3396
  %v3398 = vpop.f32.mrf.mxu0
  %3399 = vmatprep.mubr.bf16.mxu0 0
  %3400 = vmatmul.mubr.bf16.gmra.mxu0 %v915
  %v3401 = vpop.f32.mrf.mxu0
  %v3402 = vadd.f32 %v3113, %v3401
  %v3403 = vpop.f32.mrf.mxu0
  %v3404 = vpop.f32.mrf.mxu0
  %v3405 = vadd.f32 %v3116, %v3404
  %v3406 = vpop.f32.mrf.mxu0
  %3407 = vmatprep.mubr.bf16.mxu0 0
  %3408 = vmatmul.mubr.bf16.gmra.mxu0 %v918
  %v3409 = vpop.f32.mrf.mxu0
  %v3410 = vadd.f32 %v3121, %v3409
  %v3411 = vpop.f32.mrf.mxu0
  %v3412 = vpop.f32.mrf.mxu0
  %v3413 = vadd.f32 %v3124, %v3412
  %v3414 = vpop.f32.mrf.mxu0
  %3415 = vmatprep.mubr.bf16.mxu0 0
  %3416 = vmatmul.mubr.bf16.gmra.mxu0 %v921
  %v3417 = vpop.f32.mrf.mxu0
  %v3418 = vadd.f32 %v3129, %v3417
  %v3419 = vpop.f32.mrf.mxu0
  %v3420 = vpop.f32.mrf.mxu0
  %v3421 = vadd.f32 %v3132, %v3420
  %v3422 = vpop.f32.mrf.mxu0
  %3423 = vdwg.mxu0
  %s3424 = scalar_lea.vmem %s0, 24
  %v3425 = vld [vmem:[%s3424] sm:$0xf]
  %v3426 = vld [vmem:[%s3424 + $0x4] sm:$0xf]
  %v3427 = vld [vmem:[%s3424 + $0x8] sm:$0x1]
  %v3428 = vld [vmem:[%s3424 + $0xc] sm:$0xf]
  %v3429 = vld [vmem:[%s3424 + $0x10] sm:$0xf]
  %v3430 = vld [vmem:[%s3424 + $0x14] sm:$0x1]
  %v3431 = vld [vmem:[%s3424 + $0x18] sm:$0xf]
  %v3432 = vld [vmem:[%s3424 + $0x1c] sm:$0xf]
  %v3433 = vld [vmem:[%s3424 + $0x20] sm:$0x1]
  %v3434 = vld [vmem:[%s3424 + $0x24] sm:$0xf]
  %v3435 = vld [vmem:[%s3424 + $0x28] sm:$0xf]
  %v3436 = vld [vmem:[%s3424 + $0x2c] sm:$0x1]
  %v3437 = vld [vmem:[%s3424 + $0x30] sm:$0xf]
  %v3438 = vld [vmem:[%s3424 + $0x34] sm:$0xf]
  %v3439 = vld [vmem:[%s3424 + $0x38] sm:$0x1]
  %v3440 = vld [vmem:[%s3424 + $0x3c] sm:$0xf]
  %v3441 = vld [vmem:[%s3424 + $0x40] sm:$0xf]
  %v3442 = vld [vmem:[%s3424 + $0x44] sm:$0x1]
  %v3443 = vld [vmem:[%s3424 + $0x48] sm:$0xf]
  %v3444 = vld [vmem:[%s3424 + $0x4c] sm:$0xf]
  %v3445 = vld [vmem:[%s3424 + $0x50] sm:$0x1]
  %v3446 = vld [vmem:[%s3424 + $0x54] sm:$0xf]
  %v3447 = vld [vmem:[%s3424 + $0x58] sm:$0xf]
  %v3448 = vld [vmem:[%s3424 + $0x5c] sm:$0x1]
  %v3449 = vld [vmem:[%s3424 + $0x60] sm:$0xf]
  %v3450 = vld [vmem:[%s3424 + $0x64] sm:$0xf]
  %v3451 = vld [vmem:[%s3424 + $0x68] sm:$0x1]
  %v3452 = vld [vmem:[%s3424 + $0x6c] sm:$0xf]
  %v3453 = vld [vmem:[%s3424 + $0x70] sm:$0xf]
  %v3454 = vld [vmem:[%s3424 + $0x74] sm:$0x1]
  %v3455 = vld [vmem:[%s3424 + $0x78] sm:$0xf]
  %v3456 = vld [vmem:[%s3424 + $0x7c] sm:$0xf]
  %v3457 = vld [vmem:[%s3424 + $0x80] sm:$0x1]
  %v3458 = vld [vmem:[%s3424 + $0x84] sm:$0xf]
  %v3459 = vld [vmem:[%s3424 + $0x88] sm:$0xf]
  %v3460 = vld [vmem:[%s3424 + $0x8c] sm:$0x1]
  %v3461 = vld [vmem:[%s3424 + $0x90] sm:$0xf]
  %v3462 = vld [vmem:[%s3424 + $0x94] sm:$0xf]
  %v3463 = vld [vmem:[%s3424 + $0x98] sm:$0x1]
  %v3464 = vld [vmem:[%s3424 + $0x9c] sm:$0xf]
  %v3465 = vld [vmem:[%s3424 + $0xa0] sm:$0xf]
  %v3466 = vld [vmem:[%s3424 + $0xa4] sm:$0x1]
  %v3467 = vld [vmem:[%s3424 + $0xa8] sm:$0xf]
  %v3468 = vld [vmem:[%s3424 + $0xac] sm:$0xf]
  %v3469 = vld [vmem:[%s3424 + $0xb0] sm:$0x1]
  %v3470 = vld [vmem:[%s3424 + $0xb4] sm:$0xf]
  %v3471 = vld [vmem:[%s3424 + $0xb8] sm:$0xf]
  %v3472 = vld [vmem:[%s3424 + $0xbc] sm:$0x1]
  %v3473 = vld [vmem:[%s3424 + $0xd8] sm:$0xf]
  %v3474 = vld [vmem:[%s3424 + $0xdc] sm:$0xf]
  %v3475 = vld [vmem:[%s3424 + $0xe0] sm:$0x1]
  %v3476 = vld [vmem:[%s3424 + $0xe4] sm:$0xf]
  %v3477 = vld [vmem:[%s3424 + $0xe8] sm:$0xf]
  %v3478 = vld [vmem:[%s3424 + $0xec] sm:$0x1]
  %v3479 = vld [vmem:[%s3424 + $0xf0] sm:$0xf]
  %v3480 = vld [vmem:[%s3424 + $0xf4] sm:$0xf]
  %v3481 = vld [vmem:[%s3424 + $0xf8] sm:$0x1]
  %v3482 = vld [vmem:[%s3424 + $0xfc] sm:$0xf]
  %v3483 = vld [vmem:[%s3424 + $0x100] sm:$0xf]
  %v3484 = vld [vmem:[%s3424 + $0x104] sm:$0x1]
  %v3485 = vld [vmem:[%s3424 + $0x108] sm:$0xf]
  %v3486 = vld [vmem:[%s3424 + $0x10c] sm:$0xf]
  %v3487 = vld [vmem:[%s3424 + $0x110] sm:$0x1]
  %v3488 = vld [vmem:[%s3424 + $0x114] sm:$0xf]
  %v3489 = vld [vmem:[%s3424 + $0x118] sm:$0xf]
  %v3490 = vld [vmem:[%s3424 + $0x11c] sm:$0x1]
  %v3491 = vld [vmem:[%s3424 + $0x120] sm:$0xf]
  %v3492 = vld [vmem:[%s3424 + $0x124] sm:$0xf]
  %v3493 = vld [vmem:[%s3424 + $0x128] sm:$0x1]
  %v3494 = vld [vmem:[%s3424 + $0x12c] sm:$0xf]
  %v3495 = vld [vmem:[%s3424 + $0x130] sm:$0xf]
  %v3496 = vld [vmem:[%s3424 + $0x134] sm:$0x1]
  %v3497 = vld [vmem:[%s3424 + $0x138] sm:$0xf]
  %v3498 = vld [vmem:[%s3424 + $0x13c] sm:$0xf]
  %v3499 = vld [vmem:[%s3424 + $0x140] sm:$0x1]
  %v3500 = vld [vmem:[%s3424 + $0x144] sm:$0xf]
  %v3501 = vld [vmem:[%s3424 + $0x148] sm:$0xf]
  %v3502 = vld [vmem:[%s3424 + $0x14c] sm:$0x1]
  %v3503 = vld [vmem:[%s3424 + $0x150] sm:$0xf]
  %v3504 = vld [vmem:[%s3424 + $0x154] sm:$0xf]
  %v3505 = vld [vmem:[%s3424 + $0x158] sm:$0x1]
  %v3506 = vld [vmem:[%s3424 + $0x15c] sm:$0xf]
  %v3507 = vld [vmem:[%s3424 + $0x160] sm:$0xf]
  %v3508 = vld [vmem:[%s3424 + $0x164] sm:$0x1]
  %v3509 = vld [vmem:[%s3424 + $0x168] sm:$0xf]
  %v3510 = vld [vmem:[%s3424 + $0x16c] sm:$0xf]
  %v3511 = vld [vmem:[%s3424 + $0x170] sm:$0x1]
  %v3512 = vld [vmem:[%s3424 + $0x174] sm:$0xf]
  %v3513 = vld [vmem:[%s3424 + $0x178] sm:$0xf]
  %v3514 = vld [vmem:[%s3424 + $0x17c] sm:$0x1]
  %v3515 = vld [vmem:[%s3424 + $0x180] sm:$0xf]
  %v3516 = vld [vmem:[%s3424 + $0x184] sm:$0xf]
  %v3517 = vld [vmem:[%s3424 + $0x188] sm:$0x1]
  %v3518 = vld [vmem:[%s3424 + $0x18c] sm:$0xf]
  %v3519 = vld [vmem:[%s3424 + $0x190] sm:$0xf]
  %v3520 = vld [vmem:[%s3424 + $0x194] sm:$0x1]
  %v3585 = vunpack.c.l.b16 %v3425
  %v3586 = vunpack.c.l.b16 %v3426
  %v3587 = vunpack.c.l.b16 %v3428
  %v3588 = vunpack.c.l.b16 %v3429
  %v3589 = vunpack.c.l.b16 %v3431
  %v3590 = vunpack.c.l.b16 %v3432
  %v3591 = vunpack.c.l.b16 %v3434
  %v3592 = vunpack.c.l.b16 %v3435
  %v3593 = vunpack.c.l.b16 %v3437
  %v3594 = vunpack.c.l.b16 %v3438
  %v3595 = vunpack.c.l.b16 %v3440
  %v3596 = vunpack.c.l.b16 %v3441
  %v3597 = vunpack.c.l.b16 %v3443
  %v3598 = vunpack.c.l.b16 %v3444
  %v3599 = vunpack.c.l.b16 %v3446
  %v3600 = vunpack.c.l.b16 %v3447
  %v3601 = vunpack.c.l.b16 %v3449
  %v3602 = vunpack.c.l.b16 %v3450
  %v3603 = vunpack.c.l.b16 %v3452
  %v3604 = vunpack.c.l.b16 %v3453
  %v3605 = vunpack.c.l.b16 %v3455
  %v3606 = vunpack.c.l.b16 %v3456
  %v3607 = vunpack.c.l.b16 %v3458
  %v3608 = vunpack.c.l.b16 %v3459
  %v3609 = vunpack.c.l.b16 %v3461
  %v3610 = vunpack.c.l.b16 %v3462
  %v3611 = vunpack.c.l.b16 %v3464
  %v3612 = vunpack.c.l.b16 %v3465
  %v3613 = vunpack.c.l.b16 %v3467
  %v3614 = vunpack.c.l.b16 %v3468
  %v3615 = vunpack.c.l.b16 %v3470
  %v3616 = vunpack.c.l.b16 %v3471
  %v3617 = vunpack.c.l.b16 %v3473
  %v3618 = vunpack.c.l.b16 %v3474
  %v3619 = vunpack.c.l.b16 %v3476
  %v3620 = vunpack.c.l.b16 %v3477
  %v3621 = vunpack.c.l.b16 %v3479
  %v3622 = vunpack.c.l.b16 %v3480
  %v3623 = vunpack.c.l.b16 %v3482
  %v3624 = vunpack.c.l.b16 %v3483
  %v3625 = vunpack.c.l.b16 %v3485
  %v3626 = vunpack.c.l.b16 %v3486
  %v3627 = vunpack.c.l.b16 %v3488
  %v3628 = vunpack.c.l.b16 %v3489
  %v3629 = vunpack.c.l.b16 %v3491
  %v3630 = vunpack.c.l.b16 %v3492
  %v3631 = vunpack.c.l.b16 %v3494
  %v3632 = vunpack.c.l.b16 %v3495
  %v3633 = vunpack.c.l.b16 %v3497
  %v3634 = vunpack.c.l.b16 %v3498
  %v3635 = vunpack.c.l.b16 %v3500
  %v3636 = vunpack.c.l.b16 %v3501
  %v3637 = vunpack.c.l.b16 %v3503
  %v3638 = vunpack.c.l.b16 %v3504
  %v3639 = vunpack.c.l.b16 %v3506
  %v3640 = vunpack.c.l.b16 %v3507
  %v3641 = vunpack.c.l.b16 %v3509
  %v3642 = vunpack.c.l.b16 %v3510
  %v3643 = vunpack.c.l.b16 %v3512
  %v3644 = vunpack.c.l.b16 %v3513
  %v3645 = vunpack.c.l.b16 %v3515
  %v3646 = vunpack.c.l.b16 %v3516
  %v3647 = vunpack.c.l.b16 %v3518
  %v3648 = vunpack.c.l.b16 %v3519
  %v3649 = vpack.c.b16 %v3586, %v3585
  %v3650 = vpack.c.b16 %v3588, %v3587
  %v3651 = vpack.c.b16 %v3590, %v3589
  %v3652 = vpack.c.b16 %v3592, %v3591
  %v3653 = vpack.c.b16 %v3594, %v3593
  %v3654 = vpack.c.b16 %v3596, %v3595
  %v3655 = vpack.c.b16 %v3598, %v3597
  %v3656 = vpack.c.b16 %v3600, %v3599
  %v3657 = vpack.c.b16 %v3602, %v3601
  %v3658 = vpack.c.b16 %v3604, %v3603
  %v3659 = vpack.c.b16 %v3606, %v3605
  %v3660 = vpack.c.b16 %v3608, %v3607
  %v3661 = vpack.c.b16 %v3610, %v3609
  %v3662 = vpack.c.b16 %v3612, %v3611
  %v3663 = vpack.c.b16 %v3614, %v3613
  %v3664 = vpack.c.b16 %v3616, %v3615
  %v3665 = vpack.c.b16 %v3618, %v3617
  %v3666 = vpack.c.b16 %v3620, %v3619
  %v3667 = vpack.c.b16 %v3622, %v3621
  %v3668 = vpack.c.b16 %v3624, %v3623
  %v3669 = vpack.c.b16 %v3626, %v3625
  %v3670 = vpack.c.b16 %v3628, %v3627
  %v3671 = vpack.c.b16 %v3630, %v3629
  %v3672 = vpack.c.b16 %v3632, %v3631
  %v3673 = vpack.c.b16 %v3634, %v3633
  %v3674 = vpack.c.b16 %v3636, %v3635
  %v3675 = vpack.c.b16 %v3638, %v3637
  %v3676 = vpack.c.b16 %v3640, %v3639
  %v3677 = vpack.c.b16 %v3642, %v3641
  %v3678 = vpack.c.b16 %v3644, %v3643
  %v3679 = vpack.c.b16 %v3646, %v3645
  %v3680 = vpack.c.b16 %v3648, %v3647
  %v3745 = vunpack.c.l.b16 %v3427
  %v3746 = vunpack.c.l.b16 %v3430
  %v3747 = vunpack.c.l.b16 %v3433
  %v3748 = vunpack.c.l.b16 %v3436
  %v3749 = vunpack.c.l.b16 %v3439
  %v3750 = vunpack.c.l.b16 %v3442
  %v3751 = vunpack.c.l.b16 %v3445
  %v3752 = vunpack.c.l.b16 %v3448
  %v3753 = vunpack.c.l.b16 %v3451
  %v3754 = vunpack.c.l.b16 %v3454
  %v3755 = vunpack.c.l.b16 %v3457
  %v3756 = vunpack.c.l.b16 %v3460
  %v3757 = vunpack.c.l.b16 %v3463
  %v3758 = vunpack.c.l.b16 %v3466
  %v3759 = vunpack.c.l.b16 %v3469
  %v3760 = vunpack.c.l.b16 %v3472
  %v3761 = vunpack.c.l.b16 %v3475
  %v3762 = vunpack.c.l.b16 %v3478
  %v3763 = vunpack.c.l.b16 %v3481
  %v3764 = vunpack.c.l.b16 %v3484
  %v3765 = vunpack.c.l.b16 %v3487
  %v3766 = vunpack.c.l.b16 %v3490
  %v3767 = vunpack.c.l.b16 %v3493
  %v3768 = vunpack.c.l.b16 %v3496
  %v3769 = vunpack.c.l.b16 %v3499
  %v3770 = vunpack.c.l.b16 %v3502
  %v3771 = vunpack.c.l.b16 %v3505
  %v3772 = vunpack.c.l.b16 %v3508
  %v3773 = vunpack.c.l.b16 %v3511
  %v3774 = vunpack.c.l.b16 %v3514
  %v3775 = vunpack.c.l.b16 %v3517
  %v3776 = vunpack.c.l.b16 %v3520
  %v3777 = vpack.c.b16 %v3745, %v3745
  %v3778 = vpack.c.b16 %v3746, %v3746
  %v3779 = vpack.c.b16 %v3747, %v3747
  %v3780 = vpack.c.b16 %v3748, %v3748
  %v3781 = vpack.c.b16 %v3749, %v3749
  %v3782 = vpack.c.b16 %v3750, %v3750
  %v3783 = vpack.c.b16 %v3751, %v3751
  %v3784 = vpack.c.b16 %v3752, %v3752
  %v3785 = vpack.c.b16 %v3753, %v3753
  %v3786 = vpack.c.b16 %v3754, %v3754
  %v3787 = vpack.c.b16 %v3755, %v3755
  %v3788 = vpack.c.b16 %v3756, %v3756
  %v3789 = vpack.c.b16 %v3757, %v3757
  %v3790 = vpack.c.b16 %v3758, %v3758
  %v3791 = vpack.c.b16 %v3759, %v3759
  %v3792 = vpack.c.b16 %v3760, %v3760
  %v3793 = vpack.c.b16 %v3761, %v3761
  %v3794 = vpack.c.b16 %v3762, %v3762
  %v3795 = vpack.c.b16 %v3763, %v3763
  %v3796 = vpack.c.b16 %v3764, %v3764
  %v3797 = vpack.c.b16 %v3765, %v3765
  %v3798 = vpack.c.b16 %v3766, %v3766
  %v3799 = vpack.c.b16 %v3767, %v3767
  %v3800 = vpack.c.b16 %v3768, %v3768
  %v3801 = vpack.c.b16 %v3769, %v3769
  %v3802 = vpack.c.b16 %v3770, %v3770
  %v3803 = vpack.c.b16 %v3771, %v3771
  %v3804 = vpack.c.b16 %v3772, %v3772
  %v3805 = vpack.c.b16 %v3773, %v3773
  %v3806 = vpack.c.b16 %v3774, %v3774
  %v3807 = vpack.c.b16 %v3775, %v3775
  %v3808 = vpack.c.b16 %v3776, %v3776
  %v3810 = vshrl.u32 %v3649, 16
  %v3812 = vshll.u32 %v3649, 16
  %v3814 = vrot.slane %v3812, 1
  %v3815 = vor.u32 %v3810, %v3814
  %v3817 = vshll.u32 %v3777, 16
  %v3819 = vrot.slane %v3817, 1
  %v3820 = vsel %vm408, %v3815, %v3819
  %v3822 = vshrl.u32 %v3650, 16
  %v3824 = vshll.u32 %v3650, 16
  %v3826 = vrot.slane %v3824, 1
  %v3827 = vor.u32 %v3822, %v3826
  %v3829 = vshll.u32 %v3778, 16
  %v3831 = vrot.slane %v3829, 1
  %v3832 = vsel %vm408, %v3827, %v3831
  %v3834 = vshrl.u32 %v3651, 16
  %v3836 = vshll.u32 %v3651, 16
  %v3838 = vrot.slane %v3836, 1
  %v3839 = vor.u32 %v3834, %v3838
  %v3841 = vshll.u32 %v3779, 16
  %v3843 = vrot.slane %v3841, 1
  %v3844 = vsel %vm408, %v3839, %v3843
  %v3846 = vshrl.u32 %v3652, 16
  %v3848 = vshll.u32 %v3652, 16
  %v3850 = vrot.slane %v3848, 1
  %v3851 = vor.u32 %v3846, %v3850
  %v3853 = vshll.u32 %v3780, 16
  %v3855 = vrot.slane %v3853, 1
  %v3856 = vsel %vm408, %v3851, %v3855
  %v3858 = vshrl.u32 %v3653, 16
  %v3860 = vshll.u32 %v3653, 16
  %v3862 = vrot.slane %v3860, 1
  %v3863 = vor.u32 %v3858, %v3862
  %v3865 = vshll.u32 %v3781, 16
  %v3867 = vrot.slane %v3865, 1
  %v3868 = vsel %vm408, %v3863, %v3867
  %v3870 = vshrl.u32 %v3654, 16
  %v3872 = vshll.u32 %v3654, 16
  %v3874 = vrot.slane %v3872, 1
  %v3875 = vor.u32 %v3870, %v3874
  %v3877 = vshll.u32 %v3782, 16
  %v3879 = vrot.slane %v3877, 1
  %v3880 = vsel %vm408, %v3875, %v3879
  %v3882 = vshrl.u32 %v3655, 16
  %v3884 = vshll.u32 %v3655, 16
  %v3886 = vrot.slane %v3884, 1
  %v3887 = vor.u32 %v3882, %v3886
  %v3889 = vshll.u32 %v3783, 16
  %v3891 = vrot.slane %v3889, 1
  %v3892 = vsel %vm408, %v3887, %v3891
  %v3894 = vshrl.u32 %v3656, 16
  %v3896 = vshll.u32 %v3656, 16
  %v3898 = vrot.slane %v3896, 1
  %v3899 = vor.u32 %v3894, %v3898
  %v3901 = vshll.u32 %v3784, 16
  %v3903 = vrot.slane %v3901, 1
  %v3904 = vsel %vm408, %v3899, %v3903
  %v3906 = vshrl.u32 %v3657, 16
  %v3908 = vshll.u32 %v3657, 16
  %v3910 = vrot.slane %v3908, 1
  %v3911 = vor.u32 %v3906, %v3910
  %v3913 = vshll.u32 %v3785, 16
  %v3915 = vrot.slane %v3913, 1
  %v3916 = vsel %vm408, %v3911, %v3915
  %v3918 = vshrl.u32 %v3658, 16
  %v3920 = vshll.u32 %v3658, 16
  %v3922 = vrot.slane %v3920, 1
  %v3923 = vor.u32 %v3918, %v3922
  %v3925 = vshll.u32 %v3786, 16
  %v3927 = vrot.slane %v3925, 1
  %v3928 = vsel %vm408, %v3923, %v3927
  %v3930 = vshrl.u32 %v3659, 16
  %v3932 = vshll.u32 %v3659, 16
  %v3934 = vrot.slane %v3932, 1
  %v3935 = vor.u32 %v3930, %v3934
  %v3937 = vshll.u32 %v3787, 16
  %v3939 = vrot.slane %v3937, 1
  %v3940 = vsel %vm408, %v3935, %v3939
  %v3942 = vshrl.u32 %v3660, 16
  %v3944 = vshll.u32 %v3660, 16
  %v3946 = vrot.slane %v3944, 1
  %v3947 = vor.u32 %v3942, %v3946
  %v3949 = vshll.u32 %v3788, 16
  %v3951 = vrot.slane %v3949, 1
  %v3952 = vsel %vm408, %v3947, %v3951
  %v3954 = vshrl.u32 %v3661, 16
  %v3956 = vshll.u32 %v3661, 16
  %v3958 = vrot.slane %v3956, 1
  %v3959 = vor.u32 %v3954, %v3958
  %v3961 = vshll.u32 %v3789, 16
  %v3963 = vrot.slane %v3961, 1
  %v3964 = vsel %vm408, %v3959, %v3963
  %v3966 = vshrl.u32 %v3662, 16
  %v3968 = vshll.u32 %v3662, 16
  %v3970 = vrot.slane %v3968, 1
  %v3971 = vor.u32 %v3966, %v3970
  %v3973 = vshll.u32 %v3790, 16
  %v3975 = vrot.slane %v3973, 1
  %v3976 = vsel %vm408, %v3971, %v3975
  %v3978 = vshrl.u32 %v3663, 16
  %v3980 = vshll.u32 %v3663, 16
  %v3982 = vrot.slane %v3980, 1
  %v3983 = vor.u32 %v3978, %v3982
  %v3985 = vshll.u32 %v3791, 16
  %v3987 = vrot.slane %v3985, 1
  %v3988 = vsel %vm408, %v3983, %v3987
  %v3990 = vshrl.u32 %v3664, 16
  %v3992 = vshll.u32 %v3664, 16
  %v3994 = vrot.slane %v3992, 1
  %v3995 = vor.u32 %v3990, %v3994
  %v3997 = vshll.u32 %v3792, 16
  %v3999 = vrot.slane %v3997, 1
  %v4000 = vsel %vm408, %v3995, %v3999
  %v4002 = vshrl.u32 %v3665, 16
  %v4004 = vshll.u32 %v3665, 16
  %v4006 = vrot.slane %v4004, 1
  %v4007 = vor.u32 %v4002, %v4006
  %v4009 = vshll.u32 %v3793, 16
  %v4011 = vrot.slane %v4009, 1
  %v4012 = vsel %vm408, %v4007, %v4011
  %v4014 = vshrl.u32 %v3666, 16
  %v4016 = vshll.u32 %v3666, 16
  %v4018 = vrot.slane %v4016, 1
  %v4019 = vor.u32 %v4014, %v4018
  %v4021 = vshll.u32 %v3794, 16
  %v4023 = vrot.slane %v4021, 1
  %v4024 = vsel %vm408, %v4019, %v4023
  %v4026 = vshrl.u32 %v3667, 16
  %v4028 = vshll.u32 %v3667, 16
  %v4030 = vrot.slane %v4028, 1
  %v4031 = vor.u32 %v4026, %v4030
  %v4033 = vshll.u32 %v3795, 16
  %v4035 = vrot.slane %v4033, 1
  %v4036 = vsel %vm408, %v4031, %v4035
  %v4038 = vshrl.u32 %v3668, 16
  %v4040 = vshll.u32 %v3668, 16
  %v4042 = vrot.slane %v4040, 1
  %v4043 = vor.u32 %v4038, %v4042
  %v4045 = vshll.u32 %v3796, 16
  %v4047 = vrot.slane %v4045, 1
  %v4048 = vsel %vm408, %v4043, %v4047
  %v4050 = vshrl.u32 %v3669, 16
  %v4052 = vshll.u32 %v3669, 16
  %v4054 = vrot.slane %v4052, 1
  %v4055 = vor.u32 %v4050, %v4054
  %v4057 = vshll.u32 %v3797, 16
  %v4059 = vrot.slane %v4057, 1
  %v4060 = vsel %vm408, %v4055, %v4059
  %v4062 = vshrl.u32 %v3670, 16
  %v4064 = vshll.u32 %v3670, 16
  %v4066 = vrot.slane %v4064, 1
  %v4067 = vor.u32 %v4062, %v4066
  %v4069 = vshll.u32 %v3798, 16
  %v4071 = vrot.slane %v4069, 1
  %v4072 = vsel %vm408, %v4067, %v4071
  %v4074 = vshrl.u32 %v3671, 16
  %v4076 = vshll.u32 %v3671, 16
  %v4078 = vrot.slane %v4076, 1
  %v4079 = vor.u32 %v4074, %v4078
  %v4081 = vshll.u32 %v3799, 16
  %v4083 = vrot.slane %v4081, 1
  %v4084 = vsel %vm408, %v4079, %v4083
  %v4086 = vshrl.u32 %v3672, 16
  %v4088 = vshll.u32 %v3672, 16
  %v4090 = vrot.slane %v4088, 1
  %v4091 = vor.u32 %v4086, %v4090
  %v4093 = vshll.u32 %v3800, 16
  %v4095 = vrot.slane %v4093, 1
  %v4096 = vsel %vm408, %v4091, %v4095
  %v4098 = vshrl.u32 %v3673, 16
  %v4100 = vshll.u32 %v3673, 16
  %v4102 = vrot.slane %v4100, 1
  %v4103 = vor.u32 %v4098, %v4102
  %v4105 = vshll.u32 %v3801, 16
  %v4107 = vrot.slane %v4105, 1
  %v4108 = vsel %vm408, %v4103, %v4107
  %v4110 = vshrl.u32 %v3674, 16
  %v4112 = vshll.u32 %v3674, 16
  %v4114 = vrot.slane %v4112, 1
  %v4115 = vor.u32 %v4110, %v4114
  %v4117 = vshll.u32 %v3802, 16
  %v4119 = vrot.slane %v4117, 1
  %v4120 = vsel %vm408, %v4115, %v4119
  %v4122 = vshrl.u32 %v3675, 16
  %v4124 = vshll.u32 %v3675, 16
  %v4126 = vrot.slane %v4124, 1
  %v4127 = vor.u32 %v4122, %v4126
  %v4129 = vshll.u32 %v3803, 16
  %v4131 = vrot.slane %v4129, 1
  %v4132 = vsel %vm408, %v4127, %v4131
  %v4134 = vshrl.u32 %v3676, 16
  %v4136 = vshll.u32 %v3676, 16
  %v4138 = vrot.slane %v4136, 1
  %v4139 = vor.u32 %v4134, %v4138
  %v4141 = vshll.u32 %v3804, 16
  %v4143 = vrot.slane %v4141, 1
  %v4144 = vsel %vm408, %v4139, %v4143
  %v4146 = vshrl.u32 %v3677, 16
  %v4148 = vshll.u32 %v3677, 16
  %v4150 = vrot.slane %v4148, 1
  %v4151 = vor.u32 %v4146, %v4150
  %v4153 = vshll.u32 %v3805, 16
  %v4155 = vrot.slane %v4153, 1
  %v4156 = vsel %vm408, %v4151, %v4155
  %v4158 = vshrl.u32 %v3678, 16
  %v4160 = vshll.u32 %v3678, 16
  %v4162 = vrot.slane %v4160, 1
  %v4163 = vor.u32 %v4158, %v4162
  %v4165 = vshll.u32 %v3806, 16
  %v4167 = vrot.slane %v4165, 1
  %v4168 = vsel %vm408, %v4163, %v4167
  %v4170 = vshrl.u32 %v3679, 16
  %v4172 = vshll.u32 %v3679, 16
  %v4174 = vrot.slane %v4172, 1
  %v4175 = vor.u32 %v4170, %v4174
  %v4177 = vshll.u32 %v3807, 16
  %v4179 = vrot.slane %v4177, 1
  %v4180 = vsel %vm408, %v4175, %v4179
  %v4182 = vshrl.u32 %v3680, 16
  %v4184 = vshll.u32 %v3680, 16
  %v4186 = vrot.slane %v4184, 1
  %v4187 = vor.u32 %v4182, %v4186
  %v4189 = vshll.u32 %v3808, 16
  %v4191 = vrot.slane %v4189, 1
  %v4192 = vsel %vm408, %v4187, %v4191
  %v4225 = vrot.slane %v3649, 1
  %v4226 = vrot.slane %v3777, 1
  %v4227 = vsel %vm825, %v4225, %v4226
  %v4228 = vrot.slane %v3650, 1
  %v4229 = vrot.slane %v3778, 1
  %v4230 = vsel %vm825, %v4228, %v4229
  %v4231 = vrot.slane %v3651, 1
  %v4232 = vrot.slane %v3779, 1
  %v4233 = vsel %vm825, %v4231, %v4232
  %v4234 = vrot.slane %v3652, 1
  %v4235 = vrot.slane %v3780, 1
  %v4236 = vsel %vm825, %v4234, %v4235
  %v4237 = vrot.slane %v3653, 1
  %v4238 = vrot.slane %v3781, 1
  %v4239 = vsel %vm825, %v4237, %v4238
  %v4240 = vrot.slane %v3654, 1
  %v4241 = vrot.slane %v3782, 1
  %v4242 = vsel %vm825, %v4240, %v4241
  %v4243 = vrot.slane %v3655, 1
  %v4244 = vrot.slane %v3783, 1
  %v4245 = vsel %vm825, %v4243, %v4244
  %v4246 = vrot.slane %v3656, 1
  %v4247 = vrot.slane %v3784, 1
  %v4248 = vsel %vm825, %v4246, %v4247
  %v4249 = vrot.slane %v3657, 1
  %v4250 = vrot.slane %v3785, 1
  %v4251 = vsel %vm825, %v4249, %v4250
  %v4252 = vrot.slane %v3658, 1
  %v4253 = vrot.slane %v3786, 1
  %v4254 = vsel %vm825, %v4252, %v4253
  %v4255 = vrot.slane %v3659, 1
  %v4256 = vrot.slane %v3787, 1
  %v4257 = vsel %vm825, %v4255, %v4256
  %v4258 = vrot.slane %v3660, 1
  %v4259 = vrot.slane %v3788, 1
  %v4260 = vsel %vm825, %v4258, %v4259
  %v4261 = vrot.slane %v3661, 1
  %v4262 = vrot.slane %v3789, 1
  %v4263 = vsel %vm825, %v4261, %v4262
  %v4264 = vrot.slane %v3662, 1
  %v4265 = vrot.slane %v3790, 1
  %v4266 = vsel %vm825, %v4264, %v4265
  %v4267 = vrot.slane %v3663, 1
  %v4268 = vrot.slane %v3791, 1
  %v4269 = vsel %vm825, %v4267, %v4268
  %v4270 = vrot.slane %v3664, 1
  %v4271 = vrot.slane %v3792, 1
  %v4272 = vsel %vm825, %v4270, %v4271
  %v4273 = vrot.slane %v3665, 1
  %v4274 = vrot.slane %v3793, 1
  %v4275 = vsel %vm825, %v4273, %v4274
  %v4276 = vrot.slane %v3666, 1
  %v4277 = vrot.slane %v3794, 1
  %v4278 = vsel %vm825, %v4276, %v4277
  %v4279 = vrot.slane %v3667, 1
  %v4280 = vrot.slane %v3795, 1
  %v4281 = vsel %vm825, %v4279, %v4280
  %v4282 = vrot.slane %v3668, 1
  %v4283 = vrot.slane %v3796, 1
  %v4284 = vsel %vm825, %v4282, %v4283
  %v4285 = vrot.slane %v3669, 1
  %v4286 = vrot.slane %v3797, 1
  %v4287 = vsel %vm825, %v4285, %v4286
  %v4288 = vrot.slane %v3670, 1
  %v4289 = vrot.slane %v3798, 1
  %v4290 = vsel %vm825, %v4288, %v4289
  %v4291 = vrot.slane %v3671, 1
  %v4292 = vrot.slane %v3799, 1
  %v4293 = vsel %vm825, %v4291, %v4292
  %v4294 = vrot.slane %v3672, 1
  %v4295 = vrot.slane %v3800, 1
  %v4296 = vsel %vm825, %v4294, %v4295
  %v4297 = vrot.slane %v3673, 1
  %v4298 = vrot.slane %v3801, 1
  %v4299 = vsel %vm825, %v4297, %v4298
  %v4300 = vrot.slane %v3674, 1
  %v4301 = vrot.slane %v3802, 1
  %v4302 = vsel %vm825, %v4300, %v4301
  %v4303 = vrot.slane %v3675, 1
  %v4304 = vrot.slane %v3803, 1
  %v4305 = vsel %vm825, %v4303, %v4304
  %v4306 = vrot.slane %v3676, 1
  %v4307 = vrot.slane %v3804, 1
  %v4308 = vsel %vm825, %v4306, %v4307
  %v4309 = vrot.slane %v3677, 1
  %v4310 = vrot.slane %v3805, 1
  %v4311 = vsel %vm825, %v4309, %v4310
  %v4312 = vrot.slane %v3678, 1
  %v4313 = vrot.slane %v3806, 1
  %v4314 = vsel %vm825, %v4312, %v4313
  %v4315 = vrot.slane %v3679, 1
  %v4316 = vrot.slane %v3807, 1
  %v4317 = vsel %vm825, %v4315, %v4316
  %v4318 = vrot.slane %v3680, 1
  %v4319 = vrot.slane %v3808, 1
  %v4320 = vsel %vm825, %v4318, %v4319
  %s4353 = scalar_lea.vmem %s1, 384
  %v4354 = vld [vmem:[%s4353] sm:$0xf]
  %v4355 = vld [vmem:[%s4353 + $0x4] sm:$0xf]
  %v4356 = vld [vmem:[%s4353 + $0x8] sm:$0xf]
  %v4357 = vld [vmem:[%s4353 + $0xc] sm:$0xf]
  %v4358 = vld [vmem:[%s4353 + $0x10] sm:$0xf]
  %v4359 = vld [vmem:[%s4353 + $0x14] sm:$0xf]
  %v4360 = vld [vmem:[%s4353 + $0x18] sm:$0xf]
  %v4361 = vld [vmem:[%s4353 + $0x1c] sm:$0xf]
  %v4362 = vld [vmem:[%s4353 + $0x20] sm:$0xf]
  %v4363 = vld [vmem:[%s4353 + $0x24] sm:$0xf]
  %v4364 = vld [vmem:[%s4353 + $0x28] sm:$0xf]
  %v4365 = vld [vmem:[%s4353 + $0x2c] sm:$0xf]
  %v4366 = vld [vmem:[%s4353 + $0x30] sm:$0xf]
  %v4367 = vld [vmem:[%s4353 + $0x34] sm:$0xf]
  %v4368 = vld [vmem:[%s4353 + $0x38] sm:$0xf]
  %v4369 = vld [vmem:[%s4353 + $0x3c] sm:$0xf]
  %v4370 = vld [vmem:[%s4353 + $0x40] sm:$0xf]
  %v4371 = vld [vmem:[%s4353 + $0x44] sm:$0xf]
  %v4372 = vld [vmem:[%s4353 + $0x48] sm:$0xf]
  %v4373 = vld [vmem:[%s4353 + $0x4c] sm:$0xf]
  %v4374 = vld [vmem:[%s4353 + $0x50] sm:$0xf]
  %v4375 = vld [vmem:[%s4353 + $0x54] sm:$0xf]
  %v4376 = vld [vmem:[%s4353 + $0x58] sm:$0xf]
  %v4377 = vld [vmem:[%s4353 + $0x5c] sm:$0xf]
  %v4378 = vld [vmem:[%s4353 + $0x60] sm:$0xf]
  %v4379 = vld [vmem:[%s4353 + $0x64] sm:$0xf]
  %v4380 = vld [vmem:[%s4353 + $0x68] sm:$0xf]
  %v4381 = vld [vmem:[%s4353 + $0x6c] sm:$0xf]
  %v4382 = vld [vmem:[%s4353 + $0x70] sm:$0xf]
  %v4383 = vld [vmem:[%s4353 + $0x74] sm:$0xf]
  %v4384 = vld [vmem:[%s4353 + $0x78] sm:$0xf]
  %v4385 = vld [vmem:[%s4353 + $0x7c] sm:$0xf]
  %v4386 = vld [vmem:[%s4353 + $0x80] sm:$0xf]
  %v4387 = vld [vmem:[%s4353 + $0x84] sm:$0xf]
  %v4388 = vld [vmem:[%s4353 + $0x88] sm:$0xf]
  %v4389 = vld [vmem:[%s4353 + $0x8c] sm:$0xf]
  %v4390 = vld [vmem:[%s4353 + $0x90] sm:$0xf]
  %v4391 = vld [vmem:[%s4353 + $0x94] sm:$0xf]
  %v4392 = vld [vmem:[%s4353 + $0x98] sm:$0xf]
  %v4393 = vld [vmem:[%s4353 + $0x9c] sm:$0xf]
  %v4394 = vld [vmem:[%s4353 + $0xa0] sm:$0xf]
  %v4395 = vld [vmem:[%s4353 + $0xa4] sm:$0xf]
  %v4396 = vld [vmem:[%s4353 + $0xa8] sm:$0xf]
  %v4397 = vld [vmem:[%s4353 + $0xac] sm:$0xf]
  %v4398 = vld [vmem:[%s4353 + $0xb0] sm:$0xf]
  %v4399 = vld [vmem:[%s4353 + $0xb4] sm:$0xf]
  %v4400 = vld [vmem:[%s4353 + $0xb8] sm:$0xf]
  %v4401 = vld [vmem:[%s4353 + $0xbc] sm:$0xf]
  %v4450 = vunpack.c.l.b16 %v4354
  %v4451 = vunpack.c.l.b16 %v4355
  %v4452 = vunpack.c.l.b16 %v4356
  %v4453 = vunpack.c.l.b16 %v4357
  %v4454 = vunpack.c.l.b16 %v4358
  %v4455 = vunpack.c.l.b16 %v4359
  %v4456 = vunpack.c.l.b16 %v4360
  %v4457 = vunpack.c.l.b16 %v4361
  %v4458 = vunpack.c.l.b16 %v4362
  %v4459 = vunpack.c.l.b16 %v4363
  %v4460 = vunpack.c.l.b16 %v4364
  %v4461 = vunpack.c.l.b16 %v4365
  %v4462 = vunpack.c.l.b16 %v4366
  %v4463 = vunpack.c.l.b16 %v4367
  %v4464 = vunpack.c.l.b16 %v4368
  %v4465 = vunpack.c.l.b16 %v4369
  %v4466 = vunpack.c.l.b16 %v4370
  %v4467 = vunpack.c.l.b16 %v4371
  %v4468 = vunpack.c.l.b16 %v4372
  %v4469 = vunpack.c.l.b16 %v4373
  %v4470 = vunpack.c.l.b16 %v4374
  %v4471 = vunpack.c.l.b16 %v4375
  %v4472 = vunpack.c.l.b16 %v4376
  %v4473 = vunpack.c.l.b16 %v4377
  %v4474 = vunpack.c.l.b16 %v4378
  %v4475 = vunpack.c.l.b16 %v4379
  %v4476 = vunpack.c.l.b16 %v4380
  %v4477 = vunpack.c.l.b16 %v4381
  %v4478 = vunpack.c.l.b16 %v4382
  %v4479 = vunpack.c.l.b16 %v4383
  %v4480 = vunpack.c.l.b16 %v4384
  %v4481 = vunpack.c.l.b16 %v4385
  %v4482 = vunpack.c.l.b16 %v4386
  %v4483 = vunpack.c.l.b16 %v4387
  %v4484 = vunpack.c.l.b16 %v4388
  %v4485 = vunpack.c.l.b16 %v4389
  %v4486 = vunpack.c.l.b16 %v4390
  %v4487 = vunpack.c.l.b16 %v4391
  %v4488 = vunpack.c.l.b16 %v4392
  %v4489 = vunpack.c.l.b16 %v4393
  %v4490 = vunpack.c.l.b16 %v4394
  %v4491 = vunpack.c.l.b16 %v4395
  %v4492 = vunpack.c.l.b16 %v4396
  %v4493 = vunpack.c.l.b16 %v4397
  %v4494 = vunpack.c.l.b16 %v4398
  %v4495 = vunpack.c.l.b16 %v4399
  %v4496 = vunpack.c.l.b16 %v4400
  %v4497 = vunpack.c.l.b16 %v4401
  %v4498 = vpack.c.b16 %v4451, %v4450
  %v4499 = vpack.c.b16 %v4453, %v4452
  %v4500 = vpack.c.b16 %v4455, %v4454
  %v4501 = vpack.c.b16 %v4457, %v4456
  %v4502 = vpack.c.b16 %v4459, %v4458
  %v4503 = vpack.c.b16 %v4461, %v4460
  %v4504 = vpack.c.b16 %v4463, %v4462
  %v4505 = vpack.c.b16 %v4465, %v4464
  %v4506 = vpack.c.b16 %v4467, %v4466
  %v4507 = vpack.c.b16 %v4469, %v4468
  %v4508 = vpack.c.b16 %v4471, %v4470
  %v4509 = vpack.c.b16 %v4473, %v4472
  %v4510 = vpack.c.b16 %v4475, %v4474
  %v4511 = vpack.c.b16 %v4477, %v4476
  %v4512 = vpack.c.b16 %v4479, %v4478
  %v4513 = vpack.c.b16 %v4481, %v4480
  %v4514 = vpack.c.b16 %v4483, %v4482
  %v4515 = vpack.c.b16 %v4485, %v4484
  %v4516 = vpack.c.b16 %v4487, %v4486
  %v4517 = vpack.c.b16 %v4489, %v4488
  %v4518 = vpack.c.b16 %v4491, %v4490
  %v4519 = vpack.c.b16 %v4493, %v4492
  %v4520 = vpack.c.b16 %v4495, %v4494
  %v4521 = vpack.c.b16 %v4497, %v4496
  %4546 = vmatprep.subr.bf16.mxu0 0
  %4547 = vmatpush1.bf16.msra.mxu0 %v4505
  %4548 = vmatprep.subr.bf16.mxu0 0
  %4549 = vmatpush1.bf16.msra.mxu0 %v4504
  %4550 = vmatprep.subr.bf16.mxu0 0
  %4551 = vmatpush1.bf16.msra.mxu0 %v4503
  %4552 = vmatprep.subr.bf16.mxu0 0
  %4553 = vmatpush1.bf16.msra.mxu0 %v4502
  %4554 = vmatprep.subr.bf16.mxu0 0
  %4555 = vmatpush1.bf16.msra.mxu0 %v4501
  %4556 = vmatprep.subr.bf16.mxu0 0
  %4557 = vmatpush1.bf16.msra.mxu0 %v4500
  %4558 = vmatprep.subr.bf16.mxu0 0
  %4559 = vmatpush1.bf16.msra.mxu0 %v4499
  %4560 = vmatprep.subr.bf16.mxu0 0
  %4561 = vmatpush1.bf16.msra.mxu0 %v4498
  %4562 = vmatprep.subr.bf16.mxu0 0
  %4563 = vmatpush2.bf16.msra.mxu0 %v4513
  %4564 = vmatprep.subr.bf16.mxu0 0
  %4565 = vmatpush2.bf16.msra.mxu0 %v4512
  %4566 = vmatprep.subr.bf16.mxu0 0
  %4567 = vmatpush2.bf16.msra.mxu0 %v4511
  %4568 = vmatprep.subr.bf16.mxu0 0
  %4569 = vmatpush2.bf16.msra.mxu0 %v4510
  %4570 = vmatprep.subr.bf16.mxu0 0
  %4571 = vmatpush2.bf16.msra.mxu0 %v4509
  %4572 = vmatprep.subr.bf16.mxu0 0
  %4573 = vmatpush2.bf16.msra.mxu0 %v4508
  %4574 = vmatprep.subr.bf16.mxu0 0
  %4575 = vmatpush2.bf16.msra.mxu0 %v4507
  %4576 = vmatprep.subr.bf16.mxu0 0
  %4577 = vmatpush2.bf16.msra.mxu0 %v4506
  %4578 = vmatprep.mubr.bf16.mxu0 %v3820
  %4579 = vmatmul.mubr.bf16.gmra.mxu0 %v3649
  %v4580 = vpop.f32.mrf.mxu0
  %v4581 = vadd.f32 0.0, %v4580
  %v4582 = vpop.f32.mrf.mxu0
  %v4583 = vpop.f32.mrf.mxu0
  %v4584 = vadd.f32 0.0, %v4583
  %v4585 = vpop.f32.mrf.mxu0
  %4586 = vmatprep.mubr.bf16.mxu0 %v3832
  %4587 = vmatmul.mubr.bf16.gmra.mxu0 %v3650
  %v4588 = vpop.f32.mrf.mxu0
  %v4589 = vadd.f32 0.0, %v4588
  %v4590 = vpop.f32.mrf.mxu0
  %v4591 = vpop.f32.mrf.mxu0
  %v4592 = vadd.f32 0.0, %v4591
  %v4593 = vpop.f32.mrf.mxu0
  %4594 = vmatprep.mubr.bf16.mxu0 %v3844
  %4595 = vmatmul.mubr.bf16.gmra.mxu0 %v3651
  %v4596 = vpop.f32.mrf.mxu0
  %v4597 = vadd.f32 0.0, %v4596
  %v4598 = vpop.f32.mrf.mxu0
  %v4599 = vpop.f32.mrf.mxu0
  %v4600 = vadd.f32 0.0, %v4599
  %v4601 = vpop.f32.mrf.mxu0
  %4602 = vmatprep.mubr.bf16.mxu0 %v3856
  %4603 = vmatmul.mubr.bf16.gmra.mxu0 %v3652
  %v4604 = vpop.f32.mrf.mxu0
  %v4605 = vadd.f32 0.0, %v4604
  %v4606 = vpop.f32.mrf.mxu0
  %v4607 = vpop.f32.mrf.mxu0
  %v4608 = vadd.f32 0.0, %v4607
  %v4609 = vpop.f32.mrf.mxu0
  %4610 = vmatprep.mubr.bf16.mxu0 %v3868
  %4611 = vmatmul.mubr.bf16.gmra.mxu0 %v3653
  %v4612 = vpop.f32.mrf.mxu0
  %v4613 = vadd.f32 0.0, %v4612
  %v4614 = vpop.f32.mrf.mxu0
  %v4615 = vpop.f32.mrf.mxu0
  %v4616 = vadd.f32 0.0, %v4615
  %v4617 = vpop.f32.mrf.mxu0
  %4618 = vmatprep.mubr.bf16.mxu0 %v3880
  %4619 = vmatmul.mubr.bf16.gmra.mxu0 %v3654
  %v4620 = vpop.f32.mrf.mxu0
  %v4621 = vadd.f32 0.0, %v4620
  %v4622 = vpop.f32.mrf.mxu0
  %v4623 = vpop.f32.mrf.mxu0
  %v4624 = vadd.f32 0.0, %v4623
  %v4625 = vpop.f32.mrf.mxu0
  %4626 = vmatprep.mubr.bf16.mxu0 %v3892
  %4627 = vmatmul.mubr.bf16.gmra.mxu0 %v3655
  %v4628 = vpop.f32.mrf.mxu0
  %v4629 = vadd.f32 0.0, %v4628
  %v4630 = vpop.f32.mrf.mxu0
  %v4631 = vpop.f32.mrf.mxu0
  %v4632 = vadd.f32 0.0, %v4631
  %v4633 = vpop.f32.mrf.mxu0
  %4634 = vmatprep.mubr.bf16.mxu0 %v3904
  %4635 = vmatmul.mubr.bf16.gmra.mxu0 %v3656
  %v4636 = vpop.f32.mrf.mxu0
  %v4637 = vadd.f32 0.0, %v4636
  %v4638 = vpop.f32.mrf.mxu0
  %v4639 = vpop.f32.mrf.mxu0
  %v4640 = vadd.f32 0.0, %v4639
  %v4641 = vpop.f32.mrf.mxu0
  %4642 = vmatprep.mubr.bf16.mxu0 %v3916
  %4643 = vmatmul.mubr.bf16.gmra.mxu0 %v3657
  %v4644 = vpop.f32.mrf.mxu0
  %v4645 = vadd.f32 0.0, %v4644
  %v4646 = vpop.f32.mrf.mxu0
  %v4647 = vpop.f32.mrf.mxu0
  %v4648 = vadd.f32 0.0, %v4647
  %v4649 = vpop.f32.mrf.mxu0
  %4650 = vmatprep.mubr.bf16.mxu0 %v3928
  %4651 = vmatmul.mubr.bf16.gmra.mxu0 %v3658
  %v4652 = vpop.f32.mrf.mxu0
  %v4653 = vadd.f32 0.0, %v4652
  %v4654 = vpop.f32.mrf.mxu0
  %v4655 = vpop.f32.mrf.mxu0
  %v4656 = vadd.f32 0.0, %v4655
  %v4657 = vpop.f32.mrf.mxu0
  %4658 = vmatprep.mubr.bf16.mxu0 %v3940
  %4659 = vmatmul.mubr.bf16.gmra.mxu0 %v3659
  %v4660 = vpop.f32.mrf.mxu0
  %v4661 = vadd.f32 0.0, %v4660
  %v4662 = vpop.f32.mrf.mxu0
  %v4663 = vpop.f32.mrf.mxu0
  %v4664 = vadd.f32 0.0, %v4663
  %v4665 = vpop.f32.mrf.mxu0
  %4666 = vmatprep.mubr.bf16.mxu0 %v3952
  %4667 = vmatmul.mubr.bf16.gmra.mxu0 %v3660
  %v4668 = vpop.f32.mrf.mxu0
  %v4669 = vadd.f32 0.0, %v4668
  %v4670 = vpop.f32.mrf.mxu0
  %v4671 = vpop.f32.mrf.mxu0
  %v4672 = vadd.f32 0.0, %v4671
  %v4673 = vpop.f32.mrf.mxu0
  %4674 = vmatprep.mubr.bf16.mxu0 %v3964
  %4675 = vmatmul.mubr.bf16.gmra.mxu0 %v3661
  %v4676 = vpop.f32.mrf.mxu0
  %v4677 = vadd.f32 0.0, %v4676
  %v4678 = vpop.f32.mrf.mxu0
  %v4679 = vpop.f32.mrf.mxu0
  %v4680 = vadd.f32 0.0, %v4679
  %v4681 = vpop.f32.mrf.mxu0
  %4682 = vmatprep.mubr.bf16.mxu0 %v3976
  %4683 = vmatmul.mubr.bf16.gmra.mxu0 %v3662
  %v4684 = vpop.f32.mrf.mxu0
  %v4685 = vadd.f32 0.0, %v4684
  %v4686 = vpop.f32.mrf.mxu0
  %v4687 = vpop.f32.mrf.mxu0
  %v4688 = vadd.f32 0.0, %v4687
  %v4689 = vpop.f32.mrf.mxu0
  %4690 = vmatprep.mubr.bf16.mxu0 %v3988
  %4691 = vmatmul.mubr.bf16.gmra.mxu0 %v3663
  %v4692 = vpop.f32.mrf.mxu0
  %v4693 = vadd.f32 0.0, %v4692
  %v4694 = vpop.f32.mrf.mxu0
  %v4695 = vpop.f32.mrf.mxu0
  %v4696 = vadd.f32 0.0, %v4695
  %v4697 = vpop.f32.mrf.mxu0
  %4698 = vmatprep.mubr.bf16.mxu0 %v4000
  %4699 = vmatmul.mubr.bf16.gmra.mxu0 %v3664
  %v4700 = vpop.f32.mrf.mxu0
  %v4701 = vadd.f32 0.0, %v4700
  %v4702 = vpop.f32.mrf.mxu0
  %v4703 = vpop.f32.mrf.mxu0
  %v4704 = vadd.f32 0.0, %v4703
  %v4705 = vpop.f32.mrf.mxu0
  %4706 = vmatprep.mubr.bf16.mxu0 %v4012
  %4707 = vmatmul.mubr.bf16.gmra.mxu0 %v3665
  %v4708 = vpop.f32.mrf.mxu0
  %v4709 = vadd.f32 0.0, %v4708
  %v4710 = vpop.f32.mrf.mxu0
  %v4711 = vpop.f32.mrf.mxu0
  %v4712 = vadd.f32 0.0, %v4711
  %v4713 = vpop.f32.mrf.mxu0
  %4714 = vmatprep.mubr.bf16.mxu0 %v4024
  %4715 = vmatmul.mubr.bf16.gmra.mxu0 %v3666
  %v4716 = vpop.f32.mrf.mxu0
  %v4717 = vadd.f32 0.0, %v4716
  %v4718 = vpop.f32.mrf.mxu0
  %v4719 = vpop.f32.mrf.mxu0
  %v4720 = vadd.f32 0.0, %v4719
  %v4721 = vpop.f32.mrf.mxu0
  %4722 = vmatprep.mubr.bf16.mxu0 %v4036
  %4723 = vmatmul.mubr.bf16.gmra.mxu0 %v3667
  %v4724 = vpop.f32.mrf.mxu0
  %v4725 = vadd.f32 0.0, %v4724
  %v4726 = vpop.f32.mrf.mxu0
  %v4727 = vpop.f32.mrf.mxu0
  %v4728 = vadd.f32 0.0, %v4727
  %v4729 = vpop.f32.mrf.mxu0
  %4730 = vmatprep.mubr.bf16.mxu0 %v4048
  %4731 = vmatmul.mubr.bf16.gmra.mxu0 %v3668
  %v4732 = vpop.f32.mrf.mxu0
  %v4733 = vadd.f32 0.0, %v4732
  %v4734 = vpop.f32.mrf.mxu0
  %v4735 = vpop.f32.mrf.mxu0
  %v4736 = vadd.f32 0.0, %v4735
  %v4737 = vpop.f32.mrf.mxu0
  %4738 = vmatprep.mubr.bf16.mxu0 %v4060
  %4739 = vmatmul.mubr.bf16.gmra.mxu0 %v3669
  %v4740 = vpop.f32.mrf.mxu0
  %v4741 = vadd.f32 0.0, %v4740
  %v4742 = vpop.f32.mrf.mxu0
  %v4743 = vpop.f32.mrf.mxu0
  %v4744 = vadd.f32 0.0, %v4743
  %v4745 = vpop.f32.mrf.mxu0
  %4746 = vmatprep.mubr.bf16.mxu0 %v4072
  %4747 = vmatmul.mubr.bf16.gmra.mxu0 %v3670
  %v4748 = vpop.f32.mrf.mxu0
  %v4749 = vadd.f32 0.0, %v4748
  %v4750 = vpop.f32.mrf.mxu0
  %v4751 = vpop.f32.mrf.mxu0
  %v4752 = vadd.f32 0.0, %v4751
  %v4753 = vpop.f32.mrf.mxu0
  %4754 = vmatprep.mubr.bf16.mxu0 %v4084
  %4755 = vmatmul.mubr.bf16.gmra.mxu0 %v3671
  %v4756 = vpop.f32.mrf.mxu0
  %v4757 = vadd.f32 0.0, %v4756
  %v4758 = vpop.f32.mrf.mxu0
  %v4759 = vpop.f32.mrf.mxu0
  %v4760 = vadd.f32 0.0, %v4759
  %v4761 = vpop.f32.mrf.mxu0
  %4762 = vmatprep.mubr.bf16.mxu0 %v4096
  %4763 = vmatmul.mubr.bf16.gmra.mxu0 %v3672
  %v4764 = vpop.f32.mrf.mxu0
  %v4765 = vadd.f32 0.0, %v4764
  %v4766 = vpop.f32.mrf.mxu0
  %v4767 = vpop.f32.mrf.mxu0
  %v4768 = vadd.f32 0.0, %v4767
  %v4769 = vpop.f32.mrf.mxu0
  %4770 = vmatprep.mubr.bf16.mxu0 %v4108
  %4771 = vmatmul.mubr.bf16.gmra.mxu0 %v3673
  %v4772 = vpop.f32.mrf.mxu0
  %v4773 = vadd.f32 0.0, %v4772
  %v4774 = vpop.f32.mrf.mxu0
  %v4775 = vpop.f32.mrf.mxu0
  %v4776 = vadd.f32 0.0, %v4775
  %v4777 = vpop.f32.mrf.mxu0
  %4778 = vmatprep.mubr.bf16.mxu0 %v4120
  %4779 = vmatmul.mubr.bf16.gmra.mxu0 %v3674
  %v4780 = vpop.f32.mrf.mxu0
  %v4781 = vadd.f32 0.0, %v4780
  %v4782 = vpop.f32.mrf.mxu0
  %v4783 = vpop.f32.mrf.mxu0
  %v4784 = vadd.f32 0.0, %v4783
  %v4785 = vpop.f32.mrf.mxu0
  %4786 = vmatprep.mubr.bf16.mxu0 %v4132
  %4787 = vmatmul.mubr.bf16.gmra.mxu0 %v3675
  %v4788 = vpop.f32.mrf.mxu0
  %v4789 = vadd.f32 0.0, %v4788
  %v4790 = vpop.f32.mrf.mxu0
  %v4791 = vpop.f32.mrf.mxu0
  %v4792 = vadd.f32 0.0, %v4791
  %v4793 = vpop.f32.mrf.mxu0
  %4794 = vmatprep.mubr.bf16.mxu0 %v4144
  %4795 = vmatmul.mubr.bf16.gmra.mxu0 %v3676
  %v4796 = vpop.f32.mrf.mxu0
  %v4797 = vadd.f32 0.0, %v4796
  %v4798 = vpop.f32.mrf.mxu0
  %v4799 = vpop.f32.mrf.mxu0
  %v4800 = vadd.f32 0.0, %v4799
  %v4801 = vpop.f32.mrf.mxu0
  %4802 = vmatprep.mubr.bf16.mxu0 %v4156
  %4803 = vmatmul.mubr.bf16.gmra.mxu0 %v3677
  %v4804 = vpop.f32.mrf.mxu0
  %v4805 = vadd.f32 0.0, %v4804
  %v4806 = vpop.f32.mrf.mxu0
  %v4807 = vpop.f32.mrf.mxu0
  %v4808 = vadd.f32 0.0, %v4807
  %v4809 = vpop.f32.mrf.mxu0
  %4810 = vmatprep.mubr.bf16.mxu0 %v4168
  %4811 = vmatmul.mubr.bf16.gmra.mxu0 %v3678
  %v4812 = vpop.f32.mrf.mxu0
  %v4813 = vadd.f32 0.0, %v4812
  %v4814 = vpop.f32.mrf.mxu0
  %v4815 = vpop.f32.mrf.mxu0
  %v4816 = vadd.f32 0.0, %v4815
  %v4817 = vpop.f32.mrf.mxu0
  %4818 = vmatprep.mubr.bf16.mxu0 %v4180
  %4819 = vmatmul.mubr.bf16.gmra.mxu0 %v3679
  %v4820 = vpop.f32.mrf.mxu0
  %v4821 = vadd.f32 0.0, %v4820
  %v4822 = vpop.f32.mrf.mxu0
  %v4823 = vpop.f32.mrf.mxu0
  %v4824 = vadd.f32 0.0, %v4823
  %v4825 = vpop.f32.mrf.mxu0
  %4826 = vmatprep.mubr.bf16.mxu0 %v4192
  %4827 = vmatmul.mubr.bf16.gmra.mxu0 %v3680
  %v4828 = vpop.f32.mrf.mxu0
  %v4829 = vadd.f32 0.0, %v4828
  %v4830 = vpop.f32.mrf.mxu0
  %v4831 = vpop.f32.mrf.mxu0
  %v4832 = vadd.f32 0.0, %v4831
  %v4833 = vpop.f32.mrf.mxu0
  %4834 = vdwg.mxu0
  %4835 = vmatprep.subr.bf16.mxu0 0
  %4836 = vmatpush1.bf16.msra.mxu0 %v4521
  %4837 = vmatprep.subr.bf16.mxu0 0
  %4838 = vmatpush1.bf16.msra.mxu0 %v4520
  %4839 = vmatprep.subr.bf16.mxu0 0
  %4840 = vmatpush1.bf16.msra.mxu0 %v4519
  %4841 = vmatprep.subr.bf16.mxu0 0
  %4842 = vmatpush1.bf16.msra.mxu0 %v4518
  %4843 = vmatprep.subr.bf16.mxu0 0
  %4844 = vmatpush1.bf16.msra.mxu0 %v4517
  %4845 = vmatprep.subr.bf16.mxu0 0
  %4846 = vmatpush1.bf16.msra.mxu0 %v4516
  %4847 = vmatprep.subr.bf16.mxu0 0
  %4848 = vmatpush1.bf16.msra.mxu0 %v4515
  %4849 = vmatprep.subr.bf16.mxu0 0
  %4850 = vmatpush1.bf16.msra.mxu0 %v4514
  %4851 = vmatprep.subr.bf16.mxu0 0
  %4852 = vmatpush2.bf16.msra.mxu0 0
  %4853 = vmatprep.subr.bf16.mxu0 0
  %4854 = vmatpush2.bf16.msra.mxu0 0
  %4855 = vmatprep.subr.bf16.mxu0 0
  %4856 = vmatpush2.bf16.msra.mxu0 0
  %4857 = vmatprep.subr.bf16.mxu0 0
  %4858 = vmatpush2.bf16.msra.mxu0 0
  %4859 = vmatprep.subr.bf16.mxu0 0
  %4860 = vmatpush2.bf16.msra.mxu0 0
  %4861 = vmatprep.subr.bf16.mxu0 0
  %4862 = vmatpush2.bf16.msra.mxu0 0
  %4863 = vmatprep.subr.bf16.mxu0 0
  %4864 = vmatpush2.bf16.msra.mxu0 0
  %4865 = vmatprep.subr.bf16.mxu0 0
  %4866 = vmatpush2.bf16.msra.mxu0 0
  %4867 = vmatprep.mubr.bf16.mxu0 0
  %4868 = vmatmul.mubr.bf16.gmra.mxu0 %v4227
  %v4869 = vpop.f32.mrf.mxu0
  %v4870 = vadd.f32 %v4581, %v4869
  %v4871 = vpop.f32.mrf.mxu0
  %v4872 = vpop.f32.mrf.mxu0
  %v4873 = vadd.f32 %v4584, %v4872
  %v4874 = vpop.f32.mrf.mxu0
  %4875 = vmatprep.mubr.bf16.mxu0 0
  %4876 = vmatmul.mubr.bf16.gmra.mxu0 %v4230
  %v4877 = vpop.f32.mrf.mxu0
  %v4878 = vadd.f32 %v4589, %v4877
  %v4879 = vpop.f32.mrf.mxu0
  %v4880 = vpop.f32.mrf.mxu0
  %v4881 = vadd.f32 %v4592, %v4880
  %v4882 = vpop.f32.mrf.mxu0
  %4883 = vmatprep.mubr.bf16.mxu0 0
  %4884 = vmatmul.mubr.bf16.gmra.mxu0 %v4233
  %v4885 = vpop.f32.mrf.mxu0
  %v4886 = vadd.f32 %v4597, %v4885
  %v4887 = vpop.f32.mrf.mxu0
  %v4888 = vpop.f32.mrf.mxu0
  %v4889 = vadd.f32 %v4600, %v4888
  %v4890 = vpop.f32.mrf.mxu0
  %4891 = vmatprep.mubr.bf16.mxu0 0
  %4892 = vmatmul.mubr.bf16.gmra.mxu0 %v4236
  %v4893 = vpop.f32.mrf.mxu0
  %v4894 = vadd.f32 %v4605, %v4893
  %v4895 = vpop.f32.mrf.mxu0
  %v4896 = vpop.f32.mrf.mxu0
  %v4897 = vadd.f32 %v4608, %v4896
  %v4898 = vpop.f32.mrf.mxu0
  %4899 = vmatprep.mubr.bf16.mxu0 0
  %4900 = vmatmul.mubr.bf16.gmra.mxu0 %v4239
  %v4901 = vpop.f32.mrf.mxu0
  %v4902 = vadd.f32 %v4613, %v4901
  %v4903 = vpop.f32.mrf.mxu0
  %v4904 = vpop.f32.mrf.mxu0
  %v4905 = vadd.f32 %v4616, %v4904
  %v4906 = vpop.f32.mrf.mxu0
  %4907 = vmatprep.mubr.bf16.mxu0 0
  %4908 = vmatmul.mubr.bf16.gmra.mxu0 %v4242
  %v4909 = vpop.f32.mrf.mxu0
  %v4910 = vadd.f32 %v4621, %v4909
  %v4911 = vpop.f32.mrf.mxu0
  %v4912 = vpop.f32.mrf.mxu0
  %v4913 = vadd.f32 %v4624, %v4912
  %v4914 = vpop.f32.mrf.mxu0
  %4915 = vmatprep.mubr.bf16.mxu0 0
  %4916 = vmatmul.mubr.bf16.gmra.mxu0 %v4245
  %v4917 = vpop.f32.mrf.mxu0
  %v4918 = vadd.f32 %v4629, %v4917
  %v4919 = vpop.f32.mrf.mxu0
  %v4920 = vpop.f32.mrf.mxu0
  %v4921 = vadd.f32 %v4632, %v4920
  %v4922 = vpop.f32.mrf.mxu0
  %4923 = vmatprep.mubr.bf16.mxu0 0
  %4924 = vmatmul.mubr.bf16.gmra.mxu0 %v4248
  %v4925 = vpop.f32.mrf.mxu0
  %v4926 = vadd.f32 %v4637, %v4925
  %v4927 = vpop.f32.mrf.mxu0
  %v4928 = vpop.f32.mrf.mxu0
  %v4929 = vadd.f32 %v4640, %v4928
  %v4930 = vpop.f32.mrf.mxu0
  %4931 = vmatprep.mubr.bf16.mxu0 0
  %4932 = vmatmul.mubr.bf16.gmra.mxu0 %v4251
  %v4933 = vpop.f32.mrf.mxu0
  %v4934 = vadd.f32 %v4645, %v4933
  %v4935 = vpop.f32.mrf.mxu0
  %v4936 = vpop.f32.mrf.mxu0
  %v4937 = vadd.f32 %v4648, %v4936
  %v4938 = vpop.f32.mrf.mxu0
  %4939 = vmatprep.mubr.bf16.mxu0 0
  %4940 = vmatmul.mubr.bf16.gmra.mxu0 %v4254
  %v4941 = vpop.f32.mrf.mxu0
  %v4942 = vadd.f32 %v4653, %v4941
  %v4943 = vpop.f32.mrf.mxu0
  %v4944 = vpop.f32.mrf.mxu0
  %v4945 = vadd.f32 %v4656, %v4944
  %v4946 = vpop.f32.mrf.mxu0
  %4947 = vmatprep.mubr.bf16.mxu0 0
  %4948 = vmatmul.mubr.bf16.gmra.mxu0 %v4257
  %v4949 = vpop.f32.mrf.mxu0
  %v4950 = vadd.f32 %v4661, %v4949
  %v4951 = vpop.f32.mrf.mxu0
  %v4952 = vpop.f32.mrf.mxu0
  %v4953 = vadd.f32 %v4664, %v4952
  %v4954 = vpop.f32.mrf.mxu0
  %4955 = vmatprep.mubr.bf16.mxu0 0
  %4956 = vmatmul.mubr.bf16.gmra.mxu0 %v4260
  %v4957 = vpop.f32.mrf.mxu0
  %v4958 = vadd.f32 %v4669, %v4957
  %v4959 = vpop.f32.mrf.mxu0
  %v4960 = vpop.f32.mrf.mxu0
  %v4961 = vadd.f32 %v4672, %v4960
  %v4962 = vpop.f32.mrf.mxu0
  %4963 = vmatprep.mubr.bf16.mxu0 0
  %4964 = vmatmul.mubr.bf16.gmra.mxu0 %v4263
  %v4965 = vpop.f32.mrf.mxu0
  %v4966 = vadd.f32 %v4677, %v4965
  %v4967 = vpop.f32.mrf.mxu0
  %v4968 = vpop.f32.mrf.mxu0
  %v4969 = vadd.f32 %v4680, %v4968
  %v4970 = vpop.f32.mrf.mxu0
  %4971 = vmatprep.mubr.bf16.mxu0 0
  %4972 = vmatmul.mubr.bf16.gmra.mxu0 %v4266
  %v4973 = vpop.f32.mrf.mxu0
  %v4974 = vadd.f32 %v4685, %v4973
  %v4975 = vpop.f32.mrf.mxu0
  %v4976 = vpop.f32.mrf.mxu0
  %v4977 = vadd.f32 %v4688, %v4976
  %v4978 = vpop.f32.mrf.mxu0
  %4979 = vmatprep.mubr.bf16.mxu0 0
  %4980 = vmatmul.mubr.bf16.gmra.mxu0 %v4269
  %v4981 = vpop.f32.mrf.mxu0
  %v4982 = vadd.f32 %v4693, %v4981
  %v4983 = vpop.f32.mrf.mxu0
  %v4984 = vpop.f32.mrf.mxu0
  %v4985 = vadd.f32 %v4696, %v4984
  %v4986 = vpop.f32.mrf.mxu0
  %4987 = vmatprep.mubr.bf16.mxu0 0
  %4988 = vmatmul.mubr.bf16.gmra.mxu0 %v4272
  %v4989 = vpop.f32.mrf.mxu0
  %v4990 = vadd.f32 %v4701, %v4989
  %v4991 = vpop.f32.mrf.mxu0
  %v4992 = vpop.f32.mrf.mxu0
  %v4993 = vadd.f32 %v4704, %v4992
  %v4994 = vpop.f32.mrf.mxu0
  %4995 = vmatprep.mubr.bf16.mxu0 0
  %4996 = vmatmul.mubr.bf16.gmra.mxu0 %v4275
  %v4997 = vpop.f32.mrf.mxu0
  %v4998 = vadd.f32 %v4709, %v4997
  %v4999 = vpop.f32.mrf.mxu0
  %v5000 = vpop.f32.mrf.mxu0
  %v5001 = vadd.f32 %v4712, %v5000
  %v5002 = vpop.f32.mrf.mxu0
  %5003 = vmatprep.mubr.bf16.mxu0 0
  %5004 = vmatmul.mubr.bf16.gmra.mxu0 %v4278
  %v5005 = vpop.f32.mrf.mxu0
  %v5006 = vadd.f32 %v4717, %v5005
  %v5007 = vpop.f32.mrf.mxu0
  %v5008 = vpop.f32.mrf.mxu0
  %v5009 = vadd.f32 %v4720, %v5008
  %v5010 = vpop.f32.mrf.mxu0
  %5011 = vmatprep.mubr.bf16.mxu0 0
  %5012 = vmatmul.mubr.bf16.gmra.mxu0 %v4281
  %v5013 = vpop.f32.mrf.mxu0
  %v5014 = vadd.f32 %v4725, %v5013
  %v5015 = vpop.f32.mrf.mxu0
  %v5016 = vpop.f32.mrf.mxu0
  %v5017 = vadd.f32 %v4728, %v5016
  %v5018 = vpop.f32.mrf.mxu0
  %5019 = vmatprep.mubr.bf16.mxu0 0
  %5020 = vmatmul.mubr.bf16.gmra.mxu0 %v4284
  %v5021 = vpop.f32.mrf.mxu0
  %v5022 = vadd.f32 %v4733, %v5021
  %v5023 = vpop.f32.mrf.mxu0
  %v5024 = vpop.f32.mrf.mxu0
  %v5025 = vadd.f32 %v4736, %v5024
  %v5026 = vpop.f32.mrf.mxu0
  %5027 = vmatprep.mubr.bf16.mxu0 0
  %5028 = vmatmul.mubr.bf16.gmra.mxu0 %v4287
  %v5029 = vpop.f32.mrf.mxu0
  %v5030 = vadd.f32 %v4741, %v5029
  %v5031 = vpop.f32.mrf.mxu0
  %v5032 = vpop.f32.mrf.mxu0
  %v5033 = vadd.f32 %v4744, %v5032
  %v5034 = vpop.f32.mrf.mxu0
  %5035 = vmatprep.mubr.bf16.mxu0 0
  %5036 = vmatmul.mubr.bf16.gmra.mxu0 %v4290
  %v5037 = vpop.f32.mrf.mxu0
  %v5038 = vadd.f32 %v4749, %v5037
  %v5039 = vpop.f32.mrf.mxu0
  %v5040 = vpop.f32.mrf.mxu0
  %v5041 = vadd.f32 %v4752, %v5040
  %v5042 = vpop.f32.mrf.mxu0
  %5043 = vmatprep.mubr.bf16.mxu0 0
  %5044 = vmatmul.mubr.bf16.gmra.mxu0 %v4293
  %v5045 = vpop.f32.mrf.mxu0
  %v5046 = vadd.f32 %v4757, %v5045
  %v5047 = vpop.f32.mrf.mxu0
  %v5048 = vpop.f32.mrf.mxu0
  %v5049 = vadd.f32 %v4760, %v5048
  %v5050 = vpop.f32.mrf.mxu0
  %5051 = vmatprep.mubr.bf16.mxu0 0
  %5052 = vmatmul.mubr.bf16.gmra.mxu0 %v4296
  %v5053 = vpop.f32.mrf.mxu0
  %v5054 = vadd.f32 %v4765, %v5053
  %v5055 = vpop.f32.mrf.mxu0
  %v5056 = vpop.f32.mrf.mxu0
  %v5057 = vadd.f32 %v4768, %v5056
  %v5058 = vpop.f32.mrf.mxu0
  %5059 = vmatprep.mubr.bf16.mxu0 0
  %5060 = vmatmul.mubr.bf16.gmra.mxu0 %v4299
  %v5061 = vpop.f32.mrf.mxu0
  %v5062 = vadd.f32 %v4773, %v5061
  %v5063 = vpop.f32.mrf.mxu0
  %v5064 = vpop.f32.mrf.mxu0
  %v5065 = vadd.f32 %v4776, %v5064
  %v5066 = vpop.f32.mrf.mxu0
  %5067 = vmatprep.mubr.bf16.mxu0 0
  %5068 = vmatmul.mubr.bf16.gmra.mxu0 %v4302
  %v5069 = vpop.f32.mrf.mxu0
  %v5070 = vadd.f32 %v4781, %v5069
  %v5071 = vpop.f32.mrf.mxu0
  %v5072 = vpop.f32.mrf.mxu0
  %v5073 = vadd.f32 %v4784, %v5072
  %v5074 = vpop.f32.mrf.mxu0
  %5075 = vmatprep.mubr.bf16.mxu0 0
  %5076 = vmatmul.mubr.bf16.gmra.mxu0 %v4305
  %v5077 = vpop.f32.mrf.mxu0
  %v5078 = vadd.f32 %v4789, %v5077
  %v5079 = vpop.f32.mrf.mxu0
  %v5080 = vpop.f32.mrf.mxu0
  %v5081 = vadd.f32 %v4792, %v5080
  %v5082 = vpop.f32.mrf.mxu0
  %5083 = vmatprep.mubr.bf16.mxu0 0
  %5084 = vmatmul.mubr.bf16.gmra.mxu0 %v4308
  %v5085 = vpop.f32.mrf.mxu0
  %v5086 = vadd.f32 %v4797, %v5085
  %v5087 = vpop.f32.mrf.mxu0
  %v5088 = vpop.f32.mrf.mxu0
  %v5089 = vadd.f32 %v4800, %v5088
  %v5090 = vpop.f32.mrf.mxu0
  %5091 = vmatprep.mubr.bf16.mxu0 0
  %5092 = vmatmul.mubr.bf16.gmra.mxu0 %v4311
  %v5093 = vpop.f32.mrf.mxu0
  %v5094 = vadd.f32 %v4805, %v5093
  %v5095 = vpop.f32.mrf.mxu0
  %v5096 = vpop.f32.mrf.mxu0
  %v5097 = vadd.f32 %v4808, %v5096
  %v5098 = vpop.f32.mrf.mxu0
  %5099 = vmatprep.mubr.bf16.mxu0 0
  %5100 = vmatmul.mubr.bf16.gmra.mxu0 %v4314
  %v5101 = vpop.f32.mrf.mxu0
  %v5102 = vadd.f32 %v4813, %v5101
  %v5103 = vpop.f32.mrf.mxu0
  %v5104 = vpop.f32.mrf.mxu0
  %v5105 = vadd.f32 %v4816, %v5104
  %v5106 = vpop.f32.mrf.mxu0
  %5107 = vmatprep.mubr.bf16.mxu0 0
  %5108 = vmatmul.mubr.bf16.gmra.mxu0 %v4317
  %v5109 = vpop.f32.mrf.mxu0
  %v5110 = vadd.f32 %v4821, %v5109
  %v5111 = vpop.f32.mrf.mxu0
  %v5112 = vpop.f32.mrf.mxu0
  %v5113 = vadd.f32 %v4824, %v5112
  %v5114 = vpop.f32.mrf.mxu0
  %5115 = vmatprep.mubr.bf16.mxu0 0
  %5116 = vmatmul.mubr.bf16.gmra.mxu0 %v4320
  %v5117 = vpop.f32.mrf.mxu0
  %v5118 = vadd.f32 %v4829, %v5117
  %v5119 = vpop.f32.mrf.mxu0
  %v5120 = vpop.f32.mrf.mxu0
  %v5121 = vadd.f32 %v4832, %v5120
  %v5122 = vpop.f32.mrf.mxu0
  %5123 = vdwg.mxu0
  %v5124 = vadd.f32 %v3170, %v4870
  %v5125 = vadd.f32 %v3173, %v4873
  %v5126 = vadd.f32 %v3178, %v4878
  %v5127 = vadd.f32 %v3181, %v4881
  %v5128 = vadd.f32 %v3186, %v4886
  %v5129 = vadd.f32 %v3189, %v4889
  %v5130 = vadd.f32 %v3194, %v4894
  %v5131 = vadd.f32 %v3197, %v4897
  %v5132 = vadd.f32 %v3202, %v4902
  %v5133 = vadd.f32 %v3205, %v4905
  %v5134 = vadd.f32 %v3210, %v4910
  %v5135 = vadd.f32 %v3213, %v4913
  %v5136 = vadd.f32 %v3218, %v4918
  %v5137 = vadd.f32 %v3221, %v4921
  %v5138 = vadd.f32 %v3226, %v4926
  %v5139 = vadd.f32 %v3229, %v4929
  %v5140 = vadd.f32 %v3234, %v4934
  %v5141 = vadd.f32 %v3237, %v4937
  %v5142 = vadd.f32 %v3242, %v4942
  %v5143 = vadd.f32 %v3245, %v4945
  %v5144 = vadd.f32 %v3250, %v4950
  %v5145 = vadd.f32 %v3253, %v4953
  %v5146 = vadd.f32 %v3258, %v4958
  %v5147 = vadd.f32 %v3261, %v4961
  %v5148 = vadd.f32 %v3266, %v4966
  %v5149 = vadd.f32 %v3269, %v4969
  %v5150 = vadd.f32 %v3274, %v4974
  %v5151 = vadd.f32 %v3277, %v4977
  %v5152 = vadd.f32 %v3282, %v4982
  %v5153 = vadd.f32 %v3285, %v4985
  %v5154 = vadd.f32 %v3290, %v4990
  %v5155 = vadd.f32 %v3293, %v4993
  %v5156 = vadd.f32 %v3298, %v4998
  %v5157 = vadd.f32 %v3301, %v5001
  %v5158 = vadd.f32 %v3306, %v5006
  %v5159 = vadd.f32 %v3309, %v5009
  %v5160 = vadd.f32 %v3314, %v5014
  %v5161 = vadd.f32 %v3317, %v5017
  %v5162 = vadd.f32 %v3322, %v5022
  %v5163 = vadd.f32 %v3325, %v5025
  %v5164 = vadd.f32 %v3330, %v5030
  %v5165 = vadd.f32 %v3333, %v5033
  %v5166 = vadd.f32 %v3338, %v5038
  %v5167 = vadd.f32 %v3341, %v5041
  %v5168 = vadd.f32 %v3346, %v5046
  %v5169 = vadd.f32 %v3349, %v5049
  %v5170 = vadd.f32 %v3354, %v5054
  %v5171 = vadd.f32 %v3357, %v5057
  %v5172 = vadd.f32 %v3362, %v5062
  %v5173 = vadd.f32 %v3365, %v5065
  %v5174 = vadd.f32 %v3370, %v5070
  %v5175 = vadd.f32 %v3373, %v5073
  %v5176 = vadd.f32 %v3378, %v5078
  %v5177 = vadd.f32 %v3381, %v5081
  %v5178 = vadd.f32 %v3386, %v5086
  %v5179 = vadd.f32 %v3389, %v5089
  %v5180 = vadd.f32 %v3394, %v5094
  %v5181 = vadd.f32 %v3397, %v5097
  %v5182 = vadd.f32 %v3402, %v5102
  %v5183 = vadd.f32 %v3405, %v5105
  %v5184 = vadd.f32 %v3410, %v5110
  %v5185 = vadd.f32 %v3413, %v5113
  %v5186 = vadd.f32 %v3418, %v5118
  %v5187 = vadd.f32 %v3421, %v5121
  %v5188 = vld [vmem:[%s2] sm:$0x1]
  %v5190 = vlaneseq
  %v5191 = vshrl.u32 %v5190, 7
  %v5192 = vsub.s32 0, %v5191
  %v5193 = vrot.slane %v5188, %v5192
  %v5195 = vadd.f32 %v5124, %v5193
  %v5196 = vadd.f32 %v5125, %v5193
  %v5197 = vadd.f32 %v5126, %v5193
  %v5198 = vadd.f32 %v5127, %v5193
  %v5199 = vadd.f32 %v5128, %v5193
  %v5200 = vadd.f32 %v5129, %v5193
  %v5201 = vadd.f32 %v5130, %v5193
  %v5202 = vadd.f32 %v5131, %v5193
  %v5203 = vadd.f32 %v5132, %v5193
  %v5204 = vadd.f32 %v5133, %v5193
  %v5205 = vadd.f32 %v5134, %v5193
  %v5206 = vadd.f32 %v5135, %v5193
  %v5207 = vadd.f32 %v5136, %v5193
  %v5208 = vadd.f32 %v5137, %v5193
  %v5209 = vadd.f32 %v5138, %v5193
  %v5210 = vadd.f32 %v5139, %v5193
  %v5211 = vadd.f32 %v5140, %v5193
  %v5212 = vadd.f32 %v5141, %v5193
  %v5213 = vadd.f32 %v5142, %v5193
  %v5214 = vadd.f32 %v5143, %v5193
  %v5215 = vadd.f32 %v5144, %v5193
  %v5216 = vadd.f32 %v5145, %v5193
  %v5217 = vadd.f32 %v5146, %v5193
  %v5218 = vadd.f32 %v5147, %v5193
  %v5219 = vadd.f32 %v5148, %v5193
  %v5220 = vadd.f32 %v5149, %v5193
  %v5221 = vadd.f32 %v5150, %v5193
  %v5222 = vadd.f32 %v5151, %v5193
  %v5223 = vadd.f32 %v5152, %v5193
  %v5224 = vadd.f32 %v5153, %v5193
  %v5225 = vadd.f32 %v5154, %v5193
  %v5226 = vadd.f32 %v5155, %v5193
  %v5227 = vadd.f32 %v5156, %v5193
  %v5228 = vadd.f32 %v5157, %v5193
  %v5229 = vadd.f32 %v5158, %v5193
  %v5230 = vadd.f32 %v5159, %v5193
  %v5231 = vadd.f32 %v5160, %v5193
  %v5232 = vadd.f32 %v5161, %v5193
  %v5233 = vadd.f32 %v5162, %v5193
  %v5234 = vadd.f32 %v5163, %v5193
  %v5235 = vadd.f32 %v5164, %v5193
  %v5236 = vadd.f32 %v5165, %v5193
  %v5237 = vadd.f32 %v5166, %v5193
  %v5238 = vadd.f32 %v5167, %v5193
  %v5239 = vadd.f32 %v5168, %v5193
  %v5240 = vadd.f32 %v5169, %v5193
  %v5241 = vadd.f32 %v5170, %v5193
  %v5242 = vadd.f32 %v5171, %v5193
  %v5243 = vadd.f32 %v5172, %v5193
  %v5244 = vadd.f32 %v5173, %v5193
  %v5245 = vadd.f32 %v5174, %v5193
  %v5246 = vadd.f32 %v5175, %v5193
  %v5247 = vadd.f32 %v5176, %v5193
  %v5248 = vadd.f32 %v5177, %v5193
  %v5249 = vadd.f32 %v5178, %v5193
  %v5250 = vadd.f32 %v5179, %v5193
  %v5251 = vadd.f32 %v5180, %v5193
  %v5252 = vadd.f32 %v5181, %v5193
  %v5253 = vadd.f32 %v5182, %v5193
  %v5254 = vadd.f32 %v5183, %v5193
  %v5255 = vadd.f32 %v5184, %v5193
  %v5256 = vadd.f32 %v5185, %v5193
  %v5257 = vadd.f32 %v5186, %v5193
  %v5258 = vadd.f32 %v5187, %v5193
  %v5259 = vld [vmem:[%s3] sm:$0xf]
  %v5260 = vld [vmem:[%s3 + $0x4] sm:$0xf]
  %v5261 = vld [vmem:[%s3 + $0x8] sm:$0xf]
  %v5262 = vld [vmem:[%s3 + $0xc] sm:$0xf]
  %v5263 = vld [vmem:[%s3 + $0x10] sm:$0xf]
  %v5264 = vld [vmem:[%s3 + $0x14] sm:$0xf]
  %v5265 = vld [vmem:[%s3 + $0x18] sm:$0xf]
  %v5266 = vld [vmem:[%s3 + $0x1c] sm:$0xf]
  %v5267 = vld [vmem:[%s3 + $0x20] sm:$0xf]
  %v5268 = vld [vmem:[%s3 + $0x24] sm:$0xf]
  %v5269 = vld [vmem:[%s3 + $0x28] sm:$0xf]
  %v5270 = vld [vmem:[%s3 + $0x2c] sm:$0xf]
  %v5271 = vld [vmem:[%s3 + $0x30] sm:$0xf]
  %v5272 = vld [vmem:[%s3 + $0x34] sm:$0xf]
  %v5273 = vld [vmem:[%s3 + $0x38] sm:$0xf]
  %v5274 = vld [vmem:[%s3 + $0x3c] sm:$0xf]
  %v5275 = vld [vmem:[%s3 + $0x40] sm:$0xf]
  %v5276 = vld [vmem:[%s3 + $0x44] sm:$0xf]
  %v5277 = vld [vmem:[%s3 + $0x48] sm:$0xf]
  %v5278 = vld [vmem:[%s3 + $0x4c] sm:$0xf]
  %v5279 = vld [vmem:[%s3 + $0x50] sm:$0xf]
  %v5280 = vld [vmem:[%s3 + $0x54] sm:$0xf]
  %v5281 = vld [vmem:[%s3 + $0x58] sm:$0xf]
  %v5282 = vld [vmem:[%s3 + $0x5c] sm:$0xf]
  %v5283 = vld [vmem:[%s3 + $0x60] sm:$0xf]
  %v5284 = vld [vmem:[%s3 + $0x64] sm:$0xf]
  %v5285 = vld [vmem:[%s3 + $0x68] sm:$0xf]
  %v5286 = vld [vmem:[%s3 + $0x6c] sm:$0xf]
  %v5287 = vld [vmem:[%s3 + $0x70] sm:$0xf]
  %v5288 = vld [vmem:[%s3 + $0x74] sm:$0xf]
  %v5289 = vld [vmem:[%s3 + $0x78] sm:$0xf]
  %v5290 = vld [vmem:[%s3 + $0x7c] sm:$0xf]
  %v5291 = vld [vmem:[%s3 + $0x80] sm:$0xf]
  %v5292 = vld [vmem:[%s3 + $0x84] sm:$0xf]
  %v5293 = vld [vmem:[%s3 + $0x88] sm:$0xf]
  %v5294 = vld [vmem:[%s3 + $0x8c] sm:$0xf]
  %v5295 = vld [vmem:[%s3 + $0x90] sm:$0xf]
  %v5296 = vld [vmem:[%s3 + $0x94] sm:$0xf]
  %v5297 = vld [vmem:[%s3 + $0x98] sm:$0xf]
  %v5298 = vld [vmem:[%s3 + $0x9c] sm:$0xf]
  %v5299 = vld [vmem:[%s3 + $0xa0] sm:$0xf]
  %v5300 = vld [vmem:[%s3 + $0xa4] sm:$0xf]
  %v5301 = vld [vmem:[%s3 + $0xa8] sm:$0xf]
  %v5302 = vld [vmem:[%s3 + $0xac] sm:$0xf]
  %v5303 = vld [vmem:[%s3 + $0xb0] sm:$0xf]
  %v5304 = vld [vmem:[%s3 + $0xb4] sm:$0xf]
  %v5305 = vld [vmem:[%s3 + $0xb8] sm:$0xf]
  %v5306 = vld [vmem:[%s3 + $0xbc] sm:$0xf]
  %v5307 = vld [vmem:[%s3 + $0xc0] sm:$0xf]
  %v5308 = vld [vmem:[%s3 + $0xc4] sm:$0xf]
  %v5309 = vld [vmem:[%s3 + $0xc8] sm:$0xf]
  %v5310 = vld [vmem:[%s3 + $0xcc] sm:$0xf]
  %v5311 = vld [vmem:[%s3 + $0xd0] sm:$0xf]
  %v5312 = vld [vmem:[%s3 + $0xd4] sm:$0xf]
  %v5313 = vld [vmem:[%s3 + $0xd8] sm:$0xf]
  %v5314 = vld [vmem:[%s3 + $0xdc] sm:$0xf]
  %v5315 = vld [vmem:[%s3 + $0xe0] sm:$0xf]
  %v5316 = vld [vmem:[%s3 + $0xe4] sm:$0xf]
  %v5317 = vld [vmem:[%s3 + $0xe8] sm:$0xf]
  %v5318 = vld [vmem:[%s3 + $0xec] sm:$0xf]
  %v5319 = vld [vmem:[%s3 + $0xf0] sm:$0xf]
  %v5320 = vld [vmem:[%s3 + $0xf4] sm:$0xf]
  %v5321 = vld [vmem:[%s3 + $0xf8] sm:$0xf]
  %v5322 = vld [vmem:[%s3 + $0xfc] sm:$0xf]
  %v5323 = vld [vmem:[%s4] sm:$0xf]
  %v5324 = vld [vmem:[%s4 + $0x4] sm:$0xf]
  %v5325 = vld [vmem:[%s4 + $0x8] sm:$0xf]
  %v5326 = vld [vmem:[%s4 + $0xc] sm:$0xf]
  %v5327 = vld [vmem:[%s4 + $0x10] sm:$0xf]
  %v5328 = vld [vmem:[%s4 + $0x14] sm:$0xf]
  %v5329 = vld [vmem:[%s4 + $0x18] sm:$0xf]
  %v5330 = vld [vmem:[%s4 + $0x1c] sm:$0xf]
  %v5331 = vld [vmem:[%s4 + $0x20] sm:$0xf]
  %v5332 = vld [vmem:[%s4 + $0x24] sm:$0xf]
  %v5333 = vld [vmem:[%s4 + $0x28] sm:$0xf]
  %v5334 = vld [vmem:[%s4 + $0x2c] sm:$0xf]
  %v5335 = vld [vmem:[%s4 + $0x30] sm:$0xf]
  %v5336 = vld [vmem:[%s4 + $0x34] sm:$0xf]
  %v5337 = vld [vmem:[%s4 + $0x38] sm:$0xf]
  %v5338 = vld [vmem:[%s4 + $0x3c] sm:$0xf]
  %v5339 = vld [vmem:[%s5] sm:$0x1]
  %v5341 = vlaneseq
  %v5342 = vshrl.u32 %v5341, 7
  %v5343 = vsub.s32 0, %v5342
  %v5344 = vrot.slane %v5339, %v5343
  %v5410 = vunpack.c.l.b16 %v5259
  %v5411 = vunpack.c.l.b16 %v5260
  %v5412 = vunpack.c.l.b16 %v5261
  %v5413 = vunpack.c.l.b16 %v5262
  %v5414 = vunpack.c.l.b16 %v5263
  %v5415 = vunpack.c.l.b16 %v5264
  %v5416 = vunpack.c.l.b16 %v5265
  %v5417 = vunpack.c.l.b16 %v5266
  %v5418 = vunpack.c.l.b16 %v5267
  %v5419 = vunpack.c.l.b16 %v5268
  %v5420 = vunpack.c.l.b16 %v5269
  %v5421 = vunpack.c.l.b16 %v5270
  %v5422 = vunpack.c.l.b16 %v5271
  %v5423 = vunpack.c.l.b16 %v5272
  %v5424 = vunpack.c.l.b16 %v5273
  %v5425 = vunpack.c.l.b16 %v5274
  %v5426 = vunpack.c.l.b16 %v5275
  %v5427 = vunpack.c.l.b16 %v5276
  %v5428 = vunpack.c.l.b16 %v5277
  %v5429 = vunpack.c.l.b16 %v5278
  %v5430 = vunpack.c.l.b16 %v5279
  %v5431 = vunpack.c.l.b16 %v5280
  %v5432 = vunpack.c.l.b16 %v5281
  %v5433 = vunpack.c.l.b16 %v5282
  %v5434 = vunpack.c.l.b16 %v5283
  %v5435 = vunpack.c.l.b16 %v5284
  %v5436 = vunpack.c.l.b16 %v5285
  %v5437 = vunpack.c.l.b16 %v5286
  %v5438 = vunpack.c.l.b16 %v5287
  %v5439 = vunpack.c.l.b16 %v5288
  %v5440 = vunpack.c.l.b16 %v5289
  %v5441 = vunpack.c.l.b16 %v5290
  %v5442 = vunpack.c.l.b16 %v5291
  %v5443 = vunpack.c.l.b16 %v5292
  %v5444 = vunpack.c.l.b16 %v5293
  %v5445 = vunpack.c.l.b16 %v5294
  %v5446 = vunpack.c.l.b16 %v5295
  %v5447 = vunpack.c.l.b16 %v5296
  %v5448 = vunpack.c.l.b16 %v5297
  %v5449 = vunpack.c.l.b16 %v5298
  %v5450 = vunpack.c.l.b16 %v5299
  %v5451 = vunpack.c.l.b16 %v5300
  %v5452 = vunpack.c.l.b16 %v5301
  %v5453 = vunpack.c.l.b16 %v5302
  %v5454 = vunpack.c.l.b16 %v5303
  %v5455 = vunpack.c.l.b16 %v5304
  %v5456 = vunpack.c.l.b16 %v5305
  %v5457 = vunpack.c.l.b16 %v5306
  %v5458 = vunpack.c.l.b16 %v5307
  %v5459 = vunpack.c.l.b16 %v5308
  %v5460 = vunpack.c.l.b16 %v5309
  %v5461 = vunpack.c.l.b16 %v5310
  %v5462 = vunpack.c.l.b16 %v5311
  %v5463 = vunpack.c.l.b16 %v5312
  %v5464 = vunpack.c.l.b16 %v5313
  %v5465 = vunpack.c.l.b16 %v5314
  %v5466 = vunpack.c.l.b16 %v5315
  %v5467 = vunpack.c.l.b16 %v5316
  %v5468 = vunpack.c.l.b16 %v5317
  %v5469 = vunpack.c.l.b16 %v5318
  %v5470 = vunpack.c.l.b16 %v5319
  %v5471 = vunpack.c.l.b16 %v5320
  %v5472 = vunpack.c.l.b16 %v5321
  %v5473 = vunpack.c.l.b16 %v5322
  %v5474 = vpack.c.b16 %v5411, %v5410
  %v5475 = vpack.c.b16 %v5413, %v5412
  %v5476 = vpack.c.b16 %v5415, %v5414
  %v5477 = vpack.c.b16 %v5417, %v5416
  %v5478 = vpack.c.b16 %v5419, %v5418
  %v5479 = vpack.c.b16 %v5421, %v5420
  %v5480 = vpack.c.b16 %v5423, %v5422
  %v5481 = vpack.c.b16 %v5425, %v5424
  %v5482 = vpack.c.b16 %v5427, %v5426
  %v5483 = vpack.c.b16 %v5429, %v5428
  %v5484 = vpack.c.b16 %v5431, %v5430
  %v5485 = vpack.c.b16 %v5433, %v5432
  %v5486 = vpack.c.b16 %v5435, %v5434
  %v5487 = vpack.c.b16 %v5437, %v5436
  %v5488 = vpack.c.b16 %v5439, %v5438
  %v5489 = vpack.c.b16 %v5441, %v5440
  %v5490 = vpack.c.b16 %v5443, %v5442
  %v5491 = vpack.c.b16 %v5445, %v5444
  %v5492 = vpack.c.b16 %v5447, %v5446
  %v5493 = vpack.c.b16 %v5449, %v5448
  %v5494 = vpack.c.b16 %v5451, %v5450
  %v5495 = vpack.c.b16 %v5453, %v5452
  %v5496 = vpack.c.b16 %v5455, %v5454
  %v5497 = vpack.c.b16 %v5457, %v5456
  %v5498 = vpack.c.b16 %v5459, %v5458
  %v5499 = vpack.c.b16 %v5461, %v5460
  %v5500 = vpack.c.b16 %v5463, %v5462
  %v5501 = vpack.c.b16 %v5465, %v5464
  %v5502 = vpack.c.b16 %v5467, %v5466
  %v5503 = vpack.c.b16 %v5469, %v5468
  %v5504 = vpack.c.b16 %v5471, %v5470
  %v5505 = vpack.c.b16 %v5473, %v5472
  %v5554 = vunpack.c.l.b16 %v5323
  %v5555 = vunpack.c.l.b16 %v5324
  %v5556 = vunpack.c.l.b16 %v5325
  %v5557 = vunpack.c.l.b16 %v5326
  %v5558 = vunpack.c.l.b16 %v5327
  %v5559 = vunpack.c.l.b16 %v5328
  %v5560 = vunpack.c.l.b16 %v5329
  %v5561 = vunpack.c.l.b16 %v5330
  %v5562 = vunpack.c.l.b16 %v5331
  %v5563 = vunpack.c.l.b16 %v5332
  %v5564 = vunpack.c.l.b16 %v5333
  %v5565 = vunpack.c.l.b16 %v5334
  %v5566 = vunpack.c.l.b16 %v5335
  %v5567 = vunpack.c.l.b16 %v5336
  %v5568 = vunpack.c.l.b16 %v5337
  %v5569 = vunpack.c.l.b16 %v5338
  %v5570 = vpack.c.b16 %v5555, %v5554
  %v5571 = vpack.c.b16 %v5557, %v5556
  %v5572 = vpack.c.b16 %v5559, %v5558
  %v5573 = vpack.c.b16 %v5561, %v5560
  %v5574 = vpack.c.b16 %v5563, %v5562
  %v5575 = vpack.c.b16 %v5565, %v5564
  %v5576 = vpack.c.b16 %v5567, %v5566
  %v5577 = vpack.c.b16 %v5569, %v5568
  %5586 = vmatprep.subr.bf16.mxu0 0
  %5587 = vmatpush1.bf16.msra.mxu0 %v5577
  %5588 = vmatprep.subr.bf16.mxu0 0
  %5589 = vmatpush1.bf16.msra.mxu0 %v5576
  %5590 = vmatprep.subr.bf16.mxu0 0
  %5591 = vmatpush1.bf16.msra.mxu0 %v5575
  %5592 = vmatprep.subr.bf16.mxu0 0
  %5593 = vmatpush1.bf16.msra.mxu0 %v5574
  %5594 = vmatprep.subr.bf16.mxu0 0
  %5595 = vmatpush1.bf16.msra.mxu0 %v5573
  %5596 = vmatprep.subr.bf16.mxu0 0
  %5597 = vmatpush1.bf16.msra.mxu0 %v5572
  %5598 = vmatprep.subr.bf16.mxu0 0
  %5599 = vmatpush1.bf16.msra.mxu0 %v5571
  %5600 = vmatprep.subr.bf16.mxu0 0
  %5601 = vmatpush1.bf16.msra.mxu0 %v5570
  %5602 = vmatprep.subr.bf16.mxu0 0
  %5603 = vmatpush2.bf16.msra.mxu0 0
  %5604 = vmatprep.subr.bf16.mxu0 0
  %5605 = vmatpush2.bf16.msra.mxu0 0
  %5606 = vmatprep.subr.bf16.mxu0 0
  %5607 = vmatpush2.bf16.msra.mxu0 0
  %5608 = vmatprep.subr.bf16.mxu0 0
  %5609 = vmatpush2.bf16.msra.mxu0 0
  %5610 = vmatprep.subr.bf16.mxu0 0
  %5611 = vmatpush2.bf16.msra.mxu0 0
  %5612 = vmatprep.subr.bf16.mxu0 0
  %5613 = vmatpush2.bf16.msra.mxu0 0
  %5614 = vmatprep.subr.bf16.mxu0 0
  %5615 = vmatpush2.bf16.msra.mxu0 0
  %5616 = vmatprep.subr.bf16.mxu0 0
  %5617 = vmatpush2.bf16.msra.mxu0 0
  %5618 = vmatprep.mubr.bf16.mxu0 0
  %5619 = vmatmul.mubr.bf16.gmra.mxu0 %v5474
  %v5620 = vpop.f32.mrf.mxu0
  %v5621 = vadd.f32 %v5344, %v5620
  %v5622 = vpop.f32.mrf.mxu0
  %v5623 = vpop.f32.mrf.mxu0
  %v5624 = vadd.f32 %v5344, %v5623
  %v5625 = vpop.f32.mrf.mxu0
  %5626 = vmatprep.mubr.bf16.mxu0 0
  %5627 = vmatmul.mubr.bf16.gmra.mxu0 %v5475
  %v5628 = vpop.f32.mrf.mxu0
  %v5629 = vadd.f32 %v5344, %v5628
  %v5630 = vpop.f32.mrf.mxu0
  %v5631 = vpop.f32.mrf.mxu0
  %v5632 = vadd.f32 %v5344, %v5631
  %v5633 = vpop.f32.mrf.mxu0
  %5634 = vmatprep.mubr.bf16.mxu0 0
  %5635 = vmatmul.mubr.bf16.gmra.mxu0 %v5476
  %v5636 = vpop.f32.mrf.mxu0
  %v5637 = vadd.f32 %v5344, %v5636
  %v5638 = vpop.f32.mrf.mxu0
  %v5639 = vpop.f32.mrf.mxu0
  %v5640 = vadd.f32 %v5344, %v5639
  %v5641 = vpop.f32.mrf.mxu0
  %5642 = vmatprep.mubr.bf16.mxu0 0
  %5643 = vmatmul.mubr.bf16.gmra.mxu0 %v5477
  %v5644 = vpop.f32.mrf.mxu0
  %v5645 = vadd.f32 %v5344, %v5644
  %v5646 = vpop.f32.mrf.mxu0
  %v5647 = vpop.f32.mrf.mxu0
  %v5648 = vadd.f32 %v5344, %v5647
  %v5649 = vpop.f32.mrf.mxu0
  %5650 = vmatprep.mubr.bf16.mxu0 0
  %5651 = vmatmul.mubr.bf16.gmra.mxu0 %v5478
  %v5652 = vpop.f32.mrf.mxu0
  %v5653 = vadd.f32 %v5344, %v5652
  %v5654 = vpop.f32.mrf.mxu0
  %v5655 = vpop.f32.mrf.mxu0
  %v5656 = vadd.f32 %v5344, %v5655
  %v5657 = vpop.f32.mrf.mxu0
  %5658 = vmatprep.mubr.bf16.mxu0 0
  %5659 = vmatmul.mubr.bf16.gmra.mxu0 %v5479
  %v5660 = vpop.f32.mrf.mxu0
  %v5661 = vadd.f32 %v5344, %v5660
  %v5662 = vpop.f32.mrf.mxu0
  %v5663 = vpop.f32.mrf.mxu0
  %v5664 = vadd.f32 %v5344, %v5663
  %v5665 = vpop.f32.mrf.mxu0
  %5666 = vmatprep.mubr.bf16.mxu0 0
  %5667 = vmatmul.mubr.bf16.gmra.mxu0 %v5480
  %v5668 = vpop.f32.mrf.mxu0
  %v5669 = vadd.f32 %v5344, %v5668
  %v5670 = vpop.f32.mrf.mxu0
  %v5671 = vpop.f32.mrf.mxu0
  %v5672 = vadd.f32 %v5344, %v5671
  %v5673 = vpop.f32.mrf.mxu0
  %5674 = vmatprep.mubr.bf16.mxu0 0
  %5675 = vmatmul.mubr.bf16.gmra.mxu0 %v5481
  %v5676 = vpop.f32.mrf.mxu0
  %v5677 = vadd.f32 %v5344, %v5676
  %v5678 = vpop.f32.mrf.mxu0
  %v5679 = vpop.f32.mrf.mxu0
  %v5680 = vadd.f32 %v5344, %v5679
  %v5681 = vpop.f32.mrf.mxu0
  %5682 = vmatprep.mubr.bf16.mxu0 0
  %5683 = vmatmul.mubr.bf16.gmra.mxu0 %v5482
  %v5684 = vpop.f32.mrf.mxu0
  %v5685 = vadd.f32 %v5344, %v5684
  %v5686 = vpop.f32.mrf.mxu0
  %v5687 = vpop.f32.mrf.mxu0
  %v5688 = vadd.f32 %v5344, %v5687
  %v5689 = vpop.f32.mrf.mxu0
  %5690 = vmatprep.mubr.bf16.mxu0 0
  %5691 = vmatmul.mubr.bf16.gmra.mxu0 %v5483
  %v5692 = vpop.f32.mrf.mxu0
  %v5693 = vadd.f32 %v5344, %v5692
  %v5694 = vpop.f32.mrf.mxu0
  %v5695 = vpop.f32.mrf.mxu0
  %v5696 = vadd.f32 %v5344, %v5695
  %v5697 = vpop.f32.mrf.mxu0
  %5698 = vmatprep.mubr.bf16.mxu0 0
  %5699 = vmatmul.mubr.bf16.gmra.mxu0 %v5484
  %v5700 = vpop.f32.mrf.mxu0
  %v5701 = vadd.f32 %v5344, %v5700
  %v5702 = vpop.f32.mrf.mxu0
  %v5703 = vpop.f32.mrf.mxu0
  %v5704 = vadd.f32 %v5344, %v5703
  %v5705 = vpop.f32.mrf.mxu0
  %5706 = vmatprep.mubr.bf16.mxu0 0
  %5707 = vmatmul.mubr.bf16.gmra.mxu0 %v5485
  %v5708 = vpop.f32.mrf.mxu0
  %v5709 = vadd.f32 %v5344, %v5708
  %v5710 = vpop.f32.mrf.mxu0
  %v5711 = vpop.f32.mrf.mxu0
  %v5712 = vadd.f32 %v5344, %v5711
  %v5713 = vpop.f32.mrf.mxu0
  %5714 = vmatprep.mubr.bf16.mxu0 0
  %5715 = vmatmul.mubr.bf16.gmra.mxu0 %v5486
  %v5716 = vpop.f32.mrf.mxu0
  %v5717 = vadd.f32 %v5344, %v5716
  %v5718 = vpop.f32.mrf.mxu0
  %v5719 = vpop.f32.mrf.mxu0
  %v5720 = vadd.f32 %v5344, %v5719
  %v5721 = vpop.f32.mrf.mxu0
  %5722 = vmatprep.mubr.bf16.mxu0 0
  %5723 = vmatmul.mubr.bf16.gmra.mxu0 %v5487
  %v5724 = vpop.f32.mrf.mxu0
  %v5725 = vadd.f32 %v5344, %v5724
  %v5726 = vpop.f32.mrf.mxu0
  %v5727 = vpop.f32.mrf.mxu0
  %v5728 = vadd.f32 %v5344, %v5727
  %v5729 = vpop.f32.mrf.mxu0
  %5730 = vmatprep.mubr.bf16.mxu0 0
  %5731 = vmatmul.mubr.bf16.gmra.mxu0 %v5488
  %v5732 = vpop.f32.mrf.mxu0
  %v5733 = vadd.f32 %v5344, %v5732
  %v5734 = vpop.f32.mrf.mxu0
  %v5735 = vpop.f32.mrf.mxu0
  %v5736 = vadd.f32 %v5344, %v5735
  %v5737 = vpop.f32.mrf.mxu0
  %5738 = vmatprep.mubr.bf16.mxu0 0
  %5739 = vmatmul.mubr.bf16.gmra.mxu0 %v5489
  %v5740 = vpop.f32.mrf.mxu0
  %v5741 = vadd.f32 %v5344, %v5740
  %v5742 = vpop.f32.mrf.mxu0
  %v5743 = vpop.f32.mrf.mxu0
  %v5744 = vadd.f32 %v5344, %v5743
  %v5745 = vpop.f32.mrf.mxu0
  %5746 = vmatprep.mubr.bf16.mxu0 0
  %5747 = vmatmul.mubr.bf16.gmra.mxu0 %v5490
  %v5748 = vpop.f32.mrf.mxu0
  %v5749 = vadd.f32 %v5344, %v5748
  %v5750 = vpop.f32.mrf.mxu0
  %v5751 = vpop.f32.mrf.mxu0
  %v5752 = vadd.f32 %v5344, %v5751
  %v5753 = vpop.f32.mrf.mxu0
  %5754 = vmatprep.mubr.bf16.mxu0 0
  %5755 = vmatmul.mubr.bf16.gmra.mxu0 %v5491
  %v5756 = vpop.f32.mrf.mxu0
  %v5757 = vadd.f32 %v5344, %v5756
  %v5758 = vpop.f32.mrf.mxu0
  %v5759 = vpop.f32.mrf.mxu0
  %v5760 = vadd.f32 %v5344, %v5759
  %v5761 = vpop.f32.mrf.mxu0
  %5762 = vmatprep.mubr.bf16.mxu0 0
  %5763 = vmatmul.mubr.bf16.gmra.mxu0 %v5492
  %v5764 = vpop.f32.mrf.mxu0
  %v5765 = vadd.f32 %v5344, %v5764
  %v5766 = vpop.f32.mrf.mxu0
  %v5767 = vpop.f32.mrf.mxu0
  %v5768 = vadd.f32 %v5344, %v5767
  %v5769 = vpop.f32.mrf.mxu0
  %5770 = vmatprep.mubr.bf16.mxu0 0
  %5771 = vmatmul.mubr.bf16.gmra.mxu0 %v5493
  %v5772 = vpop.f32.mrf.mxu0
  %v5773 = vadd.f32 %v5344, %v5772
  %v5774 = vpop.f32.mrf.mxu0
  %v5775 = vpop.f32.mrf.mxu0
  %v5776 = vadd.f32 %v5344, %v5775
  %v5777 = vpop.f32.mrf.mxu0
  %5778 = vmatprep.mubr.bf16.mxu0 0
  %5779 = vmatmul.mubr.bf16.gmra.mxu0 %v5494
  %v5780 = vpop.f32.mrf.mxu0
  %v5781 = vadd.f32 %v5344, %v5780
  %v5782 = vpop.f32.mrf.mxu0
  %v5783 = vpop.f32.mrf.mxu0
  %v5784 = vadd.f32 %v5344, %v5783
  %v5785 = vpop.f32.mrf.mxu0
  %5786 = vmatprep.mubr.bf16.mxu0 0
  %5787 = vmatmul.mubr.bf16.gmra.mxu0 %v5495
  %v5788 = vpop.f32.mrf.mxu0
  %v5789 = vadd.f32 %v5344, %v5788
  %v5790 = vpop.f32.mrf.mxu0
  %v5791 = vpop.f32.mrf.mxu0
  %v5792 = vadd.f32 %v5344, %v5791
  %v5793 = vpop.f32.mrf.mxu0
  %5794 = vmatprep.mubr.bf16.mxu0 0
  %5795 = vmatmul.mubr.bf16.gmra.mxu0 %v5496
  %v5796 = vpop.f32.mrf.mxu0
  %v5797 = vadd.f32 %v5344, %v5796
  %v5798 = vpop.f32.mrf.mxu0
  %v5799 = vpop.f32.mrf.mxu0
  %v5800 = vadd.f32 %v5344, %v5799
  %v5801 = vpop.f32.mrf.mxu0
  %5802 = vmatprep.mubr.bf16.mxu0 0
  %5803 = vmatmul.mubr.bf16.gmra.mxu0 %v5497
  %v5804 = vpop.f32.mrf.mxu0
  %v5805 = vadd.f32 %v5344, %v5804
  %v5806 = vpop.f32.mrf.mxu0
  %v5807 = vpop.f32.mrf.mxu0
  %v5808 = vadd.f32 %v5344, %v5807
  %v5809 = vpop.f32.mrf.mxu0
  %5810 = vmatprep.mubr.bf16.mxu0 0
  %5811 = vmatmul.mubr.bf16.gmra.mxu0 %v5498
  %v5812 = vpop.f32.mrf.mxu0
  %v5813 = vadd.f32 %v5344, %v5812
  %v5814 = vpop.f32.mrf.mxu0
  %v5815 = vpop.f32.mrf.mxu0
  %v5816 = vadd.f32 %v5344, %v5815
  %v5817 = vpop.f32.mrf.mxu0
  %5818 = vmatprep.mubr.bf16.mxu0 0
  %5819 = vmatmul.mubr.bf16.gmra.mxu0 %v5499
  %v5820 = vpop.f32.mrf.mxu0
  %v5821 = vadd.f32 %v5344, %v5820
  %v5822 = vpop.f32.mrf.mxu0
  %v5823 = vpop.f32.mrf.mxu0
  %v5824 = vadd.f32 %v5344, %v5823
  %v5825 = vpop.f32.mrf.mxu0
  %5826 = vmatprep.mubr.bf16.mxu0 0
  %5827 = vmatmul.mubr.bf16.gmra.mxu0 %v5500
  %v5828 = vpop.f32.mrf.mxu0
  %v5829 = vadd.f32 %v5344, %v5828
  %v5830 = vpop.f32.mrf.mxu0
  %v5831 = vpop.f32.mrf.mxu0
  %v5832 = vadd.f32 %v5344, %v5831
  %v5833 = vpop.f32.mrf.mxu0
  %5834 = vmatprep.mubr.bf16.mxu0 0
  %5835 = vmatmul.mubr.bf16.gmra.mxu0 %v5501
  %v5836 = vpop.f32.mrf.mxu0
  %v5837 = vadd.f32 %v5344, %v5836
  %v5838 = vpop.f32.mrf.mxu0
  %v5839 = vpop.f32.mrf.mxu0
  %v5840 = vadd.f32 %v5344, %v5839
  %v5841 = vpop.f32.mrf.mxu0
  %5842 = vmatprep.mubr.bf16.mxu0 0
  %5843 = vmatmul.mubr.bf16.gmra.mxu0 %v5502
  %v5844 = vpop.f32.mrf.mxu0
  %v5845 = vadd.f32 %v5344, %v5844
  %v5846 = vpop.f32.mrf.mxu0
  %v5847 = vpop.f32.mrf.mxu0
  %v5848 = vadd.f32 %v5344, %v5847
  %v5849 = vpop.f32.mrf.mxu0
  %5850 = vmatprep.mubr.bf16.mxu0 0
  %5851 = vmatmul.mubr.bf16.gmra.mxu0 %v5503
  %v5852 = vpop.f32.mrf.mxu0
  %v5853 = vadd.f32 %v5344, %v5852
  %v5854 = vpop.f32.mrf.mxu0
  %v5855 = vpop.f32.mrf.mxu0
  %v5856 = vadd.f32 %v5344, %v5855
  %v5857 = vpop.f32.mrf.mxu0
  %5858 = vmatprep.mubr.bf16.mxu0 0
  %5859 = vmatmul.mubr.bf16.gmra.mxu0 %v5504
  %v5860 = vpop.f32.mrf.mxu0
  %v5861 = vadd.f32 %v5344, %v5860
  %v5862 = vpop.f32.mrf.mxu0
  %v5863 = vpop.f32.mrf.mxu0
  %v5864 = vadd.f32 %v5344, %v5863
  %v5865 = vpop.f32.mrf.mxu0
  %5866 = vmatprep.mubr.bf16.mxu0 0
  %5867 = vmatmul.mubr.bf16.gmra.mxu0 %v5505
  %v5868 = vpop.f32.mrf.mxu0
  %v5869 = vadd.f32 %v5344, %v5868
  %v5870 = vpop.f32.mrf.mxu0
  %v5871 = vpop.f32.mrf.mxu0
  %v5872 = vadd.f32 %v5344, %v5871
  %v5873 = vpop.f32.mrf.mxu0
  %5874 = vdwg.mxu0
  %v5875 = vadd.f32 %v5195, %v5621
  %v5876 = vadd.f32 %v5196, %v5624
  %v5877 = vadd.f32 %v5197, %v5629
  %v5878 = vadd.f32 %v5198, %v5632
  %v5879 = vadd.f32 %v5199, %v5637
  %v5880 = vadd.f32 %v5200, %v5640
  %v5881 = vadd.f32 %v5201, %v5645
  %v5882 = vadd.f32 %v5202, %v5648
  %v5883 = vadd.f32 %v5203, %v5653
  %v5884 = vadd.f32 %v5204, %v5656
  %v5885 = vadd.f32 %v5205, %v5661
  %v5886 = vadd.f32 %v5206, %v5664
  %v5887 = vadd.f32 %v5207, %v5669
  %v5888 = vadd.f32 %v5208, %v5672
  %v5889 = vadd.f32 %v5209, %v5677
  %v5890 = vadd.f32 %v5210, %v5680
  %v5891 = vadd.f32 %v5211, %v5685
  %v5892 = vadd.f32 %v5212, %v5688
  %v5893 = vadd.f32 %v5213, %v5693
  %v5894 = vadd.f32 %v5214, %v5696
  %v5895 = vadd.f32 %v5215, %v5701
  %v5896 = vadd.f32 %v5216, %v5704
  %v5897 = vadd.f32 %v5217, %v5709
  %v5898 = vadd.f32 %v5218, %v5712
  %v5899 = vadd.f32 %v5219, %v5717
  %v5900 = vadd.f32 %v5220, %v5720
  %v5901 = vadd.f32 %v5221, %v5725
  %v5902 = vadd.f32 %v5222, %v5728
  %v5903 = vadd.f32 %v5223, %v5733
  %v5904 = vadd.f32 %v5224, %v5736
  %v5905 = vadd.f32 %v5225, %v5741
  %v5906 = vadd.f32 %v5226, %v5744
  %v5907 = vadd.f32 %v5227, %v5749
  %v5908 = vadd.f32 %v5228, %v5752
  %v5909 = vadd.f32 %v5229, %v5757
  %v5910 = vadd.f32 %v5230, %v5760
  %v5911 = vadd.f32 %v5231, %v5765
  %v5912 = vadd.f32 %v5232, %v5768
  %v5913 = vadd.f32 %v5233, %v5773
  %v5914 = vadd.f32 %v5234, %v5776
  %v5915 = vadd.f32 %v5235, %v5781
  %v5916 = vadd.f32 %v5236, %v5784
  %v5917 = vadd.f32 %v5237, %v5789
  %v5918 = vadd.f32 %v5238, %v5792
  %v5919 = vadd.f32 %v5239, %v5797
  %v5920 = vadd.f32 %v5240, %v5800
  %v5921 = vadd.f32 %v5241, %v5805
  %v5922 = vadd.f32 %v5242, %v5808
  %v5923 = vadd.f32 %v5243, %v5813
  %v5924 = vadd.f32 %v5244, %v5816
  %v5925 = vadd.f32 %v5245, %v5821
  %v5926 = vadd.f32 %v5246, %v5824
  %v5927 = vadd.f32 %v5247, %v5829
  %v5928 = vadd.f32 %v5248, %v5832
  %v5929 = vadd.f32 %v5249, %v5837
  %v5930 = vadd.f32 %v5250, %v5840
  %v5931 = vadd.f32 %v5251, %v5845
  %v5932 = vadd.f32 %v5252, %v5848
  %v5933 = vadd.f32 %v5253, %v5853
  %v5934 = vadd.f32 %v5254, %v5856
  %v5935 = vadd.f32 %v5255, %v5861
  %v5936 = vadd.f32 %v5256, %v5864
  %v5937 = vadd.f32 %v5257, %v5869
  %v5938 = vadd.f32 %v5258, %v5872
  %v5939 = vmax.f32 %v5875, 0.0
  %v5940 = vmax.f32 %v5876, 0.0
  %v5941 = vmax.f32 %v5877, 0.0
  %v5942 = vmax.f32 %v5878, 0.0
  %v5943 = vmax.f32 %v5879, 0.0
  %v5944 = vmax.f32 %v5880, 0.0
  %v5945 = vmax.f32 %v5881, 0.0
  %v5946 = vmax.f32 %v5882, 0.0
  %v5947 = vmax.f32 %v5883, 0.0
  %v5948 = vmax.f32 %v5884, 0.0
  %v5949 = vmax.f32 %v5885, 0.0
  %v5950 = vmax.f32 %v5886, 0.0
  %v5951 = vmax.f32 %v5887, 0.0
  %v5952 = vmax.f32 %v5888, 0.0
  %v5953 = vmax.f32 %v5889, 0.0
  %v5954 = vmax.f32 %v5890, 0.0
  %v5955 = vmax.f32 %v5891, 0.0
  %v5956 = vmax.f32 %v5892, 0.0
  %v5957 = vmax.f32 %v5893, 0.0
  %v5958 = vmax.f32 %v5894, 0.0
  %v5959 = vmax.f32 %v5895, 0.0
  %v5960 = vmax.f32 %v5896, 0.0
  %v5961 = vmax.f32 %v5897, 0.0
  %v5962 = vmax.f32 %v5898, 0.0
  %v5963 = vmax.f32 %v5899, 0.0
  %v5964 = vmax.f32 %v5900, 0.0
  %v5965 = vmax.f32 %v5901, 0.0
  %v5966 = vmax.f32 %v5902, 0.0
  %v5967 = vmax.f32 %v5903, 0.0
  %v5968 = vmax.f32 %v5904, 0.0
  %v5969 = vmax.f32 %v5905, 0.0
  %v5970 = vmax.f32 %v5906, 0.0
  %v5971 = vmax.f32 %v5907, 0.0
  %v5972 = vmax.f32 %v5908, 0.0
  %v5973 = vmax.f32 %v5909, 0.0
  %v5974 = vmax.f32 %v5910, 0.0
  %v5975 = vmax.f32 %v5911, 0.0
  %v5976 = vmax.f32 %v5912, 0.0
  %v5977 = vmax.f32 %v5913, 0.0
  %v5978 = vmax.f32 %v5914, 0.0
  %v5979 = vmax.f32 %v5915, 0.0
  %v5980 = vmax.f32 %v5916, 0.0
  %v5981 = vmax.f32 %v5917, 0.0
  %v5982 = vmax.f32 %v5918, 0.0
  %v5983 = vmax.f32 %v5919, 0.0
  %v5984 = vmax.f32 %v5920, 0.0
  %v5985 = vmax.f32 %v5921, 0.0
  %v5986 = vmax.f32 %v5922, 0.0
  %v5987 = vmax.f32 %v5923, 0.0
  %v5988 = vmax.f32 %v5924, 0.0
  %v5989 = vmax.f32 %v5925, 0.0
  %v5990 = vmax.f32 %v5926, 0.0
  %v5991 = vmax.f32 %v5927, 0.0
  %v5992 = vmax.f32 %v5928, 0.0
  %v5993 = vmax.f32 %v5929, 0.0
  %v5994 = vmax.f32 %v5930, 0.0
  %v5995 = vmax.f32 %v5931, 0.0
  %v5996 = vmax.f32 %v5932, 0.0
  %v5997 = vmax.f32 %v5933, 0.0
  %v5998 = vmax.f32 %v5934, 0.0
  %v5999 = vmax.f32 %v5935, 0.0
  %v6000 = vmax.f32 %v5936, 0.0
  %v6001 = vmax.f32 %v5937, 0.0
  %v6002 = vmax.f32 %v5938, 0.0
  %v6003 = vpack.c.bf16 %v5940, %v5939
  %v6004 = vpack.c.bf16 %v5942, %v5941
  %v6005 = vpack.c.bf16 %v5944, %v5943
  %v6006 = vpack.c.bf16 %v5946, %v5945
  %v6007 = vpack.c.bf16 %v5948, %v5947
  %v6008 = vpack.c.bf16 %v5950, %v5949
  %v6009 = vpack.c.bf16 %v5952, %v5951
  %v6010 = vpack.c.bf16 %v5954, %v5953
  %v6011 = vpack.c.bf16 %v5956, %v5955
  %v6012 = vpack.c.bf16 %v5958, %v5957
  %v6013 = vpack.c.bf16 %v5960, %v5959
  %v6014 = vpack.c.bf16 %v5962, %v5961
  %v6015 = vpack.c.bf16 %v5964, %v5963
  %v6016 = vpack.c.bf16 %v5966, %v5965
  %v6017 = vpack.c.bf16 %v5968, %v5967
  %v6018 = vpack.c.bf16 %v5970, %v5969
  %v6019 = vpack.c.bf16 %v5972, %v5971
  %v6020 = vpack.c.bf16 %v5974, %v5973
  %v6021 = vpack.c.bf16 %v5976, %v5975
  %v6022 = vpack.c.bf16 %v5978, %v5977
  %v6023 = vpack.c.bf16 %v5980, %v5979
  %v6024 = vpack.c.bf16 %v5982, %v5981
  %v6025 = vpack.c.bf16 %v5984, %v5983
  %v6026 = vpack.c.bf16 %v5986, %v5985
  %v6027 = vpack.c.bf16 %v5988, %v5987
  %v6028 = vpack.c.bf16 %v5990, %v5989
  %v6029 = vpack.c.bf16 %v5992, %v5991
  %v6030 = vpack.c.bf16 %v5994, %v5993
  %v6031 = vpack.c.bf16 %v5996, %v5995
  %v6032 = vpack.c.bf16 %v5998, %v5997
  %v6033 = vpack.c.bf16 %v6000, %v5999
  %v6034 = vpack.c.bf16 %v6002, %v6001
  %v6067 = vunpack.c.l.b16 %v6003
  %v6068 = vunpack.c.h.b16 %v6003
  %v6069 = vunpack.c.l.b16 %v6004
  %v6070 = vunpack.c.h.b16 %v6004
  %v6071 = vunpack.c.l.b16 %v6005
  %v6072 = vunpack.c.h.b16 %v6005
  %v6073 = vunpack.c.l.b16 %v6006
  %v6074 = vunpack.c.h.b16 %v6006
  %v6075 = vunpack.c.l.b16 %v6007
  %v6076 = vunpack.c.h.b16 %v6007
  %v6077 = vunpack.c.l.b16 %v6008
  %v6078 = vunpack.c.h.b16 %v6008
  %v6079 = vunpack.c.l.b16 %v6009
  %v6080 = vunpack.c.h.b16 %v6009
  %v6081 = vunpack.c.l.b16 %v6010
  %v6082 = vunpack.c.h.b16 %v6010
  %v6083 = vunpack.c.l.b16 %v6011
  %v6084 = vunpack.c.h.b16 %v6011
  %v6085 = vunpack.c.l.b16 %v6012
  %v6086 = vunpack.c.h.b16 %v6012
  %v6087 = vunpack.c.l.b16 %v6013
  %v6088 = vunpack.c.h.b16 %v6013
  %v6089 = vunpack.c.l.b16 %v6014
  %v6090 = vunpack.c.h.b16 %v6014
  %v6091 = vunpack.c.l.b16 %v6015
  %v6092 = vunpack.c.h.b16 %v6015
  %v6093 = vunpack.c.l.b16 %v6016
  %v6094 = vunpack.c.h.b16 %v6016
  %v6095 = vunpack.c.l.b16 %v6017
  %v6096 = vunpack.c.h.b16 %v6017
  %v6097 = vunpack.c.l.b16 %v6018
  %v6098 = vunpack.c.h.b16 %v6018
  %v6099 = vunpack.c.l.b16 %v6019
  %v6100 = vunpack.c.h.b16 %v6019
  %v6101 = vunpack.c.l.b16 %v6020
  %v6102 = vunpack.c.h.b16 %v6020
  %v6103 = vunpack.c.l.b16 %v6021
  %v6104 = vunpack.c.h.b16 %v6021
  %v6105 = vunpack.c.l.b16 %v6022
  %v6106 = vunpack.c.h.b16 %v6022
  %v6107 = vunpack.c.l.b16 %v6023
  %v6108 = vunpack.c.h.b16 %v6023
  %v6109 = vunpack.c.l.b16 %v6024
  %v6110 = vunpack.c.h.b16 %v6024
  %v6111 = vunpack.c.l.b16 %v6025
  %v6112 = vunpack.c.h.b16 %v6025
  %v6113 = vunpack.c.l.b16 %v6026
  %v6114 = vunpack.c.h.b16 %v6026
  %v6115 = vunpack.c.l.b16 %v6027
  %v6116 = vunpack.c.h.b16 %v6027
  %v6117 = vunpack.c.l.b16 %v6028
  %v6118 = vunpack.c.h.b16 %v6028
  %v6119 = vunpack.c.l.b16 %v6029
  %v6120 = vunpack.c.h.b16 %v6029
  %v6121 = vunpack.c.l.b16 %v6030
  %v6122 = vunpack.c.h.b16 %v6030
  %v6123 = vunpack.c.l.b16 %v6031
  %v6124 = vunpack.c.h.b16 %v6031
  %v6125 = vunpack.c.l.b16 %v6032
  %v6126 = vunpack.c.h.b16 %v6032
  %v6127 = vunpack.c.l.b16 %v6033
  %v6128 = vunpack.c.h.b16 %v6033
  %v6129 = vunpack.c.l.b16 %v6034
  %v6130 = vunpack.c.h.b16 %v6034
  %v6131 = vpack.c.b16 %v6067, %v6067
  %v6132 = vpack.c.b16 %v6068, %v6068
  %v6133 = vpack.c.b16 %v6069, %v6069
  %v6134 = vpack.c.b16 %v6070, %v6070
  %v6135 = vpack.c.b16 %v6071, %v6071
  %v6136 = vpack.c.b16 %v6072, %v6072
  %v6137 = vpack.c.b16 %v6073, %v6073
  %v6138 = vpack.c.b16 %v6074, %v6074
  %v6139 = vpack.c.b16 %v6075, %v6075
  %v6140 = vpack.c.b16 %v6076, %v6076
  %v6141 = vpack.c.b16 %v6077, %v6077
  %v6142 = vpack.c.b16 %v6078, %v6078
  %v6143 = vpack.c.b16 %v6079, %v6079
  %v6144 = vpack.c.b16 %v6080, %v6080
  %v6145 = vpack.c.b16 %v6081, %v6081
  %v6146 = vpack.c.b16 %v6082, %v6082
  %v6147 = vpack.c.b16 %v6083, %v6083
  %v6148 = vpack.c.b16 %v6084, %v6084
  %v6149 = vpack.c.b16 %v6085, %v6085
  %v6150 = vpack.c.b16 %v6086, %v6086
  %v6151 = vpack.c.b16 %v6087, %v6087
  %v6152 = vpack.c.b16 %v6088, %v6088
  %v6153 = vpack.c.b16 %v6089, %v6089
  %v6154 = vpack.c.b16 %v6090, %v6090
  %v6155 = vpack.c.b16 %v6091, %v6091
  %v6156 = vpack.c.b16 %v6092, %v6092
  %v6157 = vpack.c.b16 %v6093, %v6093
  %v6158 = vpack.c.b16 %v6094, %v6094
  %v6159 = vpack.c.b16 %v6095, %v6095
  %v6160 = vpack.c.b16 %v6096, %v6096
  %v6161 = vpack.c.b16 %v6097, %v6097
  %v6162 = vpack.c.b16 %v6098, %v6098
  %v6163 = vpack.c.b16 %v6099, %v6099
  %v6164 = vpack.c.b16 %v6100, %v6100
  %v6165 = vpack.c.b16 %v6101, %v6101
  %v6166 = vpack.c.b16 %v6102, %v6102
  %v6167 = vpack.c.b16 %v6103, %v6103
  %v6168 = vpack.c.b16 %v6104, %v6104
  %v6169 = vpack.c.b16 %v6105, %v6105
  %v6170 = vpack.c.b16 %v6106, %v6106
  %v6171 = vpack.c.b16 %v6107, %v6107
  %v6172 = vpack.c.b16 %v6108, %v6108
  %v6173 = vpack.c.b16 %v6109, %v6109
  %v6174 = vpack.c.b16 %v6110, %v6110
  %v6175 = vpack.c.b16 %v6111, %v6111
  %v6176 = vpack.c.b16 %v6112, %v6112
  %v6177 = vpack.c.b16 %v6113, %v6113
  %v6178 = vpack.c.b16 %v6114, %v6114
  %v6179 = vpack.c.b16 %v6115, %v6115
  %v6180 = vpack.c.b16 %v6116, %v6116
  %v6181 = vpack.c.b16 %v6117, %v6117
  %v6182 = vpack.c.b16 %v6118, %v6118
  %v6183 = vpack.c.b16 %v6119, %v6119
  %v6184 = vpack.c.b16 %v6120, %v6120
  %v6185 = vpack.c.b16 %v6121, %v6121
  %v6186 = vpack.c.b16 %v6122, %v6122
  %v6187 = vpack.c.b16 %v6123, %v6123
  %v6188 = vpack.c.b16 %v6124, %v6124
  %v6189 = vpack.c.b16 %v6125, %v6125
  %v6190 = vpack.c.b16 %v6126, %v6126
  %v6191 = vpack.c.b16 %v6127, %v6127
  %v6192 = vpack.c.b16 %v6128, %v6128
  %v6193 = vpack.c.b16 %v6129, %v6129
  %v6194 = vpack.c.b16 %v6130, %v6130
  %6259 = vst [vmem:[%s6] sm:$0xf] %v6131
  %6260 = vst [vmem:[%s6 + $0x4] sm:$0xf] %v6132
  %6261 = vst [vmem:[%s6 + $0x8] sm:$0xf] %v6133
  %6262 = vst [vmem:[%s6 + $0xc] sm:$0xf] %v6134
  %6263 = vst [vmem:[%s6 + $0x10] sm:$0xf] %v6135
  %6264 = vst [vmem:[%s6 + $0x14] sm:$0xf] %v6136
  %6265 = vst [vmem:[%s6 + $0x18] sm:$0xf] %v6137
  %6266 = vst [vmem:[%s6 + $0x1c] sm:$0xf] %v6138
  %6267 = vst [vmem:[%s6 + $0x20] sm:$0xf] %v6139
  %6268 = vst [vmem:[%s6 + $0x24] sm:$0xf] %v6140
  %6269 = vst [vmem:[%s6 + $0x28] sm:$0xf] %v6141
  %6270 = vst [vmem:[%s6 + $0x2c] sm:$0xf] %v6142
  %6271 = vst [vmem:[%s6 + $0x30] sm:$0xf] %v6143
  %6272 = vst [vmem:[%s6 + $0x34] sm:$0xf] %v6144
  %6273 = vst [vmem:[%s6 + $0x38] sm:$0xf] %v6145
  %6274 = vst [vmem:[%s6 + $0x3c] sm:$0xf] %v6146
  %6275 = vst [vmem:[%s6 + $0x40] sm:$0xf] %v6147
  %6276 = vst [vmem:[%s6 + $0x44] sm:$0xf] %v6148
  %6277 = vst [vmem:[%s6 + $0x48] sm:$0xf] %v6149
  %6278 = vst [vmem:[%s6 + $0x4c] sm:$0xf] %v6150
  %6279 = vst [vmem:[%s6 + $0x50] sm:$0xf] %v6151
  %6280 = vst [vmem:[%s6 + $0x54] sm:$0xf] %v6152
  %6281 = vst [vmem:[%s6 + $0x58] sm:$0xf] %v6153
  %6282 = vst [vmem:[%s6 + $0x5c] sm:$0xf] %v6154
  %6283 = vst [vmem:[%s6 + $0x60] sm:$0xf] %v6155
  %6284 = vst [vmem:[%s6 + $0x64] sm:$0xf] %v6156
  %6285 = vst [vmem:[%s6 + $0x68] sm:$0xf] %v6157
  %6286 = vst [vmem:[%s6 + $0x6c] sm:$0xf] %v6158
  %6287 = vst [vmem:[%s6 + $0x70] sm:$0xf] %v6159
  %6288 = vst [vmem:[%s6 + $0x74] sm:$0xf] %v6160
  %6289 = vst [vmem:[%s6 + $0x78] sm:$0xf] %v6161
  %6290 = vst [vmem:[%s6 + $0x7c] sm:$0xf] %v6162
  %6291 = vst [vmem:[%s6 + $0x80] sm:$0xf] %v6163
  %6292 = vst [vmem:[%s6 + $0x84] sm:$0xf] %v6164
  %6293 = vst [vmem:[%s6 + $0x88] sm:$0xf] %v6165
  %6294 = vst [vmem:[%s6 + $0x8c] sm:$0xf] %v6166
  %6295 = vst [vmem:[%s6 + $0x90] sm:$0xf] %v6167
  %6296 = vst [vmem:[%s6 + $0x94] sm:$0xf] %v6168
  %6297 = vst [vmem:[%s6 + $0x98] sm:$0xf] %v6169
  %6298 = vst [vmem:[%s6 + $0x9c] sm:$0xf] %v6170
  %6299 = vst [vmem:[%s6 + $0xa0] sm:$0xf] %v6171
  %6300 = vst [vmem:[%s6 + $0xa4] sm:$0xf] %v6172
  %6301 = vst [vmem:[%s6 + $0xa8] sm:$0xf] %v6173
  %6302 = vst [vmem:[%s6 + $0xac] sm:$0xf] %v6174
  %6303 = vst [vmem:[%s6 + $0xb0] sm:$0xf] %v6175
  %6304 = vst [vmem:[%s6 + $0xb4] sm:$0xf] %v6176
  %6305 = vst [vmem:[%s6 + $0xb8] sm:$0xf] %v6177
  %6306 = vst [vmem:[%s6 + $0xbc] sm:$0xf] %v6178
  %6307 = vst [vmem:[%s6 + $0xc0] sm:$0xf] %v6179
  %6308 = vst [vmem:[%s6 + $0xc4] sm:$0xf] %v6180
  %6309 = vst [vmem:[%s6 + $0xc8] sm:$0xf] %v6181
  %6310 = vst [vmem:[%s6 + $0xcc] sm:$0xf] %v6182
  %6311 = vst [vmem:[%s6 + $0xd0] sm:$0xf] %v6183
  %6312 = vst [vmem:[%s6 + $0xd4] sm:$0xf] %v6184
  %6313 = vst [vmem:[%s6 + $0xd8] sm:$0xf] %v6185
  %6314 = vst [vmem:[%s6 + $0xdc] sm:$0xf] %v6186
  %6315 = vst [vmem:[%s6 + $0xe0] sm:$0xf] %v6187
  %6316 = vst [vmem:[%s6 + $0xe4] sm:$0xf] %v6188
  %6317 = vst [vmem:[%s6 + $0xe8] sm:$0xf] %v6189
  %6318 = vst [vmem:[%s6 + $0xec] sm:$0xf] %v6190
  %6319 = vst [vmem:[%s6 + $0xf0] sm:$0xf] %v6191
  %6320 = vst [vmem:[%s6 + $0xf4] sm:$0xf] %v6192
  %6321 = vst [vmem:[%s6 + $0xf8] sm:$0xf] %v6193
  %6322 = vst [vmem:[%s6 + $0xfc] sm:$0xf] %v6194
  // Predicated region
  $region26: #{basic_block_forward.3} parent=0 // pred_check
    _
  $region27: #{basic_block_forward.3} parent=0 // pred_check_branch
    %6324 = sbr.rel (0) target = $region29
  $region28: #{basic_block_forward.3} parent=0 // pred_region
    _
  $region29: #{basic_block_forward.3} parent=0 // pred_fallthru
    _
  // Predicated region
  $region30: #{basic_block_forward.3} parent=0 // pred_check
    _
  $region31: #{basic_block_forward.3} parent=0 // pred_check_branch
    %6326 = sbr.rel (0) target = $region33
  $region32: #{basic_block_forward.3} parent=0 // pred_region
    _
  $region33: #{basic_block_forward.3} parent=0 // pred_fallthru
    _

</llo_original>
